<compile_context>
chip_gen: v6e
topology: v6e:2x2x1
jax: 0.10.0
libtpu: 0.0.40
codegen_flags: <defaults>
</compile_context>

<pallas_src>
import jax
import jax.numpy as jnp
from jax.experimental import pallas as pl
from jax.experimental.pallas import tpu as pltpu

LANES = 128


# ---------------------------------------------------------------------------
# Fused kernel
# ---------------------------------------------------------------------------
def _conv_branch(x, layers, K):
    """x: (bb, L, 128) f32 channels-last.  layers: [(w_ref(K*128,128), b_ref(1,128)), ...]."""
    for (w_ref, b_ref) in layers:
        bb, L, C = x.shape
        L_out = L - K + 1
        # im2col: lane index = k*128 + c_in, matching the packed weight rows.
        patches = jnp.concatenate([x[:, k:k + L_out, :] for k in range(K)], axis=-1)
        patches = patches.reshape(bb * L_out, K * C)          # (bb*L_out, K*128)
        acc = jnp.dot(patches, w_ref[...], preferred_element_type=jnp.float32)
        x = jnp.maximum(acc + b_ref[...], 0.0).reshape(bb, L_out, C)
    # AdaptiveMaxPool1d(1) + squeeze  -> (bb, 128)
    return jnp.max(x, axis=1)


def deepdta_fused_kernel(
    xd_ref, xp_ref,
    wd1, bd1, wd2, bd2, wd3, bd3,
    wp1, bp1, wp2, bp2, wp3, bp3,
    w1, b1, w2, b2, w3, b3, w4, b4,
    o_ref,
):
    d_feat = _conv_branch(xd_ref[...], [(wd1, bd1), (wd2, bd2), (wd3, bd3)], K=4)
    p_feat = _conv_branch(xp_ref[...], [(wp1, bp1), (wp2, bp2), (wp3, bp3)], K=8)

    # lanes [0,96)=drug feats, [96,128)=0, [128,224)=protein feats, [224,256)=0
    feat = jnp.concatenate([d_feat, p_feat], axis=-1)          # (bb, 256) f32

    # MLP head.  Dropouts are identity at inference; trailing .relu() after a
    # ReLU output is a no-op.  bf16 MXU inputs, f32 accumulation/bias/ReLU.
    h = jnp.maximum(
        jnp.dot(feat.astype(jnp.bfloat16), w1[...],
                preferred_element_type=jnp.float32) + b1[...], 0.0)
    h = jnp.maximum(
        jnp.dot(h.astype(jnp.bfloat16), w2[...],
                preferred_element_type=jnp.float32) + b2[...], 0.0)
    h = jnp.maximum(
        jnp.dot(h.astype(jnp.bfloat16), w3[...],
                preferred_element_type=jnp.float32) + b3[...], 0.0)
    out = jnp.dot(h.astype(jnp.bfloat16), w4[...],
                  preferred_element_type=jnp.float32) + b4[...]  # (bb, 128) lane-dense
    o_ref[...] = out.reshape(o_ref.shape)


# ---------------------------------------------------------------------------
# Wrapper
# ---------------------------------------------------------------------------
def deepdta_forward(xd, xp, kp):
    # Embedding gather in plain JAX (glue); result is channels-last (B, L, 128),
    # equivalent to PyTorch's embedding(...).transpose(1, 2) feeding NCL Conv1d.
    xd_e = jnp.take(kp["emb_d"], xd.astype(jnp.int32), axis=0)
    xp_e = jnp.take(kp["emb_p"], xp.astype(jnp.int32), axis=0)

    B = xd_e.shape[0]
    bb = 1 if B <= 8 else 8                 # >=2 grid steps at small B -> both v7x TCs
    grid = (pl.cdiv(B, bb),)

    weights = (kp["wd1"], kp["bd1"], kp["wd2"], kp["bd2"], kp["wd3"], kp["bd3"],
               kp["wp1"], kp["bp1"], kp["wp2"], kp["bp2"], kp["wp3"], kp["bp3"],
               kp["w1"], kp["b1"], kp["w2"], kp["b2"], kp["w3"], kp["b3"],
               kp["w4"], kp["b4"])

    def batch_spec(shape):
        # Block only over batch; last two dims stay full -> no (8,128) constraints.
        return pl.BlockSpec((bb,) + shape[1:],
                            lambda i: (i,) + (0,) * (len(shape) - 1))

    def const_spec(shape):
        # Constant index_map: fetched once, stays resident in VMEM across the grid.
        return pl.BlockSpec(shape, lambda i: (0,) * len(shape))

    out_padded = pl.pallas_call(
        deepdta_fused_kernel,
        out_shape=jax.ShapeDtypeStruct((B, 1, LANES), jnp.float32),
        grid=grid,
        in_specs=[batch_spec(xd_e.shape), batch_spec(xp_e.shape)]
                 + [const_spec(w.shape) for w in weights],
        out_specs=pl.BlockSpec((bb, 1, LANES), lambda i: (i, 0, 0)),
        compiler_params=pltpu.CompilerParams(
            dimension_semantics=("parallel",),
            vmem_limit_bytes=32 * 1024 * 1024,   # ~13 MB resident weights + headroom
        ),
    )(xd_e, xp_e, *weights)

    return out_padded[:, 0, :1]                 # prediction lives in lane 0 -> (B, 1)


# ---------------------------------------------------------------------------
# Parameters: logical shapes (match the PyTorch module) + kernel packing
# ---------------------------------------------------------------------------
def init_params(key, drug_vocab, prot_vocab):
    """Logical (unpadded) parameters.  Conv weights stored as (K, C_in, C_out)
    == torch_weight.permute(2, 1, 0); Linear weights as (in, out) == torch.T."""
    ks = jax.random.split(key, 22)
    n = lambda k, shape, s=0.05: (s * jax.random.normal(k, shape)).astype(jnp.float32)
    p = {}
    p["emb_d"] = n(ks[0], (drug_vocab + 1, 128), 0.1)
    p["emb_p"] = n(ks[1], (prot_vocab + 1, 128), 0.1)
    p["wd1"], p["bd1"] = n(ks[2], (4, 128, 32)), n(ks[3], (1, 32))
    p["wd2"], p["bd2"] = n(ks[4], (4, 32, 64)), n(ks[5], (1, 64))
    p["wd3"], p["bd3"] = n(ks[6], (4, 64, 96)), n(ks[7], (1, 96))
    p["wp1"], p["bp1"] = n(ks[8], (8, 128, 32)), n(ks[9], (1, 32))
    p["wp2"], p["bp2"] = n(ks[10], (8, 32, 64)), n(ks[11], (1, 64))
    p["wp3"], p["bp3"] = n(ks[12], (8, 64, 96)), n(ks[13], (1, 96))
    p["w1"], p["b1"] = n(ks[14], (192, 1024)), n(ks[15], (1, 1024))
    p["w2"], p["b2"] = n(ks[16], (1024, 1024)), n(ks[17], (1, 1024))
    p["w3"], p["b3"] = n(ks[18], (1024, 512)), n(ks[19], (1, 512))
    p["w4"], p["b4"] = n(ks[20], (512, 1), 1.0), n(ks[21], (1, 1))  # dense_4: std-normal init
    return p


def _pad_conv_w(w):
    """(K, C_in, C_out) -> (K*128, 128), zero-padded; row index = k*128 + c_in."""
    K, ci, co = w.shape
    wp = jnp.zeros((K, LANES, LANES), jnp.float32).at[:, :ci, :co].set(w)
    return wp.reshape(K * LANES, LANES)


def _pad_bias(b, width):
    return jnp.zeros((1, width), jnp.float32).at[:, : b.shape[1]].set(b)


def pack_params(p):
    """Build the lane-padded, bf16-where-useful parameter set the kernel consumes."""
    kp = {"emb_d": p["emb_d"], "emb_p": p["emb_p"]}
    for name in ("wd1", "wd2", "wd3", "wp1", "wp2", "wp3"):
        bname = "b" + name[1:]
        kp[name] = _pad_conv_w(p[name])          # f32; conv weights are small
        kp[bname] = _pad_bias(p[bname], LANES)
    # dense_1: (192, 1024) -> (256, 1024); drug feats occupy lanes [0,96) of the
    # first padded 128-block, protein feats lanes [0,96) of the second.
    n_d = p["wd3"].shape[2]
    n_p = p["wp3"].shape[2]
    w1 = jnp.zeros((2 * LANES, 1024), jnp.float32)
    w1 = w1.at[0:n_d, :].set(p["w1"][0:n_d])
    w1 = w1.at[LANES:LANES + n_p, :].set(p["w1"][n_d:n_d + n_p])
    kp["w1"], kp["b1"] = w1.astype(jnp.bfloat16), p["b1"]
    kp["w2"], kp["b2"] = p["w2"].astype(jnp.bfloat16), p["b2"]
    kp["w3"], kp["b3"] = p["w3"].astype(jnp.bfloat16), p["b3"]
    # dense_4: (512, 1) -> (512, 128) so the output store is lane-dense.
    w4 = jnp.zeros((512, LANES), jnp.float32).at[:, :1].set(p["w4"])
    kp["w4"] = w4.astype(jnp.bfloat16)
    kp["b4"] = _pad_bias(p["b4"], LANES)
    return kp


# ---------------------------------------------------------------------------
# Pure-JAX reference (exact PyTorch-module math, f32, unpadded) for validation
# ---------------------------------------------------------------------------
def _ref_forward(xd, xp, lp):
    def conv_relu(x, w, b):                      # x (B,L,Cin), w (K,Cin,Cout)
        K = w.shape[0]
        L_out = x.shape[1] - K + 1
        acc = sum(jnp.einsum("blc,cd->bld", x[:, k:k + L_out, :], w[k]) for k in range(K))
        return jax.nn.relu(acc + b)

    xd_e = jnp.take(lp["emb_d"], xd.astype(jnp.int32), axis=0)
    xp_e = jnp.take(lp["emb_p"], xp.astype(jnp.int32), axis=0)
    h = conv_relu(conv_relu(conv_relu(xd_e, lp["wd1"], lp["bd1"]),
                            lp["wd2"], lp["bd2"]), lp["wd3"], lp["bd3"]).max(axis=1)
    g = conv_relu(conv_relu(conv_relu(xp_e, lp["wp1"], lp["bp1"]),
                            lp["wp2"], lp["bp2"]), lp["wp3"], lp["bp3"]).max(axis=1)
    x = jnp.concatenate([h, g], axis=1)
    x = jax.nn.relu(x @ lp["w1"] + lp["b1"])     # dropout_1 / trailing relu: no-op (eval)
    x = jax.nn.relu(x @ lp["w2"] + lp["b2"])     # dropout_2: no-op (eval)
    x = jax.nn.relu(x @ lp["w3"] + lp["b3"])
    return x @ lp["w4"] + lp["b4"]


# ---------------------------------------------------------------------------
if __name__ == "__main__":
    key = jax.random.PRNGKey(0)
    k_par, k_xd, k_xp = jax.random.split(key, 3)

    B = 2
    DRUG_VOCAB, PROT_VOCAB = 64, 25
    LD, LP = 32, 64          # drug/protein sequence lengths (valid conv needs LD>9, LP>21)

    logical = init_params(k_par, DRUG_VOCAB, PROT_VOCAB)
    kp = pack_params(logical)

    xd = jax.random.randint(k_xd, (B, LD), 0, DRUG_VOCAB + 1, dtype=jnp.int32)
    xp = jax.random.randint(k_xp, (B, LP), 0, PROT_VOCAB + 1, dtype=jnp.int32)

    pred = jax.jit(deepdta_forward)(xd, xp, kp)
    pred = jax.block_until_ready(pred)

    assert pred.shape == (B, 1), pred.shape
    assert bool(jnp.all(jnp.isfinite(pred)))

    # Loose tolerance: kernel uses bf16 MXU inputs for the MLP weights.
    ref = _ref_forward(xd, xp, logical)
    assert bool(jnp.allclose(pred, ref, rtol=5e-2, atol=5e-2)), (pred, ref)

    print("KERNEL_OK")
</pallas_src>

<mosaic_0001>
module attributes {stable_mosaic.version = 11 : i64} {
  func.func @deepdta_fused_kernel(%arg0: i32, %arg1: memref<1x32x128xf32, #tpu.memory_space<vmem>>, %arg2: memref<1x64x128xf32, #tpu.memory_space<vmem>>, %arg3: memref<512x128xf32, #tpu.memory_space<vmem>>, %arg4: memref<1x128xf32, #tpu.memory_space<vmem>>, %arg5: memref<512x128xf32, #tpu.memory_space<vmem>>, %arg6: memref<1x128xf32, #tpu.memory_space<vmem>>, %arg7: memref<512x128xf32, #tpu.memory_space<vmem>>, %arg8: memref<1x128xf32, #tpu.memory_space<vmem>>, %arg9: memref<1024x128xf32, #tpu.memory_space<vmem>>, %arg10: memref<1x128xf32, #tpu.memory_space<vmem>>, %arg11: memref<1024x128xf32, #tpu.memory_space<vmem>>, %arg12: memref<1x128xf32, #tpu.memory_space<vmem>>, %arg13: memref<1024x128xf32, #tpu.memory_space<vmem>>, %arg14: memref<1x128xf32, #tpu.memory_space<vmem>>, %arg15: memref<256x1024xbf16, #tpu.memory_space<vmem>>, %arg16: memref<1x1024xf32, #tpu.memory_space<vmem>>, %arg17: memref<1024x1024xbf16, #tpu.memory_space<vmem>>, %arg18: memref<1x1024xf32, #tpu.memory_space<vmem>>, %arg19: memref<1024x512xbf16, #tpu.memory_space<vmem>>, %arg20: memref<1x512xf32, #tpu.memory_space<vmem>>, %arg21: memref<512x128xbf16, #tpu.memory_space<vmem>>, %arg22: memref<1x128xf32, #tpu.memory_space<vmem>>, %arg23: memref<1x1x128xf32, #tpu.memory_space<vmem>>) attributes {dimension_semantics = [#tpu.dimension_semantics<parallel>], iteration_bounds = array<i64: 2>, scalar_prefetch = 0 : i64, scratch_operands = 0 : i64, tpu.core_type = #tpu.core_type<tc>, window_params = [{transform_indices = @transform_0, window_bounds = array<i64: 1, 32, 128>}, {transform_indices = @transform_1, window_bounds = array<i64: 1, 64, 128>}, {pipeline_mode = #tpu.pipeline_mode<synchronous>, transform_indices = @transform_2, window_bounds = array<i64: 512, 128>}, {pipeline_mode = #tpu.pipeline_mode<synchronous>, transform_indices = @transform_3, window_bounds = array<i64: 1, 128>}, {pipeline_mode = #tpu.pipeline_mode<synchronous>, transform_indices = @transform_4, window_bounds = array<i64: 512, 128>}, {pipeline_mode = #tpu.pipeline_mode<synchronous>, transform_indices = @transform_5, window_bounds = array<i64: 1, 128>}, {pipeline_mode = #tpu.pipeline_mode<synchronous>, transform_indices = @transform_6, window_bounds = array<i64: 512, 128>}, {pipeline_mode = #tpu.pipeline_mode<synchronous>, transform_indices = @transform_7, window_bounds = array<i64: 1, 128>}, {pipeline_mode = #tpu.pipeline_mode<synchronous>, transform_indices = @transform_8, window_bounds = array<i64: 1024, 128>}, {pipeline_mode = #tpu.pipeline_mode<synchronous>, transform_indices = @transform_9, window_bounds = array<i64: 1, 128>}, {pipeline_mode = #tpu.pipeline_mode<synchronous>, transform_indices = @transform_10, window_bounds = array<i64: 1024, 128>}, {pipeline_mode = #tpu.pipeline_mode<synchronous>, transform_indices = @transform_11, window_bounds = array<i64: 1, 128>}, {pipeline_mode = #tpu.pipeline_mode<synchronous>, transform_indices = @transform_12, window_bounds = array<i64: 1024, 128>}, {pipeline_mode = #tpu.pipeline_mode<synchronous>, transform_indices = @transform_13, window_bounds = array<i64: 1, 128>}, {pipeline_mode = #tpu.pipeline_mode<synchronous>, transform_indices = @transform_14, window_bounds = array<i64: 256, 1024>}, {pipeline_mode = #tpu.pipeline_mode<synchronous>, transform_indices = @transform_15, window_bounds = array<i64: 1, 1024>}, {pipeline_mode = #tpu.pipeline_mode<synchronous>, transform_indices = @transform_16, window_bounds = array<i64: 1024, 1024>}, {pipeline_mode = #tpu.pipeline_mode<synchronous>, transform_indices = @transform_17, window_bounds = array<i64: 1, 1024>}, {pipeline_mode = #tpu.pipeline_mode<synchronous>, transform_indices = @transform_18, window_bounds = array<i64: 1024, 512>}, {pipeline_mode = #tpu.pipeline_mode<synchronous>, transform_indices = @transform_19, window_bounds = array<i64: 1, 512>}, {pipeline_mode = #tpu.pipeline_mode<synchronous>, transform_indices = @transform_20, window_bounds = array<i64: 512, 128>}, {pipeline_mode = #tpu.pipeline_mode<synchronous>, transform_indices = @transform_21, window_bounds = array<i64: 1, 128>}, {transform_indices = @transform_22, window_bounds = array<i64: 1, 1, 128>}]} {
    %c0 = arith.constant 0 : index
    %c0_0 = arith.constant 0 : index
    %c0_1 = arith.constant 0 : index
    %0 = vector.load %arg1[%c0, %c0_0, %c0_1] : memref<1x32x128xf32, #tpu.memory_space<vmem>>, vector<1x32x128xf32>
    %1 = vector.extract_strided_slice %0 {offsets = [0, 0, 0], sizes = [1, 29, 128], strides = [1, 1, 1]} : vector<1x32x128xf32> to vector<1x29x128xf32>
    %2 = vector.extract_strided_slice %0 {offsets = [0, 1, 0], sizes = [1, 29, 128], strides = [1, 1, 1]} : vector<1x32x128xf32> to vector<1x29x128xf32>
    %3 = vector.extract_strided_slice %0 {offsets = [0, 2, 0], sizes = [1, 29, 128], strides = [1, 1, 1]} : vector<1x32x128xf32> to vector<1x29x128xf32>
    %4 = vector.extract_strided_slice %0 {offsets = [0, 3, 0], sizes = [1, 29, 128], strides = [1, 1, 1]} : vector<1x32x128xf32> to vector<1x29x128xf32>
    %5 = tpu.concatenate %1, %2, %3, %4 in 2 : vector<1x29x128xf32>, vector<1x29x128xf32>, vector<1x29x128xf32>, vector<1x29x128xf32> -> vector<1x29x512xf32>
    %6 = vector.shape_cast %5 : vector<1x29x512xf32> to vector<29x512xf32>
    %c0_2 = arith.constant 0 : index
    %c0_3 = arith.constant 0 : index
    %7 = vector.load %arg3[%c0_2, %c0_3] : memref<512x128xf32, #tpu.memory_space<vmem>>, vector<512x128xf32>
    %cst = arith.constant dense<0.000000e+00> : vector<29x128xf32>
    %8 = tpu.matmul %6, %7, %cst {dimension_numbers = #tpu.dot_dimension_numbers<[1], [0], [0], [1], [0, 0, 1, 1], [], []>} : vector<29x512xf32>, vector<512x128xf32>, vector<29x128xf32> -> vector<29x128xf32>
    %c0_4 = arith.constant 0 : index
    %c0_5 = arith.constant 0 : index
    %9 = vector.load %arg4[%c0_4, %c0_5] : memref<1x128xf32, #tpu.memory_space<vmem>>, vector<1x128xf32>
    %10 = vector.broadcast %9 : vector<1x128xf32> to vector<29x128xf32>
    %11 = arith.addf %8, %10 : vector<29x128xf32>
    %cst_6 = arith.constant 0.000000e+00 : f32
    %12 = vector.broadcast %cst_6 : f32 to vector<29x128xf32>
    %13 = arith.maximumf %11, %12 : vector<29x128xf32>
    %14 = vector.shape_cast %13 : vector<29x128xf32> to vector<1x29x128xf32>
    %15 = vector.extract_strided_slice %14 {offsets = [0, 0, 0], sizes = [1, 26, 128], strides = [1, 1, 1]} : vector<1x29x128xf32> to vector<1x26x128xf32>
    %16 = vector.extract_strided_slice %14 {offsets = [0, 1, 0], sizes = [1, 26, 128], strides = [1, 1, 1]} : vector<1x29x128xf32> to vector<1x26x128xf32>
    %17 = vector.extract_strided_slice %14 {offsets = [0, 2, 0], sizes = [1, 26, 128], strides = [1, 1, 1]} : vector<1x29x128xf32> to vector<1x26x128xf32>
    %18 = vector.extract_strided_slice %14 {offsets = [0, 3, 0], sizes = [1, 26, 128], strides = [1, 1, 1]} : vector<1x29x128xf32> to vector<1x26x128xf32>
    %19 = tpu.concatenate %15, %16, %17, %18 in 2 : vector<1x26x128xf32>, vector<1x26x128xf32>, vector<1x26x128xf32>, vector<1x26x128xf32> -> vector<1x26x512xf32>
    %20 = vector.shape_cast %19 : vector<1x26x512xf32> to vector<26x512xf32>
    %c0_7 = arith.constant 0 : index
    %c0_8 = arith.constant 0 : index
    %21 = vector.load %arg5[%c0_7, %c0_8] : memref<512x128xf32, #tpu.memory_space<vmem>>, vector<512x128xf32>
    %cst_9 = arith.constant dense<0.000000e+00> : vector<26x128xf32>
    %22 = tpu.matmul %20, %21, %cst_9 {dimension_numbers = #tpu.dot_dimension_numbers<[1], [0], [0], [1], [0, 0, 1, 1], [], []>} : vector<26x512xf32>, vector<512x128xf32>, vector<26x128xf32> -> vector<26x128xf32>
    %c0_10 = arith.constant 0 : index
    %c0_11 = arith.constant 0 : index
    %23 = vector.load %arg6[%c0_10, %c0_11] : memref<1x128xf32, #tpu.memory_space<vmem>>, vector<1x128xf32>
    %24 = vector.broadcast %23 : vector<1x128xf32> to vector<26x128xf32>
    %25 = arith.addf %22, %24 : vector<26x128xf32>
    %cst_12 = arith.constant 0.000000e+00 : f32
    %26 = vector.broadcast %cst_12 : f32 to vector<26x128xf32>
    %27 = arith.maximumf %25, %26 : vector<26x128xf32>
    %28 = vector.shape_cast %27 : vector<26x128xf32> to vector<1x26x128xf32>
    %29 = vector.extract_strided_slice %28 {offsets = [0, 0, 0], sizes = [1, 23, 128], strides = [1, 1, 1]} : vector<1x26x128xf32> to vector<1x23x128xf32>
    %30 = vector.extract_strided_slice %28 {offsets = [0, 1, 0], sizes = [1, 23, 128], strides = [1, 1, 1]} : vector<1x26x128xf32> to vector<1x23x128xf32>
    %31 = vector.extract_strided_slice %28 {offsets = [0, 2, 0], sizes = [1, 23, 128], strides = [1, 1, 1]} : vector<1x26x128xf32> to vector<1x23x128xf32>
    %32 = vector.extract_strided_slice %28 {offsets = [0, 3, 0], sizes = [1, 23, 128], strides = [1, 1, 1]} : vector<1x26x128xf32> to vector<1x23x128xf32>
    %33 = tpu.concatenate %29, %30, %31, %32 in 2 : vector<1x23x128xf32>, vector<1x23x128xf32>, vector<1x23x128xf32>, vector<1x23x128xf32> -> vector<1x23x512xf32>
    %34 = vector.shape_cast %33 : vector<1x23x512xf32> to vector<23x512xf32>
    %c0_13 = arith.constant 0 : index
    %c0_14 = arith.constant 0 : index
    %35 = vector.load %arg7[%c0_13, %c0_14] : memref<512x128xf32, #tpu.memory_space<vmem>>, vector<512x128xf32>
    %cst_15 = arith.constant dense<0.000000e+00> : vector<23x128xf32>
    %36 = tpu.matmul %34, %35, %cst_15 {dimension_numbers = #tpu.dot_dimension_numbers<[1], [0], [0], [1], [0, 0, 1, 1], [], []>} : vector<23x512xf32>, vector<512x128xf32>, vector<23x128xf32> -> vector<23x128xf32>
    %c0_16 = arith.constant 0 : index
    %c0_17 = arith.constant 0 : index
    %37 = vector.load %arg8[%c0_16, %c0_17] : memref<1x128xf32, #tpu.memory_space<vmem>>, vector<1x128xf32>
    %38 = vector.broadcast %37 : vector<1x128xf32> to vector<23x128xf32>
    %39 = arith.addf %36, %38 : vector<23x128xf32>
    %cst_18 = arith.constant 0.000000e+00 : f32
    %40 = vector.broadcast %cst_18 : f32 to vector<23x128xf32>
    %41 = arith.maximumf %39, %40 : vector<23x128xf32>
    %42 = vector.shape_cast %41 : vector<23x128xf32> to vector<1x23x128xf32>
    %cst_19 = arith.constant dense<0xFF800000> : vector<1x128xf32>
    %43 = vector.multi_reduction <maximumf>, %42, %cst_19 [1] : vector<1x23x128xf32> to vector<1x128xf32>
    %c0_20 = arith.constant 0 : index
    %c0_21 = arith.constant 0 : index
    %c0_22 = arith.constant 0 : index
    %44 = vector.load %arg2[%c0_20, %c0_21, %c0_22] : memref<1x64x128xf32, #tpu.memory_space<vmem>>, vector<1x64x128xf32>
    %45 = vector.extract_strided_slice %44 {offsets = [0, 0, 0], sizes = [1, 57, 128], strides = [1, 1, 1]} : vector<1x64x128xf32> to vector<1x57x128xf32>
    %46 = vector.extract_strided_slice %44 {offsets = [0, 1, 0], sizes = [1, 57, 128], strides = [1, 1, 1]} : vector<1x64x128xf32> to vector<1x57x128xf32>
    %47 = vector.extract_strided_slice %44 {offsets = [0, 2, 0], sizes = [1, 57, 128], strides = [1, 1, 1]} : vector<1x64x128xf32> to vector<1x57x128xf32>
    %48 = vector.extract_strided_slice %44 {offsets = [0, 3, 0], sizes = [1, 57, 128], strides = [1, 1, 1]} : vector<1x64x128xf32> to vector<1x57x128xf32>
    %49 = vector.extract_strided_slice %44 {offsets = [0, 4, 0], sizes = [1, 57, 128], strides = [1, 1, 1]} : vector<1x64x128xf32> to vector<1x57x128xf32>
    %50 = vector.extract_strided_slice %44 {offsets = [0, 5, 0], sizes = [1, 57, 128], strides = [1, 1, 1]} : vector<1x64x128xf32> to vector<1x57x128xf32>
    %51 = vector.extract_strided_slice %44 {offsets = [0, 6, 0], sizes = [1, 57, 128], strides = [1, 1, 1]} : vector<1x64x128xf32> to vector<1x57x128xf32>
    %52 = vector.extract_strided_slice %44 {offsets = [0, 7, 0], sizes = [1, 57, 128], strides = [1, 1, 1]} : vector<1x64x128xf32> to vector<1x57x128xf32>
    %53 = tpu.concatenate %45, %46, %47, %48, %49, %50, %51, %52 in 2 : vector<1x57x128xf32>, vector<1x57x128xf32>, vector<1x57x128xf32>, vector<1x57x128xf32>, vector<1x57x128xf32>, vector<1x57x128xf32>, vector<1x57x128xf32>, vector<1x57x128xf32> -> vector<1x57x1024xf32>
    %54 = vector.shape_cast %53 : vector<1x57x1024xf32> to vector<57x1024xf32>
    %c0_23 = arith.constant 0 : index
    %c0_24 = arith.constant 0 : index
    %55 = vector.load %arg9[%c0_23, %c0_24] : memref<1024x128xf32, #tpu.memory_space<vmem>>, vector<1024x128xf32>
    %cst_25 = arith.constant dense<0.000000e+00> : vector<57x128xf32>
    %56 = tpu.matmul %54, %55, %cst_25 {dimension_numbers = #tpu.dot_dimension_numbers<[1], [0], [0], [1], [0, 0, 1, 1], [], []>} : vector<57x1024xf32>, vector<1024x128xf32>, vector<57x128xf32> -> vector<57x128xf32>
    %c0_26 = arith.constant 0 : index
    %c0_27 = arith.constant 0 : index
    %57 = vector.load %arg10[%c0_26, %c0_27] : memref<1x128xf32, #tpu.memory_space<vmem>>, vector<1x128xf32>
    %58 = vector.broadcast %57 : vector<1x128xf32> to vector<57x128xf32>
    %59 = arith.addf %56, %58 : vector<57x128xf32>
    %cst_28 = arith.constant 0.000000e+00 : f32
    %60 = vector.broadcast %cst_28 : f32 to vector<57x128xf32>
    %61 = arith.maximumf %59, %60 : vector<57x128xf32>
    %62 = vector.shape_cast %61 : vector<57x128xf32> to vector<1x57x128xf32>
    %63 = vector.extract_strided_slice %62 {offsets = [0, 0, 0], sizes = [1, 50, 128], strides = [1, 1, 1]} : vector<1x57x128xf32> to vector<1x50x128xf32>
    %64 = vector.extract_strided_slice %62 {offsets = [0, 1, 0], sizes = [1, 50, 128], strides = [1, 1, 1]} : vector<1x57x128xf32> to vector<1x50x128xf32>
    %65 = vector.extract_strided_slice %62 {offsets = [0, 2, 0], sizes = [1, 50, 128], strides = [1, 1, 1]} : vector<1x57x128xf32> to vector<1x50x128xf32>
    %66 = vector.extract_strided_slice %62 {offsets = [0, 3, 0], sizes = [1, 50, 128], strides = [1, 1, 1]} : vector<1x57x128xf32> to vector<1x50x128xf32>
    %67 = vector.extract_strided_slice %62 {offsets = [0, 4, 0], sizes = [1, 50, 128], strides = [1, 1, 1]} : vector<1x57x128xf32> to vector<1x50x128xf32>
    %68 = vector.extract_strided_slice %62 {offsets = [0, 5, 0], sizes = [1, 50, 128], strides = [1, 1, 1]} : vector<1x57x128xf32> to vector<1x50x128xf32>
    %69 = vector.extract_strided_slice %62 {offsets = [0, 6, 0], sizes = [1, 50, 128], strides = [1, 1, 1]} : vector<1x57x128xf32> to vector<1x50x128xf32>
    %70 = vector.extract_strided_slice %62 {offsets = [0, 7, 0], sizes = [1, 50, 128], strides = [1, 1, 1]} : vector<1x57x128xf32> to vector<1x50x128xf32>
    %71 = tpu.concatenate %63, %64, %65, %66, %67, %68, %69, %70 in 2 : vector<1x50x128xf32>, vector<1x50x128xf32>, vector<1x50x128xf32>, vector<1x50x128xf32>, vector<1x50x128xf32>, vector<1x50x128xf32>, vector<1x50x128xf32>, vector<1x50x128xf32> -> vector<1x50x1024xf32>
    %72 = vector.shape_cast %71 : vector<1x50x1024xf32> to vector<50x1024xf32>
    %c0_29 = arith.constant 0 : index
    %c0_30 = arith.constant 0 : index
    %73 = vector.load %arg11[%c0_29, %c0_30] : memref<1024x128xf32, #tpu.memory_space<vmem>>, vector<1024x128xf32>
    %cst_31 = arith.constant dense<0.000000e+00> : vector<50x128xf32>
    %74 = tpu.matmul %72, %73, %cst_31 {dimension_numbers = #tpu.dot_dimension_numbers<[1], [0], [0], [1], [0, 0, 1, 1], [], []>} : vector<50x1024xf32>, vector<1024x128xf32>, vector<50x128xf32> -> vector<50x128xf32>
    %c0_32 = arith.constant 0 : index
    %c0_33 = arith.constant 0 : index
    %75 = vector.load %arg12[%c0_32, %c0_33] : memref<1x128xf32, #tpu.memory_space<vmem>>, vector<1x128xf32>
    %76 = vector.broadcast %75 : vector<1x128xf32> to vector<50x128xf32>
    %77 = arith.addf %74, %76 : vector<50x128xf32>
    %cst_34 = arith.constant 0.000000e+00 : f32
    %78 = vector.broadcast %cst_34 : f32 to vector<50x128xf32>
    %79 = arith.maximumf %77, %78 : vector<50x128xf32>
    %80 = vector.shape_cast %79 : vector<50x128xf32> to vector<1x50x128xf32>
    %81 = vector.extract_strided_slice %80 {offsets = [0, 0, 0], sizes = [1, 43, 128], strides = [1, 1, 1]} : vector<1x50x128xf32> to vector<1x43x128xf32>
    %82 = vector.extract_strided_slice %80 {offsets = [0, 1, 0], sizes = [1, 43, 128], strides = [1, 1, 1]} : vector<1x50x128xf32> to vector<1x43x128xf32>
    %83 = vector.extract_strided_slice %80 {offsets = [0, 2, 0], sizes = [1, 43, 128], strides = [1, 1, 1]} : vector<1x50x128xf32> to vector<1x43x128xf32>
    %84 = vector.extract_strided_slice %80 {offsets = [0, 3, 0], sizes = [1, 43, 128], strides = [1, 1, 1]} : vector<1x50x128xf32> to vector<1x43x128xf32>
    %85 = vector.extract_strided_slice %80 {offsets = [0, 4, 0], sizes = [1, 43, 128], strides = [1, 1, 1]} : vector<1x50x128xf32> to vector<1x43x128xf32>
    %86 = vector.extract_strided_slice %80 {offsets = [0, 5, 0], sizes = [1, 43, 128], strides = [1, 1, 1]} : vector<1x50x128xf32> to vector<1x43x128xf32>
    %87 = vector.extract_strided_slice %80 {offsets = [0, 6, 0], sizes = [1, 43, 128], strides = [1, 1, 1]} : vector<1x50x128xf32> to vector<1x43x128xf32>
    %88 = vector.extract_strided_slice %80 {offsets = [0, 7, 0], sizes = [1, 43, 128], strides = [1, 1, 1]} : vector<1x50x128xf32> to vector<1x43x128xf32>
    %89 = tpu.concatenate %81, %82, %83, %84, %85, %86, %87, %88 in 2 : vector<1x43x128xf32>, vector<1x43x128xf32>, vector<1x43x128xf32>, vector<1x43x128xf32>, vector<1x43x128xf32>, vector<1x43x128xf32>, vector<1x43x128xf32>, vector<1x43x128xf32> -> vector<1x43x1024xf32>
    %90 = vector.shape_cast %89 : vector<1x43x1024xf32> to vector<43x1024xf32>
    %c0_35 = arith.constant 0 : index
    %c0_36 = arith.constant 0 : index
    %91 = vector.load %arg13[%c0_35, %c0_36] : memref<1024x128xf32, #tpu.memory_space<vmem>>, vector<1024x128xf32>
    %cst_37 = arith.constant dense<0.000000e+00> : vector<43x128xf32>
    %92 = tpu.matmul %90, %91, %cst_37 {dimension_numbers = #tpu.dot_dimension_numbers<[1], [0], [0], [1], [0, 0, 1, 1], [], []>} : vector<43x1024xf32>, vector<1024x128xf32>, vector<43x128xf32> -> vector<43x128xf32>
    %c0_38 = arith.constant 0 : index
    %c0_39 = arith.constant 0 : index
    %93 = vector.load %arg14[%c0_38, %c0_39] : memref<1x128xf32, #tpu.memory_space<vmem>>, vector<1x128xf32>
    %94 = vector.broadcast %93 : vector<1x128xf32> to vector<43x128xf32>
    %95 = arith.addf %92, %94 : vector<43x128xf32>
    %cst_40 = arith.constant 0.000000e+00 : f32
    %96 = vector.broadcast %cst_40 : f32 to vector<43x128xf32>
    %97 = arith.maximumf %95, %96 : vector<43x128xf32>
    %98 = vector.shape_cast %97 : vector<43x128xf32> to vector<1x43x128xf32>
    %cst_41 = arith.constant dense<0xFF800000> : vector<1x128xf32>
    %99 = vector.multi_reduction <maximumf>, %98, %cst_41 [1] : vector<1x43x128xf32> to vector<1x128xf32>
    %100 = tpu.concatenate %43, %99 in 1 : vector<1x128xf32>, vector<1x128xf32> -> vector<1x256xf32>
    %101 = arith.truncf %100 : vector<1x256xf32> to vector<1x256xbf16>
    %c0_42 = arith.constant 0 : index
    %c0_43 = arith.constant 0 : index
    %102 = vector.load %arg15[%c0_42, %c0_43] : memref<256x1024xbf16, #tpu.memory_space<vmem>>, vector<256x1024xbf16>
    %cst_44 = arith.constant dense<0.000000e+00> : vector<1x1024xf32>
    %103 = tpu.matmul %101, %102, %cst_44 {dimension_numbers = #tpu.dot_dimension_numbers<[1], [0], [0], [1], [0, 0, 1, 1], [], []>} : vector<1x256xbf16>, vector<256x1024xbf16>, vector<1x1024xf32> -> vector<1x1024xf32>
    %c0_45 = arith.constant 0 : index
    %c0_46 = arith.constant 0 : index
    %104 = vector.load %arg16[%c0_45, %c0_46] : memref<1x1024xf32, #tpu.memory_space<vmem>>, vector<1x1024xf32>
    %105 = arith.addf %103, %104 : vector<1x1024xf32>
    %cst_47 = arith.constant 0.000000e+00 : f32
    %106 = vector.broadcast %cst_47 : f32 to vector<1x1024xf32>
    %107 = arith.maximumf %105, %106 : vector<1x1024xf32>
    %108 = arith.truncf %107 : vector<1x1024xf32> to vector<1x1024xbf16>
    %c0_48 = arith.constant 0 : index
    %c0_49 = arith.constant 0 : index
    %109 = vector.load %arg17[%c0_48, %c0_49] : memref<1024x1024xbf16, #tpu.memory_space<vmem>>, vector<1024x1024xbf16>
    %cst_50 = arith.constant dense<0.000000e+00> : vector<1x1024xf32>
    %110 = tpu.matmul %108, %109, %cst_50 {dimension_numbers = #tpu.dot_dimension_numbers<[1], [0], [0], [1], [0, 0, 1, 1], [], []>} : vector<1x1024xbf16>, vector<1024x1024xbf16>, vector<1x1024xf32> -> vector<1x1024xf32>
    %c0_51 = arith.constant 0 : index
    %c0_52 = arith.constant 0 : index
    %111 = vector.load %arg18[%c0_51, %c0_52] : memref<1x1024xf32, #tpu.memory_space<vmem>>, vector<1x1024xf32>
    %112 = arith.addf %110, %111 : vector<1x1024xf32>
    %cst_53 = arith.constant 0.000000e+00 : f32
    %113 = vector.broadcast %cst_53 : f32 to vector<1x1024xf32>
    %114 = arith.maximumf %112, %113 : vector<1x1024xf32>
    %115 = arith.truncf %114 : vector<1x1024xf32> to vector<1x1024xbf16>
    %c0_54 = arith.constant 0 : index
    %c0_55 = arith.constant 0 : index
    %116 = vector.load %arg19[%c0_54, %c0_55] : memref<1024x512xbf16, #tpu.memory_space<vmem>>, vector<1024x512xbf16>
    %cst_56 = arith.constant dense<0.000000e+00> : vector<1x512xf32>
    %117 = tpu.matmul %115, %116, %cst_56 {dimension_numbers = #tpu.dot_dimension_numbers<[1], [0], [0], [1], [0, 0, 1, 1], [], []>} : vector<1x1024xbf16>, vector<1024x512xbf16>, vector<1x512xf32> -> vector<1x512xf32>
    %c0_57 = arith.constant 0 : index
    %c0_58 = arith.constant 0 : index
    %118 = vector.load %arg20[%c0_57, %c0_58] : memref<1x512xf32, #tpu.memory_space<vmem>>, vector<1x512xf32>
    %119 = arith.addf %117, %118 : vector<1x512xf32>
    %cst_59 = arith.constant 0.000000e+00 : f32
    %120 = vector.broadcast %cst_59 : f32 to vector<1x512xf32>
    %121 = arith.maximumf %119, %120 : vector<1x512xf32>
    %122 = arith.truncf %121 : vector<1x512xf32> to vector<1x512xbf16>
    %c0_60 = arith.constant 0 : index
    %c0_61 = arith.constant 0 : index
    %123 = vector.load %arg21[%c0_60, %c0_61] : memref<512x128xbf16, #tpu.memory_space<vmem>>, vector<512x128xbf16>
    %cst_62 = arith.constant dense<0.000000e+00> : vector<1x128xf32>
    %124 = tpu.matmul %122, %123, %cst_62 {dimension_numbers = #tpu.dot_dimension_numbers<[1], [0], [0], [1], [0, 0, 1, 1], [], []>} : vector<1x512xbf16>, vector<512x128xbf16>, vector<1x128xf32> -> vector<1x128xf32>
    %c0_63 = arith.constant 0 : index
    %c0_64 = arith.constant 0 : index
    %125 = vector.load %arg22[%c0_63, %c0_64] : memref<1x128xf32, #tpu.memory_space<vmem>>, vector<1x128xf32>
    %126 = arith.addf %124, %125 : vector<1x128xf32>
    %127 = vector.shape_cast %126 : vector<1x128xf32> to vector<1x1x128xf32>
    %c0_65 = arith.constant 0 : index
    %c0_66 = arith.constant 0 : index
    %c0_67 = arith.constant 0 : index
    %128 = vector.load %arg23[%c0_65, %c0_66, %c0_67] : memref<1x1x128xf32, #tpu.memory_space<vmem>>, vector<1x1x128xf32>
    tpu.vector_store %arg23[%c0_65, %c0_66, %c0_67], %127 {strides = array<i32>} : memref<1x1x128xf32, #tpu.memory_space<vmem>>, vector<1x1x128xf32>,
    return
  }
  func.func @transform_0(%arg0: i32) -> (i32, i32, i32) {
    %c0_i32 = arith.constant 0 : i32
    %c0_i32_0 = arith.constant 0 : i32
    %c0_i32_1 = arith.constant 0 : i32
    return %arg0, %c0_i32, %c0_i32_0 : i32, i32, i32
  }
  func.func @transform_1(%arg0: i32) -> (i32, i32, i32) {
    %c0_i32 = arith.constant 0 : i32
    %c0_i32_0 = arith.constant 0 : i32
    %c0_i32_1 = arith.constant 0 : i32
    return %arg0, %c0_i32, %c0_i32_0 : i32, i32, i32
  }
  func.func @transform_2(%arg0: i32) -> (i32, i32) {
    %c0_i32 = arith.constant 0 : i32
    %c0_i32_0 = arith.constant 0 : i32
    %c0_i32_1 = arith.constant 0 : i32
    return %c0_i32, %c0_i32_0 : i32, i32
  }
  func.func @transform_3(%arg0: i32) -> (i32, i32) {
    %c0_i32 = arith.constant 0 : i32
    %c0_i32_0 = arith.constant 0 : i32
    %c0_i32_1 = arith.constant 0 : i32
    return %c0_i32, %c0_i32_0 : i32, i32
  }
  func.func @transform_4(%arg0: i32) -> (i32, i32) {
    %c0_i32 = arith.constant 0 : i32
    %c0_i32_0 = arith.constant 0 : i32
    %c0_i32_1 = arith.constant 0 : i32
    return %c0_i32, %c0_i32_0 : i32, i32
  }
  func.func @transform_5(%arg0: i32) -> (i32, i32) {
    %c0_i32 = arith.constant 0 : i32
    %c0_i32_0 = arith.constant 0 : i32
    %c0_i32_1 = arith.constant 0 : i32
    return %c0_i32, %c0_i32_0 : i32, i32
  }
  func.func @transform_6(%arg0: i32) -> (i32, i32) {
    %c0_i32 = arith.constant 0 : i32
    %c0_i32_0 = arith.constant 0 : i32
    %c0_i32_1 = arith.constant 0 : i32
    return %c0_i32, %c0_i32_0 : i32, i32
  }
  func.func @transform_7(%arg0: i32) -> (i32, i32) {
    %c0_i32 = arith.constant 0 : i32
    %c0_i32_0 = arith.constant 0 : i32
    %c0_i32_1 = arith.constant 0 : i32
    return %c0_i32, %c0_i32_0 : i32, i32
  }
  func.func @transform_8(%arg0: i32) -> (i32, i32) {
    %c0_i32 = arith.constant 0 : i32
    %c0_i32_0 = arith.constant 0 : i32
    %c0_i32_1 = arith.constant 0 : i32
    return %c0_i32, %c0_i32_0 : i32, i32
  }
  func.func @transform_9(%arg0: i32) -> (i32, i32) {
    %c0_i32 = arith.constant 0 : i32
    %c0_i32_0 = arith.constant 0 : i32
    %c0_i32_1 = arith.constant 0 : i32
    return %c0_i32, %c0_i32_0 : i32, i32
  }
  func.func @transform_10(%arg0: i32) -> (i32, i32) {
    %c0_i32 = arith.constant 0 : i32
    %c0_i32_0 = arith.constant 0 : i32
    %c0_i32_1 = arith.constant 0 : i32
    return %c0_i32, %c0_i32_0 : i32, i32
  }
  func.func @transform_11(%arg0: i32) -> (i32, i32) {
    %c0_i32 = arith.constant 0 : i32
    %c0_i32_0 = arith.constant 0 : i32
    %c0_i32_1 = arith.constant 0 : i32
    return %c0_i32, %c0_i32_0 : i32, i32
  }
  func.func @transform_12(%arg0: i32) -> (i32, i32) {
    %c0_i32 = arith.constant 0 : i32
    %c0_i32_0 = arith.constant 0 : i32
    %c0_i32_1 = arith.constant 0 : i32
    return %c0_i32, %c0_i32_0 : i32, i32
  }
  func.func @transform_13(%arg0: i32) -> (i32, i32) {
    %c0_i32 = arith.constant 0 : i32
    %c0_i32_0 = arith.constant 0 : i32
    %c0_i32_1 = arith.constant 0 : i32
    return %c0_i32, %c0_i32_0 : i32, i32
  }
  func.func @transform_14(%arg0: i32) -> (i32, i32) {
    %c0_i32 = arith.constant 0 : i32
    %c0_i32_0 = arith.constant 0 : i32
    %c0_i32_1 = arith.constant 0 : i32
    return %c0_i32, %c0_i32_0 : i32, i32
  }
  func.func @transform_15(%arg0: i32) -> (i32, i32) {
    %c0_i32 = arith.constant 0 : i32
    %c0_i32_0 = arith.constant 0 : i32
    %c0_i32_1 = arith.constant 0 : i32
    return %c0_i32, %c0_i32_0 : i32, i32
  }
  func.func @transform_16(%arg0: i32) -> (i32, i32) {
    %c0_i32 = arith.constant 0 : i32
    %c0_i32_0 = arith.constant 0 : i32
    %c0_i32_1 = arith.constant 0 : i32
    return %c0_i32, %c0_i32_0 : i32, i32
  }
  func.func @transform_17(%arg0: i32) -> (i32, i32) {
    %c0_i32 = arith.constant 0 : i32
    %c0_i32_0 = arith.constant 0 : i32
    %c0_i32_1 = arith.constant 0 : i32
    return %c0_i32, %c0_i32_0 : i32, i32
  }
  func.func @transform_18(%arg0: i32) -> (i32, i32) {
    %c0_i32 = arith.constant 0 : i32
    %c0_i32_0 = arith.constant 0 : i32
    %c0_i32_1 = arith.constant 0 : i32
    return %c0_i32, %c0_i32_0 : i32, i32
  }
  func.func @transform_19(%arg0: i32) -> (i32, i32) {
    %c0_i32 = arith.constant 0 : i32
    %c0_i32_0 = arith.constant 0 : i32
    %c0_i32_1 = arith.constant 0 : i32
    return %c0_i32, %c0_i32_0 : i32, i32
  }
  func.func @transform_20(%arg0: i32) -> (i32, i32) {
    %c0_i32 = arith.constant 0 : i32
    %c0_i32_0 = arith.constant 0 : i32
    %c0_i32_1 = arith.constant 0 : i32
    return %c0_i32, %c0_i32_0 : i32, i32
  }
  func.func @transform_21(%arg0: i32) -> (i32, i32) {
    %c0_i32 = arith.constant 0 : i32
    %c0_i32_0 = arith.constant 0 : i32
    %c0_i32_1 = arith.constant 0 : i32
    return %c0_i32, %c0_i32_0 : i32, i32
  }
  func.func @transform_22(%arg0: i32) -> (i32, i32, i32) {
    %c0_i32 = arith.constant 0 : i32
    %c0_i32_0 = arith.constant 0 : i32
    %c0_i32_1 = arith.constant 0 : i32
    return %arg0, %c0_i32, %c0_i32_0 : i32, i32, i32
  }
}

</mosaic_0001>

<llo_original>
// kernel: deepdta_forward.1
$region0: #{deepdta_forward.1}
  #allocation0 [shape = 'u32[]', space=smem, size = 0x4, offset = 0x4, fixed_abs, tag = 'smem constant byte address 0x4 - core index']
  #allocation1 [shape = 'u32[144,128]{1,0:T(1,128)}', space=vmem, size = 0x12000, scoped, tag = 'internal scratch']
  %s0 = inlined_call_operand.vmem [shape: f32[2,32,128], index: 0, kind: input, shape index: {}]
  %s1 = inlined_call_operand.vmem [shape: f32[2,64,128], index: 1, kind: input, shape index: {}]
  %s2 = inlined_call_operand.hbm [shape: f32[512,128], index: 2, kind: input, shape index: {}]
  %s3 = inlined_call_operand.hbm [shape: f32[1,128], index: 3, kind: input, shape index: {}]
  %s4 = inlined_call_operand.hbm [shape: f32[512,128], index: 4, kind: input, shape index: {}]
  %s5 = inlined_call_operand.hbm [shape: f32[1,128], index: 5, kind: input, shape index: {}]
  %s6 = inlined_call_operand.hbm [shape: f32[512,128], index: 6, kind: input, shape index: {}]
  %s7 = inlined_call_operand.hbm [shape: f32[1,128], index: 7, kind: input, shape index: {}]
  %s8 = inlined_call_operand.hbm [shape: f32[1024,128], index: 8, kind: input, shape index: {}]
  %s9 = inlined_call_operand.hbm [shape: f32[1,128], index: 9, kind: input, shape index: {}]
  %s10 = inlined_call_operand.hbm [shape: f32[1024,128], index: 10, kind: input, shape index: {}]
  %s11 = inlined_call_operand.hbm [shape: f32[1,128], index: 11, kind: input, shape index: {}]
  %s12 = inlined_call_operand.hbm [shape: f32[1024,128], index: 12, kind: input, shape index: {}]
  %s13 = inlined_call_operand.hbm [shape: f32[1,128], index: 13, kind: input, shape index: {}]
  %s14 = inlined_call_operand.hbm [shape: bf16[256,1024], index: 14, kind: input, shape index: {}]
  %s15 = inlined_call_operand.hbm [shape: f32[1,1024], index: 15, kind: input, shape index: {}]
  %s16 = inlined_call_operand.hbm [shape: bf16[1024,1024], index: 16, kind: input, shape index: {}]
  %s17 = inlined_call_operand.hbm [shape: f32[1,1024], index: 17, kind: input, shape index: {}]
  %s18 = inlined_call_operand.hbm [shape: bf16[1024,512], index: 18, kind: input, shape index: {}]
  %s19 = inlined_call_operand.hbm [shape: f32[1,512], index: 19, kind: input, shape index: {}]
  %s20 = inlined_call_operand.hbm [shape: bf16[512,128], index: 20, kind: input, shape index: {}]
  %s21 = inlined_call_operand.hbm [shape: f32[1,128], index: 21, kind: input, shape index: {}]
  %s22 = inlined_call_operand.vmem [shape: f32[2,1,128], index: 22, kind: output, shape index: {}]
  %s23 = sld [smem:[#allocation0]]
  $region201: #{deepdta_forward.1} parent=0
    _
  %s25 = ssub.s32 1, %s23
  %s26 = scalar_select 0, %s25, %s23
  $region1: #{deepdta_forward.1} parent=0
    #allocation2 [shape = 'u8[262144]{0}', space=vmem, size = 0x40000, scoped, tag = 'input window, operand 2, single buffered']
    #allocation3 [shape = 's32[2]{0}', space=sflag, size = 0x8, scoped, tag = 'scoped memory for deepdta_forward.1']
    #allocation4 [shape = 'u8[512]{0}', space=vmem, size = 0x400, scoped, tag = 'input window, operand 3, single buffered']
    #allocation5 [shape = 's32[1]{0}', space=sflag, size = 0x4, scoped, tag = 'scoped memory for deepdta_forward.1']
    #allocation6 [shape = 'u8[262144]{0}', space=vmem, size = 0x40000, scoped, tag = 'input window, operand 4, single buffered']
    #allocation7 [shape = 'u8[512]{0}', space=vmem, size = 0x400, scoped, tag = 'input window, operand 5, single buffered']
    #allocation8 [shape = 's32[1]{0}', space=sflag, size = 0x4, scoped, tag = 'scoped memory for deepdta_forward.1']
    #allocation9 [shape = 'u8[262144]{0}', space=vmem, size = 0x40000, scoped, tag = 'input window, operand 6, single buffered']
    #allocation10 [shape = 'u8[512]{0}', space=vmem, size = 0x400, scoped, tag = 'input window, operand 7, single buffered']
    #allocation11 [shape = 's32[1]{0}', space=sflag, size = 0x4, scoped, tag = 'scoped memory for deepdta_forward.1']
    #allocation12 [shape = 'u8[524288]{0}', space=vmem, size = 0x80000, scoped, tag = 'input window, operand 8, single buffered']
    #allocation13 [shape = 'u8[512]{0}', space=vmem, size = 0x400, scoped, tag = 'input window, operand 9, single buffered']
    #allocation14 [shape = 's32[1]{0}', space=sflag, size = 0x4, scoped, tag = 'scoped memory for deepdta_forward.1']
    #allocation15 [shape = 'u8[524288]{0}', space=vmem, size = 0x80000, scoped, tag = 'input window, operand 10, single buffered']
    #allocation16 [shape = 'u8[512]{0}', space=vmem, size = 0x400, scoped, tag = 'input window, operand 11, single buffered']
    #allocation17 [shape = 's32[1]{0}', space=sflag, size = 0x4, scoped, tag = 'scoped memory for deepdta_forward.1']
    #allocation18 [shape = 'u8[524288]{0}', space=vmem, size = 0x80000, scoped, tag = 'input window, operand 12, single buffered']
    #allocation19 [shape = 'u8[512]{0}', space=vmem, size = 0x400, scoped, tag = 'input window, operand 13, single buffered']
    #allocation20 [shape = 's32[1]{0}', space=sflag, size = 0x4, scoped, tag = 'scoped memory for deepdta_forward.1']
    #allocation21 [shape = 'u8[524288]{0}', space=vmem, size = 0x80000, scoped, tag = 'input window, operand 14, single buffered']
    #allocation22 [shape = 'u8[4096]{0}', space=vmem, size = 0x1000, scoped, tag = 'input window, operand 15, single buffered']
    #allocation23 [shape = 's32[1]{0}', space=sflag, size = 0x4, scoped, tag = 'scoped memory for deepdta_forward.1']
    #allocation24 [shape = 'u8[2097152]{0}', space=vmem, size = 0x200000, scoped, tag = 'input window, operand 16, single buffered']
    #allocation25 [shape = 'u8[4096]{0}', space=vmem, size = 0x1000, scoped, tag = 'input window, operand 17, single buffered']
    #allocation26 [shape = 's32[1]{0}', space=sflag, size = 0x4, scoped, tag = 'scoped memory for deepdta_forward.1']
    #allocation27 [shape = 'u8[1048576]{0}', space=vmem, size = 0x100000, scoped, tag = 'input window, operand 18, single buffered']
    #allocation28 [shape = 'u8[2048]{0}', space=vmem, size = 0x800, scoped, tag = 'input window, operand 19, single buffered']
    #allocation29 [shape = 's32[1]{0}', space=sflag, size = 0x4, scoped, tag = 'scoped memory for deepdta_forward.1']
    #allocation30 [shape = 'u8[131072]{0}', space=vmem, size = 0x20000, scoped, tag = 'input window, operand 20, single buffered']
    #allocation31 [shape = 'u8[512]{0}', space=vmem, size = 0x400, scoped, tag = 'input window, operand 21, single buffered']
    #allocation32 [shape = 's32[1]{0}', space=sflag, size = 0x4, scoped, tag = 'scoped memory for deepdta_forward.1']
    %27 = vsyncpa [#allocation3], 0
    %28 = vsyncpa [#allocation5], 0
    %29 = vsyncpa [#allocation8], 0
    %30 = vsyncpa [#allocation11], 0
    %31 = vsyncpa [#allocation14], 0
    %32 = vsyncpa [#allocation17], 0
    %33 = vsyncpa [#allocation20], 0
    %34 = vsyncpa [#allocation23], 0
    %35 = vsyncpa [#allocation26], 0
    %36 = vsyncpa [#allocation29], 0
    %37 = vsyncpa [#allocation32], 0
    loop: start=0, step=1, limit=4
    $region2: #{deepdta_forward.1} parent=1 // loop_pre_header
      _
    $region3: #{deepdta_forward.1} parent=1 // loop_header
      %s39 = sphi 0, %s43
      %p40 = scmp.ge.s32.totalorder %s39, 4
      %s49 = sphi 0, %s51
      %s52 = sphi 0, %s49
      %s53 = sphi 0, %s52
      %s69 = sphi 0, %s53
      %s75 = sphi 0, %s77
      %s78 = sphi 0, %s75
      %s79 = sphi 0, %s78
      %s95 = sphi 0, %s79
      %s99 = sphi 0, %s99
      %s101 = sphi 0, %s99
      %s102 = sphi 0, %s101
      %s116 = sphi 0, %s102
      %s120 = sphi 0, %s120
      %s122 = sphi 0, %s120
      %s123 = sphi 0, %s122
      %s137 = sphi 0, %s123
      %s141 = sphi 0, %s141
      %s143 = sphi 0, %s141
      %s144 = sphi 0, %s143
      %s158 = sphi 0, %s144
      %s162 = sphi 0, %s162
      %s164 = sphi 0, %s162
      %s165 = sphi 0, %s164
      %s179 = sphi 0, %s165
      %s183 = sphi 0, %s183
      %s185 = sphi 0, %s183
      %s186 = sphi 0, %s185
      %s200 = sphi 0, %s186
      %s204 = sphi 0, %s204
      %s206 = sphi 0, %s204
      %s207 = sphi 0, %s206
      %s221 = sphi 0, %s207
      %s225 = sphi 0, %s225
      %s227 = sphi 0, %s225
      %s228 = sphi 0, %s227
      %s242 = sphi 0, %s228
      %s246 = sphi 0, %s246
      %s248 = sphi 0, %s246
      %s249 = sphi 0, %s248
      %s263 = sphi 0, %s249
      %s267 = sphi 0, %s267
      %s269 = sphi 0, %s267
      %s270 = sphi 0, %s269
      %s284 = sphi 0, %s270
      %s288 = sphi 0, %s288
      %s290 = sphi 0, %s288
      %s291 = sphi 0, %s290
      %s305 = sphi 0, %s291
      %s309 = sphi 0, %s309
      %s311 = sphi 0, %s309
      %s312 = sphi 0, %s311
      %s326 = sphi 0, %s312
      %s330 = sphi 0, %s330
      %s332 = sphi 0, %s330
      %s333 = sphi 0, %s332
      %s347 = sphi 0, %s333
      %s351 = sphi 0, %s351
      %s353 = sphi 0, %s351
      %s354 = sphi 0, %s353
      %s368 = sphi 0, %s354
      %s372 = sphi 0, %s372
      %s374 = sphi 0, %s372
      %s375 = sphi 0, %s374
      %s389 = sphi 0, %s375
      %s393 = sphi 0, %s393
      %s395 = sphi 0, %s393
      %s396 = sphi 0, %s395
      %s410 = sphi 0, %s396
      %s414 = sphi 0, %s414
      %s416 = sphi 0, %s414
      %s417 = sphi 0, %s416
      %s431 = sphi 0, %s417
      %s435 = sphi 0, %s435
      %s437 = sphi 0, %s435
      %s438 = sphi 0, %s437
      %s452 = sphi 0, %s438
      %s456 = sphi 0, %s456
      %s458 = sphi 0, %s456
      %s459 = sphi 0, %s458
      %s473 = sphi 0, %s459
      %s477 = sphi 0, %s477
      %s479 = sphi 0, %s477
      %s480 = sphi 0, %s479
      %s494 = sphi 0, %s480
      %s498 = sphi 0, %s498
      %s500 = sphi 0, %s498
      %s501 = sphi 0, %s500
      %s515 = sphi 0, %s501
      %s521 = sphi 0, %s523
      %s524 = sphi 0, %s521
      %s525 = sphi 0, %s524
      %s541 = sphi 0, %s525
    $region4: #{deepdta_forward.1} parent=1 // loop_header_branch
      %42 = sbr.rel (%p40) target = $region8
    $region5: #{deepdta_forward.1} parent=1 // loop_body
      %s44 = ssub.s32 %s39, 1
      %s45 = ssub.s32 %s39, 2
      %s46 = sadd.s32 %s39, 1
      %s47 = ssub.s32 %s39, %s46
      %p48 = scmp.eq.s32.totalorder %s47, 0
      %s50 = sadd.s32 %s49, 1
      %s51 = scalar_select %p48, %s49, %s50
      %p54 = pneg %p48
      %p55 = scmp.eq.s32.totalorder %s39, 1
      %p56 = por %p54, %p55
      %p57 = scmp.ne.s32.totalorder %s49, %s52
      %p58 = scmp.eq.s32.totalorder %s39, 0
      %p59 = por %p57, %p58
      %p60 = scmp.ne.s32.totalorder %s49, %s52
      %p61 = scmp.eq.s32.totalorder %s44, 1
      %p62 = por %p60, %p61
      %p63 = scmp.ne.s32.totalorder %s52, %s53
      %p64 = scmp.eq.s32.totalorder %s44, 0
      %p65 = por %p63, %p64
      %p66 = scmp.ne.s32.totalorder %s52, %s53
      %p67 = scmp.eq.s32.totalorder %s45, 1
      %p68 = por %p66, %p67
      %p70 = scmp.ne.s32.totalorder %s53, %s69
      %p71 = scmp.eq.s32.totalorder %s45, 0
      %p72 = por %p70, %p71
      %s73 = ssub.s32 %s39, %s46
      %p74 = scmp.eq.s32.totalorder %s73, 0
      %s76 = sadd.s32 %s75, 1
      %s77 = scalar_select %p74, %s75, %s76
      %p80 = pneg %p74
      %p81 = scmp.eq.s32.totalorder %s39, 1
      %p82 = por %p80, %p81
      %p83 = scmp.ne.s32.totalorder %s75, %s78
      %p84 = scmp.eq.s32.totalorder %s39, 0
      %p85 = por %p83, %p84
      %p86 = scmp.ne.s32.totalorder %s75, %s78
      %p87 = scmp.eq.s32.totalorder %s44, 1
      %p88 = por %p86, %p87
      %p89 = scmp.ne.s32.totalorder %s78, %s79
      %p90 = scmp.eq.s32.totalorder %s44, 0
      %p91 = por %p89, %p90
      %p92 = scmp.ne.s32.totalorder %s78, %s79
      %p93 = scmp.eq.s32.totalorder %s45, 1
      %p94 = por %p92, %p93
      %p96 = scmp.ne.s32.totalorder %s79, %s95
      %p97 = scmp.eq.s32.totalorder %s45, 0
      %p98 = por %p96, %p97
      %s100 = sadd.s32 %s99, 1
      %p103 = scmp.eq.s32.totalorder %s39, 1
      %p104 = scmp.ne.s32.totalorder %s99, %s101
      %p105 = scmp.eq.s32.totalorder %s39, 0
      %p106 = por %p104, %p105
      %p107 = scmp.ne.s32.totalorder %s99, %s101
      %p108 = scmp.eq.s32.totalorder %s44, 1
      %p109 = por %p107, %p108
      %p110 = scmp.ne.s32.totalorder %s101, %s102
      %p111 = scmp.eq.s32.totalorder %s44, 0
      %p112 = por %p110, %p111
      %p113 = scmp.ne.s32.totalorder %s101, %s102
      %p114 = scmp.eq.s32.totalorder %s45, 1
      %p115 = por %p113, %p114
      %p117 = scmp.ne.s32.totalorder %s102, %s116
      %p118 = scmp.eq.s32.totalorder %s45, 0
      %p119 = por %p117, %p118
      %s121 = sadd.s32 %s120, 1
      %p124 = scmp.eq.s32.totalorder %s39, 1
      %p125 = scmp.ne.s32.totalorder %s120, %s122
      %p126 = scmp.eq.s32.totalorder %s39, 0
      %p127 = por %p125, %p126
      %p128 = scmp.ne.s32.totalorder %s120, %s122
      %p129 = scmp.eq.s32.totalorder %s44, 1
      %p130 = por %p128, %p129
      %p131 = scmp.ne.s32.totalorder %s122, %s123
      %p132 = scmp.eq.s32.totalorder %s44, 0
      %p133 = por %p131, %p132
      %p134 = scmp.ne.s32.totalorder %s122, %s123
      %p135 = scmp.eq.s32.totalorder %s45, 1
      %p136 = por %p134, %p135
      %p138 = scmp.ne.s32.totalorder %s123, %s137
      %p139 = scmp.eq.s32.totalorder %s45, 0
      %p140 = por %p138, %p139
      %s142 = sadd.s32 %s141, 1
      %p145 = scmp.eq.s32.totalorder %s39, 1
      %p146 = scmp.ne.s32.totalorder %s141, %s143
      %p147 = scmp.eq.s32.totalorder %s39, 0
      %p148 = por %p146, %p147
      %p149 = scmp.ne.s32.totalorder %s141, %s143
      %p150 = scmp.eq.s32.totalorder %s44, 1
      %p151 = por %p149, %p150
      %p152 = scmp.ne.s32.totalorder %s143, %s144
      %p153 = scmp.eq.s32.totalorder %s44, 0
      %p154 = por %p152, %p153
      %p155 = scmp.ne.s32.totalorder %s143, %s144
      %p156 = scmp.eq.s32.totalorder %s45, 1
      %p157 = por %p155, %p156
      %p159 = scmp.ne.s32.totalorder %s144, %s158
      %p160 = scmp.eq.s32.totalorder %s45, 0
      %p161 = por %p159, %p160
      %s163 = sadd.s32 %s162, 1
      %p166 = scmp.eq.s32.totalorder %s39, 1
      %p167 = scmp.ne.s32.totalorder %s162, %s164
      %p168 = scmp.eq.s32.totalorder %s39, 0
      %p169 = por %p167, %p168
      %p170 = scmp.ne.s32.totalorder %s162, %s164
      %p171 = scmp.eq.s32.totalorder %s44, 1
      %p172 = por %p170, %p171
      %p173 = scmp.ne.s32.totalorder %s164, %s165
      %p174 = scmp.eq.s32.totalorder %s44, 0
      %p175 = por %p173, %p174
      %p176 = scmp.ne.s32.totalorder %s164, %s165
      %p177 = scmp.eq.s32.totalorder %s45, 1
      %p178 = por %p176, %p177
      %p180 = scmp.ne.s32.totalorder %s165, %s179
      %p181 = scmp.eq.s32.totalorder %s45, 0
      %p182 = por %p180, %p181
      %s184 = sadd.s32 %s183, 1
      %p187 = scmp.eq.s32.totalorder %s39, 1
      %p188 = scmp.ne.s32.totalorder %s183, %s185
      %p189 = scmp.eq.s32.totalorder %s39, 0
      %p190 = por %p188, %p189
      %p191 = scmp.ne.s32.totalorder %s183, %s185
      %p192 = scmp.eq.s32.totalorder %s44, 1
      %p193 = por %p191, %p192
      %p194 = scmp.ne.s32.totalorder %s185, %s186
      %p195 = scmp.eq.s32.totalorder %s44, 0
      %p196 = por %p194, %p195
      %p197 = scmp.ne.s32.totalorder %s185, %s186
      %p198 = scmp.eq.s32.totalorder %s45, 1
      %p199 = por %p197, %p198
      %p201 = scmp.ne.s32.totalorder %s186, %s200
      %p202 = scmp.eq.s32.totalorder %s45, 0
      %p203 = por %p201, %p202
      %s205 = sadd.s32 %s204, 1
      %p208 = scmp.eq.s32.totalorder %s39, 1
      %p209 = scmp.ne.s32.totalorder %s204, %s206
      %p210 = scmp.eq.s32.totalorder %s39, 0
      %p211 = por %p209, %p210
      %p212 = scmp.ne.s32.totalorder %s204, %s206
      %p213 = scmp.eq.s32.totalorder %s44, 1
      %p214 = por %p212, %p213
      %p215 = scmp.ne.s32.totalorder %s206, %s207
      %p216 = scmp.eq.s32.totalorder %s44, 0
      %p217 = por %p215, %p216
      %p218 = scmp.ne.s32.totalorder %s206, %s207
      %p219 = scmp.eq.s32.totalorder %s45, 1
      %p220 = por %p218, %p219
      %p222 = scmp.ne.s32.totalorder %s207, %s221
      %p223 = scmp.eq.s32.totalorder %s45, 0
      %p224 = por %p222, %p223
      %s226 = sadd.s32 %s225, 1
      %p229 = scmp.eq.s32.totalorder %s39, 1
      %p230 = scmp.ne.s32.totalorder %s225, %s227
      %p231 = scmp.eq.s32.totalorder %s39, 0
      %p232 = por %p230, %p231
      %p233 = scmp.ne.s32.totalorder %s225, %s227
      %p234 = scmp.eq.s32.totalorder %s44, 1
      %p235 = por %p233, %p234
      %p236 = scmp.ne.s32.totalorder %s227, %s228
      %p237 = scmp.eq.s32.totalorder %s44, 0
      %p238 = por %p236, %p237
      %p239 = scmp.ne.s32.totalorder %s227, %s228
      %p240 = scmp.eq.s32.totalorder %s45, 1
      %p241 = por %p239, %p240
      %p243 = scmp.ne.s32.totalorder %s228, %s242
      %p244 = scmp.eq.s32.totalorder %s45, 0
      %p245 = por %p243, %p244
      %s247 = sadd.s32 %s246, 1
      %p250 = scmp.eq.s32.totalorder %s39, 1
      %p251 = scmp.ne.s32.totalorder %s246, %s248
      %p252 = scmp.eq.s32.totalorder %s39, 0
      %p253 = por %p251, %p252
      %p254 = scmp.ne.s32.totalorder %s246, %s248
      %p255 = scmp.eq.s32.totalorder %s44, 1
      %p256 = por %p254, %p255
      %p257 = scmp.ne.s32.totalorder %s248, %s249
      %p258 = scmp.eq.s32.totalorder %s44, 0
      %p259 = por %p257, %p258
      %p260 = scmp.ne.s32.totalorder %s248, %s249
      %p261 = scmp.eq.s32.totalorder %s45, 1
      %p262 = por %p260, %p261
      %p264 = scmp.ne.s32.totalorder %s249, %s263
      %p265 = scmp.eq.s32.totalorder %s45, 0
      %p266 = por %p264, %p265
      %s268 = sadd.s32 %s267, 1
      %p271 = scmp.eq.s32.totalorder %s39, 1
      %p272 = scmp.ne.s32.totalorder %s267, %s269
      %p273 = scmp.eq.s32.totalorder %s39, 0
      %p274 = por %p272, %p273
      %p275 = scmp.ne.s32.totalorder %s267, %s269
      %p276 = scmp.eq.s32.totalorder %s44, 1
      %p277 = por %p275, %p276
      %p278 = scmp.ne.s32.totalorder %s269, %s270
      %p279 = scmp.eq.s32.totalorder %s44, 0
      %p280 = por %p278, %p279
      %p281 = scmp.ne.s32.totalorder %s269, %s270
      %p282 = scmp.eq.s32.totalorder %s45, 1
      %p283 = por %p281, %p282
      %p285 = scmp.ne.s32.totalorder %s270, %s284
      %p286 = scmp.eq.s32.totalorder %s45, 0
      %p287 = por %p285, %p286
      %s289 = sadd.s32 %s288, 1
      %p292 = scmp.eq.s32.totalorder %s39, 1
      %p293 = scmp.ne.s32.totalorder %s288, %s290
      %p294 = scmp.eq.s32.totalorder %s39, 0
      %p295 = por %p293, %p294
      %p296 = scmp.ne.s32.totalorder %s288, %s290
      %p297 = scmp.eq.s32.totalorder %s44, 1
      %p298 = por %p296, %p297
      %p299 = scmp.ne.s32.totalorder %s290, %s291
      %p300 = scmp.eq.s32.totalorder %s44, 0
      %p301 = por %p299, %p300
      %p302 = scmp.ne.s32.totalorder %s290, %s291
      %p303 = scmp.eq.s32.totalorder %s45, 1
      %p304 = por %p302, %p303
      %p306 = scmp.ne.s32.totalorder %s291, %s305
      %p307 = scmp.eq.s32.totalorder %s45, 0
      %p308 = por %p306, %p307
      %s310 = sadd.s32 %s309, 1
      %p313 = scmp.eq.s32.totalorder %s39, 1
      %p314 = scmp.ne.s32.totalorder %s309, %s311
      %p315 = scmp.eq.s32.totalorder %s39, 0
      %p316 = por %p314, %p315
      %p317 = scmp.ne.s32.totalorder %s309, %s311
      %p318 = scmp.eq.s32.totalorder %s44, 1
      %p319 = por %p317, %p318
      %p320 = scmp.ne.s32.totalorder %s311, %s312
      %p321 = scmp.eq.s32.totalorder %s44, 0
      %p322 = por %p320, %p321
      %p323 = scmp.ne.s32.totalorder %s311, %s312
      %p324 = scmp.eq.s32.totalorder %s45, 1
      %p325 = por %p323, %p324
      %p327 = scmp.ne.s32.totalorder %s312, %s326
      %p328 = scmp.eq.s32.totalorder %s45, 0
      %p329 = por %p327, %p328
      %s331 = sadd.s32 %s330, 1
      %p334 = scmp.eq.s32.totalorder %s39, 1
      %p335 = scmp.ne.s32.totalorder %s330, %s332
      %p336 = scmp.eq.s32.totalorder %s39, 0
      %p337 = por %p335, %p336
      %p338 = scmp.ne.s32.totalorder %s330, %s332
      %p339 = scmp.eq.s32.totalorder %s44, 1
      %p340 = por %p338, %p339
      %p341 = scmp.ne.s32.totalorder %s332, %s333
      %p342 = scmp.eq.s32.totalorder %s44, 0
      %p343 = por %p341, %p342
      %p344 = scmp.ne.s32.totalorder %s332, %s333
      %p345 = scmp.eq.s32.totalorder %s45, 1
      %p346 = por %p344, %p345
      %p348 = scmp.ne.s32.totalorder %s333, %s347
      %p349 = scmp.eq.s32.totalorder %s45, 0
      %p350 = por %p348, %p349
      %s352 = sadd.s32 %s351, 1
      %p355 = scmp.eq.s32.totalorder %s39, 1
      %p356 = scmp.ne.s32.totalorder %s351, %s353
      %p357 = scmp.eq.s32.totalorder %s39, 0
      %p358 = por %p356, %p357
      %p359 = scmp.ne.s32.totalorder %s351, %s353
      %p360 = scmp.eq.s32.totalorder %s44, 1
      %p361 = por %p359, %p360
      %p362 = scmp.ne.s32.totalorder %s353, %s354
      %p363 = scmp.eq.s32.totalorder %s44, 0
      %p364 = por %p362, %p363
      %p365 = scmp.ne.s32.totalorder %s353, %s354
      %p366 = scmp.eq.s32.totalorder %s45, 1
      %p367 = por %p365, %p366
      %p369 = scmp.ne.s32.totalorder %s354, %s368
      %p370 = scmp.eq.s32.totalorder %s45, 0
      %p371 = por %p369, %p370
      %s373 = sadd.s32 %s372, 1
      %p376 = scmp.eq.s32.totalorder %s39, 1
      %p377 = scmp.ne.s32.totalorder %s372, %s374
      %p378 = scmp.eq.s32.totalorder %s39, 0
      %p379 = por %p377, %p378
      %p380 = scmp.ne.s32.totalorder %s372, %s374
      %p381 = scmp.eq.s32.totalorder %s44, 1
      %p382 = por %p380, %p381
      %p383 = scmp.ne.s32.totalorder %s374, %s375
      %p384 = scmp.eq.s32.totalorder %s44, 0
      %p385 = por %p383, %p384
      %p386 = scmp.ne.s32.totalorder %s374, %s375
      %p387 = scmp.eq.s32.totalorder %s45, 1
      %p388 = por %p386, %p387
      %p390 = scmp.ne.s32.totalorder %s375, %s389
      %p391 = scmp.eq.s32.totalorder %s45, 0
      %p392 = por %p390, %p391
      %s394 = sadd.s32 %s393, 1
      %p397 = scmp.eq.s32.totalorder %s39, 1
      %p398 = scmp.ne.s32.totalorder %s393, %s395
      %p399 = scmp.eq.s32.totalorder %s39, 0
      %p400 = por %p398, %p399
      %p401 = scmp.ne.s32.totalorder %s393, %s395
      %p402 = scmp.eq.s32.totalorder %s44, 1
      %p403 = por %p401, %p402
      %p404 = scmp.ne.s32.totalorder %s395, %s396
      %p405 = scmp.eq.s32.totalorder %s44, 0
      %p406 = por %p404, %p405
      %p407 = scmp.ne.s32.totalorder %s395, %s396
      %p408 = scmp.eq.s32.totalorder %s45, 1
      %p409 = por %p407, %p408
      %p411 = scmp.ne.s32.totalorder %s396, %s410
      %p412 = scmp.eq.s32.totalorder %s45, 0
      %p413 = por %p411, %p412
      %s415 = sadd.s32 %s414, 1
      %p418 = scmp.eq.s32.totalorder %s39, 1
      %p419 = scmp.ne.s32.totalorder %s414, %s416
      %p420 = scmp.eq.s32.totalorder %s39, 0
      %p421 = por %p419, %p420
      %p422 = scmp.ne.s32.totalorder %s414, %s416
      %p423 = scmp.eq.s32.totalorder %s44, 1
      %p424 = por %p422, %p423
      %p425 = scmp.ne.s32.totalorder %s416, %s417
      %p426 = scmp.eq.s32.totalorder %s44, 0
      %p427 = por %p425, %p426
      %p428 = scmp.ne.s32.totalorder %s416, %s417
      %p429 = scmp.eq.s32.totalorder %s45, 1
      %p430 = por %p428, %p429
      %p432 = scmp.ne.s32.totalorder %s417, %s431
      %p433 = scmp.eq.s32.totalorder %s45, 0
      %p434 = por %p432, %p433
      %s436 = sadd.s32 %s435, 1
      %p439 = scmp.eq.s32.totalorder %s39, 1
      %p440 = scmp.ne.s32.totalorder %s435, %s437
      %p441 = scmp.eq.s32.totalorder %s39, 0
      %p442 = por %p440, %p441
      %p443 = scmp.ne.s32.totalorder %s435, %s437
      %p444 = scmp.eq.s32.totalorder %s44, 1
      %p445 = por %p443, %p444
      %p446 = scmp.ne.s32.totalorder %s437, %s438
      %p447 = scmp.eq.s32.totalorder %s44, 0
      %p448 = por %p446, %p447
      %p449 = scmp.ne.s32.totalorder %s437, %s438
      %p450 = scmp.eq.s32.totalorder %s45, 1
      %p451 = por %p449, %p450
      %p453 = scmp.ne.s32.totalorder %s438, %s452
      %p454 = scmp.eq.s32.totalorder %s45, 0
      %p455 = por %p453, %p454
      %s457 = sadd.s32 %s456, 1
      %p460 = scmp.eq.s32.totalorder %s39, 1
      %p461 = scmp.ne.s32.totalorder %s456, %s458
      %p462 = scmp.eq.s32.totalorder %s39, 0
      %p463 = por %p461, %p462
      %p464 = scmp.ne.s32.totalorder %s456, %s458
      %p465 = scmp.eq.s32.totalorder %s44, 1
      %p466 = por %p464, %p465
      %p467 = scmp.ne.s32.totalorder %s458, %s459
      %p468 = scmp.eq.s32.totalorder %s44, 0
      %p469 = por %p467, %p468
      %p470 = scmp.ne.s32.totalorder %s458, %s459
      %p471 = scmp.eq.s32.totalorder %s45, 1
      %p472 = por %p470, %p471
      %p474 = scmp.ne.s32.totalorder %s459, %s473
      %p475 = scmp.eq.s32.totalorder %s45, 0
      %p476 = por %p474, %p475
      %s478 = sadd.s32 %s477, 1
      %p481 = scmp.eq.s32.totalorder %s39, 1
      %p482 = scmp.ne.s32.totalorder %s477, %s479
      %p483 = scmp.eq.s32.totalorder %s39, 0
      %p484 = por %p482, %p483
      %p485 = scmp.ne.s32.totalorder %s477, %s479
      %p486 = scmp.eq.s32.totalorder %s44, 1
      %p487 = por %p485, %p486
      %p488 = scmp.ne.s32.totalorder %s479, %s480
      %p489 = scmp.eq.s32.totalorder %s44, 0
      %p490 = por %p488, %p489
      %p491 = scmp.ne.s32.totalorder %s479, %s480
      %p492 = scmp.eq.s32.totalorder %s45, 1
      %p493 = por %p491, %p492
      %p495 = scmp.ne.s32.totalorder %s480, %s494
      %p496 = scmp.eq.s32.totalorder %s45, 0
      %p497 = por %p495, %p496
      %s499 = sadd.s32 %s498, 1
      %p502 = scmp.eq.s32.totalorder %s39, 1
      %p503 = scmp.ne.s32.totalorder %s498, %s500
      %p504 = scmp.eq.s32.totalorder %s39, 0
      %p505 = por %p503, %p504
      %p506 = scmp.ne.s32.totalorder %s498, %s500
      %p507 = scmp.eq.s32.totalorder %s44, 1
      %p508 = por %p506, %p507
      %p509 = scmp.ne.s32.totalorder %s500, %s501
      %p510 = scmp.eq.s32.totalorder %s44, 0
      %p511 = por %p509, %p510
      %p512 = scmp.ne.s32.totalorder %s500, %s501
      %p513 = scmp.eq.s32.totalorder %s45, 1
      %p514 = por %p512, %p513
      %p516 = scmp.ne.s32.totalorder %s501, %s515
      %p517 = scmp.eq.s32.totalorder %s45, 0
      %p518 = por %p516, %p517
      %s519 = ssub.s32 %s39, %s46
      %p520 = scmp.eq.s32.totalorder %s519, 0
      %s522 = sadd.s32 %s521, 1
      %s523 = scalar_select %p520, %s521, %s522
      %p526 = pneg %p520
      %p527 = scmp.eq.s32.totalorder %s39, 1
      %p528 = por %p526, %p527
      %p529 = scmp.ne.s32.totalorder %s521, %s524
      %p530 = scmp.eq.s32.totalorder %s39, 0
      %p531 = por %p529, %p530
      %p532 = scmp.ne.s32.totalorder %s521, %s524
      %p533 = scmp.eq.s32.totalorder %s44, 1
      %p534 = por %p532, %p533
      %p535 = scmp.ne.s32.totalorder %s524, %s525
      %p536 = scmp.eq.s32.totalorder %s44, 0
      %p537 = por %p535, %p536
      %p538 = scmp.ne.s32.totalorder %s524, %s525
      %p539 = scmp.eq.s32.totalorder %s45, 1
      %p540 = por %p538, %p539
      %p542 = scmp.ne.s32.totalorder %s525, %s541
      %p543 = scmp.eq.s32.totalorder %s45, 0
      %p544 = por %p542, %p543
      %p545 = scmp.le.s32.totalorder 1, %s39
      %p546 = scmp.lt.s32.totalorder %s39, 3
      %p547 = pnand %p545, %p546
      %p548 = pneg %p547
      // Predicated region
      $region9: #{deepdta_forward.1} parent=5 // pred_check
        _
      $region10: #{deepdta_forward.1} parent=5 // pred_check_branch
        %550 = sbr.rel (%p547) target = $region12
      $region11: #{deepdta_forward.1} parent=5 // pred_region
        %s551 = ssub.s32 %s39, 1
        // Predicated region
        $region13: #{deepdta_forward.1} parent=11 // pred_check
          %p552 = pneg %p112
        $region14: #{deepdta_forward.1} parent=11 // pred_check_branch
          %554 = sbr.rel (%p552) target = $region16
        $region15: #{deepdta_forward.1} parent=11 // pred_region
          %s556 = ssub.s32 8192, 8192
          %557 = vsyncadd [#allocation3], %s556
          %s558 = sshll.u32 [#allocation2], 4
          %s559 = int_to_ptr.vmem [resolvable:$true] %s558
          %564 = dma.hbm_to_vmem [thread:$0]  %s2, 8192, %s559, [#allocation3], 128, 128, 8
        $region16: #{deepdta_forward.1} parent=11 // pred_fallthru
          _
        // Predicated region
        $region17: #{deepdta_forward.1} parent=11 // pred_check
          %p565 = pneg %p133
        $region18: #{deepdta_forward.1} parent=11 // pred_check_branch
          %567 = sbr.rel (%p565) target = $region20
        $region19: #{deepdta_forward.1} parent=11 // pred_region
          %s569 = ssub.s32 16, 16
          %570 = vsyncadd [#allocation5], %s569
          %s572 = sshll.u32 [#allocation4], 4
          %s573 = int_to_ptr.vmem [resolvable:$true] %s572
          %575 = dma.hbm_to_vmem [thread:$0]  %s3, 16, %s573, [#allocation5]
        $region20: #{deepdta_forward.1} parent=11 // pred_fallthru
          _
        // Predicated region
        $region21: #{deepdta_forward.1} parent=11 // pred_check
          %p576 = pneg %p154
        $region22: #{deepdta_forward.1} parent=11 // pred_check_branch
          %578 = sbr.rel (%p576) target = $region24
        $region23: #{deepdta_forward.1} parent=11 // pred_region
          %s580 = ssub.s32 8192, 8192
          %581 = vsyncadd [#allocation5], %s580
          %s582 = sshll.u32 [#allocation6], 4
          %s583 = int_to_ptr.vmem [resolvable:$true] %s582
          %588 = dma.hbm_to_vmem [thread:$0]  %s4, 8192, %s583, [#allocation5], 128, 128, 8
        $region24: #{deepdta_forward.1} parent=11 // pred_fallthru
          _
        // Predicated region
        $region25: #{deepdta_forward.1} parent=11 // pred_check
          %p589 = pneg %p175
        $region26: #{deepdta_forward.1} parent=11 // pred_check_branch
          %591 = sbr.rel (%p589) target = $region28
        $region27: #{deepdta_forward.1} parent=11 // pred_region
          %s593 = ssub.s32 16, 16
          %594 = vsyncadd [#allocation8], %s593
          %s596 = sshll.u32 [#allocation7], 4
          %s597 = int_to_ptr.vmem [resolvable:$true] %s596
          %599 = dma.hbm_to_vmem [thread:$0]  %s5, 16, %s597, [#allocation8]
        $region28: #{deepdta_forward.1} parent=11 // pred_fallthru
          _
        // Predicated region
        $region29: #{deepdta_forward.1} parent=11 // pred_check
          %p600 = pneg %p196
        $region30: #{deepdta_forward.1} parent=11 // pred_check_branch
          %602 = sbr.rel (%p600) target = $region32
        $region31: #{deepdta_forward.1} parent=11 // pred_region
          %s604 = ssub.s32 8192, 8192
          %605 = vsyncadd [#allocation8], %s604
          %s606 = sshll.u32 [#allocation9], 4
          %s607 = int_to_ptr.vmem [resolvable:$true] %s606
          %612 = dma.hbm_to_vmem [thread:$0]  %s6, 8192, %s607, [#allocation8], 128, 128, 8
        $region32: #{deepdta_forward.1} parent=11 // pred_fallthru
          _
        // Predicated region
        $region33: #{deepdta_forward.1} parent=11 // pred_check
          %p613 = pneg %p217
        $region34: #{deepdta_forward.1} parent=11 // pred_check_branch
          %615 = sbr.rel (%p613) target = $region36
        $region35: #{deepdta_forward.1} parent=11 // pred_region
          %s617 = ssub.s32 16, 16
          %618 = vsyncadd [#allocation11], %s617
          %s620 = sshll.u32 [#allocation10], 4
          %s621 = int_to_ptr.vmem [resolvable:$true] %s620
          %623 = dma.hbm_to_vmem [thread:$0]  %s7, 16, %s621, [#allocation11]
        $region36: #{deepdta_forward.1} parent=11 // pred_fallthru
          _
        // Predicated region
        $region37: #{deepdta_forward.1} parent=11 // pred_check
          %p624 = pneg %p238
        $region38: #{deepdta_forward.1} parent=11 // pred_check_branch
          %626 = sbr.rel (%p624) target = $region40
        $region39: #{deepdta_forward.1} parent=11 // pred_region
          %s628 = ssub.s32 16384, 16384
          %629 = vsyncadd [#allocation11], %s628
          %s630 = sshll.u32 [#allocation12], 4
          %s631 = int_to_ptr.vmem [resolvable:$true] %s630
          %636 = dma.hbm_to_vmem [thread:$0]  %s8, 16384, %s631, [#allocation11], 128, 128, 8
        $region40: #{deepdta_forward.1} parent=11 // pred_fallthru
          _
        // Predicated region
        $region41: #{deepdta_forward.1} parent=11 // pred_check
          %p637 = pneg %p259
        $region42: #{deepdta_forward.1} parent=11 // pred_check_branch
          %639 = sbr.rel (%p637) target = $region44
        $region43: #{deepdta_forward.1} parent=11 // pred_region
          %s641 = ssub.s32 16, 16
          %642 = vsyncadd [#allocation14], %s641
          %s644 = sshll.u32 [#allocation13], 4
          %s645 = int_to_ptr.vmem [resolvable:$true] %s644
          %647 = dma.hbm_to_vmem [thread:$0]  %s9, 16, %s645, [#allocation14]
        $region44: #{deepdta_forward.1} parent=11 // pred_fallthru
          _
        // Predicated region
        $region45: #{deepdta_forward.1} parent=11 // pred_check
          %p648 = pneg %p280
        $region46: #{deepdta_forward.1} parent=11 // pred_check_branch
          %650 = sbr.rel (%p648) target = $region48
        $region47: #{deepdta_forward.1} parent=11 // pred_region
          %s652 = ssub.s32 16384, 16384
          %653 = vsyncadd [#allocation14], %s652
          %s654 = sshll.u32 [#allocation15], 4
          %s655 = int_to_ptr.vmem [resolvable:$true] %s654
          %660 = dma.hbm_to_vmem [thread:$0]  %s10, 16384, %s655, [#allocation14], 128, 128, 8
        $region48: #{deepdta_forward.1} parent=11 // pred_fallthru
          _
        // Predicated region
        $region49: #{deepdta_forward.1} parent=11 // pred_check
          %p661 = pneg %p301
        $region50: #{deepdta_forward.1} parent=11 // pred_check_branch
          %663 = sbr.rel (%p661) target = $region52
        $region51: #{deepdta_forward.1} parent=11 // pred_region
          %s665 = ssub.s32 16, 16
          %666 = vsyncadd [#allocation17], %s665
          %s668 = sshll.u32 [#allocation16], 4
          %s669 = int_to_ptr.vmem [resolvable:$true] %s668
          %671 = dma.hbm_to_vmem [thread:$0]  %s11, 16, %s669, [#allocation17]
        $region52: #{deepdta_forward.1} parent=11 // pred_fallthru
          _
        // Predicated region
        $region53: #{deepdta_forward.1} parent=11 // pred_check
          %p672 = pneg %p322
        $region54: #{deepdta_forward.1} parent=11 // pred_check_branch
          %674 = sbr.rel (%p672) target = $region56
        $region55: #{deepdta_forward.1} parent=11 // pred_region
          %s676 = ssub.s32 16384, 16384
          %677 = vsyncadd [#allocation17], %s676
          %s678 = sshll.u32 [#allocation18], 4
          %s679 = int_to_ptr.vmem [resolvable:$true] %s678
          %684 = dma.hbm_to_vmem [thread:$0]  %s12, 16384, %s679, [#allocation17], 128, 128, 8
        $region56: #{deepdta_forward.1} parent=11 // pred_fallthru
          _
        // Predicated region
        $region57: #{deepdta_forward.1} parent=11 // pred_check
          %p685 = pneg %p343
        $region58: #{deepdta_forward.1} parent=11 // pred_check_branch
          %687 = sbr.rel (%p685) target = $region60
        $region59: #{deepdta_forward.1} parent=11 // pred_region
          %s689 = ssub.s32 16, 16
          %690 = vsyncadd [#allocation20], %s689
          %s692 = sshll.u32 [#allocation19], 4
          %s693 = int_to_ptr.vmem [resolvable:$true] %s692
          %695 = dma.hbm_to_vmem [thread:$0]  %s13, 16, %s693, [#allocation20]
        $region60: #{deepdta_forward.1} parent=11 // pred_fallthru
          _
        // Predicated region
        $region61: #{deepdta_forward.1} parent=11 // pred_check
          %p696 = pneg %p364
        $region62: #{deepdta_forward.1} parent=11 // pred_check_branch
          %698 = sbr.rel (%p696) target = $region64
        $region63: #{deepdta_forward.1} parent=11 // pred_region
          %s700 = ssub.s32 16384, 16384
          %701 = vsyncadd [#allocation20], %s700
          %s702 = sshll.u32 [#allocation21], 4
          %s703 = int_to_ptr.vmem [resolvable:$true] %s702
          %708 = dma.hbm_to_vmem [thread:$0]  %s14, 16384, %s703, [#allocation20], 512, 512, 32
        $region64: #{deepdta_forward.1} parent=11 // pred_fallthru
          _
        // Predicated region
        $region65: #{deepdta_forward.1} parent=11 // pred_check
          %p709 = pneg %p385
        $region66: #{deepdta_forward.1} parent=11 // pred_check_branch
          %711 = sbr.rel (%p709) target = $region68
        $region67: #{deepdta_forward.1} parent=11 // pred_region
          %s713 = ssub.s32 128, 128
          %714 = vsyncadd [#allocation23], %s713
          %s716 = sshll.u32 [#allocation22], 4
          %s717 = int_to_ptr.vmem [resolvable:$true] %s716
          %719 = dma.hbm_to_vmem [thread:$0]  %s15, 128, %s717, [#allocation23]
        $region68: #{deepdta_forward.1} parent=11 // pred_fallthru
          _
        // Predicated region
        $region69: #{deepdta_forward.1} parent=11 // pred_check
          %p720 = pneg %p406
        $region70: #{deepdta_forward.1} parent=11 // pred_check_branch
          %722 = sbr.rel (%p720) target = $region72
        $region71: #{deepdta_forward.1} parent=11 // pred_region
          %s724 = ssub.s32 65536, 65536
          %725 = vsyncadd [#allocation23], %s724
          %s726 = sshll.u32 [#allocation24], 4
          %s727 = int_to_ptr.vmem [resolvable:$true] %s726
          %732 = dma.hbm_to_vmem [thread:$0]  %s16, 65536, %s727, [#allocation23], 512, 512, 32
        $region72: #{deepdta_forward.1} parent=11 // pred_fallthru
          _
        // Predicated region
        $region73: #{deepdta_forward.1} parent=11 // pred_check
          %p733 = pneg %p427
        $region74: #{deepdta_forward.1} parent=11 // pred_check_branch
          %735 = sbr.rel (%p733) target = $region76
        $region75: #{deepdta_forward.1} parent=11 // pred_region
          %s737 = ssub.s32 128, 128
          %738 = vsyncadd [#allocation26], %s737
          %s740 = sshll.u32 [#allocation25], 4
          %s741 = int_to_ptr.vmem [resolvable:$true] %s740
          %743 = dma.hbm_to_vmem [thread:$0]  %s17, 128, %s741, [#allocation26]
        $region76: #{deepdta_forward.1} parent=11 // pred_fallthru
          _
        // Predicated region
        $region77: #{deepdta_forward.1} parent=11 // pred_check
          %p744 = pneg %p448
        $region78: #{deepdta_forward.1} parent=11 // pred_check_branch
          %746 = sbr.rel (%p744) target = $region80
        $region79: #{deepdta_forward.1} parent=11 // pred_region
          %s748 = ssub.s32 32768, 32768
          %749 = vsyncadd [#allocation26], %s748
          %s750 = sshll.u32 [#allocation27], 4
          %s751 = int_to_ptr.vmem [resolvable:$true] %s750
          %756 = dma.hbm_to_vmem [thread:$0]  %s18, 32768, %s751, [#allocation26], 256, 256, 16
        $region80: #{deepdta_forward.1} parent=11 // pred_fallthru
          _
        // Predicated region
        $region81: #{deepdta_forward.1} parent=11 // pred_check
          %p757 = pneg %p469
        $region82: #{deepdta_forward.1} parent=11 // pred_check_branch
          %759 = sbr.rel (%p757) target = $region84
        $region83: #{deepdta_forward.1} parent=11 // pred_region
          %s761 = ssub.s32 64, 64
          %762 = vsyncadd [#allocation29], %s761
          %s764 = sshll.u32 [#allocation28], 4
          %s765 = int_to_ptr.vmem [resolvable:$true] %s764
          %767 = dma.hbm_to_vmem [thread:$0]  %s19, 64, %s765, [#allocation29]
        $region84: #{deepdta_forward.1} parent=11 // pred_fallthru
          _
        // Predicated region
        $region85: #{deepdta_forward.1} parent=11 // pred_check
          %p768 = pneg %p490
        $region86: #{deepdta_forward.1} parent=11 // pred_check_branch
          %770 = sbr.rel (%p768) target = $region88
        $region87: #{deepdta_forward.1} parent=11 // pred_region
          %s772 = ssub.s32 4096, 4096
          %773 = vsyncadd [#allocation29], %s772
          %s774 = sshll.u32 [#allocation30], 4
          %s775 = int_to_ptr.vmem [resolvable:$true] %s774
          %780 = dma.hbm_to_vmem [thread:$0]  %s20, 4096, %s775, [#allocation29], 64, 64, 4
        $region88: #{deepdta_forward.1} parent=11 // pred_fallthru
          _
        // Predicated region
        $region89: #{deepdta_forward.1} parent=11 // pred_check
          %p781 = pneg %p511
        $region90: #{deepdta_forward.1} parent=11 // pred_check_branch
          %783 = sbr.rel (%p781) target = $region92
        $region91: #{deepdta_forward.1} parent=11 // pred_region
          %s785 = ssub.s32 16, 16
          %786 = vsyncadd [#allocation32], %s785
          %s788 = sshll.u32 [#allocation31], 4
          %s789 = int_to_ptr.vmem [resolvable:$true] %s788
          %791 = dma.hbm_to_vmem [thread:$0]  %s21, 16, %s789, [#allocation32]
        $region92: #{deepdta_forward.1} parent=11 // pred_fallthru
          _
      $region12: #{deepdta_forward.1} parent=5 // pred_fallthru
        _
      %p792 = scmp.lt.s32.totalorder %s39, 2
      // Predicated region
      $region93: #{deepdta_forward.1} parent=5 // pred_check
        %p793 = pneg %p792
      $region94: #{deepdta_forward.1} parent=5 // pred_check_branch
        %795 = sbr.rel (%p793) target = $region96
      $region95: #{deepdta_forward.1} parent=5 // pred_region
        // Predicated region
        $region97: #{deepdta_forward.1} parent=95 // pred_check
          %p796 = pneg %p59
        $region98: #{deepdta_forward.1} parent=95 // pred_check_branch
          %798 = sbr.rel (%p796) target = $region100
        $region99: #{deepdta_forward.1} parent=95 // pred_region
          %p799 = scmp.lt.s32.totalorder %s39, 1
          %s800 = scalar_select %p799, %s39, 1
          %s801 = smul.addr %s800, 4
          %s802 = smul.addr %s801, 8
          %s803 = scalar_lea.vmem %s0, %s802
        $region100: #{deepdta_forward.1} parent=95 // pred_fallthru
          _
        // Predicated region
        $region101: #{deepdta_forward.1} parent=95 // pred_check
          %p804 = pneg %p85
        $region102: #{deepdta_forward.1} parent=95 // pred_check_branch
          %806 = sbr.rel (%p804) target = $region104
        $region103: #{deepdta_forward.1} parent=95 // pred_region
          %p807 = scmp.lt.s32.totalorder %s39, 1
          %s808 = scalar_select %p807, %s39, 1
          %s809 = smul.addr %s808, 8
          %s810 = smul.addr %s809, 8
          %s811 = scalar_lea.vmem %s1, %s810
        $region104: #{deepdta_forward.1} parent=95 // pred_fallthru
          _
      $region96: #{deepdta_forward.1} parent=5 // pred_fallthru
        _
      %p812 = scmp.le.s32.totalorder 1, %s39
      %p813 = scmp.lt.s32.totalorder %s39, 3
      %p814 = pnand %p812, %p813
      %p815 = pneg %p814
      // Predicated region
      $region105: #{deepdta_forward.1} parent=5 // pred_check
        _
      $region106: #{deepdta_forward.1} parent=5 // pred_check_branch
        %817 = sbr.rel (%p814) target = $region108
      $region107: #{deepdta_forward.1} parent=5 // pred_region
        %s818 = ssub.s32 %s39, 1
        // Predicated region
        $region109: #{deepdta_forward.1} parent=107 // pred_check
          %p819 = pneg %p112
        $region110: #{deepdta_forward.1} parent=107 // pred_check_branch
          %821 = sbr.rel (%p819) target = $region112
        $region111: #{deepdta_forward.1} parent=107 // pred_region
          %822 = dma.done [#allocation3], 8192
        $region112: #{deepdta_forward.1} parent=107 // pred_fallthru
          _
        // Predicated region
        $region113: #{deepdta_forward.1} parent=107 // pred_check
          %p823 = pneg %p133
        $region114: #{deepdta_forward.1} parent=107 // pred_check_branch
          %825 = sbr.rel (%p823) target = $region116
        $region115: #{deepdta_forward.1} parent=107 // pred_region
          %826 = dma.done [#allocation5], 16
        $region116: #{deepdta_forward.1} parent=107 // pred_fallthru
          _
        // Predicated region
        $region117: #{deepdta_forward.1} parent=107 // pred_check
          %p827 = pneg %p154
        $region118: #{deepdta_forward.1} parent=107 // pred_check_branch
          %829 = sbr.rel (%p827) target = $region120
        $region119: #{deepdta_forward.1} parent=107 // pred_region
          %830 = dma.done [#allocation5], 8192
        $region120: #{deepdta_forward.1} parent=107 // pred_fallthru
          _
        // Predicated region
        $region121: #{deepdta_forward.1} parent=107 // pred_check
          %p831 = pneg %p175
        $region122: #{deepdta_forward.1} parent=107 // pred_check_branch
          %833 = sbr.rel (%p831) target = $region124
        $region123: #{deepdta_forward.1} parent=107 // pred_region
          %834 = dma.done [#allocation8], 16
        $region124: #{deepdta_forward.1} parent=107 // pred_fallthru
          _
        // Predicated region
        $region125: #{deepdta_forward.1} parent=107 // pred_check
          %p835 = pneg %p196
        $region126: #{deepdta_forward.1} parent=107 // pred_check_branch
          %837 = sbr.rel (%p835) target = $region128
        $region127: #{deepdta_forward.1} parent=107 // pred_region
          %838 = dma.done [#allocation8], 8192
        $region128: #{deepdta_forward.1} parent=107 // pred_fallthru
          _
        // Predicated region
        $region129: #{deepdta_forward.1} parent=107 // pred_check
          %p839 = pneg %p217
        $region130: #{deepdta_forward.1} parent=107 // pred_check_branch
          %841 = sbr.rel (%p839) target = $region132
        $region131: #{deepdta_forward.1} parent=107 // pred_region
          %842 = dma.done [#allocation11], 16
        $region132: #{deepdta_forward.1} parent=107 // pred_fallthru
          _
        // Predicated region
        $region133: #{deepdta_forward.1} parent=107 // pred_check
          %p843 = pneg %p238
        $region134: #{deepdta_forward.1} parent=107 // pred_check_branch
          %845 = sbr.rel (%p843) target = $region136
        $region135: #{deepdta_forward.1} parent=107 // pred_region
          %846 = dma.done [#allocation11], 16384
        $region136: #{deepdta_forward.1} parent=107 // pred_fallthru
          _
        // Predicated region
        $region137: #{deepdta_forward.1} parent=107 // pred_check
          %p847 = pneg %p259
        $region138: #{deepdta_forward.1} parent=107 // pred_check_branch
          %849 = sbr.rel (%p847) target = $region140
        $region139: #{deepdta_forward.1} parent=107 // pred_region
          %850 = dma.done [#allocation14], 16
        $region140: #{deepdta_forward.1} parent=107 // pred_fallthru
          _
        // Predicated region
        $region141: #{deepdta_forward.1} parent=107 // pred_check
          %p851 = pneg %p280
        $region142: #{deepdta_forward.1} parent=107 // pred_check_branch
          %853 = sbr.rel (%p851) target = $region144
        $region143: #{deepdta_forward.1} parent=107 // pred_region
          %854 = dma.done [#allocation14], 16384
        $region144: #{deepdta_forward.1} parent=107 // pred_fallthru
          _
        // Predicated region
        $region145: #{deepdta_forward.1} parent=107 // pred_check
          %p855 = pneg %p301
        $region146: #{deepdta_forward.1} parent=107 // pred_check_branch
          %857 = sbr.rel (%p855) target = $region148
        $region147: #{deepdta_forward.1} parent=107 // pred_region
          %858 = dma.done [#allocation17], 16
        $region148: #{deepdta_forward.1} parent=107 // pred_fallthru
          _
        // Predicated region
        $region149: #{deepdta_forward.1} parent=107 // pred_check
          %p859 = pneg %p322
        $region150: #{deepdta_forward.1} parent=107 // pred_check_branch
          %861 = sbr.rel (%p859) target = $region152
        $region151: #{deepdta_forward.1} parent=107 // pred_region
          %862 = dma.done [#allocation17], 16384
        $region152: #{deepdta_forward.1} parent=107 // pred_fallthru
          _
        // Predicated region
        $region153: #{deepdta_forward.1} parent=107 // pred_check
          %p863 = pneg %p343
        $region154: #{deepdta_forward.1} parent=107 // pred_check_branch
          %865 = sbr.rel (%p863) target = $region156
        $region155: #{deepdta_forward.1} parent=107 // pred_region
          %866 = dma.done [#allocation20], 16
        $region156: #{deepdta_forward.1} parent=107 // pred_fallthru
          _
        // Predicated region
        $region157: #{deepdta_forward.1} parent=107 // pred_check
          %p867 = pneg %p364
        $region158: #{deepdta_forward.1} parent=107 // pred_check_branch
          %869 = sbr.rel (%p867) target = $region160
        $region159: #{deepdta_forward.1} parent=107 // pred_region
          %870 = dma.done [#allocation20], 16384
        $region160: #{deepdta_forward.1} parent=107 // pred_fallthru
          _
        // Predicated region
        $region161: #{deepdta_forward.1} parent=107 // pred_check
          %p871 = pneg %p385
        $region162: #{deepdta_forward.1} parent=107 // pred_check_branch
          %873 = sbr.rel (%p871) target = $region164
        $region163: #{deepdta_forward.1} parent=107 // pred_region
          %874 = dma.done [#allocation23], 128
        $region164: #{deepdta_forward.1} parent=107 // pred_fallthru
          _
        // Predicated region
        $region165: #{deepdta_forward.1} parent=107 // pred_check
          %p875 = pneg %p406
        $region166: #{deepdta_forward.1} parent=107 // pred_check_branch
          %877 = sbr.rel (%p875) target = $region168
        $region167: #{deepdta_forward.1} parent=107 // pred_region
          %878 = dma.done [#allocation23], 65536
        $region168: #{deepdta_forward.1} parent=107 // pred_fallthru
          _
        // Predicated region
        $region169: #{deepdta_forward.1} parent=107 // pred_check
          %p879 = pneg %p427
        $region170: #{deepdta_forward.1} parent=107 // pred_check_branch
          %881 = sbr.rel (%p879) target = $region172
        $region171: #{deepdta_forward.1} parent=107 // pred_region
          %882 = dma.done [#allocation26], 128
        $region172: #{deepdta_forward.1} parent=107 // pred_fallthru
          _
        // Predicated region
        $region173: #{deepdta_forward.1} parent=107 // pred_check
          %p883 = pneg %p448
        $region174: #{deepdta_forward.1} parent=107 // pred_check_branch
          %885 = sbr.rel (%p883) target = $region176
        $region175: #{deepdta_forward.1} parent=107 // pred_region
          %886 = dma.done [#allocation26], 32768
        $region176: #{deepdta_forward.1} parent=107 // pred_fallthru
          _
        // Predicated region
        $region177: #{deepdta_forward.1} parent=107 // pred_check
          %p887 = pneg %p469
        $region178: #{deepdta_forward.1} parent=107 // pred_check_branch
          %889 = sbr.rel (%p887) target = $region180
        $region179: #{deepdta_forward.1} parent=107 // pred_region
          %890 = dma.done [#allocation29], 64
        $region180: #{deepdta_forward.1} parent=107 // pred_fallthru
          _
        // Predicated region
        $region181: #{deepdta_forward.1} parent=107 // pred_check
          %p891 = pneg %p490
        $region182: #{deepdta_forward.1} parent=107 // pred_check_branch
          %893 = sbr.rel (%p891) target = $region184
        $region183: #{deepdta_forward.1} parent=107 // pred_region
          %894 = dma.done [#allocation29], 4096
        $region184: #{deepdta_forward.1} parent=107 // pred_fallthru
          _
        // Predicated region
        $region185: #{deepdta_forward.1} parent=107 // pred_check
          %p895 = pneg %p511
        $region186: #{deepdta_forward.1} parent=107 // pred_check_branch
          %897 = sbr.rel (%p895) target = $region188
        $region187: #{deepdta_forward.1} parent=107 // pred_region
          %898 = dma.done [#allocation32], 16
        $region188: #{deepdta_forward.1} parent=107 // pred_fallthru
          _
        %p899 = scmp.lt.s32.totalorder %s44, 1
        %s900 = scalar_select %p899, %s44, 1
        %s901 = smul.addr %s900, 4
        %s902 = smul.addr %s901, 8
        %s903 = scalar_lea.vmem %s0, %s902
        %p904 = pneg %p65
        %p905 = pneg %p62
        %p906 = scmp.lt.s32.totalorder %s44, 1
        %s907 = scalar_select %p906, %s44, 1
        %s908 = smul.addr %s907, 8
        %s909 = smul.addr %s908, 8
        %s910 = scalar_lea.vmem %s1, %s909
        %p911 = pneg %p91
        %p912 = pneg %p88
        %p913 = pneg %p112
        %p914 = pneg %p109
        %p915 = pneg %p133
        %p916 = pneg %p130
        %p917 = pneg %p154
        %p918 = pneg %p151
        %p919 = pneg %p175
        %p920 = pneg %p172
        %p921 = pneg %p196
        %p922 = pneg %p193
        %p923 = pneg %p217
        %p924 = pneg %p214
        %p925 = pneg %p238
        %p926 = pneg %p235
        %p927 = pneg %p259
        %p928 = pneg %p256
        %p929 = pneg %p280
        %p930 = pneg %p277
        %p931 = pneg %p301
        %p932 = pneg %p298
        %p933 = pneg %p322
        %p934 = pneg %p319
        %p935 = pneg %p343
        %p936 = pneg %p340
        %p937 = pneg %p364
        %p938 = pneg %p361
        %p939 = pneg %p385
        %p940 = pneg %p382
        %p941 = pneg %p406
        %p942 = pneg %p403
        %p943 = pneg %p427
        %p944 = pneg %p424
        %p945 = pneg %p448
        %p946 = pneg %p445
        %p947 = pneg %p469
        %p948 = pneg %p466
        %p949 = pneg %p490
        %p950 = pneg %p487
        %p951 = pneg %p511
        %p952 = pneg %p508
        %p953 = pneg %p537
        %p954 = pneg %p534
        %p955 = scmp.lt.s32.totalorder %s44, 1
        %s956 = scalar_select %p955, %s44, 1
        %s957 = scalar_lea.vmem %s22, %s956
        %p958 = scmp.lt.s32.totalorder %s44, 1
        %s959 = scalar_select %p958, %s44, 1
        %s960 = smul.addr %s959, 4
        %s961 = smul.addr %s960, 8
        %s962 = scalar_lea.vmem %s0, %s961
        %p963 = scmp.lt.s32.totalorder %s44, 1
        %s964 = scalar_select %p963, %s44, 1
        %s965 = smul.addr %s964, 8
        %s966 = smul.addr %s965, 8
        %s967 = scalar_lea.vmem %s1, %s966
        %p968 = scmp.lt.s32.totalorder %s44, 1
        %s969 = scalar_select %p968, %s44, 1
        %s970 = scalar_lea.vmem %s22, %s969
        %v972 = vld [vmem:[%s962] sm:$0xff]
        %v973 = vld [vmem:[%s962 + $0x8] sm:$0xff]
        %v974 = vld [vmem:[%s962 + $0x10] sm:$0xff]
        %v975 = vld [vmem:[%s962 + $0x18] sm:$0xff]
        %vm980 = vcmask 1046528
        %v981 = vrot.slane %v972, 1
        %v982 = vrot.slane %v973, 1
        %v983 = vsel %vm980, %v981, %v982
        %v984 = vrot.slane %v974, 1
        %v985 = vsel %vm980, %v982, %v984
        %v986 = vrot.slane %v975, 1
        %v987 = vsel %vm980, %v984, %v986
        %vm992 = vcmask 1045504
        %v993 = vrot.slane %v972, 2
        %v994 = vrot.slane %v973, 2
        %v995 = vsel %vm992, %v993, %v994
        %v996 = vrot.slane %v974, 2
        %v997 = vsel %vm992, %v994, %v996
        %v998 = vrot.slane %v975, 2
        %v999 = vsel %vm992, %v996, %v998
        %vm1004 = vcmask 1044480
        %v1005 = vrot.slane %v972, 3
        %v1006 = vrot.slane %v973, 3
        %v1007 = vsel %vm1004, %v1005, %v1006
        %v1008 = vrot.slane %v974, 3
        %v1009 = vsel %vm1004, %v1006, %v1008
        %v1010 = vrot.slane %v975, 3
        %v1011 = vsel %vm1004, %v1008, %v1010
        %v1016 = vld [vmem:[#allocation2] sm:$0xff]
        %v1017 = vld [vmem:[#allocation2 + $0x8] sm:$0xff]
        %v1018 = vld [vmem:[#allocation2 + $0x10] sm:$0xff]
        %v1019 = vld [vmem:[#allocation2 + $0x18] sm:$0xff]
        %v1020 = vld [vmem:[#allocation2 + $0x20] sm:$0xff]
        %v1021 = vld [vmem:[#allocation2 + $0x28] sm:$0xff]
        %v1022 = vld [vmem:[#allocation2 + $0x30] sm:$0xff]
        %v1023 = vld [vmem:[#allocation2 + $0x38] sm:$0xff]
        %v1024 = vld [vmem:[#allocation2 + $0x40] sm:$0xff]
        %v1025 = vld [vmem:[#allocation2 + $0x48] sm:$0xff]
        %v1026 = vld [vmem:[#allocation2 + $0x50] sm:$0xff]
        %v1027 = vld [vmem:[#allocation2 + $0x58] sm:$0xff]
        %v1028 = vld [vmem:[#allocation2 + $0x60] sm:$0xff]
        %v1029 = vld [vmem:[#allocation2 + $0x68] sm:$0xff]
        %v1030 = vld [vmem:[#allocation2 + $0x70] sm:$0xff]
        %v1031 = vld [vmem:[#allocation2 + $0x78] sm:$0xff]
        %v1032 = vld [vmem:[#allocation2 + $0x80] sm:$0xff]
        %v1033 = vld [vmem:[#allocation2 + $0x88] sm:$0xff]
        %v1034 = vld [vmem:[#allocation2 + $0x90] sm:$0xff]
        %v1035 = vld [vmem:[#allocation2 + $0x98] sm:$0xff]
        %v1036 = vld [vmem:[#allocation2 + $0xa0] sm:$0xff]
        %v1037 = vld [vmem:[#allocation2 + $0xa8] sm:$0xff]
        %v1038 = vld [vmem:[#allocation2 + $0xb0] sm:$0xff]
        %v1039 = vld [vmem:[#allocation2 + $0xb8] sm:$0xff]
        %v1040 = vld [vmem:[#allocation2 + $0xc0] sm:$0xff]
        %v1041 = vld [vmem:[#allocation2 + $0xc8] sm:$0xff]
        %v1042 = vld [vmem:[#allocation2 + $0xd0] sm:$0xff]
        %v1043 = vld [vmem:[#allocation2 + $0xd8] sm:$0xff]
        %v1044 = vld [vmem:[#allocation2 + $0xe0] sm:$0xff]
        %v1045 = vld [vmem:[#allocation2 + $0xe8] sm:$0xff]
        %v1046 = vld [vmem:[#allocation2 + $0xf0] sm:$0xff]
        %v1047 = vld [vmem:[#allocation2 + $0xf8] sm:$0xff]
        %v1048 = vld [vmem:[#allocation2 + $0x100] sm:$0xff]
        %v1049 = vld [vmem:[#allocation2 + $0x108] sm:$0xff]
        %v1050 = vld [vmem:[#allocation2 + $0x110] sm:$0xff]
        %v1051 = vld [vmem:[#allocation2 + $0x118] sm:$0xff]
        %v1052 = vld [vmem:[#allocation2 + $0x120] sm:$0xff]
        %v1053 = vld [vmem:[#allocation2 + $0x128] sm:$0xff]
        %v1054 = vld [vmem:[#allocation2 + $0x130] sm:$0xff]
        %v1055 = vld [vmem:[#allocation2 + $0x138] sm:$0xff]
        %v1056 = vld [vmem:[#allocation2 + $0x140] sm:$0xff]
        %v1057 = vld [vmem:[#allocation2 + $0x148] sm:$0xff]
        %v1058 = vld [vmem:[#allocation2 + $0x150] sm:$0xff]
        %v1059 = vld [vmem:[#allocation2 + $0x158] sm:$0xff]
        %v1060 = vld [vmem:[#allocation2 + $0x160] sm:$0xff]
        %v1061 = vld [vmem:[#allocation2 + $0x168] sm:$0xff]
        %v1062 = vld [vmem:[#allocation2 + $0x170] sm:$0xff]
        %v1063 = vld [vmem:[#allocation2 + $0x178] sm:$0xff]
        %v1064 = vld [vmem:[#allocation2 + $0x180] sm:$0xff]
        %v1065 = vld [vmem:[#allocation2 + $0x188] sm:$0xff]
        %v1066 = vld [vmem:[#allocation2 + $0x190] sm:$0xff]
        %v1067 = vld [vmem:[#allocation2 + $0x198] sm:$0xff]
        %v1068 = vld [vmem:[#allocation2 + $0x1a0] sm:$0xff]
        %v1069 = vld [vmem:[#allocation2 + $0x1a8] sm:$0xff]
        %v1070 = vld [vmem:[#allocation2 + $0x1b0] sm:$0xff]
        %v1071 = vld [vmem:[#allocation2 + $0x1b8] sm:$0xff]
        %v1072 = vld [vmem:[#allocation2 + $0x1c0] sm:$0xff]
        %v1073 = vld [vmem:[#allocation2 + $0x1c8] sm:$0xff]
        %v1074 = vld [vmem:[#allocation2 + $0x1d0] sm:$0xff]
        %v1075 = vld [vmem:[#allocation2 + $0x1d8] sm:$0xff]
        %v1076 = vld [vmem:[#allocation2 + $0x1e0] sm:$0xff]
        %v1077 = vld [vmem:[#allocation2 + $0x1e8] sm:$0xff]
        %v1078 = vld [vmem:[#allocation2 + $0x1f0] sm:$0xff]
        %v1079 = vld [vmem:[#allocation2 + $0x1f8] sm:$0xff]
        %v1080 = vld [vmem:[#allocation4] sm:$0x1]
        %v1082 = vlaneseq
        %v1083 = vshrl.u32 %v1082, 7
        %v1084 = vsub.s32 0, %v1083
        %v1085 = vrot.slane %v1080, %v1084
        %1087 = vmatprep.subr.mxu0 0.0
        %1088 = vmatpush1.msra.mxu0 %v1031
        %1089 = vmatprep.subr.mxu0 0.0
        %1090 = vmatpush1.msra.mxu0 %v1030
        %1091 = vmatprep.subr.mxu0 0.0
        %1092 = vmatpush1.msra.mxu0 %v1029
        %1093 = vmatprep.subr.mxu0 0.0
        %1094 = vmatpush1.msra.mxu0 %v1028
        %1095 = vmatprep.subr.mxu0 0.0
        %1096 = vmatpush1.msra.mxu0 %v1027
        %1097 = vmatprep.subr.mxu0 0.0
        %1098 = vmatpush1.msra.mxu0 %v1026
        %1099 = vmatprep.subr.mxu0 0.0
        %1100 = vmatpush1.msra.mxu0 %v1025
        %1101 = vmatprep.subr.mxu0 0.0
        %1102 = vmatpush1.msra.mxu0 %v1024
        %1103 = vmatprep.subr.mxu0 0.0
        %1104 = vmatpush1.msra.mxu0 %v1023
        %1105 = vmatprep.subr.mxu0 0.0
        %1106 = vmatpush1.msra.mxu0 %v1022
        %1107 = vmatprep.subr.mxu0 0.0
        %1108 = vmatpush1.msra.mxu0 %v1021
        %1109 = vmatprep.subr.mxu0 0.0
        %1110 = vmatpush1.msra.mxu0 %v1020
        %1111 = vmatprep.subr.mxu0 0.0
        %1112 = vmatpush1.msra.mxu0 %v1019
        %1113 = vmatprep.subr.mxu0 0.0
        %1114 = vmatpush1.msra.mxu0 %v1018
        %1115 = vmatprep.subr.mxu0 0.0
        %1116 = vmatpush1.msra.mxu0 %v1017
        %1117 = vmatprep.subr.mxu0 0.0
        %1118 = vmatpush1.msra.mxu0 %v1016
        %1119 = vmatprep.subr.mxu0 0.0
        %1120 = vmatpush2.msra.mxu0 %v1047
        %1121 = vmatprep.subr.mxu0 0.0
        %1122 = vmatpush2.msra.mxu0 %v1046
        %1123 = vmatprep.subr.mxu0 0.0
        %1124 = vmatpush2.msra.mxu0 %v1045
        %1125 = vmatprep.subr.mxu0 0.0
        %1126 = vmatpush2.msra.mxu0 %v1044
        %1127 = vmatprep.subr.mxu0 0.0
        %1128 = vmatpush2.msra.mxu0 %v1043
        %1129 = vmatprep.subr.mxu0 0.0
        %1130 = vmatpush2.msra.mxu0 %v1042
        %1131 = vmatprep.subr.mxu0 0.0
        %1132 = vmatpush2.msra.mxu0 %v1041
        %1133 = vmatprep.subr.mxu0 0.0
        %1134 = vmatpush2.msra.mxu0 %v1040
        %1135 = vmatprep.subr.mxu0 0.0
        %1136 = vmatpush2.msra.mxu0 %v1039
        %1137 = vmatprep.subr.mxu0 0.0
        %1138 = vmatpush2.msra.mxu0 %v1038
        %1139 = vmatprep.subr.mxu0 0.0
        %1140 = vmatpush2.msra.mxu0 %v1037
        %1141 = vmatprep.subr.mxu0 0.0
        %1142 = vmatpush2.msra.mxu0 %v1036
        %1143 = vmatprep.subr.mxu0 0.0
        %1144 = vmatpush2.msra.mxu0 %v1035
        %1145 = vmatprep.subr.mxu0 0.0
        %1146 = vmatpush2.msra.mxu0 %v1034
        %1147 = vmatprep.subr.mxu0 0.0
        %1148 = vmatpush2.msra.mxu0 %v1033
        %1149 = vmatprep.subr.mxu0 0.0
        %1150 = vmatpush2.msra.mxu0 %v1032
        %1151 = vmatprep.mubr.f32.mxu0 %v983
        %1152 = vmatmul.mubr.f32.gmra.mxu0 %v972
        %v1153 = vpop.f32.mrf.mxu0
        %v1154 = vadd.f32 %v1085, %v1153
        %v1155 = vpop.f32.mrf.mxu0
        %1156 = vmatprep.mubr.f32.mxu0 %v985
        %1157 = vmatmul.mubr.f32.gmra.mxu0 %v973
        %v1158 = vpop.f32.mrf.mxu0
        %v1159 = vadd.f32 %v1085, %v1158
        %v1160 = vpop.f32.mrf.mxu0
        %1161 = vmatprep.mubr.f32.mxu0 %v987
        %1162 = vmatmul.mubr.f32.gmra.mxu0 %v974
        %v1163 = vpop.f32.mrf.mxu0
        %v1164 = vadd.f32 %v1085, %v1163
        %v1165 = vpop.f32.mrf.mxu0
        %1166 = vmatprep.mubr.f32.mxu0 %v986
        %1167 = vmatmul.mubr.f32.gmra.mxu0 %v975
        %v1168 = vpop.f32.mrf.mxu0
        %v1169 = vadd.f32 %v1085, %v1168
        %v1170 = vpop.f32.mrf.mxu0
        %1171 = vdwg.mxu0
        %1172 = vmatprep.subr.mxu0 0.0
        %1173 = vmatpush1.msra.mxu0 %v1063
        %1174 = vmatprep.subr.mxu0 0.0
        %1175 = vmatpush1.msra.mxu0 %v1062
        %1176 = vmatprep.subr.mxu0 0.0
        %1177 = vmatpush1.msra.mxu0 %v1061
        %1178 = vmatprep.subr.mxu0 0.0
        %1179 = vmatpush1.msra.mxu0 %v1060
        %1180 = vmatprep.subr.mxu0 0.0
        %1181 = vmatpush1.msra.mxu0 %v1059
        %1182 = vmatprep.subr.mxu0 0.0
        %1183 = vmatpush1.msra.mxu0 %v1058
        %1184 = vmatprep.subr.mxu0 0.0
        %1185 = vmatpush1.msra.mxu0 %v1057
        %1186 = vmatprep.subr.mxu0 0.0
        %1187 = vmatpush1.msra.mxu0 %v1056
        %1188 = vmatprep.subr.mxu0 0.0
        %1189 = vmatpush1.msra.mxu0 %v1055
        %1190 = vmatprep.subr.mxu0 0.0
        %1191 = vmatpush1.msra.mxu0 %v1054
        %1192 = vmatprep.subr.mxu0 0.0
        %1193 = vmatpush1.msra.mxu0 %v1053
        %1194 = vmatprep.subr.mxu0 0.0
        %1195 = vmatpush1.msra.mxu0 %v1052
        %1196 = vmatprep.subr.mxu0 0.0
        %1197 = vmatpush1.msra.mxu0 %v1051
        %1198 = vmatprep.subr.mxu0 0.0
        %1199 = vmatpush1.msra.mxu0 %v1050
        %1200 = vmatprep.subr.mxu0 0.0
        %1201 = vmatpush1.msra.mxu0 %v1049
        %1202 = vmatprep.subr.mxu0 0.0
        %1203 = vmatpush1.msra.mxu0 %v1048
        %1204 = vmatprep.subr.mxu0 0.0
        %1205 = vmatpush2.msra.mxu0 %v1079
        %1206 = vmatprep.subr.mxu0 0.0
        %1207 = vmatpush2.msra.mxu0 %v1078
        %1208 = vmatprep.subr.mxu0 0.0
        %1209 = vmatpush2.msra.mxu0 %v1077
        %1210 = vmatprep.subr.mxu0 0.0
        %1211 = vmatpush2.msra.mxu0 %v1076
        %1212 = vmatprep.subr.mxu0 0.0
        %1213 = vmatpush2.msra.mxu0 %v1075
        %1214 = vmatprep.subr.mxu0 0.0
        %1215 = vmatpush2.msra.mxu0 %v1074
        %1216 = vmatprep.subr.mxu0 0.0
        %1217 = vmatpush2.msra.mxu0 %v1073
        %1218 = vmatprep.subr.mxu0 0.0
        %1219 = vmatpush2.msra.mxu0 %v1072
        %1220 = vmatprep.subr.mxu0 0.0
        %1221 = vmatpush2.msra.mxu0 %v1071
        %1222 = vmatprep.subr.mxu0 0.0
        %1223 = vmatpush2.msra.mxu0 %v1070
        %1224 = vmatprep.subr.mxu0 0.0
        %1225 = vmatpush2.msra.mxu0 %v1069
        %1226 = vmatprep.subr.mxu0 0.0
        %1227 = vmatpush2.msra.mxu0 %v1068
        %1228 = vmatprep.subr.mxu0 0.0
        %1229 = vmatpush2.msra.mxu0 %v1067
        %1230 = vmatprep.subr.mxu0 0.0
        %1231 = vmatpush2.msra.mxu0 %v1066
        %1232 = vmatprep.subr.mxu0 0.0
        %1233 = vmatpush2.msra.mxu0 %v1065
        %1234 = vmatprep.subr.mxu0 0.0
        %1235 = vmatpush2.msra.mxu0 %v1064
        %1236 = vmatprep.mubr.f32.mxu0 %v1007
        %1237 = vmatmul.mubr.f32.gmra.mxu0 %v995
        %v1238 = vpop.f32.mrf.mxu0
        %v1239 = vadd.f32 %v1154, %v1238
        %v1240 = vpop.f32.mrf.mxu0
        %1241 = vmatprep.mubr.f32.mxu0 %v1009
        %1242 = vmatmul.mubr.f32.gmra.mxu0 %v997
        %v1243 = vpop.f32.mrf.mxu0
        %v1244 = vadd.f32 %v1159, %v1243
        %v1245 = vpop.f32.mrf.mxu0
        %1246 = vmatprep.mubr.f32.mxu0 %v1011
        %1247 = vmatmul.mubr.f32.gmra.mxu0 %v999
        %v1248 = vpop.f32.mrf.mxu0
        %v1249 = vadd.f32 %v1164, %v1248
        %v1250 = vpop.f32.mrf.mxu0
        %1251 = vmatprep.mubr.f32.mxu0 %v1010
        %1252 = vmatmul.mubr.f32.gmra.mxu0 %v998
        %v1253 = vpop.f32.mrf.mxu0
        %v1254 = vadd.f32 %v1169, %v1253
        %v1255 = vpop.f32.mrf.mxu0
        %1256 = vdwg.mxu0
        %v1257 = vmax.f32 %v1239, 0.0
        %v1258 = vmax.f32 %v1244, 0.0
        %v1259 = vmax.f32 %v1249, 0.0
        %v1260 = vmax.f32 %v1254, 0.0
        %v1265 = vrot.slane %v1257, 1
        %v1266 = vrot.slane %v1258, 1
        %v1267 = vsel %vm980, %v1265, %v1266
        %v1268 = vrot.slane %v1259, 1
        %v1269 = vsel %vm980, %v1266, %v1268
        %v1270 = vrot.slane %v1260, 1
        %v1271 = vsel %vm980, %v1268, %v1270
        %v1276 = vrot.slane %v1257, 2
        %v1277 = vrot.slane %v1258, 2
        %v1278 = vsel %vm992, %v1276, %v1277
        %v1279 = vrot.slane %v1259, 2
        %v1280 = vsel %vm992, %v1277, %v1279
        %v1281 = vrot.slane %v1260, 2
        %v1282 = vsel %vm992, %v1279, %v1281
        %v1287 = vrot.slane %v1257, 3
        %v1288 = vrot.slane %v1258, 3
        %v1289 = vsel %vm1004, %v1287, %v1288
        %v1290 = vrot.slane %v1259, 3
        %v1291 = vsel %vm1004, %v1288, %v1290
        %v1292 = vrot.slane %v1260, 3
        %v1293 = vsel %vm1004, %v1290, %v1292
        %v1298 = vld [vmem:[#allocation6] sm:$0xff]
        %v1299 = vld [vmem:[#allocation6 + $0x8] sm:$0xff]
        %v1300 = vld [vmem:[#allocation6 + $0x10] sm:$0xff]
        %v1301 = vld [vmem:[#allocation6 + $0x18] sm:$0xff]
        %v1302 = vld [vmem:[#allocation6 + $0x20] sm:$0xff]
        %v1303 = vld [vmem:[#allocation6 + $0x28] sm:$0xff]
        %v1304 = vld [vmem:[#allocation6 + $0x30] sm:$0xff]
        %v1305 = vld [vmem:[#allocation6 + $0x38] sm:$0xff]
        %v1306 = vld [vmem:[#allocation6 + $0x40] sm:$0xff]
        %v1307 = vld [vmem:[#allocation6 + $0x48] sm:$0xff]
        %v1308 = vld [vmem:[#allocation6 + $0x50] sm:$0xff]
        %v1309 = vld [vmem:[#allocation6 + $0x58] sm:$0xff]
        %v1310 = vld [vmem:[#allocation6 + $0x60] sm:$0xff]
        %v1311 = vld [vmem:[#allocation6 + $0x68] sm:$0xff]
        %v1312 = vld [vmem:[#allocation6 + $0x70] sm:$0xff]
        %v1313 = vld [vmem:[#allocation6 + $0x78] sm:$0xff]
        %v1314 = vld [vmem:[#allocation6 + $0x80] sm:$0xff]
        %v1315 = vld [vmem:[#allocation6 + $0x88] sm:$0xff]
        %v1316 = vld [vmem:[#allocation6 + $0x90] sm:$0xff]
        %v1317 = vld [vmem:[#allocation6 + $0x98] sm:$0xff]
        %v1318 = vld [vmem:[#allocation6 + $0xa0] sm:$0xff]
        %v1319 = vld [vmem:[#allocation6 + $0xa8] sm:$0xff]
        %v1320 = vld [vmem:[#allocation6 + $0xb0] sm:$0xff]
        %v1321 = vld [vmem:[#allocation6 + $0xb8] sm:$0xff]
        %v1322 = vld [vmem:[#allocation6 + $0xc0] sm:$0xff]
        %v1323 = vld [vmem:[#allocation6 + $0xc8] sm:$0xff]
        %v1324 = vld [vmem:[#allocation6 + $0xd0] sm:$0xff]
        %v1325 = vld [vmem:[#allocation6 + $0xd8] sm:$0xff]
        %v1326 = vld [vmem:[#allocation6 + $0xe0] sm:$0xff]
        %v1327 = vld [vmem:[#allocation6 + $0xe8] sm:$0xff]
        %v1328 = vld [vmem:[#allocation6 + $0xf0] sm:$0xff]
        %v1329 = vld [vmem:[#allocation6 + $0xf8] sm:$0xff]
        %v1330 = vld [vmem:[#allocation6 + $0x100] sm:$0xff]
        %v1331 = vld [vmem:[#allocation6 + $0x108] sm:$0xff]
        %v1332 = vld [vmem:[#allocation6 + $0x110] sm:$0xff]
        %v1333 = vld [vmem:[#allocation6 + $0x118] sm:$0xff]
        %v1334 = vld [vmem:[#allocation6 + $0x120] sm:$0xff]
        %v1335 = vld [vmem:[#allocation6 + $0x128] sm:$0xff]
        %v1336 = vld [vmem:[#allocation6 + $0x130] sm:$0xff]
        %v1337 = vld [vmem:[#allocation6 + $0x138] sm:$0xff]
        %v1338 = vld [vmem:[#allocation6 + $0x140] sm:$0xff]
        %v1339 = vld [vmem:[#allocation6 + $0x148] sm:$0xff]
        %v1340 = vld [vmem:[#allocation6 + $0x150] sm:$0xff]
        %v1341 = vld [vmem:[#allocation6 + $0x158] sm:$0xff]
        %v1342 = vld [vmem:[#allocation6 + $0x160] sm:$0xff]
        %v1343 = vld [vmem:[#allocation6 + $0x168] sm:$0xff]
        %v1344 = vld [vmem:[#allocation6 + $0x170] sm:$0xff]
        %v1345 = vld [vmem:[#allocation6 + $0x178] sm:$0xff]
        %v1346 = vld [vmem:[#allocation6 + $0x180] sm:$0xff]
        %v1347 = vld [vmem:[#allocation6 + $0x188] sm:$0xff]
        %v1348 = vld [vmem:[#allocation6 + $0x190] sm:$0xff]
        %v1349 = vld [vmem:[#allocation6 + $0x198] sm:$0xff]
        %v1350 = vld [vmem:[#allocation6 + $0x1a0] sm:$0xff]
        %v1351 = vld [vmem:[#allocation6 + $0x1a8] sm:$0xff]
        %v1352 = vld [vmem:[#allocation6 + $0x1b0] sm:$0xff]
        %v1353 = vld [vmem:[#allocation6 + $0x1b8] sm:$0xff]
        %v1354 = vld [vmem:[#allocation6 + $0x1c0] sm:$0xff]
        %v1355 = vld [vmem:[#allocation6 + $0x1c8] sm:$0xff]
        %v1356 = vld [vmem:[#allocation6 + $0x1d0] sm:$0xff]
        %v1357 = vld [vmem:[#allocation6 + $0x1d8] sm:$0xff]
        %v1358 = vld [vmem:[#allocation6 + $0x1e0] sm:$0xff]
        %v1359 = vld [vmem:[#allocation6 + $0x1e8] sm:$0xff]
        %v1360 = vld [vmem:[#allocation6 + $0x1f0] sm:$0xff]
        %v1361 = vld [vmem:[#allocation6 + $0x1f8] sm:$0xff]
        %v1362 = vld [vmem:[#allocation7] sm:$0x1]
        %v1364 = vlaneseq
        %v1365 = vshrl.u32 %v1364, 7
        %v1366 = vsub.s32 0, %v1365
        %v1367 = vrot.slane %v1362, %v1366
        %1369 = vmatprep.subr.mxu0 0.0
        %1370 = vmatpush1.msra.mxu0 %v1313
        %1371 = vmatprep.subr.mxu0 0.0
        %1372 = vmatpush1.msra.mxu0 %v1312
        %1373 = vmatprep.subr.mxu0 0.0
        %1374 = vmatpush1.msra.mxu0 %v1311
        %1375 = vmatprep.subr.mxu0 0.0
        %1376 = vmatpush1.msra.mxu0 %v1310
        %1377 = vmatprep.subr.mxu0 0.0
        %1378 = vmatpush1.msra.mxu0 %v1309
        %1379 = vmatprep.subr.mxu0 0.0
        %1380 = vmatpush1.msra.mxu0 %v1308
        %1381 = vmatprep.subr.mxu0 0.0
        %1382 = vmatpush1.msra.mxu0 %v1307
        %1383 = vmatprep.subr.mxu0 0.0
        %1384 = vmatpush1.msra.mxu0 %v1306
        %1385 = vmatprep.subr.mxu0 0.0
        %1386 = vmatpush1.msra.mxu0 %v1305
        %1387 = vmatprep.subr.mxu0 0.0
        %1388 = vmatpush1.msra.mxu0 %v1304
        %1389 = vmatprep.subr.mxu0 0.0
        %1390 = vmatpush1.msra.mxu0 %v1303
        %1391 = vmatprep.subr.mxu0 0.0
        %1392 = vmatpush1.msra.mxu0 %v1302
        %1393 = vmatprep.subr.mxu0 0.0
        %1394 = vmatpush1.msra.mxu0 %v1301
        %1395 = vmatprep.subr.mxu0 0.0
        %1396 = vmatpush1.msra.mxu0 %v1300
        %1397 = vmatprep.subr.mxu0 0.0
        %1398 = vmatpush1.msra.mxu0 %v1299
        %1399 = vmatprep.subr.mxu0 0.0
        %1400 = vmatpush1.msra.mxu0 %v1298
        %1401 = vmatprep.subr.mxu0 0.0
        %1402 = vmatpush2.msra.mxu0 %v1329
        %1403 = vmatprep.subr.mxu0 0.0
        %1404 = vmatpush2.msra.mxu0 %v1328
        %1405 = vmatprep.subr.mxu0 0.0
        %1406 = vmatpush2.msra.mxu0 %v1327
        %1407 = vmatprep.subr.mxu0 0.0
        %1408 = vmatpush2.msra.mxu0 %v1326
        %1409 = vmatprep.subr.mxu0 0.0
        %1410 = vmatpush2.msra.mxu0 %v1325
        %1411 = vmatprep.subr.mxu0 0.0
        %1412 = vmatpush2.msra.mxu0 %v1324
        %1413 = vmatprep.subr.mxu0 0.0
        %1414 = vmatpush2.msra.mxu0 %v1323
        %1415 = vmatprep.subr.mxu0 0.0
        %1416 = vmatpush2.msra.mxu0 %v1322
        %1417 = vmatprep.subr.mxu0 0.0
        %1418 = vmatpush2.msra.mxu0 %v1321
        %1419 = vmatprep.subr.mxu0 0.0
        %1420 = vmatpush2.msra.mxu0 %v1320
        %1421 = vmatprep.subr.mxu0 0.0
        %1422 = vmatpush2.msra.mxu0 %v1319
        %1423 = vmatprep.subr.mxu0 0.0
        %1424 = vmatpush2.msra.mxu0 %v1318
        %1425 = vmatprep.subr.mxu0 0.0
        %1426 = vmatpush2.msra.mxu0 %v1317
        %1427 = vmatprep.subr.mxu0 0.0
        %1428 = vmatpush2.msra.mxu0 %v1316
        %1429 = vmatprep.subr.mxu0 0.0
        %1430 = vmatpush2.msra.mxu0 %v1315
        %1431 = vmatprep.subr.mxu0 0.0
        %1432 = vmatpush2.msra.mxu0 %v1314
        %1433 = vmatprep.mubr.f32.mxu0 %v1267
        %1434 = vmatmul.mubr.f32.gmra.mxu0 %v1257
        %v1435 = vpop.f32.mrf.mxu0
        %v1436 = vadd.f32 %v1367, %v1435
        %v1437 = vpop.f32.mrf.mxu0
        %1438 = vmatprep.mubr.f32.mxu0 %v1269
        %1439 = vmatmul.mubr.f32.gmra.mxu0 %v1258
        %v1440 = vpop.f32.mrf.mxu0
        %v1441 = vadd.f32 %v1367, %v1440
        %v1442 = vpop.f32.mrf.mxu0
        %1443 = vmatprep.mubr.f32.mxu0 %v1271
        %1444 = vmatmul.mubr.f32.gmra.mxu0 %v1259
        %v1445 = vpop.f32.mrf.mxu0
        %v1446 = vadd.f32 %v1367, %v1445
        %v1447 = vpop.f32.mrf.mxu0
        %1448 = vmatprep.mubr.f32.mxu0 %v1270
        %1449 = vmatmul.mubr.f32.gmra.mxu0 %v1260
        %v1450 = vpop.f32.mrf.mxu0
        %v1451 = vadd.f32 %v1367, %v1450
        %v1452 = vpop.f32.mrf.mxu0
        %1453 = vdwg.mxu0
        %1454 = vmatprep.subr.mxu0 0.0
        %1455 = vmatpush1.msra.mxu0 %v1345
        %1456 = vmatprep.subr.mxu0 0.0
        %1457 = vmatpush1.msra.mxu0 %v1344
        %1458 = vmatprep.subr.mxu0 0.0
        %1459 = vmatpush1.msra.mxu0 %v1343
        %1460 = vmatprep.subr.mxu0 0.0
        %1461 = vmatpush1.msra.mxu0 %v1342
        %1462 = vmatprep.subr.mxu0 0.0
        %1463 = vmatpush1.msra.mxu0 %v1341
        %1464 = vmatprep.subr.mxu0 0.0
        %1465 = vmatpush1.msra.mxu0 %v1340
        %1466 = vmatprep.subr.mxu0 0.0
        %1467 = vmatpush1.msra.mxu0 %v1339
        %1468 = vmatprep.subr.mxu0 0.0
        %1469 = vmatpush1.msra.mxu0 %v1338
        %1470 = vmatprep.subr.mxu0 0.0
        %1471 = vmatpush1.msra.mxu0 %v1337
        %1472 = vmatprep.subr.mxu0 0.0
        %1473 = vmatpush1.msra.mxu0 %v1336
        %1474 = vmatprep.subr.mxu0 0.0
        %1475 = vmatpush1.msra.mxu0 %v1335
        %1476 = vmatprep.subr.mxu0 0.0
        %1477 = vmatpush1.msra.mxu0 %v1334
        %1478 = vmatprep.subr.mxu0 0.0
        %1479 = vmatpush1.msra.mxu0 %v1333
        %1480 = vmatprep.subr.mxu0 0.0
        %1481 = vmatpush1.msra.mxu0 %v1332
        %1482 = vmatprep.subr.mxu0 0.0
        %1483 = vmatpush1.msra.mxu0 %v1331
        %1484 = vmatprep.subr.mxu0 0.0
        %1485 = vmatpush1.msra.mxu0 %v1330
        %1486 = vmatprep.subr.mxu0 0.0
        %1487 = vmatpush2.msra.mxu0 %v1361
        %1488 = vmatprep.subr.mxu0 0.0
        %1489 = vmatpush2.msra.mxu0 %v1360
        %1490 = vmatprep.subr.mxu0 0.0
        %1491 = vmatpush2.msra.mxu0 %v1359
        %1492 = vmatprep.subr.mxu0 0.0
        %1493 = vmatpush2.msra.mxu0 %v1358
        %1494 = vmatprep.subr.mxu0 0.0
        %1495 = vmatpush2.msra.mxu0 %v1357
        %1496 = vmatprep.subr.mxu0 0.0
        %1497 = vmatpush2.msra.mxu0 %v1356
        %1498 = vmatprep.subr.mxu0 0.0
        %1499 = vmatpush2.msra.mxu0 %v1355
        %1500 = vmatprep.subr.mxu0 0.0
        %1501 = vmatpush2.msra.mxu0 %v1354
        %1502 = vmatprep.subr.mxu0 0.0
        %1503 = vmatpush2.msra.mxu0 %v1353
        %1504 = vmatprep.subr.mxu0 0.0
        %1505 = vmatpush2.msra.mxu0 %v1352
        %1506 = vmatprep.subr.mxu0 0.0
        %1507 = vmatpush2.msra.mxu0 %v1351
        %1508 = vmatprep.subr.mxu0 0.0
        %1509 = vmatpush2.msra.mxu0 %v1350
        %1510 = vmatprep.subr.mxu0 0.0
        %1511 = vmatpush2.msra.mxu0 %v1349
        %1512 = vmatprep.subr.mxu0 0.0
        %1513 = vmatpush2.msra.mxu0 %v1348
        %1514 = vmatprep.subr.mxu0 0.0
        %1515 = vmatpush2.msra.mxu0 %v1347
        %1516 = vmatprep.subr.mxu0 0.0
        %1517 = vmatpush2.msra.mxu0 %v1346
        %1518 = vmatprep.mubr.f32.mxu0 %v1289
        %1519 = vmatmul.mubr.f32.gmra.mxu0 %v1278
        %v1520 = vpop.f32.mrf.mxu0
        %v1521 = vadd.f32 %v1436, %v1520
        %v1522 = vpop.f32.mrf.mxu0
        %1523 = vmatprep.mubr.f32.mxu0 %v1291
        %1524 = vmatmul.mubr.f32.gmra.mxu0 %v1280
        %v1525 = vpop.f32.mrf.mxu0
        %v1526 = vadd.f32 %v1441, %v1525
        %v1527 = vpop.f32.mrf.mxu0
        %1528 = vmatprep.mubr.f32.mxu0 %v1293
        %1529 = vmatmul.mubr.f32.gmra.mxu0 %v1282
        %v1530 = vpop.f32.mrf.mxu0
        %v1531 = vadd.f32 %v1446, %v1530
        %v1532 = vpop.f32.mrf.mxu0
        %1533 = vmatprep.mubr.f32.mxu0 %v1292
        %1534 = vmatmul.mubr.f32.gmra.mxu0 %v1281
        %v1535 = vpop.f32.mrf.mxu0
        %v1536 = vadd.f32 %v1451, %v1535
        %v1537 = vpop.f32.mrf.mxu0
        %1538 = vdwg.mxu0
        %v1539 = vmax.f32 %v1521, 0.0
        %v1540 = vmax.f32 %v1526, 0.0
        %v1541 = vmax.f32 %v1531, 0.0
        %v1542 = vmax.f32 %v1536, 0.0
        %v1546 = vrot.slane %v1539, 1
        %v1547 = vrot.slane %v1540, 1
        %v1548 = vsel %vm980, %v1546, %v1547
        %v1549 = vrot.slane %v1541, 1
        %v1550 = vsel %vm980, %v1547, %v1549
        %v1555 = vrot.slane %v1539, 2
        %v1556 = vrot.slane %v1540, 2
        %v1557 = vsel %vm992, %v1555, %v1556
        %v1558 = vrot.slane %v1541, 2
        %v1559 = vsel %vm992, %v1556, %v1558
        %v1560 = vrot.slane %v1542, 2
        %v1561 = vsel %vm992, %v1558, %v1560
        %v1565 = vrot.slane %v1539, 3
        %v1566 = vrot.slane %v1540, 3
        %v1567 = vsel %vm1004, %v1565, %v1566
        %v1568 = vrot.slane %v1541, 3
        %v1569 = vsel %vm1004, %v1566, %v1568
        %v1570 = vrot.slane %v1542, 3
        %v1571 = vsel %vm1004, %v1568, %v1570
        %v1575 = vld [vmem:[#allocation9] sm:$0xff]
        %v1576 = vld [vmem:[#allocation9 + $0x8] sm:$0xff]
        %v1577 = vld [vmem:[#allocation9 + $0x10] sm:$0xff]
        %v1578 = vld [vmem:[#allocation9 + $0x18] sm:$0xff]
        %v1579 = vld [vmem:[#allocation9 + $0x20] sm:$0xff]
        %v1580 = vld [vmem:[#allocation9 + $0x28] sm:$0xff]
        %v1581 = vld [vmem:[#allocation9 + $0x30] sm:$0xff]
        %v1582 = vld [vmem:[#allocation9 + $0x38] sm:$0xff]
        %v1583 = vld [vmem:[#allocation9 + $0x40] sm:$0xff]
        %v1584 = vld [vmem:[#allocation9 + $0x48] sm:$0xff]
        %v1585 = vld [vmem:[#allocation9 + $0x50] sm:$0xff]
        %v1586 = vld [vmem:[#allocation9 + $0x58] sm:$0xff]
        %v1587 = vld [vmem:[#allocation9 + $0x60] sm:$0xff]
        %v1588 = vld [vmem:[#allocation9 + $0x68] sm:$0xff]
        %v1589 = vld [vmem:[#allocation9 + $0x70] sm:$0xff]
        %v1590 = vld [vmem:[#allocation9 + $0x78] sm:$0xff]
        %v1591 = vld [vmem:[#allocation9 + $0x80] sm:$0xff]
        %v1592 = vld [vmem:[#allocation9 + $0x88] sm:$0xff]
        %v1593 = vld [vmem:[#allocation9 + $0x90] sm:$0xff]
        %v1594 = vld [vmem:[#allocation9 + $0x98] sm:$0xff]
        %v1595 = vld [vmem:[#allocation9 + $0xa0] sm:$0xff]
        %v1596 = vld [vmem:[#allocation9 + $0xa8] sm:$0xff]
        %v1597 = vld [vmem:[#allocation9 + $0xb0] sm:$0xff]
        %v1598 = vld [vmem:[#allocation9 + $0xb8] sm:$0xff]
        %v1599 = vld [vmem:[#allocation9 + $0xc0] sm:$0xff]
        %v1600 = vld [vmem:[#allocation9 + $0xc8] sm:$0xff]
        %v1601 = vld [vmem:[#allocation9 + $0xd0] sm:$0xff]
        %v1602 = vld [vmem:[#allocation9 + $0xd8] sm:$0xff]
        %v1603 = vld [vmem:[#allocation9 + $0xe0] sm:$0xff]
        %v1604 = vld [vmem:[#allocation9 + $0xe8] sm:$0xff]
        %v1605 = vld [vmem:[#allocation9 + $0xf0] sm:$0xff]
        %v1606 = vld [vmem:[#allocation9 + $0xf8] sm:$0xff]
        %v1607 = vld [vmem:[#allocation9 + $0x100] sm:$0xff]
        %v1608 = vld [vmem:[#allocation9 + $0x108] sm:$0xff]
        %v1609 = vld [vmem:[#allocation9 + $0x110] sm:$0xff]
        %v1610 = vld [vmem:[#allocation9 + $0x118] sm:$0xff]
        %v1611 = vld [vmem:[#allocation9 + $0x120] sm:$0xff]
        %v1612 = vld [vmem:[#allocation9 + $0x128] sm:$0xff]
        %v1613 = vld [vmem:[#allocation9 + $0x130] sm:$0xff]
        %v1614 = vld [vmem:[#allocation9 + $0x138] sm:$0xff]
        %v1615 = vld [vmem:[#allocation9 + $0x140] sm:$0xff]
        %v1616 = vld [vmem:[#allocation9 + $0x148] sm:$0xff]
        %v1617 = vld [vmem:[#allocation9 + $0x150] sm:$0xff]
        %v1618 = vld [vmem:[#allocation9 + $0x158] sm:$0xff]
        %v1619 = vld [vmem:[#allocation9 + $0x160] sm:$0xff]
        %v1620 = vld [vmem:[#allocation9 + $0x168] sm:$0xff]
        %v1621 = vld [vmem:[#allocation9 + $0x170] sm:$0xff]
        %v1622 = vld [vmem:[#allocation9 + $0x178] sm:$0xff]
        %v1623 = vld [vmem:[#allocation9 + $0x180] sm:$0xff]
        %v1624 = vld [vmem:[#allocation9 + $0x188] sm:$0xff]
        %v1625 = vld [vmem:[#allocation9 + $0x190] sm:$0xff]
        %v1626 = vld [vmem:[#allocation9 + $0x198] sm:$0xff]
        %v1627 = vld [vmem:[#allocation9 + $0x1a0] sm:$0xff]
        %v1628 = vld [vmem:[#allocation9 + $0x1a8] sm:$0xff]
        %v1629 = vld [vmem:[#allocation9 + $0x1b0] sm:$0xff]
        %v1630 = vld [vmem:[#allocation9 + $0x1b8] sm:$0xff]
        %v1631 = vld [vmem:[#allocation9 + $0x1c0] sm:$0xff]
        %v1632 = vld [vmem:[#allocation9 + $0x1c8] sm:$0xff]
        %v1633 = vld [vmem:[#allocation9 + $0x1d0] sm:$0xff]
        %v1634 = vld [vmem:[#allocation9 + $0x1d8] sm:$0xff]
        %v1635 = vld [vmem:[#allocation9 + $0x1e0] sm:$0xff]
        %v1636 = vld [vmem:[#allocation9 + $0x1e8] sm:$0xff]
        %v1637 = vld [vmem:[#allocation9 + $0x1f0] sm:$0xff]
        %v1638 = vld [vmem:[#allocation9 + $0x1f8] sm:$0xff]
        %v1639 = vld [vmem:[#allocation10] sm:$0x1]
        %v1641 = vlaneseq
        %v1642 = vshrl.u32 %v1641, 7
        %v1643 = vsub.s32 0, %v1642
        %v1644 = vrot.slane %v1639, %v1643
        %1646 = vmatprep.subr.mxu0 0.0
        %1647 = vmatpush1.msra.mxu0 %v1590
        %1648 = vmatprep.subr.mxu0 0.0
        %1649 = vmatpush1.msra.mxu0 %v1589
        %1650 = vmatprep.subr.mxu0 0.0
        %1651 = vmatpush1.msra.mxu0 %v1588
        %1652 = vmatprep.subr.mxu0 0.0
        %1653 = vmatpush1.msra.mxu0 %v1587
        %1654 = vmatprep.subr.mxu0 0.0
        %1655 = vmatpush1.msra.mxu0 %v1586
        %1656 = vmatprep.subr.mxu0 0.0
        %1657 = vmatpush1.msra.mxu0 %v1585
        %1658 = vmatprep.subr.mxu0 0.0
        %1659 = vmatpush1.msra.mxu0 %v1584
        %1660 = vmatprep.subr.mxu0 0.0
        %1661 = vmatpush1.msra.mxu0 %v1583
        %1662 = vmatprep.subr.mxu0 0.0
        %1663 = vmatpush1.msra.mxu0 %v1582
        %1664 = vmatprep.subr.mxu0 0.0
        %1665 = vmatpush1.msra.mxu0 %v1581
        %1666 = vmatprep.subr.mxu0 0.0
        %1667 = vmatpush1.msra.mxu0 %v1580
        %1668 = vmatprep.subr.mxu0 0.0
        %1669 = vmatpush1.msra.mxu0 %v1579
        %1670 = vmatprep.subr.mxu0 0.0
        %1671 = vmatpush1.msra.mxu0 %v1578
        %1672 = vmatprep.subr.mxu0 0.0
        %1673 = vmatpush1.msra.mxu0 %v1577
        %1674 = vmatprep.subr.mxu0 0.0
        %1675 = vmatpush1.msra.mxu0 %v1576
        %1676 = vmatprep.subr.mxu0 0.0
        %1677 = vmatpush1.msra.mxu0 %v1575
        %1678 = vmatprep.subr.mxu0 0.0
        %1679 = vmatpush2.msra.mxu0 %v1606
        %1680 = vmatprep.subr.mxu0 0.0
        %1681 = vmatpush2.msra.mxu0 %v1605
        %1682 = vmatprep.subr.mxu0 0.0
        %1683 = vmatpush2.msra.mxu0 %v1604
        %1684 = vmatprep.subr.mxu0 0.0
        %1685 = vmatpush2.msra.mxu0 %v1603
        %1686 = vmatprep.subr.mxu0 0.0
        %1687 = vmatpush2.msra.mxu0 %v1602
        %1688 = vmatprep.subr.mxu0 0.0
        %1689 = vmatpush2.msra.mxu0 %v1601
        %1690 = vmatprep.subr.mxu0 0.0
        %1691 = vmatpush2.msra.mxu0 %v1600
        %1692 = vmatprep.subr.mxu0 0.0
        %1693 = vmatpush2.msra.mxu0 %v1599
        %1694 = vmatprep.subr.mxu0 0.0
        %1695 = vmatpush2.msra.mxu0 %v1598
        %1696 = vmatprep.subr.mxu0 0.0
        %1697 = vmatpush2.msra.mxu0 %v1597
        %1698 = vmatprep.subr.mxu0 0.0
        %1699 = vmatpush2.msra.mxu0 %v1596
        %1700 = vmatprep.subr.mxu0 0.0
        %1701 = vmatpush2.msra.mxu0 %v1595
        %1702 = vmatprep.subr.mxu0 0.0
        %1703 = vmatpush2.msra.mxu0 %v1594
        %1704 = vmatprep.subr.mxu0 0.0
        %1705 = vmatpush2.msra.mxu0 %v1593
        %1706 = vmatprep.subr.mxu0 0.0
        %1707 = vmatpush2.msra.mxu0 %v1592
        %1708 = vmatprep.subr.mxu0 0.0
        %1709 = vmatpush2.msra.mxu0 %v1591
        %1710 = vmatprep.mubr.f32.mxu0 %v1548
        %1711 = vmatmul.mubr.f32.gmra.mxu0 %v1539
        %v1712 = vpop.f32.mrf.mxu0
        %v1713 = vadd.f32 %v1644, %v1712
        %v1714 = vpop.f32.mrf.mxu0
        %1715 = vmatprep.mubr.f32.mxu0 %v1550
        %1716 = vmatmul.mubr.f32.gmra.mxu0 %v1540
        %v1717 = vpop.f32.mrf.mxu0
        %v1718 = vadd.f32 %v1644, %v1717
        %v1719 = vpop.f32.mrf.mxu0
        %1720 = vmatprep.mubr.f32.mxu0 %v1549
        %1721 = vmatmul.mubr.f32.gmra.mxu0 %v1541
        %v1722 = vpop.f32.mrf.mxu0
        %v1723 = vadd.f32 %v1644, %v1722
        %v1724 = vpop.f32.mrf.mxu0
        %1725 = vdwg.mxu0
        %1726 = vmatprep.subr.mxu0 0.0
        %1727 = vmatpush1.msra.mxu0 %v1622
        %1728 = vmatprep.subr.mxu0 0.0
        %1729 = vmatpush1.msra.mxu0 %v1621
        %1730 = vmatprep.subr.mxu0 0.0
        %1731 = vmatpush1.msra.mxu0 %v1620
        %1732 = vmatprep.subr.mxu0 0.0
        %1733 = vmatpush1.msra.mxu0 %v1619
        %1734 = vmatprep.subr.mxu0 0.0
        %1735 = vmatpush1.msra.mxu0 %v1618
        %1736 = vmatprep.subr.mxu0 0.0
        %1737 = vmatpush1.msra.mxu0 %v1617
        %1738 = vmatprep.subr.mxu0 0.0
        %1739 = vmatpush1.msra.mxu0 %v1616
        %1740 = vmatprep.subr.mxu0 0.0
        %1741 = vmatpush1.msra.mxu0 %v1615
        %1742 = vmatprep.subr.mxu0 0.0
        %1743 = vmatpush1.msra.mxu0 %v1614
        %1744 = vmatprep.subr.mxu0 0.0
        %1745 = vmatpush1.msra.mxu0 %v1613
        %1746 = vmatprep.subr.mxu0 0.0
        %1747 = vmatpush1.msra.mxu0 %v1612
        %1748 = vmatprep.subr.mxu0 0.0
        %1749 = vmatpush1.msra.mxu0 %v1611
        %1750 = vmatprep.subr.mxu0 0.0
        %1751 = vmatpush1.msra.mxu0 %v1610
        %1752 = vmatprep.subr.mxu0 0.0
        %1753 = vmatpush1.msra.mxu0 %v1609
        %1754 = vmatprep.subr.mxu0 0.0
        %1755 = vmatpush1.msra.mxu0 %v1608
        %1756 = vmatprep.subr.mxu0 0.0
        %1757 = vmatpush1.msra.mxu0 %v1607
        %1758 = vmatprep.subr.mxu0 0.0
        %1759 = vmatpush2.msra.mxu0 %v1638
        %1760 = vmatprep.subr.mxu0 0.0
        %1761 = vmatpush2.msra.mxu0 %v1637
        %1762 = vmatprep.subr.mxu0 0.0
        %1763 = vmatpush2.msra.mxu0 %v1636
        %1764 = vmatprep.subr.mxu0 0.0
        %1765 = vmatpush2.msra.mxu0 %v1635
        %1766 = vmatprep.subr.mxu0 0.0
        %1767 = vmatpush2.msra.mxu0 %v1634
        %1768 = vmatprep.subr.mxu0 0.0
        %1769 = vmatpush2.msra.mxu0 %v1633
        %1770 = vmatprep.subr.mxu0 0.0
        %1771 = vmatpush2.msra.mxu0 %v1632
        %1772 = vmatprep.subr.mxu0 0.0
        %1773 = vmatpush2.msra.mxu0 %v1631
        %1774 = vmatprep.subr.mxu0 0.0
        %1775 = vmatpush2.msra.mxu0 %v1630
        %1776 = vmatprep.subr.mxu0 0.0
        %1777 = vmatpush2.msra.mxu0 %v1629
        %1778 = vmatprep.subr.mxu0 0.0
        %1779 = vmatpush2.msra.mxu0 %v1628
        %1780 = vmatprep.subr.mxu0 0.0
        %1781 = vmatpush2.msra.mxu0 %v1627
        %1782 = vmatprep.subr.mxu0 0.0
        %1783 = vmatpush2.msra.mxu0 %v1626
        %1784 = vmatprep.subr.mxu0 0.0
        %1785 = vmatpush2.msra.mxu0 %v1625
        %1786 = vmatprep.subr.mxu0 0.0
        %1787 = vmatpush2.msra.mxu0 %v1624
        %1788 = vmatprep.subr.mxu0 0.0
        %1789 = vmatpush2.msra.mxu0 %v1623
        %1790 = vmatprep.mubr.f32.mxu0 %v1567
        %1791 = vmatmul.mubr.f32.gmra.mxu0 %v1557
        %v1792 = vpop.f32.mrf.mxu0
        %v1793 = vadd.f32 %v1713, %v1792
        %v1794 = vpop.f32.mrf.mxu0
        %1795 = vmatprep.mubr.f32.mxu0 %v1569
        %1796 = vmatmul.mubr.f32.gmra.mxu0 %v1559
        %v1797 = vpop.f32.mrf.mxu0
        %v1798 = vadd.f32 %v1718, %v1797
        %v1799 = vpop.f32.mrf.mxu0
        %1800 = vmatprep.mubr.f32.mxu0 %v1571
        %1801 = vmatmul.mubr.f32.gmra.mxu0 %v1561
        %v1802 = vpop.f32.mrf.mxu0
        %v1803 = vadd.f32 %v1723, %v1802
        %v1804 = vpop.f32.mrf.mxu0
        %1805 = vdwg.mxu0
        %v1806 = vmax.f32 %v1793, 0.0
        %v1807 = vmax.f32 %v1798, 0.0
        %v1808 = vmax.f32 %v1803, 0.0
        %v1809 = vsel %vm980, %v1808, -inf
        %v1810 = vmax.f32 %v1806, %v1807
        %v1811 = vmax.f32 %v1810, %v1809
        %v1812 = vrot.slane %v1811, 4
        %v1813 = vmax.f32 %v1811, %v1812
        %v1814 = vrot.slane %v1813, 2
        %v1815 = vmax.f32 %v1813, %v1814
        %v1816 = vrot.slane %v1815, 1
        %v1817 = vmax.f32 %v1815, %v1816
        %v1818 = vld [vmem:[%s967] sm:$0xff]
        %v1819 = vld [vmem:[%s967 + $0x8] sm:$0xff]
        %v1820 = vld [vmem:[%s967 + $0x10] sm:$0xff]
        %v1821 = vld [vmem:[%s967 + $0x18] sm:$0xff]
        %v1822 = vld [vmem:[%s967 + $0x20] sm:$0xff]
        %v1823 = vld [vmem:[%s967 + $0x28] sm:$0xff]
        %v1824 = vld [vmem:[%s967 + $0x30] sm:$0xff]
        %v1825 = vld [vmem:[%s967 + $0x38] sm:$0xff]
        %v1834 = vrot.slane %v1818, 1
        %v1835 = vrot.slane %v1819, 1
        %v1836 = vsel %vm980, %v1834, %v1835
        %v1837 = vrot.slane %v1820, 1
        %v1838 = vsel %vm980, %v1835, %v1837
        %v1839 = vrot.slane %v1821, 1
        %v1840 = vsel %vm980, %v1837, %v1839
        %v1841 = vrot.slane %v1822, 1
        %v1842 = vsel %vm980, %v1839, %v1841
        %v1843 = vrot.slane %v1823, 1
        %v1844 = vsel %vm980, %v1841, %v1843
        %v1845 = vrot.slane %v1824, 1
        %v1846 = vsel %vm980, %v1843, %v1845
        %v1847 = vrot.slane %v1825, 1
        %v1848 = vsel %vm980, %v1845, %v1847
        %v1857 = vrot.slane %v1818, 2
        %v1858 = vrot.slane %v1819, 2
        %v1859 = vsel %vm992, %v1857, %v1858
        %v1860 = vrot.slane %v1820, 2
        %v1861 = vsel %vm992, %v1858, %v1860
        %v1862 = vrot.slane %v1821, 2
        %v1863 = vsel %vm992, %v1860, %v1862
        %v1864 = vrot.slane %v1822, 2
        %v1865 = vsel %vm992, %v1862, %v1864
        %v1866 = vrot.slane %v1823, 2
        %v1867 = vsel %vm992, %v1864, %v1866
        %v1868 = vrot.slane %v1824, 2
        %v1869 = vsel %vm992, %v1866, %v1868
        %v1870 = vrot.slane %v1825, 2
        %v1871 = vsel %vm992, %v1868, %v1870
        %v1880 = vrot.slane %v1818, 3
        %v1881 = vrot.slane %v1819, 3
        %v1882 = vsel %vm1004, %v1880, %v1881
        %v1883 = vrot.slane %v1820, 3
        %v1884 = vsel %vm1004, %v1881, %v1883
        %v1885 = vrot.slane %v1821, 3
        %v1886 = vsel %vm1004, %v1883, %v1885
        %v1887 = vrot.slane %v1822, 3
        %v1888 = vsel %vm1004, %v1885, %v1887
        %v1889 = vrot.slane %v1823, 3
        %v1890 = vsel %vm1004, %v1887, %v1889
        %v1891 = vrot.slane %v1824, 3
        %v1892 = vsel %vm1004, %v1889, %v1891
        %v1893 = vrot.slane %v1825, 3
        %v1894 = vsel %vm1004, %v1891, %v1893
        %vm1903 = vcmask 1043456
        %v1904 = vrot.slane %v1818, 4
        %v1905 = vrot.slane %v1819, 4
        %v1906 = vsel %vm1903, %v1904, %v1905
        %v1907 = vrot.slane %v1820, 4
        %v1908 = vsel %vm1903, %v1905, %v1907
        %v1909 = vrot.slane %v1821, 4
        %v1910 = vsel %vm1903, %v1907, %v1909
        %v1911 = vrot.slane %v1822, 4
        %v1912 = vsel %vm1903, %v1909, %v1911
        %v1913 = vrot.slane %v1823, 4
        %v1914 = vsel %vm1903, %v1911, %v1913
        %v1915 = vrot.slane %v1824, 4
        %v1916 = vsel %vm1903, %v1913, %v1915
        %v1917 = vrot.slane %v1825, 4
        %v1918 = vsel %vm1903, %v1915, %v1917
        %vm1927 = vcmask 1042432
        %v1928 = vrot.slane %v1818, 5
        %v1929 = vrot.slane %v1819, 5
        %v1930 = vsel %vm1927, %v1928, %v1929
        %v1931 = vrot.slane %v1820, 5
        %v1932 = vsel %vm1927, %v1929, %v1931
        %v1933 = vrot.slane %v1821, 5
        %v1934 = vsel %vm1927, %v1931, %v1933
        %v1935 = vrot.slane %v1822, 5
        %v1936 = vsel %vm1927, %v1933, %v1935
        %v1937 = vrot.slane %v1823, 5
        %v1938 = vsel %vm1927, %v1935, %v1937
        %v1939 = vrot.slane %v1824, 5
        %v1940 = vsel %vm1927, %v1937, %v1939
        %v1941 = vrot.slane %v1825, 5
        %v1942 = vsel %vm1927, %v1939, %v1941
        %vm1951 = vcmask 1041408
        %v1952 = vrot.slane %v1818, 6
        %v1953 = vrot.slane %v1819, 6
        %v1954 = vsel %vm1951, %v1952, %v1953
        %v1955 = vrot.slane %v1820, 6
        %v1956 = vsel %vm1951, %v1953, %v1955
        %v1957 = vrot.slane %v1821, 6
        %v1958 = vsel %vm1951, %v1955, %v1957
        %v1959 = vrot.slane %v1822, 6
        %v1960 = vsel %vm1951, %v1957, %v1959
        %v1961 = vrot.slane %v1823, 6
        %v1962 = vsel %vm1951, %v1959, %v1961
        %v1963 = vrot.slane %v1824, 6
        %v1964 = vsel %vm1951, %v1961, %v1963
        %v1965 = vrot.slane %v1825, 6
        %v1966 = vsel %vm1951, %v1963, %v1965
        %vm1975 = vcmask 1040384
        %v1976 = vrot.slane %v1818, 7
        %v1977 = vrot.slane %v1819, 7
        %v1978 = vsel %vm1975, %v1976, %v1977
        %v1979 = vrot.slane %v1820, 7
        %v1980 = vsel %vm1975, %v1977, %v1979
        %v1981 = vrot.slane %v1821, 7
        %v1982 = vsel %vm1975, %v1979, %v1981
        %v1983 = vrot.slane %v1822, 7
        %v1984 = vsel %vm1975, %v1981, %v1983
        %v1985 = vrot.slane %v1823, 7
        %v1986 = vsel %vm1975, %v1983, %v1985
        %v1987 = vrot.slane %v1824, 7
        %v1988 = vsel %vm1975, %v1985, %v1987
        %v1989 = vrot.slane %v1825, 7
        %v1990 = vsel %vm1975, %v1987, %v1989
        %v1999 = vld [vmem:[#allocation12] sm:$0xff]
        %v2000 = vld [vmem:[#allocation12 + $0x8] sm:$0xff]
        %v2001 = vld [vmem:[#allocation12 + $0x10] sm:$0xff]
        %v2002 = vld [vmem:[#allocation12 + $0x18] sm:$0xff]
        %v2003 = vld [vmem:[#allocation12 + $0x20] sm:$0xff]
        %v2004 = vld [vmem:[#allocation12 + $0x28] sm:$0xff]
        %v2005 = vld [vmem:[#allocation12 + $0x30] sm:$0xff]
        %v2006 = vld [vmem:[#allocation12 + $0x38] sm:$0xff]
        %v2007 = vld [vmem:[#allocation12 + $0x40] sm:$0xff]
        %v2008 = vld [vmem:[#allocation12 + $0x48] sm:$0xff]
        %v2009 = vld [vmem:[#allocation12 + $0x50] sm:$0xff]
        %v2010 = vld [vmem:[#allocation12 + $0x58] sm:$0xff]
        %v2011 = vld [vmem:[#allocation12 + $0x60] sm:$0xff]
        %v2012 = vld [vmem:[#allocation12 + $0x68] sm:$0xff]
        %v2013 = vld [vmem:[#allocation12 + $0x70] sm:$0xff]
        %v2014 = vld [vmem:[#allocation12 + $0x78] sm:$0xff]
        %v2015 = vld [vmem:[#allocation12 + $0x80] sm:$0xff]
        %v2016 = vld [vmem:[#allocation12 + $0x88] sm:$0xff]
        %v2017 = vld [vmem:[#allocation12 + $0x90] sm:$0xff]
        %v2018 = vld [vmem:[#allocation12 + $0x98] sm:$0xff]
        %v2019 = vld [vmem:[#allocation12 + $0xa0] sm:$0xff]
        %v2020 = vld [vmem:[#allocation12 + $0xa8] sm:$0xff]
        %v2021 = vld [vmem:[#allocation12 + $0xb0] sm:$0xff]
        %v2022 = vld [vmem:[#allocation12 + $0xb8] sm:$0xff]
        %v2023 = vld [vmem:[#allocation12 + $0xc0] sm:$0xff]
        %v2024 = vld [vmem:[#allocation12 + $0xc8] sm:$0xff]
        %v2025 = vld [vmem:[#allocation12 + $0xd0] sm:$0xff]
        %v2026 = vld [vmem:[#allocation12 + $0xd8] sm:$0xff]
        %v2027 = vld [vmem:[#allocation12 + $0xe0] sm:$0xff]
        %v2028 = vld [vmem:[#allocation12 + $0xe8] sm:$0xff]
        %v2029 = vld [vmem:[#allocation12 + $0xf0] sm:$0xff]
        %v2030 = vld [vmem:[#allocation12 + $0xf8] sm:$0xff]
        %v2031 = vld [vmem:[#allocation12 + $0x100] sm:$0xff]
        %v2032 = vld [vmem:[#allocation12 + $0x108] sm:$0xff]
        %v2033 = vld [vmem:[#allocation12 + $0x110] sm:$0xff]
        %v2034 = vld [vmem:[#allocation12 + $0x118] sm:$0xff]
        %v2035 = vld [vmem:[#allocation12 + $0x120] sm:$0xff]
        %v2036 = vld [vmem:[#allocation12 + $0x128] sm:$0xff]
        %v2037 = vld [vmem:[#allocation12 + $0x130] sm:$0xff]
        %v2038 = vld [vmem:[#allocation12 + $0x138] sm:$0xff]
        %v2039 = vld [vmem:[#allocation12 + $0x140] sm:$0xff]
        %v2040 = vld [vmem:[#allocation12 + $0x148] sm:$0xff]
        %v2041 = vld [vmem:[#allocation12 + $0x150] sm:$0xff]
        %v2042 = vld [vmem:[#allocation12 + $0x158] sm:$0xff]
        %v2043 = vld [vmem:[#allocation12 + $0x160] sm:$0xff]
        %v2044 = vld [vmem:[#allocation12 + $0x168] sm:$0xff]
        %v2045 = vld [vmem:[#allocation12 + $0x170] sm:$0xff]
        %v2046 = vld [vmem:[#allocation12 + $0x178] sm:$0xff]
        %v2047 = vld [vmem:[#allocation12 + $0x180] sm:$0xff]
        %v2048 = vld [vmem:[#allocation12 + $0x188] sm:$0xff]
        %v2049 = vld [vmem:[#allocation12 + $0x190] sm:$0xff]
        %v2050 = vld [vmem:[#allocation12 + $0x198] sm:$0xff]
        %v2051 = vld [vmem:[#allocation12 + $0x1a0] sm:$0xff]
        %v2052 = vld [vmem:[#allocation12 + $0x1a8] sm:$0xff]
        %v2053 = vld [vmem:[#allocation12 + $0x1b0] sm:$0xff]
        %v2054 = vld [vmem:[#allocation12 + $0x1b8] sm:$0xff]
        %v2055 = vld [vmem:[#allocation12 + $0x1c0] sm:$0xff]
        %v2056 = vld [vmem:[#allocation12 + $0x1c8] sm:$0xff]
        %v2057 = vld [vmem:[#allocation12 + $0x1d0] sm:$0xff]
        %v2058 = vld [vmem:[#allocation12 + $0x1d8] sm:$0xff]
        %v2059 = vld [vmem:[#allocation12 + $0x1e0] sm:$0xff]
        %v2060 = vld [vmem:[#allocation12 + $0x1e8] sm:$0xff]
        %v2061 = vld [vmem:[#allocation12 + $0x1f0] sm:$0xff]
        %v2062 = vld [vmem:[#allocation12 + $0x1f8] sm:$0xff]
        %v2063 = vld [vmem:[#allocation12 + $0x200] sm:$0xff]
        %v2064 = vld [vmem:[#allocation12 + $0x208] sm:$0xff]
        %v2065 = vld [vmem:[#allocation12 + $0x210] sm:$0xff]
        %v2066 = vld [vmem:[#allocation12 + $0x218] sm:$0xff]
        %v2067 = vld [vmem:[#allocation12 + $0x220] sm:$0xff]
        %v2068 = vld [vmem:[#allocation12 + $0x228] sm:$0xff]
        %v2069 = vld [vmem:[#allocation12 + $0x230] sm:$0xff]
        %v2070 = vld [vmem:[#allocation12 + $0x238] sm:$0xff]
        %v2071 = vld [vmem:[#allocation12 + $0x240] sm:$0xff]
        %v2072 = vld [vmem:[#allocation12 + $0x248] sm:$0xff]
        %v2073 = vld [vmem:[#allocation12 + $0x250] sm:$0xff]
        %v2074 = vld [vmem:[#allocation12 + $0x258] sm:$0xff]
        %v2075 = vld [vmem:[#allocation12 + $0x260] sm:$0xff]
        %v2076 = vld [vmem:[#allocation12 + $0x268] sm:$0xff]
        %v2077 = vld [vmem:[#allocation12 + $0x270] sm:$0xff]
        %v2078 = vld [vmem:[#allocation12 + $0x278] sm:$0xff]
        %v2079 = vld [vmem:[#allocation12 + $0x280] sm:$0xff]
        %v2080 = vld [vmem:[#allocation12 + $0x288] sm:$0xff]
        %v2081 = vld [vmem:[#allocation12 + $0x290] sm:$0xff]
        %v2082 = vld [vmem:[#allocation12 + $0x298] sm:$0xff]
        %v2083 = vld [vmem:[#allocation12 + $0x2a0] sm:$0xff]
        %v2084 = vld [vmem:[#allocation12 + $0x2a8] sm:$0xff]
        %v2085 = vld [vmem:[#allocation12 + $0x2b0] sm:$0xff]
        %v2086 = vld [vmem:[#allocation12 + $0x2b8] sm:$0xff]
        %v2087 = vld [vmem:[#allocation12 + $0x2c0] sm:$0xff]
        %v2088 = vld [vmem:[#allocation12 + $0x2c8] sm:$0xff]
        %v2089 = vld [vmem:[#allocation12 + $0x2d0] sm:$0xff]
        %v2090 = vld [vmem:[#allocation12 + $0x2d8] sm:$0xff]
        %v2091 = vld [vmem:[#allocation12 + $0x2e0] sm:$0xff]
        %v2092 = vld [vmem:[#allocation12 + $0x2e8] sm:$0xff]
        %v2093 = vld [vmem:[#allocation12 + $0x2f0] sm:$0xff]
        %v2094 = vld [vmem:[#allocation12 + $0x2f8] sm:$0xff]
        %v2095 = vld [vmem:[#allocation12 + $0x300] sm:$0xff]
        %v2096 = vld [vmem:[#allocation12 + $0x308] sm:$0xff]
        %v2097 = vld [vmem:[#allocation12 + $0x310] sm:$0xff]
        %v2098 = vld [vmem:[#allocation12 + $0x318] sm:$0xff]
        %v2099 = vld [vmem:[#allocation12 + $0x320] sm:$0xff]
        %v2100 = vld [vmem:[#allocation12 + $0x328] sm:$0xff]
        %v2101 = vld [vmem:[#allocation12 + $0x330] sm:$0xff]
        %v2102 = vld [vmem:[#allocation12 + $0x338] sm:$0xff]
        %v2103 = vld [vmem:[#allocation12 + $0x340] sm:$0xff]
        %v2104 = vld [vmem:[#allocation12 + $0x348] sm:$0xff]
        %v2105 = vld [vmem:[#allocation12 + $0x350] sm:$0xff]
        %v2106 = vld [vmem:[#allocation12 + $0x358] sm:$0xff]
        %v2107 = vld [vmem:[#allocation12 + $0x360] sm:$0xff]
        %v2108 = vld [vmem:[#allocation12 + $0x368] sm:$0xff]
        %v2109 = vld [vmem:[#allocation12 + $0x370] sm:$0xff]
        %v2110 = vld [vmem:[#allocation12 + $0x378] sm:$0xff]
        %v2111 = vld [vmem:[#allocation12 + $0x380] sm:$0xff]
        %v2112 = vld [vmem:[#allocation12 + $0x388] sm:$0xff]
        %v2113 = vld [vmem:[#allocation12 + $0x390] sm:$0xff]
        %v2114 = vld [vmem:[#allocation12 + $0x398] sm:$0xff]
        %v2115 = vld [vmem:[#allocation12 + $0x3a0] sm:$0xff]
        %v2116 = vld [vmem:[#allocation12 + $0x3a8] sm:$0xff]
        %v2117 = vld [vmem:[#allocation12 + $0x3b0] sm:$0xff]
        %v2118 = vld [vmem:[#allocation12 + $0x3b8] sm:$0xff]
        %v2119 = vld [vmem:[#allocation12 + $0x3c0] sm:$0xff]
        %v2120 = vld [vmem:[#allocation12 + $0x3c8] sm:$0xff]
        %v2121 = vld [vmem:[#allocation12 + $0x3d0] sm:$0xff]
        %v2122 = vld [vmem:[#allocation12 + $0x3d8] sm:$0xff]
        %v2123 = vld [vmem:[#allocation12 + $0x3e0] sm:$0xff]
        %v2124 = vld [vmem:[#allocation12 + $0x3e8] sm:$0xff]
        %v2125 = vld [vmem:[#allocation12 + $0x3f0] sm:$0xff]
        %v2126 = vld [vmem:[#allocation12 + $0x3f8] sm:$0xff]
        %v2127 = vld [vmem:[#allocation13] sm:$0x1]
        %v2129 = vlaneseq
        %v2130 = vshrl.u32 %v2129, 7
        %v2131 = vsub.s32 0, %v2130
        %v2132 = vrot.slane %v2127, %v2131
        %2134 = vmatprep.subr.mxu0 0.0
        %2135 = vmatpush1.msra.mxu0 %v2014
        %2136 = vmatprep.subr.mxu0 0.0
        %2137 = vmatpush1.msra.mxu0 %v2013
        %2138 = vmatprep.subr.mxu0 0.0
        %2139 = vmatpush1.msra.mxu0 %v2012
        %2140 = vmatprep.subr.mxu0 0.0
        %2141 = vmatpush1.msra.mxu0 %v2011
        %2142 = vmatprep.subr.mxu0 0.0
        %2143 = vmatpush1.msra.mxu0 %v2010
        %2144 = vmatprep.subr.mxu0 0.0
        %2145 = vmatpush1.msra.mxu0 %v2009
        %2146 = vmatprep.subr.mxu0 0.0
        %2147 = vmatpush1.msra.mxu0 %v2008
        %2148 = vmatprep.subr.mxu0 0.0
        %2149 = vmatpush1.msra.mxu0 %v2007
        %2150 = vmatprep.subr.mxu0 0.0
        %2151 = vmatpush1.msra.mxu0 %v2006
        %2152 = vmatprep.subr.mxu0 0.0
        %2153 = vmatpush1.msra.mxu0 %v2005
        %2154 = vmatprep.subr.mxu0 0.0
        %2155 = vmatpush1.msra.mxu0 %v2004
        %2156 = vmatprep.subr.mxu0 0.0
        %2157 = vmatpush1.msra.mxu0 %v2003
        %2158 = vmatprep.subr.mxu0 0.0
        %2159 = vmatpush1.msra.mxu0 %v2002
        %2160 = vmatprep.subr.mxu0 0.0
        %2161 = vmatpush1.msra.mxu0 %v2001
        %2162 = vmatprep.subr.mxu0 0.0
        %2163 = vmatpush1.msra.mxu0 %v2000
        %2164 = vmatprep.subr.mxu0 0.0
        %2165 = vmatpush1.msra.mxu0 %v1999
        %2166 = vmatprep.subr.mxu0 0.0
        %2167 = vmatpush2.msra.mxu0 %v2030
        %2168 = vmatprep.subr.mxu0 0.0
        %2169 = vmatpush2.msra.mxu0 %v2029
        %2170 = vmatprep.subr.mxu0 0.0
        %2171 = vmatpush2.msra.mxu0 %v2028
        %2172 = vmatprep.subr.mxu0 0.0
        %2173 = vmatpush2.msra.mxu0 %v2027
        %2174 = vmatprep.subr.mxu0 0.0
        %2175 = vmatpush2.msra.mxu0 %v2026
        %2176 = vmatprep.subr.mxu0 0.0
        %2177 = vmatpush2.msra.mxu0 %v2025
        %2178 = vmatprep.subr.mxu0 0.0
        %2179 = vmatpush2.msra.mxu0 %v2024
        %2180 = vmatprep.subr.mxu0 0.0
        %2181 = vmatpush2.msra.mxu0 %v2023
        %2182 = vmatprep.subr.mxu0 0.0
        %2183 = vmatpush2.msra.mxu0 %v2022
        %2184 = vmatprep.subr.mxu0 0.0
        %2185 = vmatpush2.msra.mxu0 %v2021
        %2186 = vmatprep.subr.mxu0 0.0
        %2187 = vmatpush2.msra.mxu0 %v2020
        %2188 = vmatprep.subr.mxu0 0.0
        %2189 = vmatpush2.msra.mxu0 %v2019
        %2190 = vmatprep.subr.mxu0 0.0
        %2191 = vmatpush2.msra.mxu0 %v2018
        %2192 = vmatprep.subr.mxu0 0.0
        %2193 = vmatpush2.msra.mxu0 %v2017
        %2194 = vmatprep.subr.mxu0 0.0
        %2195 = vmatpush2.msra.mxu0 %v2016
        %2196 = vmatprep.subr.mxu0 0.0
        %2197 = vmatpush2.msra.mxu0 %v2015
        %2198 = vmatprep.mubr.f32.mxu0 %v1836
        %2199 = vmatmul.mubr.f32.gmra.mxu0 %v1818
        %v2200 = vpop.f32.mrf.mxu0
        %v2201 = vadd.f32 %v2132, %v2200
        %v2202 = vpop.f32.mrf.mxu0
        %2203 = vmatprep.mubr.f32.mxu0 %v1838
        %2204 = vmatmul.mubr.f32.gmra.mxu0 %v1819
        %v2205 = vpop.f32.mrf.mxu0
        %v2206 = vadd.f32 %v2132, %v2205
        %v2207 = vpop.f32.mrf.mxu0
        %2208 = vmatprep.mubr.f32.mxu0 %v1840
        %2209 = vmatmul.mubr.f32.gmra.mxu0 %v1820
        %v2210 = vpop.f32.mrf.mxu0
        %v2211 = vadd.f32 %v2132, %v2210
        %v2212 = vpop.f32.mrf.mxu0
        %2213 = vmatprep.mubr.f32.mxu0 %v1842
        %2214 = vmatmul.mubr.f32.gmra.mxu0 %v1821
        %v2215 = vpop.f32.mrf.mxu0
        %v2216 = vadd.f32 %v2132, %v2215
        %v2217 = vpop.f32.mrf.mxu0
        %2218 = vmatprep.mubr.f32.mxu0 %v1844
        %2219 = vmatmul.mubr.f32.gmra.mxu0 %v1822
        %v2220 = vpop.f32.mrf.mxu0
        %v2221 = vadd.f32 %v2132, %v2220
        %v2222 = vpop.f32.mrf.mxu0
        %2223 = vmatprep.mubr.f32.mxu0 %v1846
        %2224 = vmatmul.mubr.f32.gmra.mxu0 %v1823
        %v2225 = vpop.f32.mrf.mxu0
        %v2226 = vadd.f32 %v2132, %v2225
        %v2227 = vpop.f32.mrf.mxu0
        %2228 = vmatprep.mubr.f32.mxu0 %v1848
        %2229 = vmatmul.mubr.f32.gmra.mxu0 %v1824
        %v2230 = vpop.f32.mrf.mxu0
        %v2231 = vadd.f32 %v2132, %v2230
        %v2232 = vpop.f32.mrf.mxu0
        %2233 = vmatprep.mubr.f32.mxu0 %v1847
        %2234 = vmatmul.mubr.f32.gmra.mxu0 %v1825
        %v2235 = vpop.f32.mrf.mxu0
        %v2236 = vadd.f32 %v2132, %v2235
        %v2237 = vpop.f32.mrf.mxu0
        %2238 = vdwg.mxu0
        %2239 = vmatprep.subr.mxu0 0.0
        %2240 = vmatpush1.msra.mxu0 %v2046
        %2241 = vmatprep.subr.mxu0 0.0
        %2242 = vmatpush1.msra.mxu0 %v2045
        %2243 = vmatprep.subr.mxu0 0.0
        %2244 = vmatpush1.msra.mxu0 %v2044
        %2245 = vmatprep.subr.mxu0 0.0
        %2246 = vmatpush1.msra.mxu0 %v2043
        %2247 = vmatprep.subr.mxu0 0.0
        %2248 = vmatpush1.msra.mxu0 %v2042
        %2249 = vmatprep.subr.mxu0 0.0
        %2250 = vmatpush1.msra.mxu0 %v2041
        %2251 = vmatprep.subr.mxu0 0.0
        %2252 = vmatpush1.msra.mxu0 %v2040
        %2253 = vmatprep.subr.mxu0 0.0
        %2254 = vmatpush1.msra.mxu0 %v2039
        %2255 = vmatprep.subr.mxu0 0.0
        %2256 = vmatpush1.msra.mxu0 %v2038
        %2257 = vmatprep.subr.mxu0 0.0
        %2258 = vmatpush1.msra.mxu0 %v2037
        %2259 = vmatprep.subr.mxu0 0.0
        %2260 = vmatpush1.msra.mxu0 %v2036
        %2261 = vmatprep.subr.mxu0 0.0
        %2262 = vmatpush1.msra.mxu0 %v2035
        %2263 = vmatprep.subr.mxu0 0.0
        %2264 = vmatpush1.msra.mxu0 %v2034
        %2265 = vmatprep.subr.mxu0 0.0
        %2266 = vmatpush1.msra.mxu0 %v2033
        %2267 = vmatprep.subr.mxu0 0.0
        %2268 = vmatpush1.msra.mxu0 %v2032
        %2269 = vmatprep.subr.mxu0 0.0
        %2270 = vmatpush1.msra.mxu0 %v2031
        %2271 = vmatprep.subr.mxu0 0.0
        %2272 = vmatpush2.msra.mxu0 %v2062
        %2273 = vmatprep.subr.mxu0 0.0
        %2274 = vmatpush2.msra.mxu0 %v2061
        %2275 = vmatprep.subr.mxu0 0.0
        %2276 = vmatpush2.msra.mxu0 %v2060
        %2277 = vmatprep.subr.mxu0 0.0
        %2278 = vmatpush2.msra.mxu0 %v2059
        %2279 = vmatprep.subr.mxu0 0.0
        %2280 = vmatpush2.msra.mxu0 %v2058
        %2281 = vmatprep.subr.mxu0 0.0
        %2282 = vmatpush2.msra.mxu0 %v2057
        %2283 = vmatprep.subr.mxu0 0.0
        %2284 = vmatpush2.msra.mxu0 %v2056
        %2285 = vmatprep.subr.mxu0 0.0
        %2286 = vmatpush2.msra.mxu0 %v2055
        %2287 = vmatprep.subr.mxu0 0.0
        %2288 = vmatpush2.msra.mxu0 %v2054
        %2289 = vmatprep.subr.mxu0 0.0
        %2290 = vmatpush2.msra.mxu0 %v2053
        %2291 = vmatprep.subr.mxu0 0.0
        %2292 = vmatpush2.msra.mxu0 %v2052
        %2293 = vmatprep.subr.mxu0 0.0
        %2294 = vmatpush2.msra.mxu0 %v2051
        %2295 = vmatprep.subr.mxu0 0.0
        %2296 = vmatpush2.msra.mxu0 %v2050
        %2297 = vmatprep.subr.mxu0 0.0
        %2298 = vmatpush2.msra.mxu0 %v2049
        %2299 = vmatprep.subr.mxu0 0.0
        %2300 = vmatpush2.msra.mxu0 %v2048
        %2301 = vmatprep.subr.mxu0 0.0
        %2302 = vmatpush2.msra.mxu0 %v2047
        %2303 = vmatprep.mubr.f32.mxu0 %v1882
        %2304 = vmatmul.mubr.f32.gmra.mxu0 %v1859
        %v2305 = vpop.f32.mrf.mxu0
        %v2306 = vadd.f32 %v2201, %v2305
        %v2307 = vpop.f32.mrf.mxu0
        %2308 = vmatprep.mubr.f32.mxu0 %v1884
        %2309 = vmatmul.mubr.f32.gmra.mxu0 %v1861
        %v2310 = vpop.f32.mrf.mxu0
        %v2311 = vadd.f32 %v2206, %v2310
        %v2312 = vpop.f32.mrf.mxu0
        %2313 = vmatprep.mubr.f32.mxu0 %v1886
        %2314 = vmatmul.mubr.f32.gmra.mxu0 %v1863
        %v2315 = vpop.f32.mrf.mxu0
        %v2316 = vadd.f32 %v2211, %v2315
        %v2317 = vpop.f32.mrf.mxu0
        %2318 = vmatprep.mubr.f32.mxu0 %v1888
        %2319 = vmatmul.mubr.f32.gmra.mxu0 %v1865
        %v2320 = vpop.f32.mrf.mxu0
        %v2321 = vadd.f32 %v2216, %v2320
        %v2322 = vpop.f32.mrf.mxu0
        %2323 = vmatprep.mubr.f32.mxu0 %v1890
        %2324 = vmatmul.mubr.f32.gmra.mxu0 %v1867
        %v2325 = vpop.f32.mrf.mxu0
        %v2326 = vadd.f32 %v2221, %v2325
        %v2327 = vpop.f32.mrf.mxu0
        %2328 = vmatprep.mubr.f32.mxu0 %v1892
        %2329 = vmatmul.mubr.f32.gmra.mxu0 %v1869
        %v2330 = vpop.f32.mrf.mxu0
        %v2331 = vadd.f32 %v2226, %v2330
        %v2332 = vpop.f32.mrf.mxu0
        %2333 = vmatprep.mubr.f32.mxu0 %v1894
        %2334 = vmatmul.mubr.f32.gmra.mxu0 %v1871
        %v2335 = vpop.f32.mrf.mxu0
        %v2336 = vadd.f32 %v2231, %v2335
        %v2337 = vpop.f32.mrf.mxu0
        %2338 = vmatprep.mubr.f32.mxu0 %v1893
        %2339 = vmatmul.mubr.f32.gmra.mxu0 %v1870
        %v2340 = vpop.f32.mrf.mxu0
        %v2341 = vadd.f32 %v2236, %v2340
        %v2342 = vpop.f32.mrf.mxu0
        %2343 = vdwg.mxu0
        %2344 = vmatprep.subr.mxu0 0.0
        %2345 = vmatpush1.msra.mxu0 %v2078
        %2346 = vmatprep.subr.mxu0 0.0
        %2347 = vmatpush1.msra.mxu0 %v2077
        %2348 = vmatprep.subr.mxu0 0.0
        %2349 = vmatpush1.msra.mxu0 %v2076
        %2350 = vmatprep.subr.mxu0 0.0
        %2351 = vmatpush1.msra.mxu0 %v2075
        %2352 = vmatprep.subr.mxu0 0.0
        %2353 = vmatpush1.msra.mxu0 %v2074
        %2354 = vmatprep.subr.mxu0 0.0
        %2355 = vmatpush1.msra.mxu0 %v2073
        %2356 = vmatprep.subr.mxu0 0.0
        %2357 = vmatpush1.msra.mxu0 %v2072
        %2358 = vmatprep.subr.mxu0 0.0
        %2359 = vmatpush1.msra.mxu0 %v2071
        %2360 = vmatprep.subr.mxu0 0.0
        %2361 = vmatpush1.msra.mxu0 %v2070
        %2362 = vmatprep.subr.mxu0 0.0
        %2363 = vmatpush1.msra.mxu0 %v2069
        %2364 = vmatprep.subr.mxu0 0.0
        %2365 = vmatpush1.msra.mxu0 %v2068
        %2366 = vmatprep.subr.mxu0 0.0
        %2367 = vmatpush1.msra.mxu0 %v2067
        %2368 = vmatprep.subr.mxu0 0.0
        %2369 = vmatpush1.msra.mxu0 %v2066
        %2370 = vmatprep.subr.mxu0 0.0
        %2371 = vmatpush1.msra.mxu0 %v2065
        %2372 = vmatprep.subr.mxu0 0.0
        %2373 = vmatpush1.msra.mxu0 %v2064
        %2374 = vmatprep.subr.mxu0 0.0
        %2375 = vmatpush1.msra.mxu0 %v2063
        %2376 = vmatprep.subr.mxu0 0.0
        %2377 = vmatpush2.msra.mxu0 %v2094
        %2378 = vmatprep.subr.mxu0 0.0
        %2379 = vmatpush2.msra.mxu0 %v2093
        %2380 = vmatprep.subr.mxu0 0.0
        %2381 = vmatpush2.msra.mxu0 %v2092
        %2382 = vmatprep.subr.mxu0 0.0
        %2383 = vmatpush2.msra.mxu0 %v2091
        %2384 = vmatprep.subr.mxu0 0.0
        %2385 = vmatpush2.msra.mxu0 %v2090
        %2386 = vmatprep.subr.mxu0 0.0
        %2387 = vmatpush2.msra.mxu0 %v2089
        %2388 = vmatprep.subr.mxu0 0.0
        %2389 = vmatpush2.msra.mxu0 %v2088
        %2390 = vmatprep.subr.mxu0 0.0
        %2391 = vmatpush2.msra.mxu0 %v2087
        %2392 = vmatprep.subr.mxu0 0.0
        %2393 = vmatpush2.msra.mxu0 %v2086
        %2394 = vmatprep.subr.mxu0 0.0
        %2395 = vmatpush2.msra.mxu0 %v2085
        %2396 = vmatprep.subr.mxu0 0.0
        %2397 = vmatpush2.msra.mxu0 %v2084
        %2398 = vmatprep.subr.mxu0 0.0
        %2399 = vmatpush2.msra.mxu0 %v2083
        %2400 = vmatprep.subr.mxu0 0.0
        %2401 = vmatpush2.msra.mxu0 %v2082
        %2402 = vmatprep.subr.mxu0 0.0
        %2403 = vmatpush2.msra.mxu0 %v2081
        %2404 = vmatprep.subr.mxu0 0.0
        %2405 = vmatpush2.msra.mxu0 %v2080
        %2406 = vmatprep.subr.mxu0 0.0
        %2407 = vmatpush2.msra.mxu0 %v2079
        %2408 = vmatprep.mubr.f32.mxu0 %v1930
        %2409 = vmatmul.mubr.f32.gmra.mxu0 %v1906
        %v2410 = vpop.f32.mrf.mxu0
        %v2411 = vadd.f32 %v2306, %v2410
        %v2412 = vpop.f32.mrf.mxu0
        %2413 = vmatprep.mubr.f32.mxu0 %v1932
        %2414 = vmatmul.mubr.f32.gmra.mxu0 %v1908
        %v2415 = vpop.f32.mrf.mxu0
        %v2416 = vadd.f32 %v2311, %v2415
        %v2417 = vpop.f32.mrf.mxu0
        %2418 = vmatprep.mubr.f32.mxu0 %v1934
        %2419 = vmatmul.mubr.f32.gmra.mxu0 %v1910
        %v2420 = vpop.f32.mrf.mxu0
        %v2421 = vadd.f32 %v2316, %v2420
        %v2422 = vpop.f32.mrf.mxu0
        %2423 = vmatprep.mubr.f32.mxu0 %v1936
        %2424 = vmatmul.mubr.f32.gmra.mxu0 %v1912
        %v2425 = vpop.f32.mrf.mxu0
        %v2426 = vadd.f32 %v2321, %v2425
        %v2427 = vpop.f32.mrf.mxu0
        %2428 = vmatprep.mubr.f32.mxu0 %v1938
        %2429 = vmatmul.mubr.f32.gmra.mxu0 %v1914
        %v2430 = vpop.f32.mrf.mxu0
        %v2431 = vadd.f32 %v2326, %v2430
        %v2432 = vpop.f32.mrf.mxu0
        %2433 = vmatprep.mubr.f32.mxu0 %v1940
        %2434 = vmatmul.mubr.f32.gmra.mxu0 %v1916
        %v2435 = vpop.f32.mrf.mxu0
        %v2436 = vadd.f32 %v2331, %v2435
        %v2437 = vpop.f32.mrf.mxu0
        %2438 = vmatprep.mubr.f32.mxu0 %v1942
        %2439 = vmatmul.mubr.f32.gmra.mxu0 %v1918
        %v2440 = vpop.f32.mrf.mxu0
        %v2441 = vadd.f32 %v2336, %v2440
        %v2442 = vpop.f32.mrf.mxu0
        %2443 = vmatprep.mubr.f32.mxu0 %v1941
        %2444 = vmatmul.mubr.f32.gmra.mxu0 %v1917
        %v2445 = vpop.f32.mrf.mxu0
        %v2446 = vadd.f32 %v2341, %v2445
        %v2447 = vpop.f32.mrf.mxu0
        %2448 = vdwg.mxu0
        %2449 = vmatprep.subr.mxu0 0.0
        %2450 = vmatpush1.msra.mxu0 %v2110
        %2451 = vmatprep.subr.mxu0 0.0
        %2452 = vmatpush1.msra.mxu0 %v2109
        %2453 = vmatprep.subr.mxu0 0.0
        %2454 = vmatpush1.msra.mxu0 %v2108
        %2455 = vmatprep.subr.mxu0 0.0
        %2456 = vmatpush1.msra.mxu0 %v2107
        %2457 = vmatprep.subr.mxu0 0.0
        %2458 = vmatpush1.msra.mxu0 %v2106
        %2459 = vmatprep.subr.mxu0 0.0
        %2460 = vmatpush1.msra.mxu0 %v2105
        %2461 = vmatprep.subr.mxu0 0.0
        %2462 = vmatpush1.msra.mxu0 %v2104
        %2463 = vmatprep.subr.mxu0 0.0
        %2464 = vmatpush1.msra.mxu0 %v2103
        %2465 = vmatprep.subr.mxu0 0.0
        %2466 = vmatpush1.msra.mxu0 %v2102
        %2467 = vmatprep.subr.mxu0 0.0
        %2468 = vmatpush1.msra.mxu0 %v2101
        %2469 = vmatprep.subr.mxu0 0.0
        %2470 = vmatpush1.msra.mxu0 %v2100
        %2471 = vmatprep.subr.mxu0 0.0
        %2472 = vmatpush1.msra.mxu0 %v2099
        %2473 = vmatprep.subr.mxu0 0.0
        %2474 = vmatpush1.msra.mxu0 %v2098
        %2475 = vmatprep.subr.mxu0 0.0
        %2476 = vmatpush1.msra.mxu0 %v2097
        %2477 = vmatprep.subr.mxu0 0.0
        %2478 = vmatpush1.msra.mxu0 %v2096
        %2479 = vmatprep.subr.mxu0 0.0
        %2480 = vmatpush1.msra.mxu0 %v2095
        %2481 = vmatprep.subr.mxu0 0.0
        %2482 = vmatpush2.msra.mxu0 %v2126
        %2483 = vmatprep.subr.mxu0 0.0
        %2484 = vmatpush2.msra.mxu0 %v2125
        %2485 = vmatprep.subr.mxu0 0.0
        %2486 = vmatpush2.msra.mxu0 %v2124
        %2487 = vmatprep.subr.mxu0 0.0
        %2488 = vmatpush2.msra.mxu0 %v2123
        %2489 = vmatprep.subr.mxu0 0.0
        %2490 = vmatpush2.msra.mxu0 %v2122
        %2491 = vmatprep.subr.mxu0 0.0
        %2492 = vmatpush2.msra.mxu0 %v2121
        %2493 = vmatprep.subr.mxu0 0.0
        %2494 = vmatpush2.msra.mxu0 %v2120
        %2495 = vmatprep.subr.mxu0 0.0
        %2496 = vmatpush2.msra.mxu0 %v2119
        %2497 = vmatprep.subr.mxu0 0.0
        %2498 = vmatpush2.msra.mxu0 %v2118
        %2499 = vmatprep.subr.mxu0 0.0
        %2500 = vmatpush2.msra.mxu0 %v2117
        %2501 = vmatprep.subr.mxu0 0.0
        %2502 = vmatpush2.msra.mxu0 %v2116
        %2503 = vmatprep.subr.mxu0 0.0
        %2504 = vmatpush2.msra.mxu0 %v2115
        %2505 = vmatprep.subr.mxu0 0.0
        %2506 = vmatpush2.msra.mxu0 %v2114
        %2507 = vmatprep.subr.mxu0 0.0
        %2508 = vmatpush2.msra.mxu0 %v2113
        %2509 = vmatprep.subr.mxu0 0.0
        %2510 = vmatpush2.msra.mxu0 %v2112
        %2511 = vmatprep.subr.mxu0 0.0
        %2512 = vmatpush2.msra.mxu0 %v2111
        %2513 = vmatprep.mubr.f32.mxu0 %v1978
        %2514 = vmatmul.mubr.f32.gmra.mxu0 %v1954
        %v2515 = vpop.f32.mrf.mxu0
        %v2516 = vadd.f32 %v2411, %v2515
        %v2517 = vpop.f32.mrf.mxu0
        %2518 = vmatprep.mubr.f32.mxu0 %v1980
        %2519 = vmatmul.mubr.f32.gmra.mxu0 %v1956
        %v2520 = vpop.f32.mrf.mxu0
        %v2521 = vadd.f32 %v2416, %v2520
        %v2522 = vpop.f32.mrf.mxu0
        %2523 = vmatprep.mubr.f32.mxu0 %v1982
        %2524 = vmatmul.mubr.f32.gmra.mxu0 %v1958
        %v2525 = vpop.f32.mrf.mxu0
        %v2526 = vadd.f32 %v2421, %v2525
        %v2527 = vpop.f32.mrf.mxu0
        %2528 = vmatprep.mubr.f32.mxu0 %v1984
        %2529 = vmatmul.mubr.f32.gmra.mxu0 %v1960
        %v2530 = vpop.f32.mrf.mxu0
        %v2531 = vadd.f32 %v2426, %v2530
        %v2532 = vpop.f32.mrf.mxu0
        %2533 = vmatprep.mubr.f32.mxu0 %v1986
        %2534 = vmatmul.mubr.f32.gmra.mxu0 %v1962
        %v2535 = vpop.f32.mrf.mxu0
        %v2536 = vadd.f32 %v2431, %v2535
        %v2537 = vpop.f32.mrf.mxu0
        %2538 = vmatprep.mubr.f32.mxu0 %v1988
        %2539 = vmatmul.mubr.f32.gmra.mxu0 %v1964
        %v2540 = vpop.f32.mrf.mxu0
        %v2541 = vadd.f32 %v2436, %v2540
        %v2542 = vpop.f32.mrf.mxu0
        %2543 = vmatprep.mubr.f32.mxu0 %v1990
        %2544 = vmatmul.mubr.f32.gmra.mxu0 %v1966
        %v2545 = vpop.f32.mrf.mxu0
        %v2546 = vadd.f32 %v2441, %v2545
        %v2547 = vpop.f32.mrf.mxu0
        %2548 = vmatprep.mubr.f32.mxu0 %v1989
        %2549 = vmatmul.mubr.f32.gmra.mxu0 %v1965
        %v2550 = vpop.f32.mrf.mxu0
        %v2551 = vadd.f32 %v2446, %v2550
        %v2552 = vpop.f32.mrf.mxu0
        %2553 = vdwg.mxu0
        %v2554 = vmax.f32 %v2516, 0.0
        %v2555 = vmax.f32 %v2521, 0.0
        %v2556 = vmax.f32 %v2526, 0.0
        %v2557 = vmax.f32 %v2531, 0.0
        %v2558 = vmax.f32 %v2536, 0.0
        %v2559 = vmax.f32 %v2541, 0.0
        %v2560 = vmax.f32 %v2546, 0.0
        %v2561 = vmax.f32 %v2551, 0.0
        %v2569 = vrot.slane %v2554, 1
        %v2570 = vrot.slane %v2555, 1
        %v2571 = vsel %vm980, %v2569, %v2570
        %v2572 = vrot.slane %v2556, 1
        %v2573 = vsel %vm980, %v2570, %v2572
        %v2574 = vrot.slane %v2557, 1
        %v2575 = vsel %vm980, %v2572, %v2574
        %v2576 = vrot.slane %v2558, 1
        %v2577 = vsel %vm980, %v2574, %v2576
        %v2578 = vrot.slane %v2559, 1
        %v2579 = vsel %vm980, %v2576, %v2578
        %v2580 = vrot.slane %v2560, 1
        %v2581 = vsel %vm980, %v2578, %v2580
        %v2589 = vrot.slane %v2554, 2
        %v2590 = vrot.slane %v2555, 2
        %v2591 = vsel %vm992, %v2589, %v2590
        %v2592 = vrot.slane %v2556, 2
        %v2593 = vsel %vm992, %v2590, %v2592
        %v2594 = vrot.slane %v2557, 2
        %v2595 = vsel %vm992, %v2592, %v2594
        %v2596 = vrot.slane %v2558, 2
        %v2597 = vsel %vm992, %v2594, %v2596
        %v2598 = vrot.slane %v2559, 2
        %v2599 = vsel %vm992, %v2596, %v2598
        %v2600 = vrot.slane %v2560, 2
        %v2601 = vsel %vm992, %v2598, %v2600
        %v2609 = vrot.slane %v2554, 3
        %v2610 = vrot.slane %v2555, 3
        %v2611 = vsel %vm1004, %v2609, %v2610
        %v2612 = vrot.slane %v2556, 3
        %v2613 = vsel %vm1004, %v2610, %v2612
        %v2614 = vrot.slane %v2557, 3
        %v2615 = vsel %vm1004, %v2612, %v2614
        %v2616 = vrot.slane %v2558, 3
        %v2617 = vsel %vm1004, %v2614, %v2616
        %v2618 = vrot.slane %v2559, 3
        %v2619 = vsel %vm1004, %v2616, %v2618
        %v2620 = vrot.slane %v2560, 3
        %v2621 = vsel %vm1004, %v2618, %v2620
        %v2629 = vrot.slane %v2554, 4
        %v2630 = vrot.slane %v2555, 4
        %v2631 = vsel %vm1903, %v2629, %v2630
        %v2632 = vrot.slane %v2556, 4
        %v2633 = vsel %vm1903, %v2630, %v2632
        %v2634 = vrot.slane %v2557, 4
        %v2635 = vsel %vm1903, %v2632, %v2634
        %v2636 = vrot.slane %v2558, 4
        %v2637 = vsel %vm1903, %v2634, %v2636
        %v2638 = vrot.slane %v2559, 4
        %v2639 = vsel %vm1903, %v2636, %v2638
        %v2640 = vrot.slane %v2560, 4
        %v2641 = vsel %vm1903, %v2638, %v2640
        %v2649 = vrot.slane %v2554, 5
        %v2650 = vrot.slane %v2555, 5
        %v2651 = vsel %vm1927, %v2649, %v2650
        %v2652 = vrot.slane %v2556, 5
        %v2653 = vsel %vm1927, %v2650, %v2652
        %v2654 = vrot.slane %v2557, 5
        %v2655 = vsel %vm1927, %v2652, %v2654
        %v2656 = vrot.slane %v2558, 5
        %v2657 = vsel %vm1927, %v2654, %v2656
        %v2658 = vrot.slane %v2559, 5
        %v2659 = vsel %vm1927, %v2656, %v2658
        %v2660 = vrot.slane %v2560, 5
        %v2661 = vsel %vm1927, %v2658, %v2660
        %v2669 = vrot.slane %v2554, 6
        %v2670 = vrot.slane %v2555, 6
        %v2671 = vsel %vm1951, %v2669, %v2670
        %v2672 = vrot.slane %v2556, 6
        %v2673 = vsel %vm1951, %v2670, %v2672
        %v2674 = vrot.slane %v2557, 6
        %v2675 = vsel %vm1951, %v2672, %v2674
        %v2676 = vrot.slane %v2558, 6
        %v2677 = vsel %vm1951, %v2674, %v2676
        %v2678 = vrot.slane %v2559, 6
        %v2679 = vsel %vm1951, %v2676, %v2678
        %v2680 = vrot.slane %v2560, 6
        %v2681 = vsel %vm1951, %v2678, %v2680
        %v2690 = vrot.slane %v2554, 7
        %v2691 = vrot.slane %v2555, 7
        %v2692 = vsel %vm1975, %v2690, %v2691
        %v2693 = vrot.slane %v2556, 7
        %v2694 = vsel %vm1975, %v2691, %v2693
        %v2695 = vrot.slane %v2557, 7
        %v2696 = vsel %vm1975, %v2693, %v2695
        %v2697 = vrot.slane %v2558, 7
        %v2698 = vsel %vm1975, %v2695, %v2697
        %v2699 = vrot.slane %v2559, 7
        %v2700 = vsel %vm1975, %v2697, %v2699
        %v2701 = vrot.slane %v2560, 7
        %v2702 = vsel %vm1975, %v2699, %v2701
        %v2703 = vrot.slane %v2561, 7
        %v2704 = vsel %vm1975, %v2701, %v2703
        %v2712 = vld [vmem:[#allocation15] sm:$0xff]
        %v2713 = vld [vmem:[#allocation15 + $0x8] sm:$0xff]
        %v2714 = vld [vmem:[#allocation15 + $0x10] sm:$0xff]
        %v2715 = vld [vmem:[#allocation15 + $0x18] sm:$0xff]
        %v2716 = vld [vmem:[#allocation15 + $0x20] sm:$0xff]
        %v2717 = vld [vmem:[#allocation15 + $0x28] sm:$0xff]
        %v2718 = vld [vmem:[#allocation15 + $0x30] sm:$0xff]
        %v2719 = vld [vmem:[#allocation15 + $0x38] sm:$0xff]
        %v2720 = vld [vmem:[#allocation15 + $0x40] sm:$0xff]
        %v2721 = vld [vmem:[#allocation15 + $0x48] sm:$0xff]
        %v2722 = vld [vmem:[#allocation15 + $0x50] sm:$0xff]
        %v2723 = vld [vmem:[#allocation15 + $0x58] sm:$0xff]
        %v2724 = vld [vmem:[#allocation15 + $0x60] sm:$0xff]
        %v2725 = vld [vmem:[#allocation15 + $0x68] sm:$0xff]
        %v2726 = vld [vmem:[#allocation15 + $0x70] sm:$0xff]
        %v2727 = vld [vmem:[#allocation15 + $0x78] sm:$0xff]
        %v2728 = vld [vmem:[#allocation15 + $0x80] sm:$0xff]
        %v2729 = vld [vmem:[#allocation15 + $0x88] sm:$0xff]
        %v2730 = vld [vmem:[#allocation15 + $0x90] sm:$0xff]
        %v2731 = vld [vmem:[#allocation15 + $0x98] sm:$0xff]
        %v2732 = vld [vmem:[#allocation15 + $0xa0] sm:$0xff]
        %v2733 = vld [vmem:[#allocation15 + $0xa8] sm:$0xff]
        %v2734 = vld [vmem:[#allocation15 + $0xb0] sm:$0xff]
        %v2735 = vld [vmem:[#allocation15 + $0xb8] sm:$0xff]
        %v2736 = vld [vmem:[#allocation15 + $0xc0] sm:$0xff]
        %v2737 = vld [vmem:[#allocation15 + $0xc8] sm:$0xff]
        %v2738 = vld [vmem:[#allocation15 + $0xd0] sm:$0xff]
        %v2739 = vld [vmem:[#allocation15 + $0xd8] sm:$0xff]
        %v2740 = vld [vmem:[#allocation15 + $0xe0] sm:$0xff]
        %v2741 = vld [vmem:[#allocation15 + $0xe8] sm:$0xff]
        %v2742 = vld [vmem:[#allocation15 + $0xf0] sm:$0xff]
        %v2743 = vld [vmem:[#allocation15 + $0xf8] sm:$0xff]
        %v2744 = vld [vmem:[#allocation15 + $0x100] sm:$0xff]
        %v2745 = vld [vmem:[#allocation15 + $0x108] sm:$0xff]
        %v2746 = vld [vmem:[#allocation15 + $0x110] sm:$0xff]
        %v2747 = vld [vmem:[#allocation15 + $0x118] sm:$0xff]
        %v2748 = vld [vmem:[#allocation15 + $0x120] sm:$0xff]
        %v2749 = vld [vmem:[#allocation15 + $0x128] sm:$0xff]
        %v2750 = vld [vmem:[#allocation15 + $0x130] sm:$0xff]
        %v2751 = vld [vmem:[#allocation15 + $0x138] sm:$0xff]
        %v2752 = vld [vmem:[#allocation15 + $0x140] sm:$0xff]
        %v2753 = vld [vmem:[#allocation15 + $0x148] sm:$0xff]
        %v2754 = vld [vmem:[#allocation15 + $0x150] sm:$0xff]
        %v2755 = vld [vmem:[#allocation15 + $0x158] sm:$0xff]
        %v2756 = vld [vmem:[#allocation15 + $0x160] sm:$0xff]
        %v2757 = vld [vmem:[#allocation15 + $0x168] sm:$0xff]
        %v2758 = vld [vmem:[#allocation15 + $0x170] sm:$0xff]
        %v2759 = vld [vmem:[#allocation15 + $0x178] sm:$0xff]
        %v2760 = vld [vmem:[#allocation15 + $0x180] sm:$0xff]
        %v2761 = vld [vmem:[#allocation15 + $0x188] sm:$0xff]
        %v2762 = vld [vmem:[#allocation15 + $0x190] sm:$0xff]
        %v2763 = vld [vmem:[#allocation15 + $0x198] sm:$0xff]
        %v2764 = vld [vmem:[#allocation15 + $0x1a0] sm:$0xff]
        %v2765 = vld [vmem:[#allocation15 + $0x1a8] sm:$0xff]
        %v2766 = vld [vmem:[#allocation15 + $0x1b0] sm:$0xff]
        %v2767 = vld [vmem:[#allocation15 + $0x1b8] sm:$0xff]
        %v2768 = vld [vmem:[#allocation15 + $0x1c0] sm:$0xff]
        %v2769 = vld [vmem:[#allocation15 + $0x1c8] sm:$0xff]
        %v2770 = vld [vmem:[#allocation15 + $0x1d0] sm:$0xff]
        %v2771 = vld [vmem:[#allocation15 + $0x1d8] sm:$0xff]
        %v2772 = vld [vmem:[#allocation15 + $0x1e0] sm:$0xff]
        %v2773 = vld [vmem:[#allocation15 + $0x1e8] sm:$0xff]
        %v2774 = vld [vmem:[#allocation15 + $0x1f0] sm:$0xff]
        %v2775 = vld [vmem:[#allocation15 + $0x1f8] sm:$0xff]
        %v2776 = vld [vmem:[#allocation15 + $0x200] sm:$0xff]
        %v2777 = vld [vmem:[#allocation15 + $0x208] sm:$0xff]
        %v2778 = vld [vmem:[#allocation15 + $0x210] sm:$0xff]
        %v2779 = vld [vmem:[#allocation15 + $0x218] sm:$0xff]
        %v2780 = vld [vmem:[#allocation15 + $0x220] sm:$0xff]
        %v2781 = vld [vmem:[#allocation15 + $0x228] sm:$0xff]
        %v2782 = vld [vmem:[#allocation15 + $0x230] sm:$0xff]
        %v2783 = vld [vmem:[#allocation15 + $0x238] sm:$0xff]
        %v2784 = vld [vmem:[#allocation15 + $0x240] sm:$0xff]
        %v2785 = vld [vmem:[#allocation15 + $0x248] sm:$0xff]
        %v2786 = vld [vmem:[#allocation15 + $0x250] sm:$0xff]
        %v2787 = vld [vmem:[#allocation15 + $0x258] sm:$0xff]
        %v2788 = vld [vmem:[#allocation15 + $0x260] sm:$0xff]
        %v2789 = vld [vmem:[#allocation15 + $0x268] sm:$0xff]
        %v2790 = vld [vmem:[#allocation15 + $0x270] sm:$0xff]
        %v2791 = vld [vmem:[#allocation15 + $0x278] sm:$0xff]
        %v2792 = vld [vmem:[#allocation15 + $0x280] sm:$0xff]
        %v2793 = vld [vmem:[#allocation15 + $0x288] sm:$0xff]
        %v2794 = vld [vmem:[#allocation15 + $0x290] sm:$0xff]
        %v2795 = vld [vmem:[#allocation15 + $0x298] sm:$0xff]
        %v2796 = vld [vmem:[#allocation15 + $0x2a0] sm:$0xff]
        %v2797 = vld [vmem:[#allocation15 + $0x2a8] sm:$0xff]
        %v2798 = vld [vmem:[#allocation15 + $0x2b0] sm:$0xff]
        %v2799 = vld [vmem:[#allocation15 + $0x2b8] sm:$0xff]
        %v2800 = vld [vmem:[#allocation15 + $0x2c0] sm:$0xff]
        %v2801 = vld [vmem:[#allocation15 + $0x2c8] sm:$0xff]
        %v2802 = vld [vmem:[#allocation15 + $0x2d0] sm:$0xff]
        %v2803 = vld [vmem:[#allocation15 + $0x2d8] sm:$0xff]
        %v2804 = vld [vmem:[#allocation15 + $0x2e0] sm:$0xff]
        %v2805 = vld [vmem:[#allocation15 + $0x2e8] sm:$0xff]
        %v2806 = vld [vmem:[#allocation15 + $0x2f0] sm:$0xff]
        %v2807 = vld [vmem:[#allocation15 + $0x2f8] sm:$0xff]
        %v2808 = vld [vmem:[#allocation15 + $0x300] sm:$0xff]
        %v2809 = vld [vmem:[#allocation15 + $0x308] sm:$0xff]
        %v2810 = vld [vmem:[#allocation15 + $0x310] sm:$0xff]
        %v2811 = vld [vmem:[#allocation15 + $0x318] sm:$0xff]
        %v2812 = vld [vmem:[#allocation15 + $0x320] sm:$0xff]
        %v2813 = vld [vmem:[#allocation15 + $0x328] sm:$0xff]
        %v2814 = vld [vmem:[#allocation15 + $0x330] sm:$0xff]
        %v2815 = vld [vmem:[#allocation15 + $0x338] sm:$0xff]
        %v2816 = vld [vmem:[#allocation15 + $0x340] sm:$0xff]
        %v2817 = vld [vmem:[#allocation15 + $0x348] sm:$0xff]
        %v2818 = vld [vmem:[#allocation15 + $0x350] sm:$0xff]
        %v2819 = vld [vmem:[#allocation15 + $0x358] sm:$0xff]
        %v2820 = vld [vmem:[#allocation15 + $0x360] sm:$0xff]
        %v2821 = vld [vmem:[#allocation15 + $0x368] sm:$0xff]
        %v2822 = vld [vmem:[#allocation15 + $0x370] sm:$0xff]
        %v2823 = vld [vmem:[#allocation15 + $0x378] sm:$0xff]
        %v2824 = vld [vmem:[#allocation15 + $0x380] sm:$0xff]
        %v2825 = vld [vmem:[#allocation15 + $0x388] sm:$0xff]
        %v2826 = vld [vmem:[#allocation15 + $0x390] sm:$0xff]
        %v2827 = vld [vmem:[#allocation15 + $0x398] sm:$0xff]
        %v2828 = vld [vmem:[#allocation15 + $0x3a0] sm:$0xff]
        %v2829 = vld [vmem:[#allocation15 + $0x3a8] sm:$0xff]
        %v2830 = vld [vmem:[#allocation15 + $0x3b0] sm:$0xff]
        %v2831 = vld [vmem:[#allocation15 + $0x3b8] sm:$0xff]
        %v2832 = vld [vmem:[#allocation15 + $0x3c0] sm:$0xff]
        %v2833 = vld [vmem:[#allocation15 + $0x3c8] sm:$0xff]
        %v2834 = vld [vmem:[#allocation15 + $0x3d0] sm:$0xff]
        %v2835 = vld [vmem:[#allocation15 + $0x3d8] sm:$0xff]
        %v2836 = vld [vmem:[#allocation15 + $0x3e0] sm:$0xff]
        %v2837 = vld [vmem:[#allocation15 + $0x3e8] sm:$0xff]
        %v2838 = vld [vmem:[#allocation15 + $0x3f0] sm:$0xff]
        %v2839 = vld [vmem:[#allocation15 + $0x3f8] sm:$0xff]
        %v2840 = vld [vmem:[#allocation16] sm:$0x1]
        %v2842 = vlaneseq
        %v2843 = vshrl.u32 %v2842, 7
        %v2844 = vsub.s32 0, %v2843
        %v2845 = vrot.slane %v2840, %v2844
        %2847 = vmatprep.subr.mxu0 0.0
        %2848 = vmatpush1.msra.mxu0 %v2727
        %2849 = vmatprep.subr.mxu0 0.0
        %2850 = vmatpush1.msra.mxu0 %v2726
        %2851 = vmatprep.subr.mxu0 0.0
        %2852 = vmatpush1.msra.mxu0 %v2725
        %2853 = vmatprep.subr.mxu0 0.0
        %2854 = vmatpush1.msra.mxu0 %v2724
        %2855 = vmatprep.subr.mxu0 0.0
        %2856 = vmatpush1.msra.mxu0 %v2723
        %2857 = vmatprep.subr.mxu0 0.0
        %2858 = vmatpush1.msra.mxu0 %v2722
        %2859 = vmatprep.subr.mxu0 0.0
        %2860 = vmatpush1.msra.mxu0 %v2721
        %2861 = vmatprep.subr.mxu0 0.0
        %2862 = vmatpush1.msra.mxu0 %v2720
        %2863 = vmatprep.subr.mxu0 0.0
        %2864 = vmatpush1.msra.mxu0 %v2719
        %2865 = vmatprep.subr.mxu0 0.0
        %2866 = vmatpush1.msra.mxu0 %v2718
        %2867 = vmatprep.subr.mxu0 0.0
        %2868 = vmatpush1.msra.mxu0 %v2717
        %2869 = vmatprep.subr.mxu0 0.0
        %2870 = vmatpush1.msra.mxu0 %v2716
        %2871 = vmatprep.subr.mxu0 0.0
        %2872 = vmatpush1.msra.mxu0 %v2715
        %2873 = vmatprep.subr.mxu0 0.0
        %2874 = vmatpush1.msra.mxu0 %v2714
        %2875 = vmatprep.subr.mxu0 0.0
        %2876 = vmatpush1.msra.mxu0 %v2713
        %2877 = vmatprep.subr.mxu0 0.0
        %2878 = vmatpush1.msra.mxu0 %v2712
        %2879 = vmatprep.subr.mxu0 0.0
        %2880 = vmatpush2.msra.mxu0 %v2743
        %2881 = vmatprep.subr.mxu0 0.0
        %2882 = vmatpush2.msra.mxu0 %v2742
        %2883 = vmatprep.subr.mxu0 0.0
        %2884 = vmatpush2.msra.mxu0 %v2741
        %2885 = vmatprep.subr.mxu0 0.0
        %2886 = vmatpush2.msra.mxu0 %v2740
        %2887 = vmatprep.subr.mxu0 0.0
        %2888 = vmatpush2.msra.mxu0 %v2739
        %2889 = vmatprep.subr.mxu0 0.0
        %2890 = vmatpush2.msra.mxu0 %v2738
        %2891 = vmatprep.subr.mxu0 0.0
        %2892 = vmatpush2.msra.mxu0 %v2737
        %2893 = vmatprep.subr.mxu0 0.0
        %2894 = vmatpush2.msra.mxu0 %v2736
        %2895 = vmatprep.subr.mxu0 0.0
        %2896 = vmatpush2.msra.mxu0 %v2735
        %2897 = vmatprep.subr.mxu0 0.0
        %2898 = vmatpush2.msra.mxu0 %v2734
        %2899 = vmatprep.subr.mxu0 0.0
        %2900 = vmatpush2.msra.mxu0 %v2733
        %2901 = vmatprep.subr.mxu0 0.0
        %2902 = vmatpush2.msra.mxu0 %v2732
        %2903 = vmatprep.subr.mxu0 0.0
        %2904 = vmatpush2.msra.mxu0 %v2731
        %2905 = vmatprep.subr.mxu0 0.0
        %2906 = vmatpush2.msra.mxu0 %v2730
        %2907 = vmatprep.subr.mxu0 0.0
        %2908 = vmatpush2.msra.mxu0 %v2729
        %2909 = vmatprep.subr.mxu0 0.0
        %2910 = vmatpush2.msra.mxu0 %v2728
        %2911 = vmatprep.mubr.f32.mxu0 %v2571
        %2912 = vmatmul.mubr.f32.gmra.mxu0 %v2554
        %v2913 = vpop.f32.mrf.mxu0
        %v2914 = vadd.f32 %v2845, %v2913
        %v2915 = vpop.f32.mrf.mxu0
        %2916 = vmatprep.mubr.f32.mxu0 %v2573
        %2917 = vmatmul.mubr.f32.gmra.mxu0 %v2555
        %v2918 = vpop.f32.mrf.mxu0
        %v2919 = vadd.f32 %v2845, %v2918
        %v2920 = vpop.f32.mrf.mxu0
        %2921 = vmatprep.mubr.f32.mxu0 %v2575
        %2922 = vmatmul.mubr.f32.gmra.mxu0 %v2556
        %v2923 = vpop.f32.mrf.mxu0
        %v2924 = vadd.f32 %v2845, %v2923
        %v2925 = vpop.f32.mrf.mxu0
        %2926 = vmatprep.mubr.f32.mxu0 %v2577
        %2927 = vmatmul.mubr.f32.gmra.mxu0 %v2557
        %v2928 = vpop.f32.mrf.mxu0
        %v2929 = vadd.f32 %v2845, %v2928
        %v2930 = vpop.f32.mrf.mxu0
        %2931 = vmatprep.mubr.f32.mxu0 %v2579
        %2932 = vmatmul.mubr.f32.gmra.mxu0 %v2558
        %v2933 = vpop.f32.mrf.mxu0
        %v2934 = vadd.f32 %v2845, %v2933
        %v2935 = vpop.f32.mrf.mxu0
        %2936 = vmatprep.mubr.f32.mxu0 %v2581
        %2937 = vmatmul.mubr.f32.gmra.mxu0 %v2559
        %v2938 = vpop.f32.mrf.mxu0
        %v2939 = vadd.f32 %v2845, %v2938
        %v2940 = vpop.f32.mrf.mxu0
        %2941 = vmatprep.mubr.f32.mxu0 %v2580
        %2942 = vmatmul.mubr.f32.gmra.mxu0 %v2560
        %v2943 = vpop.f32.mrf.mxu0
        %v2944 = vadd.f32 %v2845, %v2943
        %v2945 = vpop.f32.mrf.mxu0
        %2946 = vdwg.mxu0
        %2947 = vmatprep.subr.mxu0 0.0
        %2948 = vmatpush1.msra.mxu0 %v2759
        %2949 = vmatprep.subr.mxu0 0.0
        %2950 = vmatpush1.msra.mxu0 %v2758
        %2951 = vmatprep.subr.mxu0 0.0
        %2952 = vmatpush1.msra.mxu0 %v2757
        %2953 = vmatprep.subr.mxu0 0.0
        %2954 = vmatpush1.msra.mxu0 %v2756
        %2955 = vmatprep.subr.mxu0 0.0
        %2956 = vmatpush1.msra.mxu0 %v2755
        %2957 = vmatprep.subr.mxu0 0.0
        %2958 = vmatpush1.msra.mxu0 %v2754
        %2959 = vmatprep.subr.mxu0 0.0
        %2960 = vmatpush1.msra.mxu0 %v2753
        %2961 = vmatprep.subr.mxu0 0.0
        %2962 = vmatpush1.msra.mxu0 %v2752
        %2963 = vmatprep.subr.mxu0 0.0
        %2964 = vmatpush1.msra.mxu0 %v2751
        %2965 = vmatprep.subr.mxu0 0.0
        %2966 = vmatpush1.msra.mxu0 %v2750
        %2967 = vmatprep.subr.mxu0 0.0
        %2968 = vmatpush1.msra.mxu0 %v2749
        %2969 = vmatprep.subr.mxu0 0.0
        %2970 = vmatpush1.msra.mxu0 %v2748
        %2971 = vmatprep.subr.mxu0 0.0
        %2972 = vmatpush1.msra.mxu0 %v2747
        %2973 = vmatprep.subr.mxu0 0.0
        %2974 = vmatpush1.msra.mxu0 %v2746
        %2975 = vmatprep.subr.mxu0 0.0
        %2976 = vmatpush1.msra.mxu0 %v2745
        %2977 = vmatprep.subr.mxu0 0.0
        %2978 = vmatpush1.msra.mxu0 %v2744
        %2979 = vmatprep.subr.mxu0 0.0
        %2980 = vmatpush2.msra.mxu0 %v2775
        %2981 = vmatprep.subr.mxu0 0.0
        %2982 = vmatpush2.msra.mxu0 %v2774
        %2983 = vmatprep.subr.mxu0 0.0
        %2984 = vmatpush2.msra.mxu0 %v2773
        %2985 = vmatprep.subr.mxu0 0.0
        %2986 = vmatpush2.msra.mxu0 %v2772
        %2987 = vmatprep.subr.mxu0 0.0
        %2988 = vmatpush2.msra.mxu0 %v2771
        %2989 = vmatprep.subr.mxu0 0.0
        %2990 = vmatpush2.msra.mxu0 %v2770
        %2991 = vmatprep.subr.mxu0 0.0
        %2992 = vmatpush2.msra.mxu0 %v2769
        %2993 = vmatprep.subr.mxu0 0.0
        %2994 = vmatpush2.msra.mxu0 %v2768
        %2995 = vmatprep.subr.mxu0 0.0
        %2996 = vmatpush2.msra.mxu0 %v2767
        %2997 = vmatprep.subr.mxu0 0.0
        %2998 = vmatpush2.msra.mxu0 %v2766
        %2999 = vmatprep.subr.mxu0 0.0
        %3000 = vmatpush2.msra.mxu0 %v2765
        %3001 = vmatprep.subr.mxu0 0.0
        %3002 = vmatpush2.msra.mxu0 %v2764
        %3003 = vmatprep.subr.mxu0 0.0
        %3004 = vmatpush2.msra.mxu0 %v2763
        %3005 = vmatprep.subr.mxu0 0.0
        %3006 = vmatpush2.msra.mxu0 %v2762
        %3007 = vmatprep.subr.mxu0 0.0
        %3008 = vmatpush2.msra.mxu0 %v2761
        %3009 = vmatprep.subr.mxu0 0.0
        %3010 = vmatpush2.msra.mxu0 %v2760
        %3011 = vmatprep.mubr.f32.mxu0 %v2611
        %3012 = vmatmul.mubr.f32.gmra.mxu0 %v2591
        %v3013 = vpop.f32.mrf.mxu0
        %v3014 = vadd.f32 %v2914, %v3013
        %v3015 = vpop.f32.mrf.mxu0
        %3016 = vmatprep.mubr.f32.mxu0 %v2613
        %3017 = vmatmul.mubr.f32.gmra.mxu0 %v2593
        %v3018 = vpop.f32.mrf.mxu0
        %v3019 = vadd.f32 %v2919, %v3018
        %v3020 = vpop.f32.mrf.mxu0
        %3021 = vmatprep.mubr.f32.mxu0 %v2615
        %3022 = vmatmul.mubr.f32.gmra.mxu0 %v2595
        %v3023 = vpop.f32.mrf.mxu0
        %v3024 = vadd.f32 %v2924, %v3023
        %v3025 = vpop.f32.mrf.mxu0
        %3026 = vmatprep.mubr.f32.mxu0 %v2617
        %3027 = vmatmul.mubr.f32.gmra.mxu0 %v2597
        %v3028 = vpop.f32.mrf.mxu0
        %v3029 = vadd.f32 %v2929, %v3028
        %v3030 = vpop.f32.mrf.mxu0
        %3031 = vmatprep.mubr.f32.mxu0 %v2619
        %3032 = vmatmul.mubr.f32.gmra.mxu0 %v2599
        %v3033 = vpop.f32.mrf.mxu0
        %v3034 = vadd.f32 %v2934, %v3033
        %v3035 = vpop.f32.mrf.mxu0
        %3036 = vmatprep.mubr.f32.mxu0 %v2621
        %3037 = vmatmul.mubr.f32.gmra.mxu0 %v2601
        %v3038 = vpop.f32.mrf.mxu0
        %v3039 = vadd.f32 %v2939, %v3038
        %v3040 = vpop.f32.mrf.mxu0
        %3041 = vmatprep.mubr.f32.mxu0 %v2620
        %3042 = vmatmul.mubr.f32.gmra.mxu0 %v2600
        %v3043 = vpop.f32.mrf.mxu0
        %v3044 = vadd.f32 %v2944, %v3043
        %v3045 = vpop.f32.mrf.mxu0
        %3046 = vdwg.mxu0
        %3047 = vmatprep.subr.mxu0 0.0
        %3048 = vmatpush1.msra.mxu0 %v2791
        %3049 = vmatprep.subr.mxu0 0.0
        %3050 = vmatpush1.msra.mxu0 %v2790
        %3051 = vmatprep.subr.mxu0 0.0
        %3052 = vmatpush1.msra.mxu0 %v2789
        %3053 = vmatprep.subr.mxu0 0.0
        %3054 = vmatpush1.msra.mxu0 %v2788
        %3055 = vmatprep.subr.mxu0 0.0
        %3056 = vmatpush1.msra.mxu0 %v2787
        %3057 = vmatprep.subr.mxu0 0.0
        %3058 = vmatpush1.msra.mxu0 %v2786
        %3059 = vmatprep.subr.mxu0 0.0
        %3060 = vmatpush1.msra.mxu0 %v2785
        %3061 = vmatprep.subr.mxu0 0.0
        %3062 = vmatpush1.msra.mxu0 %v2784
        %3063 = vmatprep.subr.mxu0 0.0
        %3064 = vmatpush1.msra.mxu0 %v2783
        %3065 = vmatprep.subr.mxu0 0.0
        %3066 = vmatpush1.msra.mxu0 %v2782
        %3067 = vmatprep.subr.mxu0 0.0
        %3068 = vmatpush1.msra.mxu0 %v2781
        %3069 = vmatprep.subr.mxu0 0.0
        %3070 = vmatpush1.msra.mxu0 %v2780
        %3071 = vmatprep.subr.mxu0 0.0
        %3072 = vmatpush1.msra.mxu0 %v2779
        %3073 = vmatprep.subr.mxu0 0.0
        %3074 = vmatpush1.msra.mxu0 %v2778
        %3075 = vmatprep.subr.mxu0 0.0
        %3076 = vmatpush1.msra.mxu0 %v2777
        %3077 = vmatprep.subr.mxu0 0.0
        %3078 = vmatpush1.msra.mxu0 %v2776
        %3079 = vmatprep.subr.mxu0 0.0
        %3080 = vmatpush2.msra.mxu0 %v2807
        %3081 = vmatprep.subr.mxu0 0.0
        %3082 = vmatpush2.msra.mxu0 %v2806
        %3083 = vmatprep.subr.mxu0 0.0
        %3084 = vmatpush2.msra.mxu0 %v2805
        %3085 = vmatprep.subr.mxu0 0.0
        %3086 = vmatpush2.msra.mxu0 %v2804
        %3087 = vmatprep.subr.mxu0 0.0
        %3088 = vmatpush2.msra.mxu0 %v2803
        %3089 = vmatprep.subr.mxu0 0.0
        %3090 = vmatpush2.msra.mxu0 %v2802
        %3091 = vmatprep.subr.mxu0 0.0
        %3092 = vmatpush2.msra.mxu0 %v2801
        %3093 = vmatprep.subr.mxu0 0.0
        %3094 = vmatpush2.msra.mxu0 %v2800
        %3095 = vmatprep.subr.mxu0 0.0
        %3096 = vmatpush2.msra.mxu0 %v2799
        %3097 = vmatprep.subr.mxu0 0.0
        %3098 = vmatpush2.msra.mxu0 %v2798
        %3099 = vmatprep.subr.mxu0 0.0
        %3100 = vmatpush2.msra.mxu0 %v2797
        %3101 = vmatprep.subr.mxu0 0.0
        %3102 = vmatpush2.msra.mxu0 %v2796
        %3103 = vmatprep.subr.mxu0 0.0
        %3104 = vmatpush2.msra.mxu0 %v2795
        %3105 = vmatprep.subr.mxu0 0.0
        %3106 = vmatpush2.msra.mxu0 %v2794
        %3107 = vmatprep.subr.mxu0 0.0
        %3108 = vmatpush2.msra.mxu0 %v2793
        %3109 = vmatprep.subr.mxu0 0.0
        %3110 = vmatpush2.msra.mxu0 %v2792
        %3111 = vmatprep.mubr.f32.mxu0 %v2651
        %3112 = vmatmul.mubr.f32.gmra.mxu0 %v2631
        %v3113 = vpop.f32.mrf.mxu0
        %v3114 = vadd.f32 %v3014, %v3113
        %v3115 = vpop.f32.mrf.mxu0
        %3116 = vmatprep.mubr.f32.mxu0 %v2653
        %3117 = vmatmul.mubr.f32.gmra.mxu0 %v2633
        %v3118 = vpop.f32.mrf.mxu0
        %v3119 = vadd.f32 %v3019, %v3118
        %v3120 = vpop.f32.mrf.mxu0
        %3121 = vmatprep.mubr.f32.mxu0 %v2655
        %3122 = vmatmul.mubr.f32.gmra.mxu0 %v2635
        %v3123 = vpop.f32.mrf.mxu0
        %v3124 = vadd.f32 %v3024, %v3123
        %v3125 = vpop.f32.mrf.mxu0
        %3126 = vmatprep.mubr.f32.mxu0 %v2657
        %3127 = vmatmul.mubr.f32.gmra.mxu0 %v2637
        %v3128 = vpop.f32.mrf.mxu0
        %v3129 = vadd.f32 %v3029, %v3128
        %v3130 = vpop.f32.mrf.mxu0
        %3131 = vmatprep.mubr.f32.mxu0 %v2659
        %3132 = vmatmul.mubr.f32.gmra.mxu0 %v2639
        %v3133 = vpop.f32.mrf.mxu0
        %v3134 = vadd.f32 %v3034, %v3133
        %v3135 = vpop.f32.mrf.mxu0
        %3136 = vmatprep.mubr.f32.mxu0 %v2661
        %3137 = vmatmul.mubr.f32.gmra.mxu0 %v2641
        %v3138 = vpop.f32.mrf.mxu0
        %v3139 = vadd.f32 %v3039, %v3138
        %v3140 = vpop.f32.mrf.mxu0
        %3141 = vmatprep.mubr.f32.mxu0 %v2660
        %3142 = vmatmul.mubr.f32.gmra.mxu0 %v2640
        %v3143 = vpop.f32.mrf.mxu0
        %v3144 = vadd.f32 %v3044, %v3143
        %v3145 = vpop.f32.mrf.mxu0
        %3146 = vdwg.mxu0
        %3147 = vmatprep.subr.mxu0 0.0
        %3148 = vmatpush1.msra.mxu0 %v2823
        %3149 = vmatprep.subr.mxu0 0.0
        %3150 = vmatpush1.msra.mxu0 %v2822
        %3151 = vmatprep.subr.mxu0 0.0
        %3152 = vmatpush1.msra.mxu0 %v2821
        %3153 = vmatprep.subr.mxu0 0.0
        %3154 = vmatpush1.msra.mxu0 %v2820
        %3155 = vmatprep.subr.mxu0 0.0
        %3156 = vmatpush1.msra.mxu0 %v2819
        %3157 = vmatprep.subr.mxu0 0.0
        %3158 = vmatpush1.msra.mxu0 %v2818
        %3159 = vmatprep.subr.mxu0 0.0
        %3160 = vmatpush1.msra.mxu0 %v2817
        %3161 = vmatprep.subr.mxu0 0.0
        %3162 = vmatpush1.msra.mxu0 %v2816
        %3163 = vmatprep.subr.mxu0 0.0
        %3164 = vmatpush1.msra.mxu0 %v2815
        %3165 = vmatprep.subr.mxu0 0.0
        %3166 = vmatpush1.msra.mxu0 %v2814
        %3167 = vmatprep.subr.mxu0 0.0
        %3168 = vmatpush1.msra.mxu0 %v2813
        %3169 = vmatprep.subr.mxu0 0.0
        %3170 = vmatpush1.msra.mxu0 %v2812
        %3171 = vmatprep.subr.mxu0 0.0
        %3172 = vmatpush1.msra.mxu0 %v2811
        %3173 = vmatprep.subr.mxu0 0.0
        %3174 = vmatpush1.msra.mxu0 %v2810
        %3175 = vmatprep.subr.mxu0 0.0
        %3176 = vmatpush1.msra.mxu0 %v2809
        %3177 = vmatprep.subr.mxu0 0.0
        %3178 = vmatpush1.msra.mxu0 %v2808
        %3179 = vmatprep.subr.mxu0 0.0
        %3180 = vmatpush2.msra.mxu0 %v2839
        %3181 = vmatprep.subr.mxu0 0.0
        %3182 = vmatpush2.msra.mxu0 %v2838
        %3183 = vmatprep.subr.mxu0 0.0
        %3184 = vmatpush2.msra.mxu0 %v2837
        %3185 = vmatprep.subr.mxu0 0.0
        %3186 = vmatpush2.msra.mxu0 %v2836
        %3187 = vmatprep.subr.mxu0 0.0
        %3188 = vmatpush2.msra.mxu0 %v2835
        %3189 = vmatprep.subr.mxu0 0.0
        %3190 = vmatpush2.msra.mxu0 %v2834
        %3191 = vmatprep.subr.mxu0 0.0
        %3192 = vmatpush2.msra.mxu0 %v2833
        %3193 = vmatprep.subr.mxu0 0.0
        %3194 = vmatpush2.msra.mxu0 %v2832
        %3195 = vmatprep.subr.mxu0 0.0
        %3196 = vmatpush2.msra.mxu0 %v2831
        %3197 = vmatprep.subr.mxu0 0.0
        %3198 = vmatpush2.msra.mxu0 %v2830
        %3199 = vmatprep.subr.mxu0 0.0
        %3200 = vmatpush2.msra.mxu0 %v2829
        %3201 = vmatprep.subr.mxu0 0.0
        %3202 = vmatpush2.msra.mxu0 %v2828
        %3203 = vmatprep.subr.mxu0 0.0
        %3204 = vmatpush2.msra.mxu0 %v2827
        %3205 = vmatprep.subr.mxu0 0.0
        %3206 = vmatpush2.msra.mxu0 %v2826
        %3207 = vmatprep.subr.mxu0 0.0
        %3208 = vmatpush2.msra.mxu0 %v2825
        %3209 = vmatprep.subr.mxu0 0.0
        %3210 = vmatpush2.msra.mxu0 %v2824
        %3211 = vmatprep.mubr.f32.mxu0 %v2692
        %3212 = vmatmul.mubr.f32.gmra.mxu0 %v2671
        %v3213 = vpop.f32.mrf.mxu0
        %v3214 = vadd.f32 %v3114, %v3213
        %v3215 = vpop.f32.mrf.mxu0
        %3216 = vmatprep.mubr.f32.mxu0 %v2694
        %3217 = vmatmul.mubr.f32.gmra.mxu0 %v2673
        %v3218 = vpop.f32.mrf.mxu0
        %v3219 = vadd.f32 %v3119, %v3218
        %v3220 = vpop.f32.mrf.mxu0
        %3221 = vmatprep.mubr.f32.mxu0 %v2696
        %3222 = vmatmul.mubr.f32.gmra.mxu0 %v2675
        %v3223 = vpop.f32.mrf.mxu0
        %v3224 = vadd.f32 %v3124, %v3223
        %v3225 = vpop.f32.mrf.mxu0
        %3226 = vmatprep.mubr.f32.mxu0 %v2698
        %3227 = vmatmul.mubr.f32.gmra.mxu0 %v2677
        %v3228 = vpop.f32.mrf.mxu0
        %v3229 = vadd.f32 %v3129, %v3228
        %v3230 = vpop.f32.mrf.mxu0
        %3231 = vmatprep.mubr.f32.mxu0 %v2700
        %3232 = vmatmul.mubr.f32.gmra.mxu0 %v2679
        %v3233 = vpop.f32.mrf.mxu0
        %v3234 = vadd.f32 %v3134, %v3233
        %v3235 = vpop.f32.mrf.mxu0
        %3236 = vmatprep.mubr.f32.mxu0 %v2702
        %3237 = vmatmul.mubr.f32.gmra.mxu0 %v2681
        %v3238 = vpop.f32.mrf.mxu0
        %v3239 = vadd.f32 %v3139, %v3238
        %v3240 = vpop.f32.mrf.mxu0
        %3241 = vmatprep.mubr.f32.mxu0 %v2704
        %3242 = vmatmul.mubr.f32.gmra.mxu0 %v2680
        %v3243 = vpop.f32.mrf.mxu0
        %v3244 = vadd.f32 %v3144, %v3243
        %v3245 = vpop.f32.mrf.mxu0
        %3246 = vdwg.mxu0
        %v3247 = vmax.f32 %v3214, 0.0
        %v3248 = vmax.f32 %v3219, 0.0
        %v3249 = vmax.f32 %v3224, 0.0
        %v3250 = vmax.f32 %v3229, 0.0
        %v3251 = vmax.f32 %v3234, 0.0
        %v3252 = vmax.f32 %v3239, 0.0
        %v3253 = vmax.f32 %v3244, 0.0
        %v3260 = vrot.slane %v3247, 1
        %v3261 = vrot.slane %v3248, 1
        %v3262 = vsel %vm980, %v3260, %v3261
        %v3263 = vrot.slane %v3249, 1
        %v3264 = vsel %vm980, %v3261, %v3263
        %v3265 = vrot.slane %v3250, 1
        %v3266 = vsel %vm980, %v3263, %v3265
        %v3267 = vrot.slane %v3251, 1
        %v3268 = vsel %vm980, %v3265, %v3267
        %v3269 = vrot.slane %v3252, 1
        %v3270 = vsel %vm980, %v3267, %v3269
        %v3277 = vrot.slane %v3247, 2
        %v3278 = vrot.slane %v3248, 2
        %v3279 = vsel %vm992, %v3277, %v3278
        %v3280 = vrot.slane %v3249, 2
        %v3281 = vsel %vm992, %v3278, %v3280
        %v3282 = vrot.slane %v3250, 2
        %v3283 = vsel %vm992, %v3280, %v3282
        %v3284 = vrot.slane %v3251, 2
        %v3285 = vsel %vm992, %v3282, %v3284
        %v3286 = vrot.slane %v3252, 2
        %v3287 = vsel %vm992, %v3284, %v3286
        %v3294 = vrot.slane %v3247, 3
        %v3295 = vrot.slane %v3248, 3
        %v3296 = vsel %vm1004, %v3294, %v3295
        %v3297 = vrot.slane %v3249, 3
        %v3298 = vsel %vm1004, %v3295, %v3297
        %v3299 = vrot.slane %v3250, 3
        %v3300 = vsel %vm1004, %v3297, %v3299
        %v3301 = vrot.slane %v3251, 3
        %v3302 = vsel %vm1004, %v3299, %v3301
        %v3303 = vrot.slane %v3252, 3
        %v3304 = vsel %vm1004, %v3301, %v3303
        %v3311 = vrot.slane %v3247, 4
        %v3312 = vrot.slane %v3248, 4
        %v3313 = vsel %vm1903, %v3311, %v3312
        %v3314 = vrot.slane %v3249, 4
        %v3315 = vsel %vm1903, %v3312, %v3314
        %v3316 = vrot.slane %v3250, 4
        %v3317 = vsel %vm1903, %v3314, %v3316
        %v3318 = vrot.slane %v3251, 4
        %v3319 = vsel %vm1903, %v3316, %v3318
        %v3320 = vrot.slane %v3252, 4
        %v3321 = vsel %vm1903, %v3318, %v3320
        %v3328 = vrot.slane %v3247, 5
        %v3329 = vrot.slane %v3248, 5
        %v3330 = vsel %vm1927, %v3328, %v3329
        %v3331 = vrot.slane %v3249, 5
        %v3332 = vsel %vm1927, %v3329, %v3331
        %v3333 = vrot.slane %v3250, 5
        %v3334 = vsel %vm1927, %v3331, %v3333
        %v3335 = vrot.slane %v3251, 5
        %v3336 = vsel %vm1927, %v3333, %v3335
        %v3337 = vrot.slane %v3252, 5
        %v3338 = vsel %vm1927, %v3335, %v3337
        %v3346 = vrot.slane %v3247, 6
        %v3347 = vrot.slane %v3248, 6
        %v3348 = vsel %vm1951, %v3346, %v3347
        %v3349 = vrot.slane %v3249, 6
        %v3350 = vsel %vm1951, %v3347, %v3349
        %v3351 = vrot.slane %v3250, 6
        %v3352 = vsel %vm1951, %v3349, %v3351
        %v3353 = vrot.slane %v3251, 6
        %v3354 = vsel %vm1951, %v3351, %v3353
        %v3355 = vrot.slane %v3252, 6
        %v3356 = vsel %vm1951, %v3353, %v3355
        %v3357 = vrot.slane %v3253, 6
        %v3358 = vsel %vm1951, %v3355, %v3357
        %v3365 = vrot.slane %v3247, 7
        %v3366 = vrot.slane %v3248, 7
        %v3367 = vsel %vm1975, %v3365, %v3366
        %v3368 = vrot.slane %v3249, 7
        %v3369 = vsel %vm1975, %v3366, %v3368
        %v3370 = vrot.slane %v3250, 7
        %v3371 = vsel %vm1975, %v3368, %v3370
        %v3372 = vrot.slane %v3251, 7
        %v3373 = vsel %vm1975, %v3370, %v3372
        %v3374 = vrot.slane %v3252, 7
        %v3375 = vsel %vm1975, %v3372, %v3374
        %v3376 = vrot.slane %v3253, 7
        %v3377 = vsel %vm1975, %v3374, %v3376
        %v3384 = vld [vmem:[#allocation18] sm:$0xff]
        %v3385 = vld [vmem:[#allocation18 + $0x8] sm:$0xff]
        %v3386 = vld [vmem:[#allocation18 + $0x10] sm:$0xff]
        %v3387 = vld [vmem:[#allocation18 + $0x18] sm:$0xff]
        %v3388 = vld [vmem:[#allocation18 + $0x20] sm:$0xff]
        %v3389 = vld [vmem:[#allocation18 + $0x28] sm:$0xff]
        %v3390 = vld [vmem:[#allocation18 + $0x30] sm:$0xff]
        %v3391 = vld [vmem:[#allocation18 + $0x38] sm:$0xff]
        %v3392 = vld [vmem:[#allocation18 + $0x40] sm:$0xff]
        %v3393 = vld [vmem:[#allocation18 + $0x48] sm:$0xff]
        %v3394 = vld [vmem:[#allocation18 + $0x50] sm:$0xff]
        %v3395 = vld [vmem:[#allocation18 + $0x58] sm:$0xff]
        %v3396 = vld [vmem:[#allocation18 + $0x60] sm:$0xff]
        %v3397 = vld [vmem:[#allocation18 + $0x68] sm:$0xff]
        %v3398 = vld [vmem:[#allocation18 + $0x70] sm:$0xff]
        %v3399 = vld [vmem:[#allocation18 + $0x78] sm:$0xff]
        %v3400 = vld [vmem:[#allocation18 + $0x80] sm:$0xff]
        %v3401 = vld [vmem:[#allocation18 + $0x88] sm:$0xff]
        %v3402 = vld [vmem:[#allocation18 + $0x90] sm:$0xff]
        %v3403 = vld [vmem:[#allocation18 + $0x98] sm:$0xff]
        %v3404 = vld [vmem:[#allocation18 + $0xa0] sm:$0xff]
        %v3405 = vld [vmem:[#allocation18 + $0xa8] sm:$0xff]
        %v3406 = vld [vmem:[#allocation18 + $0xb0] sm:$0xff]
        %v3407 = vld [vmem:[#allocation18 + $0xb8] sm:$0xff]
        %v3408 = vld [vmem:[#allocation18 + $0xc0] sm:$0xff]
        %v3409 = vld [vmem:[#allocation18 + $0xc8] sm:$0xff]
        %v3410 = vld [vmem:[#allocation18 + $0xd0] sm:$0xff]
        %v3411 = vld [vmem:[#allocation18 + $0xd8] sm:$0xff]
        %v3412 = vld [vmem:[#allocation18 + $0xe0] sm:$0xff]
        %v3413 = vld [vmem:[#allocation18 + $0xe8] sm:$0xff]
        %v3414 = vld [vmem:[#allocation18 + $0xf0] sm:$0xff]
        %v3415 = vld [vmem:[#allocation18 + $0xf8] sm:$0xff]
        %v3416 = vld [vmem:[#allocation18 + $0x100] sm:$0xff]
        %v3417 = vld [vmem:[#allocation18 + $0x108] sm:$0xff]
        %v3418 = vld [vmem:[#allocation18 + $0x110] sm:$0xff]
        %v3419 = vld [vmem:[#allocation18 + $0x118] sm:$0xff]
        %v3420 = vld [vmem:[#allocation18 + $0x120] sm:$0xff]
        %v3421 = vld [vmem:[#allocation18 + $0x128] sm:$0xff]
        %v3422 = vld [vmem:[#allocation18 + $0x130] sm:$0xff]
        %v3423 = vld [vmem:[#allocation18 + $0x138] sm:$0xff]
        %v3424 = vld [vmem:[#allocation18 + $0x140] sm:$0xff]
        %v3425 = vld [vmem:[#allocation18 + $0x148] sm:$0xff]
        %v3426 = vld [vmem:[#allocation18 + $0x150] sm:$0xff]
        %v3427 = vld [vmem:[#allocation18 + $0x158] sm:$0xff]
        %v3428 = vld [vmem:[#allocation18 + $0x160] sm:$0xff]
        %v3429 = vld [vmem:[#allocation18 + $0x168] sm:$0xff]
        %v3430 = vld [vmem:[#allocation18 + $0x170] sm:$0xff]
        %v3431 = vld [vmem:[#allocation18 + $0x178] sm:$0xff]
        %v3432 = vld [vmem:[#allocation18 + $0x180] sm:$0xff]
        %v3433 = vld [vmem:[#allocation18 + $0x188] sm:$0xff]
        %v3434 = vld [vmem:[#allocation18 + $0x190] sm:$0xff]
        %v3435 = vld [vmem:[#allocation18 + $0x198] sm:$0xff]
        %v3436 = vld [vmem:[#allocation18 + $0x1a0] sm:$0xff]
        %v3437 = vld [vmem:[#allocation18 + $0x1a8] sm:$0xff]
        %v3438 = vld [vmem:[#allocation18 + $0x1b0] sm:$0xff]
        %v3439 = vld [vmem:[#allocation18 + $0x1b8] sm:$0xff]
        %v3440 = vld [vmem:[#allocation18 + $0x1c0] sm:$0xff]
        %v3441 = vld [vmem:[#allocation18 + $0x1c8] sm:$0xff]
        %v3442 = vld [vmem:[#allocation18 + $0x1d0] sm:$0xff]
        %v3443 = vld [vmem:[#allocation18 + $0x1d8] sm:$0xff]
        %v3444 = vld [vmem:[#allocation18 + $0x1e0] sm:$0xff]
        %v3445 = vld [vmem:[#allocation18 + $0x1e8] sm:$0xff]
        %v3446 = vld [vmem:[#allocation18 + $0x1f0] sm:$0xff]
        %v3447 = vld [vmem:[#allocation18 + $0x1f8] sm:$0xff]
        %v3448 = vld [vmem:[#allocation18 + $0x200] sm:$0xff]
        %v3449 = vld [vmem:[#allocation18 + $0x208] sm:$0xff]
        %v3450 = vld [vmem:[#allocation18 + $0x210] sm:$0xff]
        %v3451 = vld [vmem:[#allocation18 + $0x218] sm:$0xff]
        %v3452 = vld [vmem:[#allocation18 + $0x220] sm:$0xff]
        %v3453 = vld [vmem:[#allocation18 + $0x228] sm:$0xff]
        %v3454 = vld [vmem:[#allocation18 + $0x230] sm:$0xff]
        %v3455 = vld [vmem:[#allocation18 + $0x238] sm:$0xff]
        %v3456 = vld [vmem:[#allocation18 + $0x240] sm:$0xff]
        %v3457 = vld [vmem:[#allocation18 + $0x248] sm:$0xff]
        %v3458 = vld [vmem:[#allocation18 + $0x250] sm:$0xff]
        %v3459 = vld [vmem:[#allocation18 + $0x258] sm:$0xff]
        %v3460 = vld [vmem:[#allocation18 + $0x260] sm:$0xff]
        %v3461 = vld [vmem:[#allocation18 + $0x268] sm:$0xff]
        %v3462 = vld [vmem:[#allocation18 + $0x270] sm:$0xff]
        %v3463 = vld [vmem:[#allocation18 + $0x278] sm:$0xff]
        %v3464 = vld [vmem:[#allocation18 + $0x280] sm:$0xff]
        %v3465 = vld [vmem:[#allocation18 + $0x288] sm:$0xff]
        %v3466 = vld [vmem:[#allocation18 + $0x290] sm:$0xff]
        %v3467 = vld [vmem:[#allocation18 + $0x298] sm:$0xff]
        %v3468 = vld [vmem:[#allocation18 + $0x2a0] sm:$0xff]
        %v3469 = vld [vmem:[#allocation18 + $0x2a8] sm:$0xff]
        %v3470 = vld [vmem:[#allocation18 + $0x2b0] sm:$0xff]
        %v3471 = vld [vmem:[#allocation18 + $0x2b8] sm:$0xff]
        %v3472 = vld [vmem:[#allocation18 + $0x2c0] sm:$0xff]
        %v3473 = vld [vmem:[#allocation18 + $0x2c8] sm:$0xff]
        %v3474 = vld [vmem:[#allocation18 + $0x2d0] sm:$0xff]
        %v3475 = vld [vmem:[#allocation18 + $0x2d8] sm:$0xff]
        %v3476 = vld [vmem:[#allocation18 + $0x2e0] sm:$0xff]
        %v3477 = vld [vmem:[#allocation18 + $0x2e8] sm:$0xff]
        %v3478 = vld [vmem:[#allocation18 + $0x2f0] sm:$0xff]
        %v3479 = vld [vmem:[#allocation18 + $0x2f8] sm:$0xff]
        %v3480 = vld [vmem:[#allocation18 + $0x300] sm:$0xff]
        %v3481 = vld [vmem:[#allocation18 + $0x308] sm:$0xff]
        %v3482 = vld [vmem:[#allocation18 + $0x310] sm:$0xff]
        %v3483 = vld [vmem:[#allocation18 + $0x318] sm:$0xff]
        %v3484 = vld [vmem:[#allocation18 + $0x320] sm:$0xff]
        %v3485 = vld [vmem:[#allocation18 + $0x328] sm:$0xff]
        %v3486 = vld [vmem:[#allocation18 + $0x330] sm:$0xff]
        %v3487 = vld [vmem:[#allocation18 + $0x338] sm:$0xff]
        %v3488 = vld [vmem:[#allocation18 + $0x340] sm:$0xff]
        %v3489 = vld [vmem:[#allocation18 + $0x348] sm:$0xff]
        %v3490 = vld [vmem:[#allocation18 + $0x350] sm:$0xff]
        %v3491 = vld [vmem:[#allocation18 + $0x358] sm:$0xff]
        %v3492 = vld [vmem:[#allocation18 + $0x360] sm:$0xff]
        %v3493 = vld [vmem:[#allocation18 + $0x368] sm:$0xff]
        %v3494 = vld [vmem:[#allocation18 + $0x370] sm:$0xff]
        %v3495 = vld [vmem:[#allocation18 + $0x378] sm:$0xff]
        %v3496 = vld [vmem:[#allocation18 + $0x380] sm:$0xff]
        %v3497 = vld [vmem:[#allocation18 + $0x388] sm:$0xff]
        %v3498 = vld [vmem:[#allocation18 + $0x390] sm:$0xff]
        %v3499 = vld [vmem:[#allocation18 + $0x398] sm:$0xff]
        %v3500 = vld [vmem:[#allocation18 + $0x3a0] sm:$0xff]
        %v3501 = vld [vmem:[#allocation18 + $0x3a8] sm:$0xff]
        %v3502 = vld [vmem:[#allocation18 + $0x3b0] sm:$0xff]
        %v3503 = vld [vmem:[#allocation18 + $0x3b8] sm:$0xff]
        %v3504 = vld [vmem:[#allocation18 + $0x3c0] sm:$0xff]
        %v3505 = vld [vmem:[#allocation18 + $0x3c8] sm:$0xff]
        %v3506 = vld [vmem:[#allocation18 + $0x3d0] sm:$0xff]
        %v3507 = vld [vmem:[#allocation18 + $0x3d8] sm:$0xff]
        %v3508 = vld [vmem:[#allocation18 + $0x3e0] sm:$0xff]
        %v3509 = vld [vmem:[#allocation18 + $0x3e8] sm:$0xff]
        %v3510 = vld [vmem:[#allocation18 + $0x3f0] sm:$0xff]
        %v3511 = vld [vmem:[#allocation18 + $0x3f8] sm:$0xff]
        %v3512 = vld [vmem:[#allocation19] sm:$0x1]
        %v3514 = vlaneseq
        %v3515 = vshrl.u32 %v3514, 7
        %v3516 = vsub.s32 0, %v3515
        %v3517 = vrot.slane %v3512, %v3516
        %3519 = vmatprep.subr.mxu0 0.0
        %3520 = vmatpush1.msra.mxu0 %v3399
        %3521 = vmatprep.subr.mxu0 0.0
        %3522 = vmatpush1.msra.mxu0 %v3398
        %3523 = vmatprep.subr.mxu0 0.0
        %3524 = vmatpush1.msra.mxu0 %v3397
        %3525 = vmatprep.subr.mxu0 0.0
        %3526 = vmatpush1.msra.mxu0 %v3396
        %3527 = vmatprep.subr.mxu0 0.0
        %3528 = vmatpush1.msra.mxu0 %v3395
        %3529 = vmatprep.subr.mxu0 0.0
        %3530 = vmatpush1.msra.mxu0 %v3394
        %3531 = vmatprep.subr.mxu0 0.0
        %3532 = vmatpush1.msra.mxu0 %v3393
        %3533 = vmatprep.subr.mxu0 0.0
        %3534 = vmatpush1.msra.mxu0 %v3392
        %3535 = vmatprep.subr.mxu0 0.0
        %3536 = vmatpush1.msra.mxu0 %v3391
        %3537 = vmatprep.subr.mxu0 0.0
        %3538 = vmatpush1.msra.mxu0 %v3390
        %3539 = vmatprep.subr.mxu0 0.0
        %3540 = vmatpush1.msra.mxu0 %v3389
        %3541 = vmatprep.subr.mxu0 0.0
        %3542 = vmatpush1.msra.mxu0 %v3388
        %3543 = vmatprep.subr.mxu0 0.0
        %3544 = vmatpush1.msra.mxu0 %v3387
        %3545 = vmatprep.subr.mxu0 0.0
        %3546 = vmatpush1.msra.mxu0 %v3386
        %3547 = vmatprep.subr.mxu0 0.0
        %3548 = vmatpush1.msra.mxu0 %v3385
        %3549 = vmatprep.subr.mxu0 0.0
        %3550 = vmatpush1.msra.mxu0 %v3384
        %3551 = vmatprep.subr.mxu0 0.0
        %3552 = vmatpush2.msra.mxu0 %v3415
        %3553 = vmatprep.subr.mxu0 0.0
        %3554 = vmatpush2.msra.mxu0 %v3414
        %3555 = vmatprep.subr.mxu0 0.0
        %3556 = vmatpush2.msra.mxu0 %v3413
        %3557 = vmatprep.subr.mxu0 0.0
        %3558 = vmatpush2.msra.mxu0 %v3412
        %3559 = vmatprep.subr.mxu0 0.0
        %3560 = vmatpush2.msra.mxu0 %v3411
        %3561 = vmatprep.subr.mxu0 0.0
        %3562 = vmatpush2.msra.mxu0 %v3410
        %3563 = vmatprep.subr.mxu0 0.0
        %3564 = vmatpush2.msra.mxu0 %v3409
        %3565 = vmatprep.subr.mxu0 0.0
        %3566 = vmatpush2.msra.mxu0 %v3408
        %3567 = vmatprep.subr.mxu0 0.0
        %3568 = vmatpush2.msra.mxu0 %v3407
        %3569 = vmatprep.subr.mxu0 0.0
        %3570 = vmatpush2.msra.mxu0 %v3406
        %3571 = vmatprep.subr.mxu0 0.0
        %3572 = vmatpush2.msra.mxu0 %v3405
        %3573 = vmatprep.subr.mxu0 0.0
        %3574 = vmatpush2.msra.mxu0 %v3404
        %3575 = vmatprep.subr.mxu0 0.0
        %3576 = vmatpush2.msra.mxu0 %v3403
        %3577 = vmatprep.subr.mxu0 0.0
        %3578 = vmatpush2.msra.mxu0 %v3402
        %3579 = vmatprep.subr.mxu0 0.0
        %3580 = vmatpush2.msra.mxu0 %v3401
        %3581 = vmatprep.subr.mxu0 0.0
        %3582 = vmatpush2.msra.mxu0 %v3400
        %3583 = vmatprep.mubr.f32.mxu0 %v3262
        %3584 = vmatmul.mubr.f32.gmra.mxu0 %v3247
        %v3585 = vpop.f32.mrf.mxu0
        %v3586 = vadd.f32 %v3517, %v3585
        %v3587 = vpop.f32.mrf.mxu0
        %3588 = vmatprep.mubr.f32.mxu0 %v3264
        %3589 = vmatmul.mubr.f32.gmra.mxu0 %v3248
        %v3590 = vpop.f32.mrf.mxu0
        %v3591 = vadd.f32 %v3517, %v3590
        %v3592 = vpop.f32.mrf.mxu0
        %3593 = vmatprep.mubr.f32.mxu0 %v3266
        %3594 = vmatmul.mubr.f32.gmra.mxu0 %v3249
        %v3595 = vpop.f32.mrf.mxu0
        %v3596 = vadd.f32 %v3517, %v3595
        %v3597 = vpop.f32.mrf.mxu0
        %3598 = vmatprep.mubr.f32.mxu0 %v3268
        %3599 = vmatmul.mubr.f32.gmra.mxu0 %v3250
        %v3600 = vpop.f32.mrf.mxu0
        %v3601 = vadd.f32 %v3517, %v3600
        %v3602 = vpop.f32.mrf.mxu0
        %3603 = vmatprep.mubr.f32.mxu0 %v3270
        %3604 = vmatmul.mubr.f32.gmra.mxu0 %v3251
        %v3605 = vpop.f32.mrf.mxu0
        %v3606 = vadd.f32 %v3517, %v3605
        %v3607 = vpop.f32.mrf.mxu0
        %3608 = vmatprep.mubr.f32.mxu0 %v3269
        %3609 = vmatmul.mubr.f32.gmra.mxu0 %v3252
        %v3610 = vpop.f32.mrf.mxu0
        %v3611 = vadd.f32 %v3517, %v3610
        %v3612 = vpop.f32.mrf.mxu0
        %3613 = vdwg.mxu0
        %3614 = vmatprep.subr.mxu0 0.0
        %3615 = vmatpush1.msra.mxu0 %v3431
        %3616 = vmatprep.subr.mxu0 0.0
        %3617 = vmatpush1.msra.mxu0 %v3430
        %3618 = vmatprep.subr.mxu0 0.0
        %3619 = vmatpush1.msra.mxu0 %v3429
        %3620 = vmatprep.subr.mxu0 0.0
        %3621 = vmatpush1.msra.mxu0 %v3428
        %3622 = vmatprep.subr.mxu0 0.0
        %3623 = vmatpush1.msra.mxu0 %v3427
        %3624 = vmatprep.subr.mxu0 0.0
        %3625 = vmatpush1.msra.mxu0 %v3426
        %3626 = vmatprep.subr.mxu0 0.0
        %3627 = vmatpush1.msra.mxu0 %v3425
        %3628 = vmatprep.subr.mxu0 0.0
        %3629 = vmatpush1.msra.mxu0 %v3424
        %3630 = vmatprep.subr.mxu0 0.0
        %3631 = vmatpush1.msra.mxu0 %v3423
        %3632 = vmatprep.subr.mxu0 0.0
        %3633 = vmatpush1.msra.mxu0 %v3422
        %3634 = vmatprep.subr.mxu0 0.0
        %3635 = vmatpush1.msra.mxu0 %v3421
        %3636 = vmatprep.subr.mxu0 0.0
        %3637 = vmatpush1.msra.mxu0 %v3420
        %3638 = vmatprep.subr.mxu0 0.0
        %3639 = vmatpush1.msra.mxu0 %v3419
        %3640 = vmatprep.subr.mxu0 0.0
        %3641 = vmatpush1.msra.mxu0 %v3418
        %3642 = vmatprep.subr.mxu0 0.0
        %3643 = vmatpush1.msra.mxu0 %v3417
        %3644 = vmatprep.subr.mxu0 0.0
        %3645 = vmatpush1.msra.mxu0 %v3416
        %3646 = vmatprep.subr.mxu0 0.0
        %3647 = vmatpush2.msra.mxu0 %v3447
        %3648 = vmatprep.subr.mxu0 0.0
        %3649 = vmatpush2.msra.mxu0 %v3446
        %3650 = vmatprep.subr.mxu0 0.0
        %3651 = vmatpush2.msra.mxu0 %v3445
        %3652 = vmatprep.subr.mxu0 0.0
        %3653 = vmatpush2.msra.mxu0 %v3444
        %3654 = vmatprep.subr.mxu0 0.0
        %3655 = vmatpush2.msra.mxu0 %v3443
        %3656 = vmatprep.subr.mxu0 0.0
        %3657 = vmatpush2.msra.mxu0 %v3442
        %3658 = vmatprep.subr.mxu0 0.0
        %3659 = vmatpush2.msra.mxu0 %v3441
        %3660 = vmatprep.subr.mxu0 0.0
        %3661 = vmatpush2.msra.mxu0 %v3440
        %3662 = vmatprep.subr.mxu0 0.0
        %3663 = vmatpush2.msra.mxu0 %v3439
        %3664 = vmatprep.subr.mxu0 0.0
        %3665 = vmatpush2.msra.mxu0 %v3438
        %3666 = vmatprep.subr.mxu0 0.0
        %3667 = vmatpush2.msra.mxu0 %v3437
        %3668 = vmatprep.subr.mxu0 0.0
        %3669 = vmatpush2.msra.mxu0 %v3436
        %3670 = vmatprep.subr.mxu0 0.0
        %3671 = vmatpush2.msra.mxu0 %v3435
        %3672 = vmatprep.subr.mxu0 0.0
        %3673 = vmatpush2.msra.mxu0 %v3434
        %3674 = vmatprep.subr.mxu0 0.0
        %3675 = vmatpush2.msra.mxu0 %v3433
        %3676 = vmatprep.subr.mxu0 0.0
        %3677 = vmatpush2.msra.mxu0 %v3432
        %3678 = vmatprep.mubr.f32.mxu0 %v3296
        %3679 = vmatmul.mubr.f32.gmra.mxu0 %v3279
        %v3680 = vpop.f32.mrf.mxu0
        %v3681 = vadd.f32 %v3586, %v3680
        %v3682 = vpop.f32.mrf.mxu0
        %3683 = vmatprep.mubr.f32.mxu0 %v3298
        %3684 = vmatmul.mubr.f32.gmra.mxu0 %v3281
        %v3685 = vpop.f32.mrf.mxu0
        %v3686 = vadd.f32 %v3591, %v3685
        %v3687 = vpop.f32.mrf.mxu0
        %3688 = vmatprep.mubr.f32.mxu0 %v3300
        %3689 = vmatmul.mubr.f32.gmra.mxu0 %v3283
        %v3690 = vpop.f32.mrf.mxu0
        %v3691 = vadd.f32 %v3596, %v3690
        %v3692 = vpop.f32.mrf.mxu0
        %3693 = vmatprep.mubr.f32.mxu0 %v3302
        %3694 = vmatmul.mubr.f32.gmra.mxu0 %v3285
        %v3695 = vpop.f32.mrf.mxu0
        %v3696 = vadd.f32 %v3601, %v3695
        %v3697 = vpop.f32.mrf.mxu0
        %3698 = vmatprep.mubr.f32.mxu0 %v3304
        %3699 = vmatmul.mubr.f32.gmra.mxu0 %v3287
        %v3700 = vpop.f32.mrf.mxu0
        %v3701 = vadd.f32 %v3606, %v3700
        %v3702 = vpop.f32.mrf.mxu0
        %3703 = vmatprep.mubr.f32.mxu0 %v3303
        %3704 = vmatmul.mubr.f32.gmra.mxu0 %v3286
        %v3705 = vpop.f32.mrf.mxu0
        %v3706 = vadd.f32 %v3611, %v3705
        %v3707 = vpop.f32.mrf.mxu0
        %3708 = vdwg.mxu0
        %3709 = vmatprep.subr.mxu0 0.0
        %3710 = vmatpush1.msra.mxu0 %v3463
        %3711 = vmatprep.subr.mxu0 0.0
        %3712 = vmatpush1.msra.mxu0 %v3462
        %3713 = vmatprep.subr.mxu0 0.0
        %3714 = vmatpush1.msra.mxu0 %v3461
        %3715 = vmatprep.subr.mxu0 0.0
        %3716 = vmatpush1.msra.mxu0 %v3460
        %3717 = vmatprep.subr.mxu0 0.0
        %3718 = vmatpush1.msra.mxu0 %v3459
        %3719 = vmatprep.subr.mxu0 0.0
        %3720 = vmatpush1.msra.mxu0 %v3458
        %3721 = vmatprep.subr.mxu0 0.0
        %3722 = vmatpush1.msra.mxu0 %v3457
        %3723 = vmatprep.subr.mxu0 0.0
        %3724 = vmatpush1.msra.mxu0 %v3456
        %3725 = vmatprep.subr.mxu0 0.0
        %3726 = vmatpush1.msra.mxu0 %v3455
        %3727 = vmatprep.subr.mxu0 0.0
        %3728 = vmatpush1.msra.mxu0 %v3454
        %3729 = vmatprep.subr.mxu0 0.0
        %3730 = vmatpush1.msra.mxu0 %v3453
        %3731 = vmatprep.subr.mxu0 0.0
        %3732 = vmatpush1.msra.mxu0 %v3452
        %3733 = vmatprep.subr.mxu0 0.0
        %3734 = vmatpush1.msra.mxu0 %v3451
        %3735 = vmatprep.subr.mxu0 0.0
        %3736 = vmatpush1.msra.mxu0 %v3450
        %3737 = vmatprep.subr.mxu0 0.0
        %3738 = vmatpush1.msra.mxu0 %v3449
        %3739 = vmatprep.subr.mxu0 0.0
        %3740 = vmatpush1.msra.mxu0 %v3448
        %3741 = vmatprep.subr.mxu0 0.0
        %3742 = vmatpush2.msra.mxu0 %v3479
        %3743 = vmatprep.subr.mxu0 0.0
        %3744 = vmatpush2.msra.mxu0 %v3478
        %3745 = vmatprep.subr.mxu0 0.0
        %3746 = vmatpush2.msra.mxu0 %v3477
        %3747 = vmatprep.subr.mxu0 0.0
        %3748 = vmatpush2.msra.mxu0 %v3476
        %3749 = vmatprep.subr.mxu0 0.0
        %3750 = vmatpush2.msra.mxu0 %v3475
        %3751 = vmatprep.subr.mxu0 0.0
        %3752 = vmatpush2.msra.mxu0 %v3474
        %3753 = vmatprep.subr.mxu0 0.0
        %3754 = vmatpush2.msra.mxu0 %v3473
        %3755 = vmatprep.subr.mxu0 0.0
        %3756 = vmatpush2.msra.mxu0 %v3472
        %3757 = vmatprep.subr.mxu0 0.0
        %3758 = vmatpush2.msra.mxu0 %v3471
        %3759 = vmatprep.subr.mxu0 0.0
        %3760 = vmatpush2.msra.mxu0 %v3470
        %3761 = vmatprep.subr.mxu0 0.0
        %3762 = vmatpush2.msra.mxu0 %v3469
        %3763 = vmatprep.subr.mxu0 0.0
        %3764 = vmatpush2.msra.mxu0 %v3468
        %3765 = vmatprep.subr.mxu0 0.0
        %3766 = vmatpush2.msra.mxu0 %v3467
        %3767 = vmatprep.subr.mxu0 0.0
        %3768 = vmatpush2.msra.mxu0 %v3466
        %3769 = vmatprep.subr.mxu0 0.0
        %3770 = vmatpush2.msra.mxu0 %v3465
        %3771 = vmatprep.subr.mxu0 0.0
        %3772 = vmatpush2.msra.mxu0 %v3464
        %3773 = vmatprep.mubr.f32.mxu0 %v3330
        %3774 = vmatmul.mubr.f32.gmra.mxu0 %v3313
        %v3775 = vpop.f32.mrf.mxu0
        %v3776 = vadd.f32 %v3681, %v3775
        %v3777 = vpop.f32.mrf.mxu0
        %3778 = vmatprep.mubr.f32.mxu0 %v3332
        %3779 = vmatmul.mubr.f32.gmra.mxu0 %v3315
        %v3780 = vpop.f32.mrf.mxu0
        %v3781 = vadd.f32 %v3686, %v3780
        %v3782 = vpop.f32.mrf.mxu0
        %3783 = vmatprep.mubr.f32.mxu0 %v3334
        %3784 = vmatmul.mubr.f32.gmra.mxu0 %v3317
        %v3785 = vpop.f32.mrf.mxu0
        %v3786 = vadd.f32 %v3691, %v3785
        %v3787 = vpop.f32.mrf.mxu0
        %3788 = vmatprep.mubr.f32.mxu0 %v3336
        %3789 = vmatmul.mubr.f32.gmra.mxu0 %v3319
        %v3790 = vpop.f32.mrf.mxu0
        %v3791 = vadd.f32 %v3696, %v3790
        %v3792 = vpop.f32.mrf.mxu0
        %3793 = vmatprep.mubr.f32.mxu0 %v3338
        %3794 = vmatmul.mubr.f32.gmra.mxu0 %v3321
        %v3795 = vpop.f32.mrf.mxu0
        %v3796 = vadd.f32 %v3701, %v3795
        %v3797 = vpop.f32.mrf.mxu0
        %3798 = vmatprep.mubr.f32.mxu0 %v3337
        %3799 = vmatmul.mubr.f32.gmra.mxu0 %v3320
        %v3800 = vpop.f32.mrf.mxu0
        %v3801 = vadd.f32 %v3706, %v3800
        %v3802 = vpop.f32.mrf.mxu0
        %3803 = vdwg.mxu0
        %3804 = vmatprep.subr.mxu0 0.0
        %3805 = vmatpush1.msra.mxu0 %v3495
        %3806 = vmatprep.subr.mxu0 0.0
        %3807 = vmatpush1.msra.mxu0 %v3494
        %3808 = vmatprep.subr.mxu0 0.0
        %3809 = vmatpush1.msra.mxu0 %v3493
        %3810 = vmatprep.subr.mxu0 0.0
        %3811 = vmatpush1.msra.mxu0 %v3492
        %3812 = vmatprep.subr.mxu0 0.0
        %3813 = vmatpush1.msra.mxu0 %v3491
        %3814 = vmatprep.subr.mxu0 0.0
        %3815 = vmatpush1.msra.mxu0 %v3490
        %3816 = vmatprep.subr.mxu0 0.0
        %3817 = vmatpush1.msra.mxu0 %v3489
        %3818 = vmatprep.subr.mxu0 0.0
        %3819 = vmatpush1.msra.mxu0 %v3488
        %3820 = vmatprep.subr.mxu0 0.0
        %3821 = vmatpush1.msra.mxu0 %v3487
        %3822 = vmatprep.subr.mxu0 0.0
        %3823 = vmatpush1.msra.mxu0 %v3486
        %3824 = vmatprep.subr.mxu0 0.0
        %3825 = vmatpush1.msra.mxu0 %v3485
        %3826 = vmatprep.subr.mxu0 0.0
        %3827 = vmatpush1.msra.mxu0 %v3484
        %3828 = vmatprep.subr.mxu0 0.0
        %3829 = vmatpush1.msra.mxu0 %v3483
        %3830 = vmatprep.subr.mxu0 0.0
        %3831 = vmatpush1.msra.mxu0 %v3482
        %3832 = vmatprep.subr.mxu0 0.0
        %3833 = vmatpush1.msra.mxu0 %v3481
        %3834 = vmatprep.subr.mxu0 0.0
        %3835 = vmatpush1.msra.mxu0 %v3480
        %3836 = vmatprep.subr.mxu0 0.0
        %3837 = vmatpush2.msra.mxu0 %v3511
        %3838 = vmatprep.subr.mxu0 0.0
        %3839 = vmatpush2.msra.mxu0 %v3510
        %3840 = vmatprep.subr.mxu0 0.0
        %3841 = vmatpush2.msra.mxu0 %v3509
        %3842 = vmatprep.subr.mxu0 0.0
        %3843 = vmatpush2.msra.mxu0 %v3508
        %3844 = vmatprep.subr.mxu0 0.0
        %3845 = vmatpush2.msra.mxu0 %v3507
        %3846 = vmatprep.subr.mxu0 0.0
        %3847 = vmatpush2.msra.mxu0 %v3506
        %3848 = vmatprep.subr.mxu0 0.0
        %3849 = vmatpush2.msra.mxu0 %v3505
        %3850 = vmatprep.subr.mxu0 0.0
        %3851 = vmatpush2.msra.mxu0 %v3504
        %3852 = vmatprep.subr.mxu0 0.0
        %3853 = vmatpush2.msra.mxu0 %v3503
        %3854 = vmatprep.subr.mxu0 0.0
        %3855 = vmatpush2.msra.mxu0 %v3502
        %3856 = vmatprep.subr.mxu0 0.0
        %3857 = vmatpush2.msra.mxu0 %v3501
        %3858 = vmatprep.subr.mxu0 0.0
        %3859 = vmatpush2.msra.mxu0 %v3500
        %3860 = vmatprep.subr.mxu0 0.0
        %3861 = vmatpush2.msra.mxu0 %v3499
        %3862 = vmatprep.subr.mxu0 0.0
        %3863 = vmatpush2.msra.mxu0 %v3498
        %3864 = vmatprep.subr.mxu0 0.0
        %3865 = vmatpush2.msra.mxu0 %v3497
        %3866 = vmatprep.subr.mxu0 0.0
        %3867 = vmatpush2.msra.mxu0 %v3496
        %3868 = vmatprep.mubr.f32.mxu0 %v3367
        %3869 = vmatmul.mubr.f32.gmra.mxu0 %v3348
        %v3870 = vpop.f32.mrf.mxu0
        %v3871 = vadd.f32 %v3776, %v3870
        %v3872 = vpop.f32.mrf.mxu0
        %3873 = vmatprep.mubr.f32.mxu0 %v3369
        %3874 = vmatmul.mubr.f32.gmra.mxu0 %v3350
        %v3875 = vpop.f32.mrf.mxu0
        %v3876 = vadd.f32 %v3781, %v3875
        %v3877 = vpop.f32.mrf.mxu0
        %3878 = vmatprep.mubr.f32.mxu0 %v3371
        %3879 = vmatmul.mubr.f32.gmra.mxu0 %v3352
        %v3880 = vpop.f32.mrf.mxu0
        %v3881 = vadd.f32 %v3786, %v3880
        %v3882 = vpop.f32.mrf.mxu0
        %3883 = vmatprep.mubr.f32.mxu0 %v3373
        %3884 = vmatmul.mubr.f32.gmra.mxu0 %v3354
        %v3885 = vpop.f32.mrf.mxu0
        %v3886 = vadd.f32 %v3791, %v3885
        %v3887 = vpop.f32.mrf.mxu0
        %3888 = vmatprep.mubr.f32.mxu0 %v3375
        %3889 = vmatmul.mubr.f32.gmra.mxu0 %v3356
        %v3890 = vpop.f32.mrf.mxu0
        %v3891 = vadd.f32 %v3796, %v3890
        %v3892 = vpop.f32.mrf.mxu0
        %3893 = vmatprep.mubr.f32.mxu0 %v3377
        %3894 = vmatmul.mubr.f32.gmra.mxu0 %v3358
        %v3895 = vpop.f32.mrf.mxu0
        %v3896 = vadd.f32 %v3801, %v3895
        %v3897 = vpop.f32.mrf.mxu0
        %3898 = vdwg.mxu0
        %v3899 = vmax.f32 %v3871, 0.0
        %v3900 = vmax.f32 %v3876, 0.0
        %v3901 = vmax.f32 %v3881, 0.0
        %v3902 = vmax.f32 %v3886, 0.0
        %v3903 = vmax.f32 %v3891, 0.0
        %v3904 = vmax.f32 %v3896, 0.0
        %v3905 = vmax.f32 %v3899, %v3903
        %v3906 = vsel %vm1927, %v3904, -inf
        %v3907 = vmax.f32 %v3900, %v3906
        %v3908 = vmax.f32 %v3905, %v3907
        %v3909 = vmax.f32 %v3901, %v3902
        %v3910 = vmax.f32 %v3908, %v3909
        %v3911 = vrot.slane %v3910, 4
        %v3912 = vmax.f32 %v3910, %v3911
        %v3913 = vrot.slane %v3912, 2
        %v3914 = vmax.f32 %v3912, %v3913
        %v3915 = vrot.slane %v3914, 1
        %v3916 = vmax.f32 %v3914, %v3915
        %v3917 = vpack.c.bf16 %v1817, %v1817
        %v3918 = vpack.c.bf16 %v3916, %v3916
        %v3919 = vld [vmem:[#allocation21] sm:$0xff]
        %v3920 = vld [vmem:[#allocation21 + $0x8] sm:$0xff]
        %v3921 = vld [vmem:[#allocation21 + $0x10] sm:$0xff]
        %v3922 = vld [vmem:[#allocation21 + $0x18] sm:$0xff]
        %v3923 = vld [vmem:[#allocation21 + $0x20] sm:$0xff]
        %v3924 = vld [vmem:[#allocation21 + $0x28] sm:$0xff]
        %v3925 = vld [vmem:[#allocation21 + $0x30] sm:$0xff]
        %v3926 = vld [vmem:[#allocation21 + $0x38] sm:$0xff]
        %v3927 = vld [vmem:[#allocation21 + $0x40] sm:$0xff]
        %v3928 = vld [vmem:[#allocation21 + $0x48] sm:$0xff]
        %v3929 = vld [vmem:[#allocation21 + $0x50] sm:$0xff]
        %v3930 = vld [vmem:[#allocation21 + $0x58] sm:$0xff]
        %v3931 = vld [vmem:[#allocation21 + $0x60] sm:$0xff]
        %v3932 = vld [vmem:[#allocation21 + $0x68] sm:$0xff]
        %v3933 = vld [vmem:[#allocation21 + $0x70] sm:$0xff]
        %v3934 = vld [vmem:[#allocation21 + $0x78] sm:$0xff]
        %v3935 = vld [vmem:[#allocation21 + $0x80] sm:$0xff]
        %v3936 = vld [vmem:[#allocation21 + $0x88] sm:$0xff]
        %v3937 = vld [vmem:[#allocation21 + $0x90] sm:$0xff]
        %v3938 = vld [vmem:[#allocation21 + $0x98] sm:$0xff]
        %v3939 = vld [vmem:[#allocation21 + $0xa0] sm:$0xff]
        %v3940 = vld [vmem:[#allocation21 + $0xa8] sm:$0xff]
        %v3941 = vld [vmem:[#allocation21 + $0xb0] sm:$0xff]
        %v3942 = vld [vmem:[#allocation21 + $0xb8] sm:$0xff]
        %v3943 = vld [vmem:[#allocation21 + $0xc0] sm:$0xff]
        %v3944 = vld [vmem:[#allocation21 + $0xc8] sm:$0xff]
        %v3945 = vld [vmem:[#allocation21 + $0xd0] sm:$0xff]
        %v3946 = vld [vmem:[#allocation21 + $0xd8] sm:$0xff]
        %v3947 = vld [vmem:[#allocation21 + $0xe0] sm:$0xff]
        %v3948 = vld [vmem:[#allocation21 + $0xe8] sm:$0xff]
        %v3949 = vld [vmem:[#allocation21 + $0xf0] sm:$0xff]
        %v3950 = vld [vmem:[#allocation21 + $0xf8] sm:$0xff]
        %v3951 = vld [vmem:[#allocation21 + $0x100] sm:$0xff]
        %v3952 = vld [vmem:[#allocation21 + $0x108] sm:$0xff]
        %v3953 = vld [vmem:[#allocation21 + $0x110] sm:$0xff]
        %v3954 = vld [vmem:[#allocation21 + $0x118] sm:$0xff]
        %v3955 = vld [vmem:[#allocation21 + $0x120] sm:$0xff]
        %v3956 = vld [vmem:[#allocation21 + $0x128] sm:$0xff]
        %v3957 = vld [vmem:[#allocation21 + $0x130] sm:$0xff]
        %v3958 = vld [vmem:[#allocation21 + $0x138] sm:$0xff]
        %v3959 = vld [vmem:[#allocation21 + $0x140] sm:$0xff]
        %v3960 = vld [vmem:[#allocation21 + $0x148] sm:$0xff]
        %v3961 = vld [vmem:[#allocation21 + $0x150] sm:$0xff]
        %v3962 = vld [vmem:[#allocation21 + $0x158] sm:$0xff]
        %v3963 = vld [vmem:[#allocation21 + $0x160] sm:$0xff]
        %v3964 = vld [vmem:[#allocation21 + $0x168] sm:$0xff]
        %v3965 = vld [vmem:[#allocation21 + $0x170] sm:$0xff]
        %v3966 = vld [vmem:[#allocation21 + $0x178] sm:$0xff]
        %v3967 = vld [vmem:[#allocation21 + $0x180] sm:$0xff]
        %v3968 = vld [vmem:[#allocation21 + $0x188] sm:$0xff]
        %v3969 = vld [vmem:[#allocation21 + $0x190] sm:$0xff]
        %v3970 = vld [vmem:[#allocation21 + $0x198] sm:$0xff]
        %v3971 = vld [vmem:[#allocation21 + $0x1a0] sm:$0xff]
        %v3972 = vld [vmem:[#allocation21 + $0x1a8] sm:$0xff]
        %v3973 = vld [vmem:[#allocation21 + $0x1b0] sm:$0xff]
        %v3974 = vld [vmem:[#allocation21 + $0x1b8] sm:$0xff]
        %v3975 = vld [vmem:[#allocation21 + $0x1c0] sm:$0xff]
        %v3976 = vld [vmem:[#allocation21 + $0x1c8] sm:$0xff]
        %v3977 = vld [vmem:[#allocation21 + $0x1d0] sm:$0xff]
        %v3978 = vld [vmem:[#allocation21 + $0x1d8] sm:$0xff]
        %v3979 = vld [vmem:[#allocation21 + $0x1e0] sm:$0xff]
        %v3980 = vld [vmem:[#allocation21 + $0x1e8] sm:$0xff]
        %v3981 = vld [vmem:[#allocation21 + $0x1f0] sm:$0xff]
        %v3982 = vld [vmem:[#allocation21 + $0x1f8] sm:$0xff]
        %v3983 = vld [vmem:[#allocation21 + $0x200] sm:$0xff]
        %v3984 = vld [vmem:[#allocation21 + $0x208] sm:$0xff]
        %v3985 = vld [vmem:[#allocation21 + $0x210] sm:$0xff]
        %v3986 = vld [vmem:[#allocation21 + $0x218] sm:$0xff]
        %v3987 = vld [vmem:[#allocation21 + $0x220] sm:$0xff]
        %v3988 = vld [vmem:[#allocation21 + $0x228] sm:$0xff]
        %v3989 = vld [vmem:[#allocation21 + $0x230] sm:$0xff]
        %v3990 = vld [vmem:[#allocation21 + $0x238] sm:$0xff]
        %v3991 = vld [vmem:[#allocation21 + $0x240] sm:$0xff]
        %v3992 = vld [vmem:[#allocation21 + $0x248] sm:$0xff]
        %v3993 = vld [vmem:[#allocation21 + $0x250] sm:$0xff]
        %v3994 = vld [vmem:[#allocation21 + $0x258] sm:$0xff]
        %v3995 = vld [vmem:[#allocation21 + $0x260] sm:$0xff]
        %v3996 = vld [vmem:[#allocation21 + $0x268] sm:$0xff]
        %v3997 = vld [vmem:[#allocation21 + $0x270] sm:$0xff]
        %v3998 = vld [vmem:[#allocation21 + $0x278] sm:$0xff]
        %v3999 = vld [vmem:[#allocation21 + $0x280] sm:$0xff]
        %v4000 = vld [vmem:[#allocation21 + $0x288] sm:$0xff]
        %v4001 = vld [vmem:[#allocation21 + $0x290] sm:$0xff]
        %v4002 = vld [vmem:[#allocation21 + $0x298] sm:$0xff]
        %v4003 = vld [vmem:[#allocation21 + $0x2a0] sm:$0xff]
        %v4004 = vld [vmem:[#allocation21 + $0x2a8] sm:$0xff]
        %v4005 = vld [vmem:[#allocation21 + $0x2b0] sm:$0xff]
        %v4006 = vld [vmem:[#allocation21 + $0x2b8] sm:$0xff]
        %v4007 = vld [vmem:[#allocation21 + $0x2c0] sm:$0xff]
        %v4008 = vld [vmem:[#allocation21 + $0x2c8] sm:$0xff]
        %v4009 = vld [vmem:[#allocation21 + $0x2d0] sm:$0xff]
        %v4010 = vld [vmem:[#allocation21 + $0x2d8] sm:$0xff]
        %v4011 = vld [vmem:[#allocation21 + $0x2e0] sm:$0xff]
        %v4012 = vld [vmem:[#allocation21 + $0x2e8] sm:$0xff]
        %v4013 = vld [vmem:[#allocation21 + $0x2f0] sm:$0xff]
        %v4014 = vld [vmem:[#allocation21 + $0x2f8] sm:$0xff]
        %v4015 = vld [vmem:[#allocation21 + $0x300] sm:$0xff]
        %v4016 = vld [vmem:[#allocation21 + $0x308] sm:$0xff]
        %v4017 = vld [vmem:[#allocation21 + $0x310] sm:$0xff]
        %v4018 = vld [vmem:[#allocation21 + $0x318] sm:$0xff]
        %v4019 = vld [vmem:[#allocation21 + $0x320] sm:$0xff]
        %v4020 = vld [vmem:[#allocation21 + $0x328] sm:$0xff]
        %v4021 = vld [vmem:[#allocation21 + $0x330] sm:$0xff]
        %v4022 = vld [vmem:[#allocation21 + $0x338] sm:$0xff]
        %v4023 = vld [vmem:[#allocation21 + $0x340] sm:$0xff]
        %v4024 = vld [vmem:[#allocation21 + $0x348] sm:$0xff]
        %v4025 = vld [vmem:[#allocation21 + $0x350] sm:$0xff]
        %v4026 = vld [vmem:[#allocation21 + $0x358] sm:$0xff]
        %v4027 = vld [vmem:[#allocation21 + $0x360] sm:$0xff]
        %v4028 = vld [vmem:[#allocation21 + $0x368] sm:$0xff]
        %v4029 = vld [vmem:[#allocation21 + $0x370] sm:$0xff]
        %v4030 = vld [vmem:[#allocation21 + $0x378] sm:$0xff]
        %v4031 = vld [vmem:[#allocation21 + $0x380] sm:$0xff]
        %v4032 = vld [vmem:[#allocation21 + $0x388] sm:$0xff]
        %v4033 = vld [vmem:[#allocation21 + $0x390] sm:$0xff]
        %v4034 = vld [vmem:[#allocation21 + $0x398] sm:$0xff]
        %v4035 = vld [vmem:[#allocation21 + $0x3a0] sm:$0xff]
        %v4036 = vld [vmem:[#allocation21 + $0x3a8] sm:$0xff]
        %v4037 = vld [vmem:[#allocation21 + $0x3b0] sm:$0xff]
        %v4038 = vld [vmem:[#allocation21 + $0x3b8] sm:$0xff]
        %v4039 = vld [vmem:[#allocation21 + $0x3c0] sm:$0xff]
        %v4040 = vld [vmem:[#allocation21 + $0x3c8] sm:$0xff]
        %v4041 = vld [vmem:[#allocation21 + $0x3d0] sm:$0xff]
        %v4042 = vld [vmem:[#allocation21 + $0x3d8] sm:$0xff]
        %v4043 = vld [vmem:[#allocation21 + $0x3e0] sm:$0xff]
        %v4044 = vld [vmem:[#allocation21 + $0x3e8] sm:$0xff]
        %v4045 = vld [vmem:[#allocation21 + $0x3f0] sm:$0xff]
        %v4046 = vld [vmem:[#allocation21 + $0x3f8] sm:$0xff]
        %v4047 = vld [vmem:[#allocation22] sm:$0xff]
        %v4176 = vunpack.c.l.b16 %v3919
        %v4177 = vunpack.c.h.b16 %v3919
        %v4178 = vunpack.c.l.b16 %v3920
        %v4179 = vunpack.c.h.b16 %v3920
        %v4180 = vunpack.c.l.b16 %v3921
        %v4181 = vunpack.c.h.b16 %v3921
        %v4182 = vunpack.c.l.b16 %v3922
        %v4183 = vunpack.c.h.b16 %v3922
        %v4184 = vunpack.c.l.b16 %v3923
        %v4185 = vunpack.c.h.b16 %v3923
        %v4186 = vunpack.c.l.b16 %v3924
        %v4187 = vunpack.c.h.b16 %v3924
        %v4188 = vunpack.c.l.b16 %v3925
        %v4189 = vunpack.c.h.b16 %v3925
        %v4190 = vunpack.c.l.b16 %v3926
        %v4191 = vunpack.c.h.b16 %v3926
        %v4192 = vunpack.c.l.b16 %v3927
        %v4193 = vunpack.c.h.b16 %v3927
        %v4194 = vunpack.c.l.b16 %v3928
        %v4195 = vunpack.c.h.b16 %v3928
        %v4196 = vunpack.c.l.b16 %v3929
        %v4197 = vunpack.c.h.b16 %v3929
        %v4198 = vunpack.c.l.b16 %v3930
        %v4199 = vunpack.c.h.b16 %v3930
        %v4200 = vunpack.c.l.b16 %v3931
        %v4201 = vunpack.c.h.b16 %v3931
        %v4202 = vunpack.c.l.b16 %v3932
        %v4203 = vunpack.c.h.b16 %v3932
        %v4204 = vunpack.c.l.b16 %v3933
        %v4205 = vunpack.c.h.b16 %v3933
        %v4206 = vunpack.c.l.b16 %v3934
        %v4207 = vunpack.c.h.b16 %v3934
        %v4208 = vunpack.c.l.b16 %v3935
        %v4209 = vunpack.c.h.b16 %v3935
        %v4210 = vunpack.c.l.b16 %v3936
        %v4211 = vunpack.c.h.b16 %v3936
        %v4212 = vunpack.c.l.b16 %v3937
        %v4213 = vunpack.c.h.b16 %v3937
        %v4214 = vunpack.c.l.b16 %v3938
        %v4215 = vunpack.c.h.b16 %v3938
        %v4216 = vunpack.c.l.b16 %v3939
        %v4217 = vunpack.c.h.b16 %v3939
        %v4218 = vunpack.c.l.b16 %v3940
        %v4219 = vunpack.c.h.b16 %v3940
        %v4220 = vunpack.c.l.b16 %v3941
        %v4221 = vunpack.c.h.b16 %v3941
        %v4222 = vunpack.c.l.b16 %v3942
        %v4223 = vunpack.c.h.b16 %v3942
        %v4224 = vunpack.c.l.b16 %v3943
        %v4225 = vunpack.c.h.b16 %v3943
        %v4226 = vunpack.c.l.b16 %v3944
        %v4227 = vunpack.c.h.b16 %v3944
        %v4228 = vunpack.c.l.b16 %v3945
        %v4229 = vunpack.c.h.b16 %v3945
        %v4230 = vunpack.c.l.b16 %v3946
        %v4231 = vunpack.c.h.b16 %v3946
        %v4232 = vunpack.c.l.b16 %v3947
        %v4233 = vunpack.c.h.b16 %v3947
        %v4234 = vunpack.c.l.b16 %v3948
        %v4235 = vunpack.c.h.b16 %v3948
        %v4236 = vunpack.c.l.b16 %v3949
        %v4237 = vunpack.c.h.b16 %v3949
        %v4238 = vunpack.c.l.b16 %v3950
        %v4239 = vunpack.c.h.b16 %v3950
        %v4240 = vunpack.c.l.b16 %v3951
        %v4241 = vunpack.c.h.b16 %v3951
        %v4242 = vunpack.c.l.b16 %v3952
        %v4243 = vunpack.c.h.b16 %v3952
        %v4244 = vunpack.c.l.b16 %v3953
        %v4245 = vunpack.c.h.b16 %v3953
        %v4246 = vunpack.c.l.b16 %v3954
        %v4247 = vunpack.c.h.b16 %v3954
        %v4248 = vunpack.c.l.b16 %v3955
        %v4249 = vunpack.c.h.b16 %v3955
        %v4250 = vunpack.c.l.b16 %v3956
        %v4251 = vunpack.c.h.b16 %v3956
        %v4252 = vunpack.c.l.b16 %v3957
        %v4253 = vunpack.c.h.b16 %v3957
        %v4254 = vunpack.c.l.b16 %v3958
        %v4255 = vunpack.c.h.b16 %v3958
        %v4256 = vunpack.c.l.b16 %v3959
        %v4257 = vunpack.c.h.b16 %v3959
        %v4258 = vunpack.c.l.b16 %v3960
        %v4259 = vunpack.c.h.b16 %v3960
        %v4260 = vunpack.c.l.b16 %v3961
        %v4261 = vunpack.c.h.b16 %v3961
        %v4262 = vunpack.c.l.b16 %v3962
        %v4263 = vunpack.c.h.b16 %v3962
        %v4264 = vunpack.c.l.b16 %v3963
        %v4265 = vunpack.c.h.b16 %v3963
        %v4266 = vunpack.c.l.b16 %v3964
        %v4267 = vunpack.c.h.b16 %v3964
        %v4268 = vunpack.c.l.b16 %v3965
        %v4269 = vunpack.c.h.b16 %v3965
        %v4270 = vunpack.c.l.b16 %v3966
        %v4271 = vunpack.c.h.b16 %v3966
        %v4272 = vunpack.c.l.b16 %v3967
        %v4273 = vunpack.c.h.b16 %v3967
        %v4274 = vunpack.c.l.b16 %v3968
        %v4275 = vunpack.c.h.b16 %v3968
        %v4276 = vunpack.c.l.b16 %v3969
        %v4277 = vunpack.c.h.b16 %v3969
        %v4278 = vunpack.c.l.b16 %v3970
        %v4279 = vunpack.c.h.b16 %v3970
        %v4280 = vunpack.c.l.b16 %v3971
        %v4281 = vunpack.c.h.b16 %v3971
        %v4282 = vunpack.c.l.b16 %v3972
        %v4283 = vunpack.c.h.b16 %v3972
        %v4284 = vunpack.c.l.b16 %v3973
        %v4285 = vunpack.c.h.b16 %v3973
        %v4286 = vunpack.c.l.b16 %v3974
        %v4287 = vunpack.c.h.b16 %v3974
        %v4288 = vunpack.c.l.b16 %v3975
        %v4289 = vunpack.c.h.b16 %v3975
        %v4290 = vunpack.c.l.b16 %v3976
        %v4291 = vunpack.c.h.b16 %v3976
        %v4292 = vunpack.c.l.b16 %v3977
        %v4293 = vunpack.c.h.b16 %v3977
        %v4294 = vunpack.c.l.b16 %v3978
        %v4295 = vunpack.c.h.b16 %v3978
        %v4296 = vunpack.c.l.b16 %v3979
        %v4297 = vunpack.c.h.b16 %v3979
        %v4298 = vunpack.c.l.b16 %v3980
        %v4299 = vunpack.c.h.b16 %v3980
        %v4300 = vunpack.c.l.b16 %v3981
        %v4301 = vunpack.c.h.b16 %v3981
        %v4302 = vunpack.c.l.b16 %v3982
        %v4303 = vunpack.c.h.b16 %v3982
        %v4304 = vunpack.c.l.b16 %v3983
        %v4305 = vunpack.c.h.b16 %v3983
        %v4306 = vunpack.c.l.b16 %v3984
        %v4307 = vunpack.c.h.b16 %v3984
        %v4308 = vunpack.c.l.b16 %v3985
        %v4309 = vunpack.c.h.b16 %v3985
        %v4310 = vunpack.c.l.b16 %v3986
        %v4311 = vunpack.c.h.b16 %v3986
        %v4312 = vunpack.c.l.b16 %v3987
        %v4313 = vunpack.c.h.b16 %v3987
        %v4314 = vunpack.c.l.b16 %v3988
        %v4315 = vunpack.c.h.b16 %v3988
        %v4316 = vunpack.c.l.b16 %v3989
        %v4317 = vunpack.c.h.b16 %v3989
        %v4318 = vunpack.c.l.b16 %v3990
        %v4319 = vunpack.c.h.b16 %v3990
        %v4320 = vunpack.c.l.b16 %v3991
        %v4321 = vunpack.c.h.b16 %v3991
        %v4322 = vunpack.c.l.b16 %v3992
        %v4323 = vunpack.c.h.b16 %v3992
        %v4324 = vunpack.c.l.b16 %v3993
        %v4325 = vunpack.c.h.b16 %v3993
        %v4326 = vunpack.c.l.b16 %v3994
        %v4327 = vunpack.c.h.b16 %v3994
        %v4328 = vunpack.c.l.b16 %v3995
        %v4329 = vunpack.c.h.b16 %v3995
        %v4330 = vunpack.c.l.b16 %v3996
        %v4331 = vunpack.c.h.b16 %v3996
        %v4332 = vunpack.c.l.b16 %v3997
        %v4333 = vunpack.c.h.b16 %v3997
        %v4334 = vunpack.c.l.b16 %v3998
        %v4335 = vunpack.c.h.b16 %v3998
        %v4336 = vunpack.c.l.b16 %v3999
        %v4337 = vunpack.c.h.b16 %v3999
        %v4338 = vunpack.c.l.b16 %v4000
        %v4339 = vunpack.c.h.b16 %v4000
        %v4340 = vunpack.c.l.b16 %v4001
        %v4341 = vunpack.c.h.b16 %v4001
        %v4342 = vunpack.c.l.b16 %v4002
        %v4343 = vunpack.c.h.b16 %v4002
        %v4344 = vunpack.c.l.b16 %v4003
        %v4345 = vunpack.c.h.b16 %v4003
        %v4346 = vunpack.c.l.b16 %v4004
        %v4347 = vunpack.c.h.b16 %v4004
        %v4348 = vunpack.c.l.b16 %v4005
        %v4349 = vunpack.c.h.b16 %v4005
        %v4350 = vunpack.c.l.b16 %v4006
        %v4351 = vunpack.c.h.b16 %v4006
        %v4352 = vunpack.c.l.b16 %v4007
        %v4353 = vunpack.c.h.b16 %v4007
        %v4354 = vunpack.c.l.b16 %v4008
        %v4355 = vunpack.c.h.b16 %v4008
        %v4356 = vunpack.c.l.b16 %v4009
        %v4357 = vunpack.c.h.b16 %v4009
        %v4358 = vunpack.c.l.b16 %v4010
        %v4359 = vunpack.c.h.b16 %v4010
        %v4360 = vunpack.c.l.b16 %v4011
        %v4361 = vunpack.c.h.b16 %v4011
        %v4362 = vunpack.c.l.b16 %v4012
        %v4363 = vunpack.c.h.b16 %v4012
        %v4364 = vunpack.c.l.b16 %v4013
        %v4365 = vunpack.c.h.b16 %v4013
        %v4366 = vunpack.c.l.b16 %v4014
        %v4367 = vunpack.c.h.b16 %v4014
        %v4368 = vunpack.c.l.b16 %v4015
        %v4369 = vunpack.c.h.b16 %v4015
        %v4370 = vunpack.c.l.b16 %v4016
        %v4371 = vunpack.c.h.b16 %v4016
        %v4372 = vunpack.c.l.b16 %v4017
        %v4373 = vunpack.c.h.b16 %v4017
        %v4374 = vunpack.c.l.b16 %v4018
        %v4375 = vunpack.c.h.b16 %v4018
        %v4376 = vunpack.c.l.b16 %v4019
        %v4377 = vunpack.c.h.b16 %v4019
        %v4378 = vunpack.c.l.b16 %v4020
        %v4379 = vunpack.c.h.b16 %v4020
        %v4380 = vunpack.c.l.b16 %v4021
        %v4381 = vunpack.c.h.b16 %v4021
        %v4382 = vunpack.c.l.b16 %v4022
        %v4383 = vunpack.c.h.b16 %v4022
        %v4384 = vunpack.c.l.b16 %v4023
        %v4385 = vunpack.c.h.b16 %v4023
        %v4386 = vunpack.c.l.b16 %v4024
        %v4387 = vunpack.c.h.b16 %v4024
        %v4388 = vunpack.c.l.b16 %v4025
        %v4389 = vunpack.c.h.b16 %v4025
        %v4390 = vunpack.c.l.b16 %v4026
        %v4391 = vunpack.c.h.b16 %v4026
        %v4392 = vunpack.c.l.b16 %v4027
        %v4393 = vunpack.c.h.b16 %v4027
        %v4394 = vunpack.c.l.b16 %v4028
        %v4395 = vunpack.c.h.b16 %v4028
        %v4396 = vunpack.c.l.b16 %v4029
        %v4397 = vunpack.c.h.b16 %v4029
        %v4398 = vunpack.c.l.b16 %v4030
        %v4399 = vunpack.c.h.b16 %v4030
        %v4400 = vunpack.c.l.b16 %v4031
        %v4401 = vunpack.c.h.b16 %v4031
        %v4402 = vunpack.c.l.b16 %v4032
        %v4403 = vunpack.c.h.b16 %v4032
        %v4404 = vunpack.c.l.b16 %v4033
        %v4405 = vunpack.c.h.b16 %v4033
        %v4406 = vunpack.c.l.b16 %v4034
        %v4407 = vunpack.c.h.b16 %v4034
        %v4408 = vunpack.c.l.b16 %v4035
        %v4409 = vunpack.c.h.b16 %v4035
        %v4410 = vunpack.c.l.b16 %v4036
        %v4411 = vunpack.c.h.b16 %v4036
        %v4412 = vunpack.c.l.b16 %v4037
        %v4413 = vunpack.c.h.b16 %v4037
        %v4414 = vunpack.c.l.b16 %v4038
        %v4415 = vunpack.c.h.b16 %v4038
        %v4416 = vunpack.c.l.b16 %v4039
        %v4417 = vunpack.c.h.b16 %v4039
        %v4418 = vunpack.c.l.b16 %v4040
        %v4419 = vunpack.c.h.b16 %v4040
        %v4420 = vunpack.c.l.b16 %v4041
        %v4421 = vunpack.c.h.b16 %v4041
        %v4422 = vunpack.c.l.b16 %v4042
        %v4423 = vunpack.c.h.b16 %v4042
        %v4424 = vunpack.c.l.b16 %v4043
        %v4425 = vunpack.c.h.b16 %v4043
        %v4426 = vunpack.c.l.b16 %v4044
        %v4427 = vunpack.c.h.b16 %v4044
        %v4428 = vunpack.c.l.b16 %v4045
        %v4429 = vunpack.c.h.b16 %v4045
        %v4430 = vunpack.c.l.b16 %v4046
        %v4431 = vunpack.c.h.b16 %v4046
        %v4432 = vpack.c.b16 %v4184, %v4176
        %v4433 = vpack.c.b16 %v4185, %v4177
        %v4434 = vpack.c.b16 %v4186, %v4178
        %v4435 = vpack.c.b16 %v4187, %v4179
        %v4436 = vpack.c.b16 %v4188, %v4180
        %v4437 = vpack.c.b16 %v4189, %v4181
        %v4438 = vpack.c.b16 %v4190, %v4182
        %v4439 = vpack.c.b16 %v4191, %v4183
        %v4440 = vpack.c.b16 %v4200, %v4192
        %v4441 = vpack.c.b16 %v4201, %v4193
        %v4442 = vpack.c.b16 %v4202, %v4194
        %v4443 = vpack.c.b16 %v4203, %v4195
        %v4444 = vpack.c.b16 %v4204, %v4196
        %v4445 = vpack.c.b16 %v4205, %v4197
        %v4446 = vpack.c.b16 %v4206, %v4198
        %v4447 = vpack.c.b16 %v4207, %v4199
        %v4448 = vpack.c.b16 %v4216, %v4208
        %v4449 = vpack.c.b16 %v4217, %v4209
        %v4450 = vpack.c.b16 %v4218, %v4210
        %v4451 = vpack.c.b16 %v4219, %v4211
        %v4452 = vpack.c.b16 %v4220, %v4212
        %v4453 = vpack.c.b16 %v4221, %v4213
        %v4454 = vpack.c.b16 %v4222, %v4214
        %v4455 = vpack.c.b16 %v4223, %v4215
        %v4456 = vpack.c.b16 %v4232, %v4224
        %v4457 = vpack.c.b16 %v4233, %v4225
        %v4458 = vpack.c.b16 %v4234, %v4226
        %v4459 = vpack.c.b16 %v4235, %v4227
        %v4460 = vpack.c.b16 %v4236, %v4228
        %v4461 = vpack.c.b16 %v4237, %v4229
        %v4462 = vpack.c.b16 %v4238, %v4230
        %v4463 = vpack.c.b16 %v4239, %v4231
        %v4464 = vpack.c.b16 %v4248, %v4240
        %v4465 = vpack.c.b16 %v4249, %v4241
        %v4466 = vpack.c.b16 %v4250, %v4242
        %v4467 = vpack.c.b16 %v4251, %v4243
        %v4468 = vpack.c.b16 %v4252, %v4244
        %v4469 = vpack.c.b16 %v4253, %v4245
        %v4470 = vpack.c.b16 %v4254, %v4246
        %v4471 = vpack.c.b16 %v4255, %v4247
        %v4472 = vpack.c.b16 %v4264, %v4256
        %v4473 = vpack.c.b16 %v4265, %v4257
        %v4474 = vpack.c.b16 %v4266, %v4258
        %v4475 = vpack.c.b16 %v4267, %v4259
        %v4476 = vpack.c.b16 %v4268, %v4260
        %v4477 = vpack.c.b16 %v4269, %v4261
        %v4478 = vpack.c.b16 %v4270, %v4262
        %v4479 = vpack.c.b16 %v4271, %v4263
        %v4480 = vpack.c.b16 %v4280, %v4272
        %v4481 = vpack.c.b16 %v4281, %v4273
        %v4482 = vpack.c.b16 %v4282, %v4274
        %v4483 = vpack.c.b16 %v4283, %v4275
        %v4484 = vpack.c.b16 %v4284, %v4276
        %v4485 = vpack.c.b16 %v4285, %v4277
        %v4486 = vpack.c.b16 %v4286, %v4278
        %v4487 = vpack.c.b16 %v4287, %v4279
        %v4488 = vpack.c.b16 %v4296, %v4288
        %v4489 = vpack.c.b16 %v4297, %v4289
        %v4490 = vpack.c.b16 %v4298, %v4290
        %v4491 = vpack.c.b16 %v4299, %v4291
        %v4492 = vpack.c.b16 %v4300, %v4292
        %v4493 = vpack.c.b16 %v4301, %v4293
        %v4494 = vpack.c.b16 %v4302, %v4294
        %v4495 = vpack.c.b16 %v4303, %v4295
        %v4496 = vpack.c.b16 %v4312, %v4304
        %v4497 = vpack.c.b16 %v4313, %v4305
        %v4498 = vpack.c.b16 %v4314, %v4306
        %v4499 = vpack.c.b16 %v4315, %v4307
        %v4500 = vpack.c.b16 %v4316, %v4308
        %v4501 = vpack.c.b16 %v4317, %v4309
        %v4502 = vpack.c.b16 %v4318, %v4310
        %v4503 = vpack.c.b16 %v4319, %v4311
        %v4504 = vpack.c.b16 %v4328, %v4320
        %v4505 = vpack.c.b16 %v4329, %v4321
        %v4506 = vpack.c.b16 %v4330, %v4322
        %v4507 = vpack.c.b16 %v4331, %v4323
        %v4508 = vpack.c.b16 %v4332, %v4324
        %v4509 = vpack.c.b16 %v4333, %v4325
        %v4510 = vpack.c.b16 %v4334, %v4326
        %v4511 = vpack.c.b16 %v4335, %v4327
        %v4512 = vpack.c.b16 %v4344, %v4336
        %v4513 = vpack.c.b16 %v4345, %v4337
        %v4514 = vpack.c.b16 %v4346, %v4338
        %v4515 = vpack.c.b16 %v4347, %v4339
        %v4516 = vpack.c.b16 %v4348, %v4340
        %v4517 = vpack.c.b16 %v4349, %v4341
        %v4518 = vpack.c.b16 %v4350, %v4342
        %v4519 = vpack.c.b16 %v4351, %v4343
        %v4520 = vpack.c.b16 %v4360, %v4352
        %v4521 = vpack.c.b16 %v4361, %v4353
        %v4522 = vpack.c.b16 %v4362, %v4354
        %v4523 = vpack.c.b16 %v4363, %v4355
        %v4524 = vpack.c.b16 %v4364, %v4356
        %v4525 = vpack.c.b16 %v4365, %v4357
        %v4526 = vpack.c.b16 %v4366, %v4358
        %v4527 = vpack.c.b16 %v4367, %v4359
        %v4528 = vpack.c.b16 %v4376, %v4368
        %v4529 = vpack.c.b16 %v4377, %v4369
        %v4530 = vpack.c.b16 %v4378, %v4370
        %v4531 = vpack.c.b16 %v4379, %v4371
        %v4532 = vpack.c.b16 %v4380, %v4372
        %v4533 = vpack.c.b16 %v4381, %v4373
        %v4534 = vpack.c.b16 %v4382, %v4374
        %v4535 = vpack.c.b16 %v4383, %v4375
        %v4536 = vpack.c.b16 %v4392, %v4384
        %v4537 = vpack.c.b16 %v4393, %v4385
        %v4538 = vpack.c.b16 %v4394, %v4386
        %v4539 = vpack.c.b16 %v4395, %v4387
        %v4540 = vpack.c.b16 %v4396, %v4388
        %v4541 = vpack.c.b16 %v4397, %v4389
        %v4542 = vpack.c.b16 %v4398, %v4390
        %v4543 = vpack.c.b16 %v4399, %v4391
        %v4544 = vpack.c.b16 %v4408, %v4400
        %v4545 = vpack.c.b16 %v4409, %v4401
        %v4546 = vpack.c.b16 %v4410, %v4402
        %v4547 = vpack.c.b16 %v4411, %v4403
        %v4548 = vpack.c.b16 %v4412, %v4404
        %v4549 = vpack.c.b16 %v4413, %v4405
        %v4550 = vpack.c.b16 %v4414, %v4406
        %v4551 = vpack.c.b16 %v4415, %v4407
        %v4552 = vpack.c.b16 %v4424, %v4416
        %v4553 = vpack.c.b16 %v4425, %v4417
        %v4554 = vpack.c.b16 %v4426, %v4418
        %v4555 = vpack.c.b16 %v4427, %v4419
        %v4556 = vpack.c.b16 %v4428, %v4420
        %v4557 = vpack.c.b16 %v4429, %v4421
        %v4558 = vpack.c.b16 %v4430, %v4422
        %v4559 = vpack.c.b16 %v4431, %v4423
        %v4689 = vlaneseq
        %v4690 = vshrl.u32 %v4689, 7
        %v4691 = vsub.s32 0, %v4690
        %v4692 = vrot.slane %v4047, %v4691
        %v4693 = vlaneseq
        %v4694 = vshrl.u32 %v4693, 7
        %v4695 = vsub.s32 1, %v4694
        %v4696 = vrot.slane %v4047, %v4695
        %v4697 = vlaneseq
        %v4698 = vshrl.u32 %v4697, 7
        %v4699 = vsub.s32 2, %v4698
        %v4700 = vrot.slane %v4047, %v4699
        %v4701 = vlaneseq
        %v4702 = vshrl.u32 %v4701, 7
        %v4703 = vsub.s32 3, %v4702
        %v4704 = vrot.slane %v4047, %v4703
        %v4705 = vlaneseq
        %v4706 = vshrl.u32 %v4705, 7
        %v4707 = vsub.s32 4, %v4706
        %v4708 = vrot.slane %v4047, %v4707
        %v4709 = vlaneseq
        %v4710 = vshrl.u32 %v4709, 7
        %v4711 = vsub.s32 5, %v4710
        %v4712 = vrot.slane %v4047, %v4711
        %v4713 = vlaneseq
        %v4714 = vshrl.u32 %v4713, 7
        %v4715 = vsub.s32 6, %v4714
        %v4716 = vrot.slane %v4047, %v4715
        %v4717 = vlaneseq
        %v4718 = vshrl.u32 %v4717, 7
        %v4719 = vsub.s32 7, %v4718
        %v4720 = vrot.slane %v4047, %v4719
        %4729 = vmatprep.subr.bf16.mxu0 %v4489
        %4730 = vmatpush1.bf16.msra.mxu0 %v4488
        %4731 = vmatprep.subr.bf16.mxu0 %v4481
        %4732 = vmatpush1.bf16.msra.mxu0 %v4480
        %4733 = vmatprep.subr.bf16.mxu0 %v4473
        %4734 = vmatpush1.bf16.msra.mxu0 %v4472
        %4735 = vmatprep.subr.bf16.mxu0 %v4465
        %4736 = vmatpush1.bf16.msra.mxu0 %v4464
        %4737 = vmatprep.subr.bf16.mxu0 %v4457
        %4738 = vmatpush1.bf16.msra.mxu0 %v4456
        %4739 = vmatprep.subr.bf16.mxu0 %v4449
        %4740 = vmatpush1.bf16.msra.mxu0 %v4448
        %4741 = vmatprep.subr.bf16.mxu0 %v4441
        %4742 = vmatpush1.bf16.msra.mxu0 %v4440
        %4743 = vmatprep.subr.bf16.mxu0 %v4433
        %4744 = vmatpush1.bf16.msra.mxu0 %v4432
        %4745 = vmatprep.subr.bf16.mxu0 %v4553
        %4746 = vmatpush2.bf16.msra.mxu0 %v4552
        %4747 = vmatprep.subr.bf16.mxu0 %v4545
        %4748 = vmatpush2.bf16.msra.mxu0 %v4544
        %4749 = vmatprep.subr.bf16.mxu0 %v4537
        %4750 = vmatpush2.bf16.msra.mxu0 %v4536
        %4751 = vmatprep.subr.bf16.mxu0 %v4529
        %4752 = vmatpush2.bf16.msra.mxu0 %v4528
        %4753 = vmatprep.subr.bf16.mxu0 %v4521
        %4754 = vmatpush2.bf16.msra.mxu0 %v4520
        %4755 = vmatprep.subr.bf16.mxu0 %v4513
        %4756 = vmatpush2.bf16.msra.mxu0 %v4512
        %4757 = vmatprep.subr.bf16.mxu0 %v4505
        %4758 = vmatpush2.bf16.msra.mxu0 %v4504
        %4759 = vmatprep.subr.bf16.mxu0 %v4497
        %4760 = vmatpush2.bf16.msra.mxu0 %v4496
        %4761 = vmatprep.mubr.bf16.mxu0 %v3918
        %4762 = vmatmul.mubr.bf16.gmra.mxu0 %v3917
        %v4763 = vpop.f32.mrf.mxu0
        %v4764 = vadd.f32 %v4692, %v4763
        %v4765 = vpop.f32.mrf.mxu0
        %v4766 = vadd.f32 %v4696, %v4765
        %v4767 = vpop.f32.mrf.mxu0
        %v4768 = vpop.f32.mrf.mxu0
        %4769 = vdwg.mxu0
        %4770 = vmatprep.subr.bf16.mxu0 %v4491
        %4771 = vmatpush1.bf16.msra.mxu0 %v4490
        %4772 = vmatprep.subr.bf16.mxu0 %v4483
        %4773 = vmatpush1.bf16.msra.mxu0 %v4482
        %4774 = vmatprep.subr.bf16.mxu0 %v4475
        %4775 = vmatpush1.bf16.msra.mxu0 %v4474
        %4776 = vmatprep.subr.bf16.mxu0 %v4467
        %4777 = vmatpush1.bf16.msra.mxu0 %v4466
        %4778 = vmatprep.subr.bf16.mxu0 %v4459
        %4779 = vmatpush1.bf16.msra.mxu0 %v4458
        %4780 = vmatprep.subr.bf16.mxu0 %v4451
        %4781 = vmatpush1.bf16.msra.mxu0 %v4450
        %4782 = vmatprep.subr.bf16.mxu0 %v4443
        %4783 = vmatpush1.bf16.msra.mxu0 %v4442
        %4784 = vmatprep.subr.bf16.mxu0 %v4435
        %4785 = vmatpush1.bf16.msra.mxu0 %v4434
        %4786 = vmatprep.subr.bf16.mxu0 %v4555
        %4787 = vmatpush2.bf16.msra.mxu0 %v4554
        %4788 = vmatprep.subr.bf16.mxu0 %v4547
        %4789 = vmatpush2.bf16.msra.mxu0 %v4546
        %4790 = vmatprep.subr.bf16.mxu0 %v4539
        %4791 = vmatpush2.bf16.msra.mxu0 %v4538
        %4792 = vmatprep.subr.bf16.mxu0 %v4531
        %4793 = vmatpush2.bf16.msra.mxu0 %v4530
        %4794 = vmatprep.subr.bf16.mxu0 %v4523
        %4795 = vmatpush2.bf16.msra.mxu0 %v4522
        %4796 = vmatprep.subr.bf16.mxu0 %v4515
        %4797 = vmatpush2.bf16.msra.mxu0 %v4514
        %4798 = vmatprep.subr.bf16.mxu0 %v4507
        %4799 = vmatpush2.bf16.msra.mxu0 %v4506
        %4800 = vmatprep.subr.bf16.mxu0 %v4499
        %4801 = vmatpush2.bf16.msra.mxu0 %v4498
        %4802 = vmatprep.mubr.bf16.mxu0 %v3918
        %4803 = vmatmul.mubr.bf16.gmra.mxu0 %v3917
        %v4804 = vpop.f32.mrf.mxu0
        %v4805 = vadd.f32 %v4700, %v4804
        %v4806 = vpop.f32.mrf.mxu0
        %v4807 = vadd.f32 %v4704, %v4806
        %v4808 = vpop.f32.mrf.mxu0
        %v4809 = vpop.f32.mrf.mxu0
        %4810 = vdwg.mxu0
        %4811 = vmatprep.subr.bf16.mxu0 %v4493
        %4812 = vmatpush1.bf16.msra.mxu0 %v4492
        %4813 = vmatprep.subr.bf16.mxu0 %v4485
        %4814 = vmatpush1.bf16.msra.mxu0 %v4484
        %4815 = vmatprep.subr.bf16.mxu0 %v4477
        %4816 = vmatpush1.bf16.msra.mxu0 %v4476
        %4817 = vmatprep.subr.bf16.mxu0 %v4469
        %4818 = vmatpush1.bf16.msra.mxu0 %v4468
        %4819 = vmatprep.subr.bf16.mxu0 %v4461
        %4820 = vmatpush1.bf16.msra.mxu0 %v4460
        %4821 = vmatprep.subr.bf16.mxu0 %v4453
        %4822 = vmatpush1.bf16.msra.mxu0 %v4452
        %4823 = vmatprep.subr.bf16.mxu0 %v4445
        %4824 = vmatpush1.bf16.msra.mxu0 %v4444
        %4825 = vmatprep.subr.bf16.mxu0 %v4437
        %4826 = vmatpush1.bf16.msra.mxu0 %v4436
        %4827 = vmatprep.subr.bf16.mxu0 %v4557
        %4828 = vmatpush2.bf16.msra.mxu0 %v4556
        %4829 = vmatprep.subr.bf16.mxu0 %v4549
        %4830 = vmatpush2.bf16.msra.mxu0 %v4548
        %4831 = vmatprep.subr.bf16.mxu0 %v4541
        %4832 = vmatpush2.bf16.msra.mxu0 %v4540
        %4833 = vmatprep.subr.bf16.mxu0 %v4533
        %4834 = vmatpush2.bf16.msra.mxu0 %v4532
        %4835 = vmatprep.subr.bf16.mxu0 %v4525
        %4836 = vmatpush2.bf16.msra.mxu0 %v4524
        %4837 = vmatprep.subr.bf16.mxu0 %v4517
        %4838 = vmatpush2.bf16.msra.mxu0 %v4516
        %4839 = vmatprep.subr.bf16.mxu0 %v4509
        %4840 = vmatpush2.bf16.msra.mxu0 %v4508
        %4841 = vmatprep.subr.bf16.mxu0 %v4501
        %4842 = vmatpush2.bf16.msra.mxu0 %v4500
        %4843 = vmatprep.mubr.bf16.mxu0 %v3918
        %4844 = vmatmul.mubr.bf16.gmra.mxu0 %v3917
        %v4845 = vpop.f32.mrf.mxu0
        %v4846 = vadd.f32 %v4708, %v4845
        %v4847 = vpop.f32.mrf.mxu0
        %v4848 = vadd.f32 %v4712, %v4847
        %v4849 = vpop.f32.mrf.mxu0
        %v4850 = vpop.f32.mrf.mxu0
        %4851 = vdwg.mxu0
        %4852 = vmatprep.subr.bf16.mxu0 %v4495
        %4853 = vmatpush1.bf16.msra.mxu0 %v4494
        %4854 = vmatprep.subr.bf16.mxu0 %v4487
        %4855 = vmatpush1.bf16.msra.mxu0 %v4486
        %4856 = vmatprep.subr.bf16.mxu0 %v4479
        %4857 = vmatpush1.bf16.msra.mxu0 %v4478
        %4858 = vmatprep.subr.bf16.mxu0 %v4471
        %4859 = vmatpush1.bf16.msra.mxu0 %v4470
        %4860 = vmatprep.subr.bf16.mxu0 %v4463
        %4861 = vmatpush1.bf16.msra.mxu0 %v4462
        %4862 = vmatprep.subr.bf16.mxu0 %v4455
        %4863 = vmatpush1.bf16.msra.mxu0 %v4454
        %4864 = vmatprep.subr.bf16.mxu0 %v4447
        %4865 = vmatpush1.bf16.msra.mxu0 %v4446
        %4866 = vmatprep.subr.bf16.mxu0 %v4439
        %4867 = vmatpush1.bf16.msra.mxu0 %v4438
        %4868 = vmatprep.subr.bf16.mxu0 %v4559
        %4869 = vmatpush2.bf16.msra.mxu0 %v4558
        %4870 = vmatprep.subr.bf16.mxu0 %v4551
        %4871 = vmatpush2.bf16.msra.mxu0 %v4550
        %4872 = vmatprep.subr.bf16.mxu0 %v4543
        %4873 = vmatpush2.bf16.msra.mxu0 %v4542
        %4874 = vmatprep.subr.bf16.mxu0 %v4535
        %4875 = vmatpush2.bf16.msra.mxu0 %v4534
        %4876 = vmatprep.subr.bf16.mxu0 %v4527
        %4877 = vmatpush2.bf16.msra.mxu0 %v4526
        %4878 = vmatprep.subr.bf16.mxu0 %v4519
        %4879 = vmatpush2.bf16.msra.mxu0 %v4518
        %4880 = vmatprep.subr.bf16.mxu0 %v4511
        %4881 = vmatpush2.bf16.msra.mxu0 %v4510
        %4882 = vmatprep.subr.bf16.mxu0 %v4503
        %4883 = vmatpush2.bf16.msra.mxu0 %v4502
        %4884 = vmatprep.mubr.bf16.mxu0 %v3918
        %4885 = vmatmul.mubr.bf16.gmra.mxu0 %v3917
        %v4886 = vpop.f32.mrf.mxu0
        %v4887 = vadd.f32 %v4716, %v4886
        %v4888 = vpop.f32.mrf.mxu0
        %v4889 = vadd.f32 %v4720, %v4888
        %v4890 = vpop.f32.mrf.mxu0
        %v4891 = vpop.f32.mrf.mxu0
        %4892 = vdwg.mxu0
        %v4893 = vmax.f32 %v4764, 0.0
        %v4894 = vmax.f32 %v4766, 0.0
        %v4895 = vmax.f32 %v4805, 0.0
        %v4896 = vmax.f32 %v4807, 0.0
        %v4897 = vmax.f32 %v4846, 0.0
        %v4898 = vmax.f32 %v4848, 0.0
        %v4899 = vmax.f32 %v4887, 0.0
        %v4900 = vmax.f32 %v4889, 0.0
        %v4901 = vpack.c.bf16 %v4893, %v4893
        %v4902 = vpack.c.bf16 %v4894, %v4894
        %v4903 = vpack.c.bf16 %v4895, %v4895
        %v4904 = vpack.c.bf16 %v4896, %v4896
        %v4905 = vpack.c.bf16 %v4897, %v4897
        %v4906 = vpack.c.bf16 %v4898, %v4898
        %v4907 = vpack.c.bf16 %v4899, %v4899
        %v4908 = vpack.c.bf16 %v4900, %v4900
        %v4909 = vld [vmem:[#allocation24] sm:$0xff]
        %v4910 = vld [vmem:[#allocation24 + $0x8] sm:$0xff]
        %v4911 = vld [vmem:[#allocation24 + $0x10] sm:$0xff]
        %v4912 = vld [vmem:[#allocation24 + $0x18] sm:$0xff]
        %v4913 = vld [vmem:[#allocation24 + $0x20] sm:$0xff]
        %v4914 = vld [vmem:[#allocation24 + $0x28] sm:$0xff]
        %v4915 = vld [vmem:[#allocation24 + $0x30] sm:$0xff]
        %v4916 = vld [vmem:[#allocation24 + $0x38] sm:$0xff]
        %v4917 = vld [vmem:[#allocation24 + $0x40] sm:$0xff]
        %v4918 = vld [vmem:[#allocation24 + $0x48] sm:$0xff]
        %v4919 = vld [vmem:[#allocation24 + $0x50] sm:$0xff]
        %v4920 = vld [vmem:[#allocation24 + $0x58] sm:$0xff]
        %v4921 = vld [vmem:[#allocation24 + $0x60] sm:$0xff]
        %v4922 = vld [vmem:[#allocation24 + $0x68] sm:$0xff]
        %v4923 = vld [vmem:[#allocation24 + $0x70] sm:$0xff]
        %v4924 = vld [vmem:[#allocation24 + $0x78] sm:$0xff]
        %v4925 = vld [vmem:[#allocation24 + $0x80] sm:$0xff]
        %v4926 = vld [vmem:[#allocation24 + $0x88] sm:$0xff]
        %v4927 = vld [vmem:[#allocation24 + $0x90] sm:$0xff]
        %v4928 = vld [vmem:[#allocation24 + $0x98] sm:$0xff]
        %v4929 = vld [vmem:[#allocation24 + $0xa0] sm:$0xff]
        %v4930 = vld [vmem:[#allocation24 + $0xa8] sm:$0xff]
        %v4931 = vld [vmem:[#allocation24 + $0xb0] sm:$0xff]
        %v4932 = vld [vmem:[#allocation24 + $0xb8] sm:$0xff]
        %v4933 = vld [vmem:[#allocation24 + $0xc0] sm:$0xff]
        %v4934 = vld [vmem:[#allocation24 + $0xc8] sm:$0xff]
        %v4935 = vld [vmem:[#allocation24 + $0xd0] sm:$0xff]
        %v4936 = vld [vmem:[#allocation24 + $0xd8] sm:$0xff]
        %v4937 = vld [vmem:[#allocation24 + $0xe0] sm:$0xff]
        %v4938 = vld [vmem:[#allocation24 + $0xe8] sm:$0xff]
        %v4939 = vld [vmem:[#allocation24 + $0xf0] sm:$0xff]
        %v4940 = vld [vmem:[#allocation24 + $0xf8] sm:$0xff]
        %v4941 = vld [vmem:[#allocation24 + $0x100] sm:$0xff]
        %v4942 = vld [vmem:[#allocation24 + $0x108] sm:$0xff]
        %v4943 = vld [vmem:[#allocation24 + $0x110] sm:$0xff]
        %v4944 = vld [vmem:[#allocation24 + $0x118] sm:$0xff]
        %v4945 = vld [vmem:[#allocation24 + $0x120] sm:$0xff]
        %v4946 = vld [vmem:[#allocation24 + $0x128] sm:$0xff]
        %v4947 = vld [vmem:[#allocation24 + $0x130] sm:$0xff]
        %v4948 = vld [vmem:[#allocation24 + $0x138] sm:$0xff]
        %v4949 = vld [vmem:[#allocation24 + $0x140] sm:$0xff]
        %v4950 = vld [vmem:[#allocation24 + $0x148] sm:$0xff]
        %v4951 = vld [vmem:[#allocation24 + $0x150] sm:$0xff]
        %v4952 = vld [vmem:[#allocation24 + $0x158] sm:$0xff]
        %v4953 = vld [vmem:[#allocation24 + $0x160] sm:$0xff]
        %v4954 = vld [vmem:[#allocation24 + $0x168] sm:$0xff]
        %v4955 = vld [vmem:[#allocation24 + $0x170] sm:$0xff]
        %v4956 = vld [vmem:[#allocation24 + $0x178] sm:$0xff]
        %v4957 = vld [vmem:[#allocation24 + $0x180] sm:$0xff]
        %v4958 = vld [vmem:[#allocation24 + $0x188] sm:$0xff]
        %v4959 = vld [vmem:[#allocation24 + $0x190] sm:$0xff]
        %v4960 = vld [vmem:[#allocation24 + $0x198] sm:$0xff]
        %v4961 = vld [vmem:[#allocation24 + $0x1a0] sm:$0xff]
        %v4962 = vld [vmem:[#allocation24 + $0x1a8] sm:$0xff]
        %v4963 = vld [vmem:[#allocation24 + $0x1b0] sm:$0xff]
        %v4964 = vld [vmem:[#allocation24 + $0x1b8] sm:$0xff]
        %v4965 = vld [vmem:[#allocation24 + $0x1c0] sm:$0xff]
        %v4966 = vld [vmem:[#allocation24 + $0x1c8] sm:$0xff]
        %v4967 = vld [vmem:[#allocation24 + $0x1d0] sm:$0xff]
        %v4968 = vld [vmem:[#allocation24 + $0x1d8] sm:$0xff]
        %v4969 = vld [vmem:[#allocation24 + $0x1e0] sm:$0xff]
        %v4970 = vld [vmem:[#allocation24 + $0x1e8] sm:$0xff]
        %v4971 = vld [vmem:[#allocation24 + $0x1f0] sm:$0xff]
        %v4972 = vld [vmem:[#allocation24 + $0x1f8] sm:$0xff]
        %v4973 = vld [vmem:[#allocation24 + $0x200] sm:$0xff]
        %v4974 = vld [vmem:[#allocation24 + $0x208] sm:$0xff]
        %v4975 = vld [vmem:[#allocation24 + $0x210] sm:$0xff]
        %v4976 = vld [vmem:[#allocation24 + $0x218] sm:$0xff]
        %v4977 = vld [vmem:[#allocation24 + $0x220] sm:$0xff]
        %v4978 = vld [vmem:[#allocation24 + $0x228] sm:$0xff]
        %v4979 = vld [vmem:[#allocation24 + $0x230] sm:$0xff]
        %v4980 = vld [vmem:[#allocation24 + $0x238] sm:$0xff]
        %v4981 = vld [vmem:[#allocation24 + $0x240] sm:$0xff]
        %v4982 = vld [vmem:[#allocation24 + $0x248] sm:$0xff]
        %v4983 = vld [vmem:[#allocation24 + $0x250] sm:$0xff]
        %v4984 = vld [vmem:[#allocation24 + $0x258] sm:$0xff]
        %v4985 = vld [vmem:[#allocation24 + $0x260] sm:$0xff]
        %v4986 = vld [vmem:[#allocation24 + $0x268] sm:$0xff]
        %v4987 = vld [vmem:[#allocation24 + $0x270] sm:$0xff]
        %v4988 = vld [vmem:[#allocation24 + $0x278] sm:$0xff]
        %v4989 = vld [vmem:[#allocation24 + $0x280] sm:$0xff]
        %v4990 = vld [vmem:[#allocation24 + $0x288] sm:$0xff]
        %v4991 = vld [vmem:[#allocation24 + $0x290] sm:$0xff]
        %v4992 = vld [vmem:[#allocation24 + $0x298] sm:$0xff]
        %v4993 = vld [vmem:[#allocation24 + $0x2a0] sm:$0xff]
        %v4994 = vld [vmem:[#allocation24 + $0x2a8] sm:$0xff]
        %v4995 = vld [vmem:[#allocation24 + $0x2b0] sm:$0xff]
        %v4996 = vld [vmem:[#allocation24 + $0x2b8] sm:$0xff]
        %v4997 = vld [vmem:[#allocation24 + $0x2c0] sm:$0xff]
        %v4998 = vld [vmem:[#allocation24 + $0x2c8] sm:$0xff]
        %v4999 = vld [vmem:[#allocation24 + $0x2d0] sm:$0xff]
        %v5000 = vld [vmem:[#allocation24 + $0x2d8] sm:$0xff]
        %v5001 = vld [vmem:[#allocation24 + $0x2e0] sm:$0xff]
        %v5002 = vld [vmem:[#allocation24 + $0x2e8] sm:$0xff]
        %v5003 = vld [vmem:[#allocation24 + $0x2f0] sm:$0xff]
        %v5004 = vld [vmem:[#allocation24 + $0x2f8] sm:$0xff]
        %v5005 = vld [vmem:[#allocation24 + $0x300] sm:$0xff]
        %v5006 = vld [vmem:[#allocation24 + $0x308] sm:$0xff]
        %v5007 = vld [vmem:[#allocation24 + $0x310] sm:$0xff]
        %v5008 = vld [vmem:[#allocation24 + $0x318] sm:$0xff]
        %v5009 = vld [vmem:[#allocation24 + $0x320] sm:$0xff]
        %v5010 = vld [vmem:[#allocation24 + $0x328] sm:$0xff]
        %v5011 = vld [vmem:[#allocation24 + $0x330] sm:$0xff]
        %v5012 = vld [vmem:[#allocation24 + $0x338] sm:$0xff]
        %v5013 = vld [vmem:[#allocation24 + $0x340] sm:$0xff]
        %v5014 = vld [vmem:[#allocation24 + $0x348] sm:$0xff]
        %v5015 = vld [vmem:[#allocation24 + $0x350] sm:$0xff]
        %v5016 = vld [vmem:[#allocation24 + $0x358] sm:$0xff]
        %v5017 = vld [vmem:[#allocation24 + $0x360] sm:$0xff]
        %v5018 = vld [vmem:[#allocation24 + $0x368] sm:$0xff]
        %v5019 = vld [vmem:[#allocation24 + $0x370] sm:$0xff]
        %v5020 = vld [vmem:[#allocation24 + $0x378] sm:$0xff]
        %v5021 = vld [vmem:[#allocation24 + $0x380] sm:$0xff]
        %v5022 = vld [vmem:[#allocation24 + $0x388] sm:$0xff]
        %v5023 = vld [vmem:[#allocation24 + $0x390] sm:$0xff]
        %v5024 = vld [vmem:[#allocation24 + $0x398] sm:$0xff]
        %v5025 = vld [vmem:[#allocation24 + $0x3a0] sm:$0xff]
        %v5026 = vld [vmem:[#allocation24 + $0x3a8] sm:$0xff]
        %v5027 = vld [vmem:[#allocation24 + $0x3b0] sm:$0xff]
        %v5028 = vld [vmem:[#allocation24 + $0x3b8] sm:$0xff]
        %v5029 = vld [vmem:[#allocation24 + $0x3c0] sm:$0xff]
        %v5030 = vld [vmem:[#allocation24 + $0x3c8] sm:$0xff]
        %v5031 = vld [vmem:[#allocation24 + $0x3d0] sm:$0xff]
        %v5032 = vld [vmem:[#allocation24 + $0x3d8] sm:$0xff]
        %v5033 = vld [vmem:[#allocation24 + $0x3e0] sm:$0xff]
        %v5034 = vld [vmem:[#allocation24 + $0x3e8] sm:$0xff]
        %v5035 = vld [vmem:[#allocation24 + $0x3f0] sm:$0xff]
        %v5036 = vld [vmem:[#allocation24 + $0x3f8] sm:$0xff]
        %v5037 = vld [vmem:[#allocation24 + $0x400] sm:$0xff]
        %v5038 = vld [vmem:[#allocation24 + $0x408] sm:$0xff]
        %v5039 = vld [vmem:[#allocation24 + $0x410] sm:$0xff]
        %v5040 = vld [vmem:[#allocation24 + $0x418] sm:$0xff]
        %v5041 = vld [vmem:[#allocation24 + $0x420] sm:$0xff]
        %v5042 = vld [vmem:[#allocation24 + $0x428] sm:$0xff]
        %v5043 = vld [vmem:[#allocation24 + $0x430] sm:$0xff]
        %v5044 = vld [vmem:[#allocation24 + $0x438] sm:$0xff]
        %v5045 = vld [vmem:[#allocation24 + $0x440] sm:$0xff]
        %v5046 = vld [vmem:[#allocation24 + $0x448] sm:$0xff]
        %v5047 = vld [vmem:[#allocation24 + $0x450] sm:$0xff]
        %v5048 = vld [vmem:[#allocation24 + $0x458] sm:$0xff]
        %v5049 = vld [vmem:[#allocation24 + $0x460] sm:$0xff]
        %v5050 = vld [vmem:[#allocation24 + $0x468] sm:$0xff]
        %v5051 = vld [vmem:[#allocation24 + $0x470] sm:$0xff]
        %v5052 = vld [vmem:[#allocation24 + $0x478] sm:$0xff]
        %v5053 = vld [vmem:[#allocation24 + $0x480] sm:$0xff]
        %v5054 = vld [vmem:[#allocation24 + $0x488] sm:$0xff]
        %v5055 = vld [vmem:[#allocation24 + $0x490] sm:$0xff]
        %v5056 = vld [vmem:[#allocation24 + $0x498] sm:$0xff]
        %v5057 = vld [vmem:[#allocation24 + $0x4a0] sm:$0xff]
        %v5058 = vld [vmem:[#allocation24 + $0x4a8] sm:$0xff]
        %v5059 = vld [vmem:[#allocation24 + $0x4b0] sm:$0xff]
        %v5060 = vld [vmem:[#allocation24 + $0x4b8] sm:$0xff]
        %v5061 = vld [vmem:[#allocation24 + $0x4c0] sm:$0xff]
        %v5062 = vld [vmem:[#allocation24 + $0x4c8] sm:$0xff]
        %v5063 = vld [vmem:[#allocation24 + $0x4d0] sm:$0xff]
        %v5064 = vld [vmem:[#allocation24 + $0x4d8] sm:$0xff]
        %v5065 = vld [vmem:[#allocation24 + $0x4e0] sm:$0xff]
        %v5066 = vld [vmem:[#allocation24 + $0x4e8] sm:$0xff]
        %v5067 = vld [vmem:[#allocation24 + $0x4f0] sm:$0xff]
        %v5068 = vld [vmem:[#allocation24 + $0x4f8] sm:$0xff]
        %v5069 = vld [vmem:[#allocation24 + $0x500] sm:$0xff]
        %v5070 = vld [vmem:[#allocation24 + $0x508] sm:$0xff]
        %v5071 = vld [vmem:[#allocation24 + $0x510] sm:$0xff]
        %v5072 = vld [vmem:[#allocation24 + $0x518] sm:$0xff]
        %v5073 = vld [vmem:[#allocation24 + $0x520] sm:$0xff]
        %v5074 = vld [vmem:[#allocation24 + $0x528] sm:$0xff]
        %v5075 = vld [vmem:[#allocation24 + $0x530] sm:$0xff]
        %v5076 = vld [vmem:[#allocation24 + $0x538] sm:$0xff]
        %v5077 = vld [vmem:[#allocation24 + $0x540] sm:$0xff]
        %v5078 = vld [vmem:[#allocation24 + $0x548] sm:$0xff]
        %v5079 = vld [vmem:[#allocation24 + $0x550] sm:$0xff]
        %v5080 = vld [vmem:[#allocation24 + $0x558] sm:$0xff]
        %v5081 = vld [vmem:[#allocation24 + $0x560] sm:$0xff]
        %v5082 = vld [vmem:[#allocation24 + $0x568] sm:$0xff]
        %v5083 = vld [vmem:[#allocation24 + $0x570] sm:$0xff]
        %v5084 = vld [vmem:[#allocation24 + $0x578] sm:$0xff]
        %v5085 = vld [vmem:[#allocation24 + $0x580] sm:$0xff]
        %v5086 = vld [vmem:[#allocation24 + $0x588] sm:$0xff]
        %v5087 = vld [vmem:[#allocation24 + $0x590] sm:$0xff]
        %v5088 = vld [vmem:[#allocation24 + $0x598] sm:$0xff]
        %v5089 = vld [vmem:[#allocation24 + $0x5a0] sm:$0xff]
        %v5090 = vld [vmem:[#allocation24 + $0x5a8] sm:$0xff]
        %v5091 = vld [vmem:[#allocation24 + $0x5b0] sm:$0xff]
        %v5092 = vld [vmem:[#allocation24 + $0x5b8] sm:$0xff]
        %v5093 = vld [vmem:[#allocation24 + $0x5c0] sm:$0xff]
        %v5094 = vld [vmem:[#allocation24 + $0x5c8] sm:$0xff]
        %v5095 = vld [vmem:[#allocation24 + $0x5d0] sm:$0xff]
        %v5096 = vld [vmem:[#allocation24 + $0x5d8] sm:$0xff]
        %v5097 = vld [vmem:[#allocation24 + $0x5e0] sm:$0xff]
        %v5098 = vld [vmem:[#allocation24 + $0x5e8] sm:$0xff]
        %v5099 = vld [vmem:[#allocation24 + $0x5f0] sm:$0xff]
        %v5100 = vld [vmem:[#allocation24 + $0x5f8] sm:$0xff]
        %v5101 = vld [vmem:[#allocation24 + $0x600] sm:$0xff]
        %v5102 = vld [vmem:[#allocation24 + $0x608] sm:$0xff]
        %v5103 = vld [vmem:[#allocation24 + $0x610] sm:$0xff]
        %v5104 = vld [vmem:[#allocation24 + $0x618] sm:$0xff]
        %v5105 = vld [vmem:[#allocation24 + $0x620] sm:$0xff]
        %v5106 = vld [vmem:[#allocation24 + $0x628] sm:$0xff]
        %v5107 = vld [vmem:[#allocation24 + $0x630] sm:$0xff]
        %v5108 = vld [vmem:[#allocation24 + $0x638] sm:$0xff]
        %v5109 = vld [vmem:[#allocation24 + $0x640] sm:$0xff]
        %v5110 = vld [vmem:[#allocation24 + $0x648] sm:$0xff]
        %v5111 = vld [vmem:[#allocation24 + $0x650] sm:$0xff]
        %v5112 = vld [vmem:[#allocation24 + $0x658] sm:$0xff]
        %v5113 = vld [vmem:[#allocation24 + $0x660] sm:$0xff]
        %v5114 = vld [vmem:[#allocation24 + $0x668] sm:$0xff]
        %v5115 = vld [vmem:[#allocation24 + $0x670] sm:$0xff]
        %v5116 = vld [vmem:[#allocation24 + $0x678] sm:$0xff]
        %v5117 = vld [vmem:[#allocation24 + $0x680] sm:$0xff]
        %v5118 = vld [vmem:[#allocation24 + $0x688] sm:$0xff]
        %v5119 = vld [vmem:[#allocation24 + $0x690] sm:$0xff]
        %v5120 = vld [vmem:[#allocation24 + $0x698] sm:$0xff]
        %v5121 = vld [vmem:[#allocation24 + $0x6a0] sm:$0xff]
        %v5122 = vld [vmem:[#allocation24 + $0x6a8] sm:$0xff]
        %v5123 = vld [vmem:[#allocation24 + $0x6b0] sm:$0xff]
        %v5124 = vld [vmem:[#allocation24 + $0x6b8] sm:$0xff]
        %v5125 = vld [vmem:[#allocation24 + $0x6c0] sm:$0xff]
        %v5126 = vld [vmem:[#allocation24 + $0x6c8] sm:$0xff]
        %v5127 = vld [vmem:[#allocation24 + $0x6d0] sm:$0xff]
        %v5128 = vld [vmem:[#allocation24 + $0x6d8] sm:$0xff]
        %v5129 = vld [vmem:[#allocation24 + $0x6e0] sm:$0xff]
        %v5130 = vld [vmem:[#allocation24 + $0x6e8] sm:$0xff]
        %v5131 = vld [vmem:[#allocation24 + $0x6f0] sm:$0xff]
        %v5132 = vld [vmem:[#allocation24 + $0x6f8] sm:$0xff]
        %v5133 = vld [vmem:[#allocation24 + $0x700] sm:$0xff]
        %v5134 = vld [vmem:[#allocation24 + $0x708] sm:$0xff]
        %v5135 = vld [vmem:[#allocation24 + $0x710] sm:$0xff]
        %v5136 = vld [vmem:[#allocation24 + $0x718] sm:$0xff]
        %v5137 = vld [vmem:[#allocation24 + $0x720] sm:$0xff]
        %v5138 = vld [vmem:[#allocation24 + $0x728] sm:$0xff]
        %v5139 = vld [vmem:[#allocation24 + $0x730] sm:$0xff]
        %v5140 = vld [vmem:[#allocation24 + $0x738] sm:$0xff]
        %v5141 = vld [vmem:[#allocation24 + $0x740] sm:$0xff]
        %v5142 = vld [vmem:[#allocation24 + $0x748] sm:$0xff]
        %v5143 = vld [vmem:[#allocation24 + $0x750] sm:$0xff]
        %v5144 = vld [vmem:[#allocation24 + $0x758] sm:$0xff]
        %v5145 = vld [vmem:[#allocation24 + $0x760] sm:$0xff]
        %v5146 = vld [vmem:[#allocation24 + $0x768] sm:$0xff]
        %v5147 = vld [vmem:[#allocation24 + $0x770] sm:$0xff]
        %v5148 = vld [vmem:[#allocation24 + $0x778] sm:$0xff]
        %v5149 = vld [vmem:[#allocation24 + $0x780] sm:$0xff]
        %v5150 = vld [vmem:[#allocation24 + $0x788] sm:$0xff]
        %v5151 = vld [vmem:[#allocation24 + $0x790] sm:$0xff]
        %v5152 = vld [vmem:[#allocation24 + $0x798] sm:$0xff]
        %v5153 = vld [vmem:[#allocation24 + $0x7a0] sm:$0xff]
        %v5154 = vld [vmem:[#allocation24 + $0x7a8] sm:$0xff]
        %v5155 = vld [vmem:[#allocation24 + $0x7b0] sm:$0xff]
        %v5156 = vld [vmem:[#allocation24 + $0x7b8] sm:$0xff]
        %v5157 = vld [vmem:[#allocation24 + $0x7c0] sm:$0xff]
        %v5158 = vld [vmem:[#allocation24 + $0x7c8] sm:$0xff]
        %v5159 = vld [vmem:[#allocation24 + $0x7d0] sm:$0xff]
        %v5160 = vld [vmem:[#allocation24 + $0x7d8] sm:$0xff]
        %v5161 = vld [vmem:[#allocation24 + $0x7e0] sm:$0xff]
        %v5162 = vld [vmem:[#allocation24 + $0x7e8] sm:$0xff]
        %v5163 = vld [vmem:[#allocation24 + $0x7f0] sm:$0xff]
        %v5164 = vld [vmem:[#allocation24 + $0x7f8] sm:$0xff]
        %v5165 = vld [vmem:[#allocation24 + $0x800] sm:$0xff]
        %v5166 = vld [vmem:[#allocation24 + $0x808] sm:$0xff]
        %v5167 = vld [vmem:[#allocation24 + $0x810] sm:$0xff]
        %v5168 = vld [vmem:[#allocation24 + $0x818] sm:$0xff]
        %v5169 = vld [vmem:[#allocation24 + $0x820] sm:$0xff]
        %v5170 = vld [vmem:[#allocation24 + $0x828] sm:$0xff]
        %v5171 = vld [vmem:[#allocation24 + $0x830] sm:$0xff]
        %v5172 = vld [vmem:[#allocation24 + $0x838] sm:$0xff]
        %v5173 = vld [vmem:[#allocation24 + $0x840] sm:$0xff]
        %v5174 = vld [vmem:[#allocation24 + $0x848] sm:$0xff]
        %v5175 = vld [vmem:[#allocation24 + $0x850] sm:$0xff]
        %v5176 = vld [vmem:[#allocation24 + $0x858] sm:$0xff]
        %v5177 = vld [vmem:[#allocation24 + $0x860] sm:$0xff]
        %v5178 = vld [vmem:[#allocation24 + $0x868] sm:$0xff]
        %v5179 = vld [vmem:[#allocation24 + $0x870] sm:$0xff]
        %v5180 = vld [vmem:[#allocation24 + $0x878] sm:$0xff]
        %v5181 = vld [vmem:[#allocation24 + $0x880] sm:$0xff]
        %v5182 = vld [vmem:[#allocation24 + $0x888] sm:$0xff]
        %v5183 = vld [vmem:[#allocation24 + $0x890] sm:$0xff]
        %v5184 = vld [vmem:[#allocation24 + $0x898] sm:$0xff]
        %v5185 = vld [vmem:[#allocation24 + $0x8a0] sm:$0xff]
        %v5186 = vld [vmem:[#allocation24 + $0x8a8] sm:$0xff]
        %v5187 = vld [vmem:[#allocation24 + $0x8b0] sm:$0xff]
        %v5188 = vld [vmem:[#allocation24 + $0x8b8] sm:$0xff]
        %v5189 = vld [vmem:[#allocation24 + $0x8c0] sm:$0xff]
        %v5190 = vld [vmem:[#allocation24 + $0x8c8] sm:$0xff]
        %v5191 = vld [vmem:[#allocation24 + $0x8d0] sm:$0xff]
        %v5192 = vld [vmem:[#allocation24 + $0x8d8] sm:$0xff]
        %v5193 = vld [vmem:[#allocation24 + $0x8e0] sm:$0xff]
        %v5194 = vld [vmem:[#allocation24 + $0x8e8] sm:$0xff]
        %v5195 = vld [vmem:[#allocation24 + $0x8f0] sm:$0xff]
        %v5196 = vld [vmem:[#allocation24 + $0x8f8] sm:$0xff]
        %v5197 = vld [vmem:[#allocation24 + $0x900] sm:$0xff]
        %v5198 = vld [vmem:[#allocation24 + $0x908] sm:$0xff]
        %v5199 = vld [vmem:[#allocation24 + $0x910] sm:$0xff]
        %v5200 = vld [vmem:[#allocation24 + $0x918] sm:$0xff]
        %v5201 = vld [vmem:[#allocation24 + $0x920] sm:$0xff]
        %v5202 = vld [vmem:[#allocation24 + $0x928] sm:$0xff]
        %v5203 = vld [vmem:[#allocation24 + $0x930] sm:$0xff]
        %v5204 = vld [vmem:[#allocation24 + $0x938] sm:$0xff]
        %v5205 = vld [vmem:[#allocation24 + $0x940] sm:$0xff]
        %v5206 = vld [vmem:[#allocation24 + $0x948] sm:$0xff]
        %v5207 = vld [vmem:[#allocation24 + $0x950] sm:$0xff]
        %v5208 = vld [vmem:[#allocation24 + $0x958] sm:$0xff]
        %v5209 = vld [vmem:[#allocation24 + $0x960] sm:$0xff]
        %v5210 = vld [vmem:[#allocation24 + $0x968] sm:$0xff]
        %v5211 = vld [vmem:[#allocation24 + $0x970] sm:$0xff]
        %v5212 = vld [vmem:[#allocation24 + $0x978] sm:$0xff]
        %v5213 = vld [vmem:[#allocation24 + $0x980] sm:$0xff]
        %v5214 = vld [vmem:[#allocation24 + $0x988] sm:$0xff]
        %v5215 = vld [vmem:[#allocation24 + $0x990] sm:$0xff]
        %v5216 = vld [vmem:[#allocation24 + $0x998] sm:$0xff]
        %v5217 = vld [vmem:[#allocation24 + $0x9a0] sm:$0xff]
        %v5218 = vld [vmem:[#allocation24 + $0x9a8] sm:$0xff]
        %v5219 = vld [vmem:[#allocation24 + $0x9b0] sm:$0xff]
        %v5220 = vld [vmem:[#allocation24 + $0x9b8] sm:$0xff]
        %v5221 = vld [vmem:[#allocation24 + $0x9c0] sm:$0xff]
        %v5222 = vld [vmem:[#allocation24 + $0x9c8] sm:$0xff]
        %v5223 = vld [vmem:[#allocation24 + $0x9d0] sm:$0xff]
        %v5224 = vld [vmem:[#allocation24 + $0x9d8] sm:$0xff]
        %v5225 = vld [vmem:[#allocation24 + $0x9e0] sm:$0xff]
        %v5226 = vld [vmem:[#allocation24 + $0x9e8] sm:$0xff]
        %v5227 = vld [vmem:[#allocation24 + $0x9f0] sm:$0xff]
        %v5228 = vld [vmem:[#allocation24 + $0x9f8] sm:$0xff]
        %v5229 = vld [vmem:[#allocation24 + $0xa00] sm:$0xff]
        %v5230 = vld [vmem:[#allocation24 + $0xa08] sm:$0xff]
        %v5231 = vld [vmem:[#allocation24 + $0xa10] sm:$0xff]
        %v5232 = vld [vmem:[#allocation24 + $0xa18] sm:$0xff]
        %v5233 = vld [vmem:[#allocation24 + $0xa20] sm:$0xff]
        %v5234 = vld [vmem:[#allocation24 + $0xa28] sm:$0xff]
        %v5235 = vld [vmem:[#allocation24 + $0xa30] sm:$0xff]
        %v5236 = vld [vmem:[#allocation24 + $0xa38] sm:$0xff]
        %v5237 = vld [vmem:[#allocation24 + $0xa40] sm:$0xff]
        %v5238 = vld [vmem:[#allocation24 + $0xa48] sm:$0xff]
        %v5239 = vld [vmem:[#allocation24 + $0xa50] sm:$0xff]
        %v5240 = vld [vmem:[#allocation24 + $0xa58] sm:$0xff]
        %v5241 = vld [vmem:[#allocation24 + $0xa60] sm:$0xff]
        %v5242 = vld [vmem:[#allocation24 + $0xa68] sm:$0xff]
        %v5243 = vld [vmem:[#allocation24 + $0xa70] sm:$0xff]
        %v5244 = vld [vmem:[#allocation24 + $0xa78] sm:$0xff]
        %v5245 = vld [vmem:[#allocation24 + $0xa80] sm:$0xff]
        %v5246 = vld [vmem:[#allocation24 + $0xa88] sm:$0xff]
        %v5247 = vld [vmem:[#allocation24 + $0xa90] sm:$0xff]
        %v5248 = vld [vmem:[#allocation24 + $0xa98] sm:$0xff]
        %v5249 = vld [vmem:[#allocation24 + $0xaa0] sm:$0xff]
        %v5250 = vld [vmem:[#allocation24 + $0xaa8] sm:$0xff]
        %v5251 = vld [vmem:[#allocation24 + $0xab0] sm:$0xff]
        %v5252 = vld [vmem:[#allocation24 + $0xab8] sm:$0xff]
        %v5253 = vld [vmem:[#allocation24 + $0xac0] sm:$0xff]
        %v5254 = vld [vmem:[#allocation24 + $0xac8] sm:$0xff]
        %v5255 = vld [vmem:[#allocation24 + $0xad0] sm:$0xff]
        %v5256 = vld [vmem:[#allocation24 + $0xad8] sm:$0xff]
        %v5257 = vld [vmem:[#allocation24 + $0xae0] sm:$0xff]
        %v5258 = vld [vmem:[#allocation24 + $0xae8] sm:$0xff]
        %v5259 = vld [vmem:[#allocation24 + $0xaf0] sm:$0xff]
        %v5260 = vld [vmem:[#allocation24 + $0xaf8] sm:$0xff]
        %v5261 = vld [vmem:[#allocation24 + $0xb00] sm:$0xff]
        %v5262 = vld [vmem:[#allocation24 + $0xb08] sm:$0xff]
        %v5263 = vld [vmem:[#allocation24 + $0xb10] sm:$0xff]
        %v5264 = vld [vmem:[#allocation24 + $0xb18] sm:$0xff]
        %v5265 = vld [vmem:[#allocation24 + $0xb20] sm:$0xff]
        %v5266 = vld [vmem:[#allocation24 + $0xb28] sm:$0xff]
        %v5267 = vld [vmem:[#allocation24 + $0xb30] sm:$0xff]
        %v5268 = vld [vmem:[#allocation24 + $0xb38] sm:$0xff]
        %v5269 = vld [vmem:[#allocation24 + $0xb40] sm:$0xff]
        %v5270 = vld [vmem:[#allocation24 + $0xb48] sm:$0xff]
        %v5271 = vld [vmem:[#allocation24 + $0xb50] sm:$0xff]
        %v5272 = vld [vmem:[#allocation24 + $0xb58] sm:$0xff]
        %v5273 = vld [vmem:[#allocation24 + $0xb60] sm:$0xff]
        %v5274 = vld [vmem:[#allocation24 + $0xb68] sm:$0xff]
        %v5275 = vld [vmem:[#allocation24 + $0xb70] sm:$0xff]
        %v5276 = vld [vmem:[#allocation24 + $0xb78] sm:$0xff]
        %v5277 = vld [vmem:[#allocation24 + $0xb80] sm:$0xff]
        %v5278 = vld [vmem:[#allocation24 + $0xb88] sm:$0xff]
        %v5279 = vld [vmem:[#allocation24 + $0xb90] sm:$0xff]
        %v5280 = vld [vmem:[#allocation24 + $0xb98] sm:$0xff]
        %v5281 = vld [vmem:[#allocation24 + $0xba0] sm:$0xff]
        %v5282 = vld [vmem:[#allocation24 + $0xba8] sm:$0xff]
        %v5283 = vld [vmem:[#allocation24 + $0xbb0] sm:$0xff]
        %v5284 = vld [vmem:[#allocation24 + $0xbb8] sm:$0xff]
        %v5285 = vld [vmem:[#allocation24 + $0xbc0] sm:$0xff]
        %v5286 = vld [vmem:[#allocation24 + $0xbc8] sm:$0xff]
        %v5287 = vld [vmem:[#allocation24 + $0xbd0] sm:$0xff]
        %v5288 = vld [vmem:[#allocation24 + $0xbd8] sm:$0xff]
        %v5289 = vld [vmem:[#allocation24 + $0xbe0] sm:$0xff]
        %v5290 = vld [vmem:[#allocation24 + $0xbe8] sm:$0xff]
        %v5291 = vld [vmem:[#allocation24 + $0xbf0] sm:$0xff]
        %v5292 = vld [vmem:[#allocation24 + $0xbf8] sm:$0xff]
        %v5293 = vld [vmem:[#allocation24 + $0xc00] sm:$0xff]
        %v5294 = vld [vmem:[#allocation24 + $0xc08] sm:$0xff]
        %v5295 = vld [vmem:[#allocation24 + $0xc10] sm:$0xff]
        %v5296 = vld [vmem:[#allocation24 + $0xc18] sm:$0xff]
        %v5297 = vld [vmem:[#allocation24 + $0xc20] sm:$0xff]
        %v5298 = vld [vmem:[#allocation24 + $0xc28] sm:$0xff]
        %v5299 = vld [vmem:[#allocation24 + $0xc30] sm:$0xff]
        %v5300 = vld [vmem:[#allocation24 + $0xc38] sm:$0xff]
        %v5301 = vld [vmem:[#allocation24 + $0xc40] sm:$0xff]
        %v5302 = vld [vmem:[#allocation24 + $0xc48] sm:$0xff]
        %v5303 = vld [vmem:[#allocation24 + $0xc50] sm:$0xff]
        %v5304 = vld [vmem:[#allocation24 + $0xc58] sm:$0xff]
        %v5305 = vld [vmem:[#allocation24 + $0xc60] sm:$0xff]
        %v5306 = vld [vmem:[#allocation24 + $0xc68] sm:$0xff]
        %v5307 = vld [vmem:[#allocation24 + $0xc70] sm:$0xff]
        %v5308 = vld [vmem:[#allocation24 + $0xc78] sm:$0xff]
        %v5309 = vld [vmem:[#allocation24 + $0xc80] sm:$0xff]
        %v5310 = vld [vmem:[#allocation24 + $0xc88] sm:$0xff]
        %v5311 = vld [vmem:[#allocation24 + $0xc90] sm:$0xff]
        %v5312 = vld [vmem:[#allocation24 + $0xc98] sm:$0xff]
        %v5313 = vld [vmem:[#allocation24 + $0xca0] sm:$0xff]
        %v5314 = vld [vmem:[#allocation24 + $0xca8] sm:$0xff]
        %v5315 = vld [vmem:[#allocation24 + $0xcb0] sm:$0xff]
        %v5316 = vld [vmem:[#allocation24 + $0xcb8] sm:$0xff]
        %v5317 = vld [vmem:[#allocation24 + $0xcc0] sm:$0xff]
        %v5318 = vld [vmem:[#allocation24 + $0xcc8] sm:$0xff]
        %v5319 = vld [vmem:[#allocation24 + $0xcd0] sm:$0xff]
        %v5320 = vld [vmem:[#allocation24 + $0xcd8] sm:$0xff]
        %v5321 = vld [vmem:[#allocation24 + $0xce0] sm:$0xff]
        %v5322 = vld [vmem:[#allocation24 + $0xce8] sm:$0xff]
        %v5323 = vld [vmem:[#allocation24 + $0xcf0] sm:$0xff]
        %v5324 = vld [vmem:[#allocation24 + $0xcf8] sm:$0xff]
        %v5325 = vld [vmem:[#allocation24 + $0xd00] sm:$0xff]
        %v5326 = vld [vmem:[#allocation24 + $0xd08] sm:$0xff]
        %v5327 = vld [vmem:[#allocation24 + $0xd10] sm:$0xff]
        %v5328 = vld [vmem:[#allocation24 + $0xd18] sm:$0xff]
        %v5329 = vld [vmem:[#allocation24 + $0xd20] sm:$0xff]
        %v5330 = vld [vmem:[#allocation24 + $0xd28] sm:$0xff]
        %v5331 = vld [vmem:[#allocation24 + $0xd30] sm:$0xff]
        %v5332 = vld [vmem:[#allocation24 + $0xd38] sm:$0xff]
        %v5333 = vld [vmem:[#allocation24 + $0xd40] sm:$0xff]
        %v5334 = vld [vmem:[#allocation24 + $0xd48] sm:$0xff]
        %v5335 = vld [vmem:[#allocation24 + $0xd50] sm:$0xff]
        %v5336 = vld [vmem:[#allocation24 + $0xd58] sm:$0xff]
        %v5337 = vld [vmem:[#allocation24 + $0xd60] sm:$0xff]
        %v5338 = vld [vmem:[#allocation24 + $0xd68] sm:$0xff]
        %v5339 = vld [vmem:[#allocation24 + $0xd70] sm:$0xff]
        %v5340 = vld [vmem:[#allocation24 + $0xd78] sm:$0xff]
        %v5341 = vld [vmem:[#allocation24 + $0xd80] sm:$0xff]
        %v5342 = vld [vmem:[#allocation24 + $0xd88] sm:$0xff]
        %v5343 = vld [vmem:[#allocation24 + $0xd90] sm:$0xff]
        %v5344 = vld [vmem:[#allocation24 + $0xd98] sm:$0xff]
        %v5345 = vld [vmem:[#allocation24 + $0xda0] sm:$0xff]
        %v5346 = vld [vmem:[#allocation24 + $0xda8] sm:$0xff]
        %v5347 = vld [vmem:[#allocation24 + $0xdb0] sm:$0xff]
        %v5348 = vld [vmem:[#allocation24 + $0xdb8] sm:$0xff]
        %v5349 = vld [vmem:[#allocation24 + $0xdc0] sm:$0xff]
        %v5350 = vld [vmem:[#allocation24 + $0xdc8] sm:$0xff]
        %v5351 = vld [vmem:[#allocation24 + $0xdd0] sm:$0xff]
        %v5352 = vld [vmem:[#allocation24 + $0xdd8] sm:$0xff]
        %v5353 = vld [vmem:[#allocation24 + $0xde0] sm:$0xff]
        %v5354 = vld [vmem:[#allocation24 + $0xde8] sm:$0xff]
        %v5355 = vld [vmem:[#allocation24 + $0xdf0] sm:$0xff]
        %v5356 = vld [vmem:[#allocation24 + $0xdf8] sm:$0xff]
        %v5357 = vld [vmem:[#allocation24 + $0xe00] sm:$0xff]
        %v5358 = vld [vmem:[#allocation24 + $0xe08] sm:$0xff]
        %v5359 = vld [vmem:[#allocation24 + $0xe10] sm:$0xff]
        %v5360 = vld [vmem:[#allocation24 + $0xe18] sm:$0xff]
        %v5361 = vld [vmem:[#allocation24 + $0xe20] sm:$0xff]
        %v5362 = vld [vmem:[#allocation24 + $0xe28] sm:$0xff]
        %v5363 = vld [vmem:[#allocation24 + $0xe30] sm:$0xff]
        %v5364 = vld [vmem:[#allocation24 + $0xe38] sm:$0xff]
        %v5365 = vld [vmem:[#allocation24 + $0xe40] sm:$0xff]
        %v5366 = vld [vmem:[#allocation24 + $0xe48] sm:$0xff]
        %v5367 = vld [vmem:[#allocation24 + $0xe50] sm:$0xff]
        %v5368 = vld [vmem:[#allocation24 + $0xe58] sm:$0xff]
        %v5369 = vld [vmem:[#allocation24 + $0xe60] sm:$0xff]
        %v5370 = vld [vmem:[#allocation24 + $0xe68] sm:$0xff]
        %v5371 = vld [vmem:[#allocation24 + $0xe70] sm:$0xff]
        %v5372 = vld [vmem:[#allocation24 + $0xe78] sm:$0xff]
        %v5373 = vld [vmem:[#allocation24 + $0xe80] sm:$0xff]
        %v5374 = vld [vmem:[#allocation24 + $0xe88] sm:$0xff]
        %v5375 = vld [vmem:[#allocation24 + $0xe90] sm:$0xff]
        %v5376 = vld [vmem:[#allocation24 + $0xe98] sm:$0xff]
        %v5377 = vld [vmem:[#allocation24 + $0xea0] sm:$0xff]
        %v5378 = vld [vmem:[#allocation24 + $0xea8] sm:$0xff]
        %v5379 = vld [vmem:[#allocation24 + $0xeb0] sm:$0xff]
        %v5380 = vld [vmem:[#allocation24 + $0xeb8] sm:$0xff]
        %v5381 = vld [vmem:[#allocation24 + $0xec0] sm:$0xff]
        %v5382 = vld [vmem:[#allocation24 + $0xec8] sm:$0xff]
        %v5383 = vld [vmem:[#allocation24 + $0xed0] sm:$0xff]
        %v5384 = vld [vmem:[#allocation24 + $0xed8] sm:$0xff]
        %v5385 = vld [vmem:[#allocation24 + $0xee0] sm:$0xff]
        %v5386 = vld [vmem:[#allocation24 + $0xee8] sm:$0xff]
        %v5387 = vld [vmem:[#allocation24 + $0xef0] sm:$0xff]
        %v5388 = vld [vmem:[#allocation24 + $0xef8] sm:$0xff]
        %v5389 = vld [vmem:[#allocation24 + $0xf00] sm:$0xff]
        %v5390 = vld [vmem:[#allocation24 + $0xf08] sm:$0xff]
        %v5391 = vld [vmem:[#allocation24 + $0xf10] sm:$0xff]
        %v5392 = vld [vmem:[#allocation24 + $0xf18] sm:$0xff]
        %v5393 = vld [vmem:[#allocation24 + $0xf20] sm:$0xff]
        %v5394 = vld [vmem:[#allocation24 + $0xf28] sm:$0xff]
        %v5395 = vld [vmem:[#allocation24 + $0xf30] sm:$0xff]
        %v5396 = vld [vmem:[#allocation24 + $0xf38] sm:$0xff]
        %v5397 = vld [vmem:[#allocation24 + $0xf40] sm:$0xff]
        %v5398 = vld [vmem:[#allocation24 + $0xf48] sm:$0xff]
        %v5399 = vld [vmem:[#allocation24 + $0xf50] sm:$0xff]
        %v5400 = vld [vmem:[#allocation24 + $0xf58] sm:$0xff]
        %v5401 = vld [vmem:[#allocation24 + $0xf60] sm:$0xff]
        %v5402 = vld [vmem:[#allocation24 + $0xf68] sm:$0xff]
        %v5403 = vld [vmem:[#allocation24 + $0xf70] sm:$0xff]
        %v5404 = vld [vmem:[#allocation24 + $0xf78] sm:$0xff]
        %v5405 = vld [vmem:[#allocation24 + $0xf80] sm:$0xff]
        %v5406 = vld [vmem:[#allocation24 + $0xf88] sm:$0xff]
        %v5407 = vld [vmem:[#allocation24 + $0xf90] sm:$0xff]
        %v5408 = vld [vmem:[#allocation24 + $0xf98] sm:$0xff]
        %v5409 = vld [vmem:[#allocation24 + $0xfa0] sm:$0xff]
        %v5410 = vld [vmem:[#allocation24 + $0xfa8] sm:$0xff]
        %v5411 = vld [vmem:[#allocation24 + $0xfb0] sm:$0xff]
        %v5412 = vld [vmem:[#allocation24 + $0xfb8] sm:$0xff]
        %v5413 = vld [vmem:[#allocation24 + $0xfc0] sm:$0xff]
        %v5414 = vld [vmem:[#allocation24 + $0xfc8] sm:$0xff]
        %v5415 = vld [vmem:[#allocation24 + $0xfd0] sm:$0xff]
        %v5416 = vld [vmem:[#allocation24 + $0xfd8] sm:$0xff]
        %v5417 = vld [vmem:[#allocation24 + $0xfe0] sm:$0xff]
        %v5418 = vld [vmem:[#allocation24 + $0xfe8] sm:$0xff]
        %v5419 = vld [vmem:[#allocation24 + $0xff0] sm:$0xff]
        %v5420 = vld [vmem:[#allocation24 + $0xff8] sm:$0xff]
        %v5421 = vld [vmem:[#allocation25] sm:$0xff]
        %v5934 = vunpack.c.l.b16 %v4909
        %v5935 = vunpack.c.h.b16 %v4909
        %v5936 = vunpack.c.l.b16 %v4910
        %v5937 = vunpack.c.h.b16 %v4910
        %v5938 = vunpack.c.l.b16 %v4911
        %v5939 = vunpack.c.h.b16 %v4911
        %v5940 = vunpack.c.l.b16 %v4912
        %v5941 = vunpack.c.h.b16 %v4912
        %v5942 = vunpack.c.l.b16 %v4913
        %v5943 = vunpack.c.h.b16 %v4913
        %v5944 = vunpack.c.l.b16 %v4914
        %v5945 = vunpack.c.h.b16 %v4914
        %v5946 = vunpack.c.l.b16 %v4915
        %v5947 = vunpack.c.h.b16 %v4915
        %v5948 = vunpack.c.l.b16 %v4916
        %v5949 = vunpack.c.h.b16 %v4916
        %v5950 = vunpack.c.l.b16 %v4917
        %v5951 = vunpack.c.h.b16 %v4917
        %v5952 = vunpack.c.l.b16 %v4918
        %v5953 = vunpack.c.h.b16 %v4918
        %v5954 = vunpack.c.l.b16 %v4919
        %v5955 = vunpack.c.h.b16 %v4919
        %v5956 = vunpack.c.l.b16 %v4920
        %v5957 = vunpack.c.h.b16 %v4920
        %v5958 = vunpack.c.l.b16 %v4921
        %v5959 = vunpack.c.h.b16 %v4921
        %v5960 = vunpack.c.l.b16 %v4922
        %v5961 = vunpack.c.h.b16 %v4922
        %v5962 = vunpack.c.l.b16 %v4923
        %v5963 = vunpack.c.h.b16 %v4923
        %v5964 = vunpack.c.l.b16 %v4924
        %v5965 = vunpack.c.h.b16 %v4924
        %v5966 = vunpack.c.l.b16 %v4925
        %v5967 = vunpack.c.h.b16 %v4925
        %v5968 = vunpack.c.l.b16 %v4926
        %v5969 = vunpack.c.h.b16 %v4926
        %v5970 = vunpack.c.l.b16 %v4927
        %v5971 = vunpack.c.h.b16 %v4927
        %v5972 = vunpack.c.l.b16 %v4928
        %v5973 = vunpack.c.h.b16 %v4928
        %v5974 = vunpack.c.l.b16 %v4929
        %v5975 = vunpack.c.h.b16 %v4929
        %v5976 = vunpack.c.l.b16 %v4930
        %v5977 = vunpack.c.h.b16 %v4930
        %v5978 = vunpack.c.l.b16 %v4931
        %v5979 = vunpack.c.h.b16 %v4931
        %v5980 = vunpack.c.l.b16 %v4932
        %v5981 = vunpack.c.h.b16 %v4932
        %v5982 = vunpack.c.l.b16 %v4933
        %v5983 = vunpack.c.h.b16 %v4933
        %v5984 = vunpack.c.l.b16 %v4934
        %v5985 = vunpack.c.h.b16 %v4934
        %v5986 = vunpack.c.l.b16 %v4935
        %v5987 = vunpack.c.h.b16 %v4935
        %v5988 = vunpack.c.l.b16 %v4936
        %v5989 = vunpack.c.h.b16 %v4936
        %v5990 = vunpack.c.l.b16 %v4937
        %v5991 = vunpack.c.h.b16 %v4937
        %v5992 = vunpack.c.l.b16 %v4938
        %v5993 = vunpack.c.h.b16 %v4938
        %v5994 = vunpack.c.l.b16 %v4939
        %v5995 = vunpack.c.h.b16 %v4939
        %v5996 = vunpack.c.l.b16 %v4940
        %v5997 = vunpack.c.h.b16 %v4940
        %v5998 = vunpack.c.l.b16 %v4941
        %v5999 = vunpack.c.h.b16 %v4941
        %v6000 = vunpack.c.l.b16 %v4942
        %v6001 = vunpack.c.h.b16 %v4942
        %v6002 = vunpack.c.l.b16 %v4943
        %v6003 = vunpack.c.h.b16 %v4943
        %v6004 = vunpack.c.l.b16 %v4944
        %v6005 = vunpack.c.h.b16 %v4944
        %v6006 = vunpack.c.l.b16 %v4945
        %v6007 = vunpack.c.h.b16 %v4945
        %v6008 = vunpack.c.l.b16 %v4946
        %v6009 = vunpack.c.h.b16 %v4946
        %v6010 = vunpack.c.l.b16 %v4947
        %v6011 = vunpack.c.h.b16 %v4947
        %v6012 = vunpack.c.l.b16 %v4948
        %v6013 = vunpack.c.h.b16 %v4948
        %v6014 = vunpack.c.l.b16 %v4949
        %v6015 = vunpack.c.h.b16 %v4949
        %v6016 = vunpack.c.l.b16 %v4950
        %v6017 = vunpack.c.h.b16 %v4950
        %v6018 = vunpack.c.l.b16 %v4951
        %v6019 = vunpack.c.h.b16 %v4951
        %v6020 = vunpack.c.l.b16 %v4952
        %v6021 = vunpack.c.h.b16 %v4952
        %v6022 = vunpack.c.l.b16 %v4953
        %v6023 = vunpack.c.h.b16 %v4953
        %v6024 = vunpack.c.l.b16 %v4954
        %v6025 = vunpack.c.h.b16 %v4954
        %v6026 = vunpack.c.l.b16 %v4955
        %v6027 = vunpack.c.h.b16 %v4955
        %v6028 = vunpack.c.l.b16 %v4956
        %v6029 = vunpack.c.h.b16 %v4956
        %v6030 = vunpack.c.l.b16 %v4957
        %v6031 = vunpack.c.h.b16 %v4957
        %v6032 = vunpack.c.l.b16 %v4958
        %v6033 = vunpack.c.h.b16 %v4958
        %v6034 = vunpack.c.l.b16 %v4959
        %v6035 = vunpack.c.h.b16 %v4959
        %v6036 = vunpack.c.l.b16 %v4960
        %v6037 = vunpack.c.h.b16 %v4960
        %v6038 = vunpack.c.l.b16 %v4961
        %v6039 = vunpack.c.h.b16 %v4961
        %v6040 = vunpack.c.l.b16 %v4962
        %v6041 = vunpack.c.h.b16 %v4962
        %v6042 = vunpack.c.l.b16 %v4963
        %v6043 = vunpack.c.h.b16 %v4963
        %v6044 = vunpack.c.l.b16 %v4964
        %v6045 = vunpack.c.h.b16 %v4964
        %v6046 = vunpack.c.l.b16 %v4965
        %v6047 = vunpack.c.h.b16 %v4965
        %v6048 = vunpack.c.l.b16 %v4966
        %v6049 = vunpack.c.h.b16 %v4966
        %v6050 = vunpack.c.l.b16 %v4967
        %v6051 = vunpack.c.h.b16 %v4967
        %v6052 = vunpack.c.l.b16 %v4968
        %v6053 = vunpack.c.h.b16 %v4968
        %v6054 = vunpack.c.l.b16 %v4969
        %v6055 = vunpack.c.h.b16 %v4969
        %v6056 = vunpack.c.l.b16 %v4970
        %v6057 = vunpack.c.h.b16 %v4970
        %v6058 = vunpack.c.l.b16 %v4971
        %v6059 = vunpack.c.h.b16 %v4971
        %v6060 = vunpack.c.l.b16 %v4972
        %v6061 = vunpack.c.h.b16 %v4972
        %v6062 = vunpack.c.l.b16 %v4973
        %v6063 = vunpack.c.h.b16 %v4973
        %v6064 = vunpack.c.l.b16 %v4974
        %v6065 = vunpack.c.h.b16 %v4974
        %v6066 = vunpack.c.l.b16 %v4975
        %v6067 = vunpack.c.h.b16 %v4975
        %v6068 = vunpack.c.l.b16 %v4976
        %v6069 = vunpack.c.h.b16 %v4976
        %v6070 = vunpack.c.l.b16 %v4977
        %v6071 = vunpack.c.h.b16 %v4977
        %v6072 = vunpack.c.l.b16 %v4978
        %v6073 = vunpack.c.h.b16 %v4978
        %v6074 = vunpack.c.l.b16 %v4979
        %v6075 = vunpack.c.h.b16 %v4979
        %v6076 = vunpack.c.l.b16 %v4980
        %v6077 = vunpack.c.h.b16 %v4980
        %v6078 = vunpack.c.l.b16 %v4981
        %v6079 = vunpack.c.h.b16 %v4981
        %v6080 = vunpack.c.l.b16 %v4982
        %v6081 = vunpack.c.h.b16 %v4982
        %v6082 = vunpack.c.l.b16 %v4983
        %v6083 = vunpack.c.h.b16 %v4983
        %v6084 = vunpack.c.l.b16 %v4984
        %v6085 = vunpack.c.h.b16 %v4984
        %v6086 = vunpack.c.l.b16 %v4985
        %v6087 = vunpack.c.h.b16 %v4985
        %v6088 = vunpack.c.l.b16 %v4986
        %v6089 = vunpack.c.h.b16 %v4986
        %v6090 = vunpack.c.l.b16 %v4987
        %v6091 = vunpack.c.h.b16 %v4987
        %v6092 = vunpack.c.l.b16 %v4988
        %v6093 = vunpack.c.h.b16 %v4988
        %v6094 = vunpack.c.l.b16 %v4989
        %v6095 = vunpack.c.h.b16 %v4989
        %v6096 = vunpack.c.l.b16 %v4990
        %v6097 = vunpack.c.h.b16 %v4990
        %v6098 = vunpack.c.l.b16 %v4991
        %v6099 = vunpack.c.h.b16 %v4991
        %v6100 = vunpack.c.l.b16 %v4992
        %v6101 = vunpack.c.h.b16 %v4992
        %v6102 = vunpack.c.l.b16 %v4993
        %v6103 = vunpack.c.h.b16 %v4993
        %v6104 = vunpack.c.l.b16 %v4994
        %v6105 = vunpack.c.h.b16 %v4994
        %v6106 = vunpack.c.l.b16 %v4995
        %v6107 = vunpack.c.h.b16 %v4995
        %v6108 = vunpack.c.l.b16 %v4996
        %v6109 = vunpack.c.h.b16 %v4996
        %v6110 = vunpack.c.l.b16 %v4997
        %v6111 = vunpack.c.h.b16 %v4997
        %v6112 = vunpack.c.l.b16 %v4998
        %v6113 = vunpack.c.h.b16 %v4998
        %v6114 = vunpack.c.l.b16 %v4999
        %v6115 = vunpack.c.h.b16 %v4999
        %v6116 = vunpack.c.l.b16 %v5000
        %v6117 = vunpack.c.h.b16 %v5000
        %v6118 = vunpack.c.l.b16 %v5001
        %v6119 = vunpack.c.h.b16 %v5001
        %v6120 = vunpack.c.l.b16 %v5002
        %v6121 = vunpack.c.h.b16 %v5002
        %v6122 = vunpack.c.l.b16 %v5003
        %v6123 = vunpack.c.h.b16 %v5003
        %v6124 = vunpack.c.l.b16 %v5004
        %v6125 = vunpack.c.h.b16 %v5004
        %v6126 = vunpack.c.l.b16 %v5005
        %v6127 = vunpack.c.h.b16 %v5005
        %v6128 = vunpack.c.l.b16 %v5006
        %v6129 = vunpack.c.h.b16 %v5006
        %v6130 = vunpack.c.l.b16 %v5007
        %v6131 = vunpack.c.h.b16 %v5007
        %v6132 = vunpack.c.l.b16 %v5008
        %v6133 = vunpack.c.h.b16 %v5008
        %v6134 = vunpack.c.l.b16 %v5009
        %v6135 = vunpack.c.h.b16 %v5009
        %v6136 = vunpack.c.l.b16 %v5010
        %v6137 = vunpack.c.h.b16 %v5010
        %v6138 = vunpack.c.l.b16 %v5011
        %v6139 = vunpack.c.h.b16 %v5011
        %v6140 = vunpack.c.l.b16 %v5012
        %v6141 = vunpack.c.h.b16 %v5012
        %v6142 = vunpack.c.l.b16 %v5013
        %v6143 = vunpack.c.h.b16 %v5013
        %v6144 = vunpack.c.l.b16 %v5014
        %v6145 = vunpack.c.h.b16 %v5014
        %v6146 = vunpack.c.l.b16 %v5015
        %v6147 = vunpack.c.h.b16 %v5015
        %v6148 = vunpack.c.l.b16 %v5016
        %v6149 = vunpack.c.h.b16 %v5016
        %v6150 = vunpack.c.l.b16 %v5017
        %v6151 = vunpack.c.h.b16 %v5017
        %v6152 = vunpack.c.l.b16 %v5018
        %v6153 = vunpack.c.h.b16 %v5018
        %v6154 = vunpack.c.l.b16 %v5019
        %v6155 = vunpack.c.h.b16 %v5019
        %v6156 = vunpack.c.l.b16 %v5020
        %v6157 = vunpack.c.h.b16 %v5020
        %v6158 = vunpack.c.l.b16 %v5021
        %v6159 = vunpack.c.h.b16 %v5021
        %v6160 = vunpack.c.l.b16 %v5022
        %v6161 = vunpack.c.h.b16 %v5022
        %v6162 = vunpack.c.l.b16 %v5023
        %v6163 = vunpack.c.h.b16 %v5023
        %v6164 = vunpack.c.l.b16 %v5024
        %v6165 = vunpack.c.h.b16 %v5024
        %v6166 = vunpack.c.l.b16 %v5025
        %v6167 = vunpack.c.h.b16 %v5025
        %v6168 = vunpack.c.l.b16 %v5026
        %v6169 = vunpack.c.h.b16 %v5026
        %v6170 = vunpack.c.l.b16 %v5027
        %v6171 = vunpack.c.h.b16 %v5027
        %v6172 = vunpack.c.l.b16 %v5028
        %v6173 = vunpack.c.h.b16 %v5028
        %v6174 = vunpack.c.l.b16 %v5029
        %v6175 = vunpack.c.h.b16 %v5029
        %v6176 = vunpack.c.l.b16 %v5030
        %v6177 = vunpack.c.h.b16 %v5030
        %v6178 = vunpack.c.l.b16 %v5031
        %v6179 = vunpack.c.h.b16 %v5031
        %v6180 = vunpack.c.l.b16 %v5032
        %v6181 = vunpack.c.h.b16 %v5032
        %v6182 = vunpack.c.l.b16 %v5033
        %v6183 = vunpack.c.h.b16 %v5033
        %v6184 = vunpack.c.l.b16 %v5034
        %v6185 = vunpack.c.h.b16 %v5034
        %v6186 = vunpack.c.l.b16 %v5035
        %v6187 = vunpack.c.h.b16 %v5035
        %v6188 = vunpack.c.l.b16 %v5036
        %v6189 = vunpack.c.h.b16 %v5036
        %v6190 = vunpack.c.l.b16 %v5037
        %v6191 = vunpack.c.h.b16 %v5037
        %v6192 = vunpack.c.l.b16 %v5038
        %v6193 = vunpack.c.h.b16 %v5038
        %v6194 = vunpack.c.l.b16 %v5039
        %v6195 = vunpack.c.h.b16 %v5039
        %v6196 = vunpack.c.l.b16 %v5040
        %v6197 = vunpack.c.h.b16 %v5040
        %v6198 = vunpack.c.l.b16 %v5041
        %v6199 = vunpack.c.h.b16 %v5041
        %v6200 = vunpack.c.l.b16 %v5042
        %v6201 = vunpack.c.h.b16 %v5042
        %v6202 = vunpack.c.l.b16 %v5043
        %v6203 = vunpack.c.h.b16 %v5043
        %v6204 = vunpack.c.l.b16 %v5044
        %v6205 = vunpack.c.h.b16 %v5044
        %v6206 = vunpack.c.l.b16 %v5045
        %v6207 = vunpack.c.h.b16 %v5045
        %v6208 = vunpack.c.l.b16 %v5046
        %v6209 = vunpack.c.h.b16 %v5046
        %v6210 = vunpack.c.l.b16 %v5047
        %v6211 = vunpack.c.h.b16 %v5047
        %v6212 = vunpack.c.l.b16 %v5048
        %v6213 = vunpack.c.h.b16 %v5048
        %v6214 = vunpack.c.l.b16 %v5049
        %v6215 = vunpack.c.h.b16 %v5049
        %v6216 = vunpack.c.l.b16 %v5050
        %v6217 = vunpack.c.h.b16 %v5050
        %v6218 = vunpack.c.l.b16 %v5051
        %v6219 = vunpack.c.h.b16 %v5051
        %v6220 = vunpack.c.l.b16 %v5052
        %v6221 = vunpack.c.h.b16 %v5052
        %v6222 = vunpack.c.l.b16 %v5053
        %v6223 = vunpack.c.h.b16 %v5053
        %v6224 = vunpack.c.l.b16 %v5054
        %v6225 = vunpack.c.h.b16 %v5054
        %v6226 = vunpack.c.l.b16 %v5055
        %v6227 = vunpack.c.h.b16 %v5055
        %v6228 = vunpack.c.l.b16 %v5056
        %v6229 = vunpack.c.h.b16 %v5056
        %v6230 = vunpack.c.l.b16 %v5057
        %v6231 = vunpack.c.h.b16 %v5057
        %v6232 = vunpack.c.l.b16 %v5058
        %v6233 = vunpack.c.h.b16 %v5058
        %v6234 = vunpack.c.l.b16 %v5059
        %v6235 = vunpack.c.h.b16 %v5059
        %v6236 = vunpack.c.l.b16 %v5060
        %v6237 = vunpack.c.h.b16 %v5060
        %v6238 = vunpack.c.l.b16 %v5061
        %v6239 = vunpack.c.h.b16 %v5061
        %v6240 = vunpack.c.l.b16 %v5062
        %v6241 = vunpack.c.h.b16 %v5062
        %v6242 = vunpack.c.l.b16 %v5063
        %v6243 = vunpack.c.h.b16 %v5063
        %v6244 = vunpack.c.l.b16 %v5064
        %v6245 = vunpack.c.h.b16 %v5064
        %v6246 = vunpack.c.l.b16 %v5065
        %v6247 = vunpack.c.h.b16 %v5065
        %v6248 = vunpack.c.l.b16 %v5066
        %v6249 = vunpack.c.h.b16 %v5066
        %v6250 = vunpack.c.l.b16 %v5067
        %v6251 = vunpack.c.h.b16 %v5067
        %v6252 = vunpack.c.l.b16 %v5068
        %v6253 = vunpack.c.h.b16 %v5068
        %v6254 = vunpack.c.l.b16 %v5069
        %v6255 = vunpack.c.h.b16 %v5069
        %v6256 = vunpack.c.l.b16 %v5070
        %v6257 = vunpack.c.h.b16 %v5070
        %v6258 = vunpack.c.l.b16 %v5071
        %v6259 = vunpack.c.h.b16 %v5071
        %v6260 = vunpack.c.l.b16 %v5072
        %v6261 = vunpack.c.h.b16 %v5072
        %v6262 = vunpack.c.l.b16 %v5073
        %v6263 = vunpack.c.h.b16 %v5073
        %v6264 = vunpack.c.l.b16 %v5074
        %v6265 = vunpack.c.h.b16 %v5074
        %v6266 = vunpack.c.l.b16 %v5075
        %v6267 = vunpack.c.h.b16 %v5075
        %v6268 = vunpack.c.l.b16 %v5076
        %v6269 = vunpack.c.h.b16 %v5076
        %v6270 = vunpack.c.l.b16 %v5077
        %v6271 = vunpack.c.h.b16 %v5077
        %v6272 = vunpack.c.l.b16 %v5078
        %v6273 = vunpack.c.h.b16 %v5078
        %v6274 = vunpack.c.l.b16 %v5079
        %v6275 = vunpack.c.h.b16 %v5079
        %v6276 = vunpack.c.l.b16 %v5080
        %v6277 = vunpack.c.h.b16 %v5080
        %v6278 = vunpack.c.l.b16 %v5081
        %v6279 = vunpack.c.h.b16 %v5081
        %v6280 = vunpack.c.l.b16 %v5082
        %v6281 = vunpack.c.h.b16 %v5082
        %v6282 = vunpack.c.l.b16 %v5083
        %v6283 = vunpack.c.h.b16 %v5083
        %v6284 = vunpack.c.l.b16 %v5084
        %v6285 = vunpack.c.h.b16 %v5084
        %v6286 = vunpack.c.l.b16 %v5085
        %v6287 = vunpack.c.h.b16 %v5085
        %v6288 = vunpack.c.l.b16 %v5086
        %v6289 = vunpack.c.h.b16 %v5086
        %v6290 = vunpack.c.l.b16 %v5087
        %v6291 = vunpack.c.h.b16 %v5087
        %v6292 = vunpack.c.l.b16 %v5088
        %v6293 = vunpack.c.h.b16 %v5088
        %v6294 = vunpack.c.l.b16 %v5089
        %v6295 = vunpack.c.h.b16 %v5089
        %v6296 = vunpack.c.l.b16 %v5090
        %v6297 = vunpack.c.h.b16 %v5090
        %v6298 = vunpack.c.l.b16 %v5091
        %v6299 = vunpack.c.h.b16 %v5091
        %v6300 = vunpack.c.l.b16 %v5092
        %v6301 = vunpack.c.h.b16 %v5092
        %v6302 = vunpack.c.l.b16 %v5093
        %v6303 = vunpack.c.h.b16 %v5093
        %v6304 = vunpack.c.l.b16 %v5094
        %v6305 = vunpack.c.h.b16 %v5094
        %v6306 = vunpack.c.l.b16 %v5095
        %v6307 = vunpack.c.h.b16 %v5095
        %v6308 = vunpack.c.l.b16 %v5096
        %v6309 = vunpack.c.h.b16 %v5096
        %v6310 = vunpack.c.l.b16 %v5097
        %v6311 = vunpack.c.h.b16 %v5097
        %v6312 = vunpack.c.l.b16 %v5098
        %v6313 = vunpack.c.h.b16 %v5098
        %v6314 = vunpack.c.l.b16 %v5099
        %v6315 = vunpack.c.h.b16 %v5099
        %v6316 = vunpack.c.l.b16 %v5100
        %v6317 = vunpack.c.h.b16 %v5100
        %v6318 = vunpack.c.l.b16 %v5101
        %v6319 = vunpack.c.h.b16 %v5101
        %v6320 = vunpack.c.l.b16 %v5102
        %v6321 = vunpack.c.h.b16 %v5102
        %v6322 = vunpack.c.l.b16 %v5103
        %v6323 = vunpack.c.h.b16 %v5103
        %v6324 = vunpack.c.l.b16 %v5104
        %v6325 = vunpack.c.h.b16 %v5104
        %v6326 = vunpack.c.l.b16 %v5105
        %v6327 = vunpack.c.h.b16 %v5105
        %v6328 = vunpack.c.l.b16 %v5106
        %v6329 = vunpack.c.h.b16 %v5106
        %v6330 = vunpack.c.l.b16 %v5107
        %v6331 = vunpack.c.h.b16 %v5107
        %v6332 = vunpack.c.l.b16 %v5108
        %v6333 = vunpack.c.h.b16 %v5108
        %v6334 = vunpack.c.l.b16 %v5109
        %v6335 = vunpack.c.h.b16 %v5109
        %v6336 = vunpack.c.l.b16 %v5110
        %v6337 = vunpack.c.h.b16 %v5110
        %v6338 = vunpack.c.l.b16 %v5111
        %v6339 = vunpack.c.h.b16 %v5111
        %v6340 = vunpack.c.l.b16 %v5112
        %v6341 = vunpack.c.h.b16 %v5112
        %v6342 = vunpack.c.l.b16 %v5113
        %v6343 = vunpack.c.h.b16 %v5113
        %v6344 = vunpack.c.l.b16 %v5114
        %v6345 = vunpack.c.h.b16 %v5114
        %v6346 = vunpack.c.l.b16 %v5115
        %v6347 = vunpack.c.h.b16 %v5115
        %v6348 = vunpack.c.l.b16 %v5116
        %v6349 = vunpack.c.h.b16 %v5116
        %v6350 = vunpack.c.l.b16 %v5117
        %v6351 = vunpack.c.h.b16 %v5117
        %v6352 = vunpack.c.l.b16 %v5118
        %v6353 = vunpack.c.h.b16 %v5118
        %v6354 = vunpack.c.l.b16 %v5119
        %v6355 = vunpack.c.h.b16 %v5119
        %v6356 = vunpack.c.l.b16 %v5120
        %v6357 = vunpack.c.h.b16 %v5120
        %v6358 = vunpack.c.l.b16 %v5121
        %v6359 = vunpack.c.h.b16 %v5121
        %v6360 = vunpack.c.l.b16 %v5122
        %v6361 = vunpack.c.h.b16 %v5122
        %v6362 = vunpack.c.l.b16 %v5123
        %v6363 = vunpack.c.h.b16 %v5123
        %v6364 = vunpack.c.l.b16 %v5124
        %v6365 = vunpack.c.h.b16 %v5124
        %v6366 = vunpack.c.l.b16 %v5125
        %v6367 = vunpack.c.h.b16 %v5125
        %v6368 = vunpack.c.l.b16 %v5126
        %v6369 = vunpack.c.h.b16 %v5126
        %v6370 = vunpack.c.l.b16 %v5127
        %v6371 = vunpack.c.h.b16 %v5127
        %v6372 = vunpack.c.l.b16 %v5128
        %v6373 = vunpack.c.h.b16 %v5128
        %v6374 = vunpack.c.l.b16 %v5129
        %v6375 = vunpack.c.h.b16 %v5129
        %v6376 = vunpack.c.l.b16 %v5130
        %v6377 = vunpack.c.h.b16 %v5130
        %v6378 = vunpack.c.l.b16 %v5131
        %v6379 = vunpack.c.h.b16 %v5131
        %v6380 = vunpack.c.l.b16 %v5132
        %v6381 = vunpack.c.h.b16 %v5132
        %v6382 = vunpack.c.l.b16 %v5133
        %v6383 = vunpack.c.h.b16 %v5133
        %v6384 = vunpack.c.l.b16 %v5134
        %v6385 = vunpack.c.h.b16 %v5134
        %v6386 = vunpack.c.l.b16 %v5135
        %v6387 = vunpack.c.h.b16 %v5135
        %v6388 = vunpack.c.l.b16 %v5136
        %v6389 = vunpack.c.h.b16 %v5136
        %v6390 = vunpack.c.l.b16 %v5137
        %v6391 = vunpack.c.h.b16 %v5137
        %v6392 = vunpack.c.l.b16 %v5138
        %v6393 = vunpack.c.h.b16 %v5138
        %v6394 = vunpack.c.l.b16 %v5139
        %v6395 = vunpack.c.h.b16 %v5139
        %v6396 = vunpack.c.l.b16 %v5140
        %v6397 = vunpack.c.h.b16 %v5140
        %v6398 = vunpack.c.l.b16 %v5141
        %v6399 = vunpack.c.h.b16 %v5141
        %v6400 = vunpack.c.l.b16 %v5142
        %v6401 = vunpack.c.h.b16 %v5142
        %v6402 = vunpack.c.l.b16 %v5143
        %v6403 = vunpack.c.h.b16 %v5143
        %v6404 = vunpack.c.l.b16 %v5144
        %v6405 = vunpack.c.h.b16 %v5144
        %v6406 = vunpack.c.l.b16 %v5145
        %v6407 = vunpack.c.h.b16 %v5145
        %v6408 = vunpack.c.l.b16 %v5146
        %v6409 = vunpack.c.h.b16 %v5146
        %v6410 = vunpack.c.l.b16 %v5147
        %v6411 = vunpack.c.h.b16 %v5147
        %v6412 = vunpack.c.l.b16 %v5148
        %v6413 = vunpack.c.h.b16 %v5148
        %v6414 = vunpack.c.l.b16 %v5149
        %v6415 = vunpack.c.h.b16 %v5149
        %v6416 = vunpack.c.l.b16 %v5150
        %v6417 = vunpack.c.h.b16 %v5150
        %v6418 = vunpack.c.l.b16 %v5151
        %v6419 = vunpack.c.h.b16 %v5151
        %v6420 = vunpack.c.l.b16 %v5152
        %v6421 = vunpack.c.h.b16 %v5152
        %v6422 = vunpack.c.l.b16 %v5153
        %v6423 = vunpack.c.h.b16 %v5153
        %v6424 = vunpack.c.l.b16 %v5154
        %v6425 = vunpack.c.h.b16 %v5154
        %v6426 = vunpack.c.l.b16 %v5155
        %v6427 = vunpack.c.h.b16 %v5155
        %v6428 = vunpack.c.l.b16 %v5156
        %v6429 = vunpack.c.h.b16 %v5156
        %v6430 = vunpack.c.l.b16 %v5157
        %v6431 = vunpack.c.h.b16 %v5157
        %v6432 = vunpack.c.l.b16 %v5158
        %v6433 = vunpack.c.h.b16 %v5158
        %v6434 = vunpack.c.l.b16 %v5159
        %v6435 = vunpack.c.h.b16 %v5159
        %v6436 = vunpack.c.l.b16 %v5160
        %v6437 = vunpack.c.h.b16 %v5160
        %v6438 = vunpack.c.l.b16 %v5161
        %v6439 = vunpack.c.h.b16 %v5161
        %v6440 = vunpack.c.l.b16 %v5162
        %v6441 = vunpack.c.h.b16 %v5162
        %v6442 = vunpack.c.l.b16 %v5163
        %v6443 = vunpack.c.h.b16 %v5163
        %v6444 = vunpack.c.l.b16 %v5164
        %v6445 = vunpack.c.h.b16 %v5164
        %v6446 = vunpack.c.l.b16 %v5165
        %v6447 = vunpack.c.h.b16 %v5165
        %v6448 = vunpack.c.l.b16 %v5166
        %v6449 = vunpack.c.h.b16 %v5166
        %v6450 = vunpack.c.l.b16 %v5167
        %v6451 = vunpack.c.h.b16 %v5167
        %v6452 = vunpack.c.l.b16 %v5168
        %v6453 = vunpack.c.h.b16 %v5168
        %v6454 = vunpack.c.l.b16 %v5169
        %v6455 = vunpack.c.h.b16 %v5169
        %v6456 = vunpack.c.l.b16 %v5170
        %v6457 = vunpack.c.h.b16 %v5170
        %v6458 = vunpack.c.l.b16 %v5171
        %v6459 = vunpack.c.h.b16 %v5171
        %v6460 = vunpack.c.l.b16 %v5172
        %v6461 = vunpack.c.h.b16 %v5172
        %v6462 = vunpack.c.l.b16 %v5173
        %v6463 = vunpack.c.h.b16 %v5173
        %v6464 = vunpack.c.l.b16 %v5174
        %v6465 = vunpack.c.h.b16 %v5174
        %v6466 = vunpack.c.l.b16 %v5175
        %v6467 = vunpack.c.h.b16 %v5175
        %v6468 = vunpack.c.l.b16 %v5176
        %v6469 = vunpack.c.h.b16 %v5176
        %v6470 = vunpack.c.l.b16 %v5177
        %v6471 = vunpack.c.h.b16 %v5177
        %v6472 = vunpack.c.l.b16 %v5178
        %v6473 = vunpack.c.h.b16 %v5178
        %v6474 = vunpack.c.l.b16 %v5179
        %v6475 = vunpack.c.h.b16 %v5179
        %v6476 = vunpack.c.l.b16 %v5180
        %v6477 = vunpack.c.h.b16 %v5180
        %v6478 = vunpack.c.l.b16 %v5181
        %v6479 = vunpack.c.h.b16 %v5181
        %v6480 = vunpack.c.l.b16 %v5182
        %v6481 = vunpack.c.h.b16 %v5182
        %v6482 = vunpack.c.l.b16 %v5183
        %v6483 = vunpack.c.h.b16 %v5183
        %v6484 = vunpack.c.l.b16 %v5184
        %v6485 = vunpack.c.h.b16 %v5184
        %v6486 = vunpack.c.l.b16 %v5185
        %v6487 = vunpack.c.h.b16 %v5185
        %v6488 = vunpack.c.l.b16 %v5186
        %v6489 = vunpack.c.h.b16 %v5186
        %v6490 = vunpack.c.l.b16 %v5187
        %v6491 = vunpack.c.h.b16 %v5187
        %v6492 = vunpack.c.l.b16 %v5188
        %v6493 = vunpack.c.h.b16 %v5188
        %v6494 = vunpack.c.l.b16 %v5189
        %v6495 = vunpack.c.h.b16 %v5189
        %v6496 = vunpack.c.l.b16 %v5190
        %v6497 = vunpack.c.h.b16 %v5190
        %v6498 = vunpack.c.l.b16 %v5191
        %v6499 = vunpack.c.h.b16 %v5191
        %v6500 = vunpack.c.l.b16 %v5192
        %v6501 = vunpack.c.h.b16 %v5192
        %v6502 = vunpack.c.l.b16 %v5193
        %v6503 = vunpack.c.h.b16 %v5193
        %v6504 = vunpack.c.l.b16 %v5194
        %v6505 = vunpack.c.h.b16 %v5194
        %v6506 = vunpack.c.l.b16 %v5195
        %v6507 = vunpack.c.h.b16 %v5195
        %v6508 = vunpack.c.l.b16 %v5196
        %v6509 = vunpack.c.h.b16 %v5196
        %v6510 = vunpack.c.l.b16 %v5197
        %v6511 = vunpack.c.h.b16 %v5197
        %v6512 = vunpack.c.l.b16 %v5198
        %v6513 = vunpack.c.h.b16 %v5198
        %v6514 = vunpack.c.l.b16 %v5199
        %v6515 = vunpack.c.h.b16 %v5199
        %v6516 = vunpack.c.l.b16 %v5200
        %v6517 = vunpack.c.h.b16 %v5200
        %v6518 = vunpack.c.l.b16 %v5201
        %v6519 = vunpack.c.h.b16 %v5201
        %v6520 = vunpack.c.l.b16 %v5202
        %v6521 = vunpack.c.h.b16 %v5202
        %v6522 = vunpack.c.l.b16 %v5203
        %v6523 = vunpack.c.h.b16 %v5203
        %v6524 = vunpack.c.l.b16 %v5204
        %v6525 = vunpack.c.h.b16 %v5204
        %v6526 = vunpack.c.l.b16 %v5205
        %v6527 = vunpack.c.h.b16 %v5205
        %v6528 = vunpack.c.l.b16 %v5206
        %v6529 = vunpack.c.h.b16 %v5206
        %v6530 = vunpack.c.l.b16 %v5207
        %v6531 = vunpack.c.h.b16 %v5207
        %v6532 = vunpack.c.l.b16 %v5208
        %v6533 = vunpack.c.h.b16 %v5208
        %v6534 = vunpack.c.l.b16 %v5209
        %v6535 = vunpack.c.h.b16 %v5209
        %v6536 = vunpack.c.l.b16 %v5210
        %v6537 = vunpack.c.h.b16 %v5210
        %v6538 = vunpack.c.l.b16 %v5211
        %v6539 = vunpack.c.h.b16 %v5211
        %v6540 = vunpack.c.l.b16 %v5212
        %v6541 = vunpack.c.h.b16 %v5212
        %v6542 = vunpack.c.l.b16 %v5213
        %v6543 = vunpack.c.h.b16 %v5213
        %v6544 = vunpack.c.l.b16 %v5214
        %v6545 = vunpack.c.h.b16 %v5214
        %v6546 = vunpack.c.l.b16 %v5215
        %v6547 = vunpack.c.h.b16 %v5215
        %v6548 = vunpack.c.l.b16 %v5216
        %v6549 = vunpack.c.h.b16 %v5216
        %v6550 = vunpack.c.l.b16 %v5217
        %v6551 = vunpack.c.h.b16 %v5217
        %v6552 = vunpack.c.l.b16 %v5218
        %v6553 = vunpack.c.h.b16 %v5218
        %v6554 = vunpack.c.l.b16 %v5219
        %v6555 = vunpack.c.h.b16 %v5219
        %v6556 = vunpack.c.l.b16 %v5220
        %v6557 = vunpack.c.h.b16 %v5220
        %v6558 = vunpack.c.l.b16 %v5221
        %v6559 = vunpack.c.h.b16 %v5221
        %v6560 = vunpack.c.l.b16 %v5222
        %v6561 = vunpack.c.h.b16 %v5222
        %v6562 = vunpack.c.l.b16 %v5223
        %v6563 = vunpack.c.h.b16 %v5223
        %v6564 = vunpack.c.l.b16 %v5224
        %v6565 = vunpack.c.h.b16 %v5224
        %v6566 = vunpack.c.l.b16 %v5225
        %v6567 = vunpack.c.h.b16 %v5225
        %v6568 = vunpack.c.l.b16 %v5226
        %v6569 = vunpack.c.h.b16 %v5226
        %v6570 = vunpack.c.l.b16 %v5227
        %v6571 = vunpack.c.h.b16 %v5227
        %v6572 = vunpack.c.l.b16 %v5228
        %v6573 = vunpack.c.h.b16 %v5228
        %v6574 = vunpack.c.l.b16 %v5229
        %v6575 = vunpack.c.h.b16 %v5229
        %v6576 = vunpack.c.l.b16 %v5230
        %v6577 = vunpack.c.h.b16 %v5230
        %v6578 = vunpack.c.l.b16 %v5231
        %v6579 = vunpack.c.h.b16 %v5231
        %v6580 = vunpack.c.l.b16 %v5232
        %v6581 = vunpack.c.h.b16 %v5232
        %v6582 = vunpack.c.l.b16 %v5233
        %v6583 = vunpack.c.h.b16 %v5233
        %v6584 = vunpack.c.l.b16 %v5234
        %v6585 = vunpack.c.h.b16 %v5234
        %v6586 = vunpack.c.l.b16 %v5235
        %v6587 = vunpack.c.h.b16 %v5235
        %v6588 = vunpack.c.l.b16 %v5236
        %v6589 = vunpack.c.h.b16 %v5236
        %v6590 = vunpack.c.l.b16 %v5237
        %v6591 = vunpack.c.h.b16 %v5237
        %v6592 = vunpack.c.l.b16 %v5238
        %v6593 = vunpack.c.h.b16 %v5238
        %v6594 = vunpack.c.l.b16 %v5239
        %v6595 = vunpack.c.h.b16 %v5239
        %v6596 = vunpack.c.l.b16 %v5240
        %v6597 = vunpack.c.h.b16 %v5240
        %v6598 = vunpack.c.l.b16 %v5241
        %v6599 = vunpack.c.h.b16 %v5241
        %v6600 = vunpack.c.l.b16 %v5242
        %v6601 = vunpack.c.h.b16 %v5242
        %v6602 = vunpack.c.l.b16 %v5243
        %v6603 = vunpack.c.h.b16 %v5243
        %v6604 = vunpack.c.l.b16 %v5244
        %v6605 = vunpack.c.h.b16 %v5244
        %v6606 = vunpack.c.l.b16 %v5245
        %v6607 = vunpack.c.h.b16 %v5245
        %v6608 = vunpack.c.l.b16 %v5246
        %v6609 = vunpack.c.h.b16 %v5246
        %v6610 = vunpack.c.l.b16 %v5247
        %v6611 = vunpack.c.h.b16 %v5247
        %v6612 = vunpack.c.l.b16 %v5248
        %v6613 = vunpack.c.h.b16 %v5248
        %v6614 = vunpack.c.l.b16 %v5249
        %v6615 = vunpack.c.h.b16 %v5249
        %v6616 = vunpack.c.l.b16 %v5250
        %v6617 = vunpack.c.h.b16 %v5250
        %v6618 = vunpack.c.l.b16 %v5251
        %v6619 = vunpack.c.h.b16 %v5251
        %v6620 = vunpack.c.l.b16 %v5252
        %v6621 = vunpack.c.h.b16 %v5252
        %v6622 = vunpack.c.l.b16 %v5253
        %v6623 = vunpack.c.h.b16 %v5253
        %v6624 = vunpack.c.l.b16 %v5254
        %v6625 = vunpack.c.h.b16 %v5254
        %v6626 = vunpack.c.l.b16 %v5255
        %v6627 = vunpack.c.h.b16 %v5255
        %v6628 = vunpack.c.l.b16 %v5256
        %v6629 = vunpack.c.h.b16 %v5256
        %v6630 = vunpack.c.l.b16 %v5257
        %v6631 = vunpack.c.h.b16 %v5257
        %v6632 = vunpack.c.l.b16 %v5258
        %v6633 = vunpack.c.h.b16 %v5258
        %v6634 = vunpack.c.l.b16 %v5259
        %v6635 = vunpack.c.h.b16 %v5259
        %v6636 = vunpack.c.l.b16 %v5260
        %v6637 = vunpack.c.h.b16 %v5260
        %v6638 = vunpack.c.l.b16 %v5261
        %v6639 = vunpack.c.h.b16 %v5261
        %v6640 = vunpack.c.l.b16 %v5262
        %v6641 = vunpack.c.h.b16 %v5262
        %v6642 = vunpack.c.l.b16 %v5263
        %v6643 = vunpack.c.h.b16 %v5263
        %v6644 = vunpack.c.l.b16 %v5264
        %v6645 = vunpack.c.h.b16 %v5264
        %v6646 = vunpack.c.l.b16 %v5265
        %v6647 = vunpack.c.h.b16 %v5265
        %v6648 = vunpack.c.l.b16 %v5266
        %v6649 = vunpack.c.h.b16 %v5266
        %v6650 = vunpack.c.l.b16 %v5267
        %v6651 = vunpack.c.h.b16 %v5267
        %v6652 = vunpack.c.l.b16 %v5268
        %v6653 = vunpack.c.h.b16 %v5268
        %v6654 = vunpack.c.l.b16 %v5269
        %v6655 = vunpack.c.h.b16 %v5269
        %v6656 = vunpack.c.l.b16 %v5270
        %v6657 = vunpack.c.h.b16 %v5270
        %v6658 = vunpack.c.l.b16 %v5271
        %v6659 = vunpack.c.h.b16 %v5271
        %v6660 = vunpack.c.l.b16 %v5272
        %v6661 = vunpack.c.h.b16 %v5272
        %v6662 = vunpack.c.l.b16 %v5273
        %v6663 = vunpack.c.h.b16 %v5273
        %v6664 = vunpack.c.l.b16 %v5274
        %v6665 = vunpack.c.h.b16 %v5274
        %v6666 = vunpack.c.l.b16 %v5275
        %v6667 = vunpack.c.h.b16 %v5275
        %v6668 = vunpack.c.l.b16 %v5276
        %v6669 = vunpack.c.h.b16 %v5276
        %v6670 = vunpack.c.l.b16 %v5277
        %v6671 = vunpack.c.h.b16 %v5277
        %v6672 = vunpack.c.l.b16 %v5278
        %v6673 = vunpack.c.h.b16 %v5278
        %v6674 = vunpack.c.l.b16 %v5279
        %v6675 = vunpack.c.h.b16 %v5279
        %v6676 = vunpack.c.l.b16 %v5280
        %v6677 = vunpack.c.h.b16 %v5280
        %v6678 = vunpack.c.l.b16 %v5281
        %v6679 = vunpack.c.h.b16 %v5281
        %v6680 = vunpack.c.l.b16 %v5282
        %v6681 = vunpack.c.h.b16 %v5282
        %v6682 = vunpack.c.l.b16 %v5283
        %v6683 = vunpack.c.h.b16 %v5283
        %v6684 = vunpack.c.l.b16 %v5284
        %v6685 = vunpack.c.h.b16 %v5284
        %v6686 = vunpack.c.l.b16 %v5285
        %v6687 = vunpack.c.h.b16 %v5285
        %v6688 = vunpack.c.l.b16 %v5286
        %v6689 = vunpack.c.h.b16 %v5286
        %v6690 = vunpack.c.l.b16 %v5287
        %v6691 = vunpack.c.h.b16 %v5287
        %v6692 = vunpack.c.l.b16 %v5288
        %v6693 = vunpack.c.h.b16 %v5288
        %v6694 = vunpack.c.l.b16 %v5289
        %v6695 = vunpack.c.h.b16 %v5289
        %v6696 = vunpack.c.l.b16 %v5290
        %v6697 = vunpack.c.h.b16 %v5290
        %v6698 = vunpack.c.l.b16 %v5291
        %v6699 = vunpack.c.h.b16 %v5291
        %v6700 = vunpack.c.l.b16 %v5292
        %v6701 = vunpack.c.h.b16 %v5292
        %v6702 = vunpack.c.l.b16 %v5293
        %v6703 = vunpack.c.h.b16 %v5293
        %v6704 = vunpack.c.l.b16 %v5294
        %v6705 = vunpack.c.h.b16 %v5294
        %v6706 = vunpack.c.l.b16 %v5295
        %v6707 = vunpack.c.h.b16 %v5295
        %v6708 = vunpack.c.l.b16 %v5296
        %v6709 = vunpack.c.h.b16 %v5296
        %v6710 = vunpack.c.l.b16 %v5297
        %v6711 = vunpack.c.h.b16 %v5297
        %v6712 = vunpack.c.l.b16 %v5298
        %v6713 = vunpack.c.h.b16 %v5298
        %v6714 = vunpack.c.l.b16 %v5299
        %v6715 = vunpack.c.h.b16 %v5299
        %v6716 = vunpack.c.l.b16 %v5300
        %v6717 = vunpack.c.h.b16 %v5300
        %v6718 = vunpack.c.l.b16 %v5301
        %v6719 = vunpack.c.h.b16 %v5301
        %v6720 = vunpack.c.l.b16 %v5302
        %v6721 = vunpack.c.h.b16 %v5302
        %v6722 = vunpack.c.l.b16 %v5303
        %v6723 = vunpack.c.h.b16 %v5303
        %v6724 = vunpack.c.l.b16 %v5304
        %v6725 = vunpack.c.h.b16 %v5304
        %v6726 = vunpack.c.l.b16 %v5305
        %v6727 = vunpack.c.h.b16 %v5305
        %v6728 = vunpack.c.l.b16 %v5306
        %v6729 = vunpack.c.h.b16 %v5306
        %v6730 = vunpack.c.l.b16 %v5307
        %v6731 = vunpack.c.h.b16 %v5307
        %v6732 = vunpack.c.l.b16 %v5308
        %v6733 = vunpack.c.h.b16 %v5308
        %v6734 = vunpack.c.l.b16 %v5309
        %v6735 = vunpack.c.h.b16 %v5309
        %v6736 = vunpack.c.l.b16 %v5310
        %v6737 = vunpack.c.h.b16 %v5310
        %v6738 = vunpack.c.l.b16 %v5311
        %v6739 = vunpack.c.h.b16 %v5311
        %v6740 = vunpack.c.l.b16 %v5312
        %v6741 = vunpack.c.h.b16 %v5312
        %v6742 = vunpack.c.l.b16 %v5313
        %v6743 = vunpack.c.h.b16 %v5313
        %v6744 = vunpack.c.l.b16 %v5314
        %v6745 = vunpack.c.h.b16 %v5314
        %v6746 = vunpack.c.l.b16 %v5315
        %v6747 = vunpack.c.h.b16 %v5315
        %v6748 = vunpack.c.l.b16 %v5316
        %v6749 = vunpack.c.h.b16 %v5316
        %v6750 = vunpack.c.l.b16 %v5317
        %v6751 = vunpack.c.h.b16 %v5317
        %v6752 = vunpack.c.l.b16 %v5318
        %v6753 = vunpack.c.h.b16 %v5318
        %v6754 = vunpack.c.l.b16 %v5319
        %v6755 = vunpack.c.h.b16 %v5319
        %v6756 = vunpack.c.l.b16 %v5320
        %v6757 = vunpack.c.h.b16 %v5320
        %v6758 = vunpack.c.l.b16 %v5321
        %v6759 = vunpack.c.h.b16 %v5321
        %v6760 = vunpack.c.l.b16 %v5322
        %v6761 = vunpack.c.h.b16 %v5322
        %v6762 = vunpack.c.l.b16 %v5323
        %v6763 = vunpack.c.h.b16 %v5323
        %v6764 = vunpack.c.l.b16 %v5324
        %v6765 = vunpack.c.h.b16 %v5324
        %v6766 = vunpack.c.l.b16 %v5325
        %v6767 = vunpack.c.h.b16 %v5325
        %v6768 = vunpack.c.l.b16 %v5326
        %v6769 = vunpack.c.h.b16 %v5326
        %v6770 = vunpack.c.l.b16 %v5327
        %v6771 = vunpack.c.h.b16 %v5327
        %v6772 = vunpack.c.l.b16 %v5328
        %v6773 = vunpack.c.h.b16 %v5328
        %v6774 = vunpack.c.l.b16 %v5329
        %v6775 = vunpack.c.h.b16 %v5329
        %v6776 = vunpack.c.l.b16 %v5330
        %v6777 = vunpack.c.h.b16 %v5330
        %v6778 = vunpack.c.l.b16 %v5331
        %v6779 = vunpack.c.h.b16 %v5331
        %v6780 = vunpack.c.l.b16 %v5332
        %v6781 = vunpack.c.h.b16 %v5332
        %v6782 = vunpack.c.l.b16 %v5333
        %v6783 = vunpack.c.h.b16 %v5333
        %v6784 = vunpack.c.l.b16 %v5334
        %v6785 = vunpack.c.h.b16 %v5334
        %v6786 = vunpack.c.l.b16 %v5335
        %v6787 = vunpack.c.h.b16 %v5335
        %v6788 = vunpack.c.l.b16 %v5336
        %v6789 = vunpack.c.h.b16 %v5336
        %v6790 = vunpack.c.l.b16 %v5337
        %v6791 = vunpack.c.h.b16 %v5337
        %v6792 = vunpack.c.l.b16 %v5338
        %v6793 = vunpack.c.h.b16 %v5338
        %v6794 = vunpack.c.l.b16 %v5339
        %v6795 = vunpack.c.h.b16 %v5339
        %v6796 = vunpack.c.l.b16 %v5340
        %v6797 = vunpack.c.h.b16 %v5340
        %v6798 = vunpack.c.l.b16 %v5341
        %v6799 = vunpack.c.h.b16 %v5341
        %v6800 = vunpack.c.l.b16 %v5342
        %v6801 = vunpack.c.h.b16 %v5342
        %v6802 = vunpack.c.l.b16 %v5343
        %v6803 = vunpack.c.h.b16 %v5343
        %v6804 = vunpack.c.l.b16 %v5344
        %v6805 = vunpack.c.h.b16 %v5344
        %v6806 = vunpack.c.l.b16 %v5345
        %v6807 = vunpack.c.h.b16 %v5345
        %v6808 = vunpack.c.l.b16 %v5346
        %v6809 = vunpack.c.h.b16 %v5346
        %v6810 = vunpack.c.l.b16 %v5347
        %v6811 = vunpack.c.h.b16 %v5347
        %v6812 = vunpack.c.l.b16 %v5348
        %v6813 = vunpack.c.h.b16 %v5348
        %v6814 = vunpack.c.l.b16 %v5349
        %v6815 = vunpack.c.h.b16 %v5349
        %v6816 = vunpack.c.l.b16 %v5350
        %v6817 = vunpack.c.h.b16 %v5350
        %v6818 = vunpack.c.l.b16 %v5351
        %v6819 = vunpack.c.h.b16 %v5351
        %v6820 = vunpack.c.l.b16 %v5352
        %v6821 = vunpack.c.h.b16 %v5352
        %v6822 = vunpack.c.l.b16 %v5353
        %v6823 = vunpack.c.h.b16 %v5353
        %v6824 = vunpack.c.l.b16 %v5354
        %v6825 = vunpack.c.h.b16 %v5354
        %v6826 = vunpack.c.l.b16 %v5355
        %v6827 = vunpack.c.h.b16 %v5355
        %v6828 = vunpack.c.l.b16 %v5356
        %v6829 = vunpack.c.h.b16 %v5356
        %v6830 = vunpack.c.l.b16 %v5357
        %v6831 = vunpack.c.h.b16 %v5357
        %v6832 = vunpack.c.l.b16 %v5358
        %v6833 = vunpack.c.h.b16 %v5358
        %v6834 = vunpack.c.l.b16 %v5359
        %v6835 = vunpack.c.h.b16 %v5359
        %v6836 = vunpack.c.l.b16 %v5360
        %v6837 = vunpack.c.h.b16 %v5360
        %v6838 = vunpack.c.l.b16 %v5361
        %v6839 = vunpack.c.h.b16 %v5361
        %v6840 = vunpack.c.l.b16 %v5362
        %v6841 = vunpack.c.h.b16 %v5362
        %v6842 = vunpack.c.l.b16 %v5363
        %v6843 = vunpack.c.h.b16 %v5363
        %v6844 = vunpack.c.l.b16 %v5364
        %v6845 = vunpack.c.h.b16 %v5364
        %v6846 = vunpack.c.l.b16 %v5365
        %v6847 = vunpack.c.h.b16 %v5365
        %v6848 = vunpack.c.l.b16 %v5366
        %v6849 = vunpack.c.h.b16 %v5366
        %v6850 = vunpack.c.l.b16 %v5367
        %v6851 = vunpack.c.h.b16 %v5367
        %v6852 = vunpack.c.l.b16 %v5368
        %v6853 = vunpack.c.h.b16 %v5368
        %v6854 = vunpack.c.l.b16 %v5369
        %v6855 = vunpack.c.h.b16 %v5369
        %v6856 = vunpack.c.l.b16 %v5370
        %v6857 = vunpack.c.h.b16 %v5370
        %v6858 = vunpack.c.l.b16 %v5371
        %v6859 = vunpack.c.h.b16 %v5371
        %v6860 = vunpack.c.l.b16 %v5372
        %v6861 = vunpack.c.h.b16 %v5372
        %v6862 = vunpack.c.l.b16 %v5373
        %v6863 = vunpack.c.h.b16 %v5373
        %v6864 = vunpack.c.l.b16 %v5374
        %v6865 = vunpack.c.h.b16 %v5374
        %v6866 = vunpack.c.l.b16 %v5375
        %v6867 = vunpack.c.h.b16 %v5375
        %v6868 = vunpack.c.l.b16 %v5376
        %v6869 = vunpack.c.h.b16 %v5376
        %v6870 = vunpack.c.l.b16 %v5377
        %v6871 = vunpack.c.h.b16 %v5377
        %v6872 = vunpack.c.l.b16 %v5378
        %v6873 = vunpack.c.h.b16 %v5378
        %v6874 = vunpack.c.l.b16 %v5379
        %v6875 = vunpack.c.h.b16 %v5379
        %v6876 = vunpack.c.l.b16 %v5380
        %v6877 = vunpack.c.h.b16 %v5380
        %v6878 = vunpack.c.l.b16 %v5381
        %v6879 = vunpack.c.h.b16 %v5381
        %v6880 = vunpack.c.l.b16 %v5382
        %v6881 = vunpack.c.h.b16 %v5382
        %v6882 = vunpack.c.l.b16 %v5383
        %v6883 = vunpack.c.h.b16 %v5383
        %v6884 = vunpack.c.l.b16 %v5384
        %v6885 = vunpack.c.h.b16 %v5384
        %v6886 = vunpack.c.l.b16 %v5385
        %v6887 = vunpack.c.h.b16 %v5385
        %v6888 = vunpack.c.l.b16 %v5386
        %v6889 = vunpack.c.h.b16 %v5386
        %v6890 = vunpack.c.l.b16 %v5387
        %v6891 = vunpack.c.h.b16 %v5387
        %v6892 = vunpack.c.l.b16 %v5388
        %v6893 = vunpack.c.h.b16 %v5388
        %v6894 = vunpack.c.l.b16 %v5389
        %v6895 = vunpack.c.h.b16 %v5389
        %v6896 = vunpack.c.l.b16 %v5390
        %v6897 = vunpack.c.h.b16 %v5390
        %v6898 = vunpack.c.l.b16 %v5391
        %v6899 = vunpack.c.h.b16 %v5391
        %v6900 = vunpack.c.l.b16 %v5392
        %v6901 = vunpack.c.h.b16 %v5392
        %v6902 = vunpack.c.l.b16 %v5393
        %v6903 = vunpack.c.h.b16 %v5393
        %v6904 = vunpack.c.l.b16 %v5394
        %v6905 = vunpack.c.h.b16 %v5394
        %v6906 = vunpack.c.l.b16 %v5395
        %v6907 = vunpack.c.h.b16 %v5395
        %v6908 = vunpack.c.l.b16 %v5396
        %v6909 = vunpack.c.h.b16 %v5396
        %v6910 = vunpack.c.l.b16 %v5397
        %v6911 = vunpack.c.h.b16 %v5397
        %v6912 = vunpack.c.l.b16 %v5398
        %v6913 = vunpack.c.h.b16 %v5398
        %v6914 = vunpack.c.l.b16 %v5399
        %v6915 = vunpack.c.h.b16 %v5399
        %v6916 = vunpack.c.l.b16 %v5400
        %v6917 = vunpack.c.h.b16 %v5400
        %v6918 = vunpack.c.l.b16 %v5401
        %v6919 = vunpack.c.h.b16 %v5401
        %v6920 = vunpack.c.l.b16 %v5402
        %v6921 = vunpack.c.h.b16 %v5402
        %v6922 = vunpack.c.l.b16 %v5403
        %v6923 = vunpack.c.h.b16 %v5403
        %v6924 = vunpack.c.l.b16 %v5404
        %v6925 = vunpack.c.h.b16 %v5404
        %v6926 = vunpack.c.l.b16 %v5405
        %v6927 = vunpack.c.h.b16 %v5405
        %v6928 = vunpack.c.l.b16 %v5406
        %v6929 = vunpack.c.h.b16 %v5406
        %v6930 = vunpack.c.l.b16 %v5407
        %v6931 = vunpack.c.h.b16 %v5407
        %v6932 = vunpack.c.l.b16 %v5408
        %v6933 = vunpack.c.h.b16 %v5408
        %v6934 = vunpack.c.l.b16 %v5409
        %v6935 = vunpack.c.h.b16 %v5409
        %v6936 = vunpack.c.l.b16 %v5410
        %v6937 = vunpack.c.h.b16 %v5410
        %v6938 = vunpack.c.l.b16 %v5411
        %v6939 = vunpack.c.h.b16 %v5411
        %v6940 = vunpack.c.l.b16 %v5412
        %v6941 = vunpack.c.h.b16 %v5412
        %v6942 = vunpack.c.l.b16 %v5413
        %v6943 = vunpack.c.h.b16 %v5413
        %v6944 = vunpack.c.l.b16 %v5414
        %v6945 = vunpack.c.h.b16 %v5414
        %v6946 = vunpack.c.l.b16 %v5415
        %v6947 = vunpack.c.h.b16 %v5415
        %v6948 = vunpack.c.l.b16 %v5416
        %v6949 = vunpack.c.h.b16 %v5416
        %v6950 = vunpack.c.l.b16 %v5417
        %v6951 = vunpack.c.h.b16 %v5417
        %v6952 = vunpack.c.l.b16 %v5418
        %v6953 = vunpack.c.h.b16 %v5418
        %v6954 = vunpack.c.l.b16 %v5419
        %v6955 = vunpack.c.h.b16 %v5419
        %v6956 = vunpack.c.l.b16 %v5420
        %v6957 = vunpack.c.h.b16 %v5420
        %v6958 = vpack.c.b16 %v5942, %v5934
        %v6959 = vpack.c.b16 %v5943, %v5935
        %v6960 = vpack.c.b16 %v5944, %v5936
        %v6961 = vpack.c.b16 %v5945, %v5937
        %v6962 = vpack.c.b16 %v5946, %v5938
        %v6963 = vpack.c.b16 %v5947, %v5939
        %v6964 = vpack.c.b16 %v5948, %v5940
        %v6965 = vpack.c.b16 %v5949, %v5941
        %v6966 = vpack.c.b16 %v5958, %v5950
        %v6967 = vpack.c.b16 %v5959, %v5951
        %v6968 = vpack.c.b16 %v5960, %v5952
        %v6969 = vpack.c.b16 %v5961, %v5953
        %v6970 = vpack.c.b16 %v5962, %v5954
        %v6971 = vpack.c.b16 %v5963, %v5955
        %v6972 = vpack.c.b16 %v5964, %v5956
        %v6973 = vpack.c.b16 %v5965, %v5957
        %v6974 = vpack.c.b16 %v5974, %v5966
        %v6975 = vpack.c.b16 %v5975, %v5967
        %v6976 = vpack.c.b16 %v5976, %v5968
        %v6977 = vpack.c.b16 %v5977, %v5969
        %v6978 = vpack.c.b16 %v5978, %v5970
        %v6979 = vpack.c.b16 %v5979, %v5971
        %v6980 = vpack.c.b16 %v5980, %v5972
        %v6981 = vpack.c.b16 %v5981, %v5973
        %v6982 = vpack.c.b16 %v5990, %v5982
        %v6983 = vpack.c.b16 %v5991, %v5983
        %v6984 = vpack.c.b16 %v5992, %v5984
        %v6985 = vpack.c.b16 %v5993, %v5985
        %v6986 = vpack.c.b16 %v5994, %v5986
        %v6987 = vpack.c.b16 %v5995, %v5987
        %v6988 = vpack.c.b16 %v5996, %v5988
        %v6989 = vpack.c.b16 %v5997, %v5989
        %v6990 = vpack.c.b16 %v6006, %v5998
        %v6991 = vpack.c.b16 %v6007, %v5999
        %v6992 = vpack.c.b16 %v6008, %v6000
        %v6993 = vpack.c.b16 %v6009, %v6001
        %v6994 = vpack.c.b16 %v6010, %v6002
        %v6995 = vpack.c.b16 %v6011, %v6003
        %v6996 = vpack.c.b16 %v6012, %v6004
        %v6997 = vpack.c.b16 %v6013, %v6005
        %v6998 = vpack.c.b16 %v6022, %v6014
        %v6999 = vpack.c.b16 %v6023, %v6015
        %v7000 = vpack.c.b16 %v6024, %v6016
        %v7001 = vpack.c.b16 %v6025, %v6017
        %v7002 = vpack.c.b16 %v6026, %v6018
        %v7003 = vpack.c.b16 %v6027, %v6019
        %v7004 = vpack.c.b16 %v6028, %v6020
        %v7005 = vpack.c.b16 %v6029, %v6021
        %v7006 = vpack.c.b16 %v6038, %v6030
        %v7007 = vpack.c.b16 %v6039, %v6031
        %v7008 = vpack.c.b16 %v6040, %v6032
        %v7009 = vpack.c.b16 %v6041, %v6033
        %v7010 = vpack.c.b16 %v6042, %v6034
        %v7011 = vpack.c.b16 %v6043, %v6035
        %v7012 = vpack.c.b16 %v6044, %v6036
        %v7013 = vpack.c.b16 %v6045, %v6037
        %v7014 = vpack.c.b16 %v6054, %v6046
        %v7015 = vpack.c.b16 %v6055, %v6047
        %v7016 = vpack.c.b16 %v6056, %v6048
        %v7017 = vpack.c.b16 %v6057, %v6049
        %v7018 = vpack.c.b16 %v6058, %v6050
        %v7019 = vpack.c.b16 %v6059, %v6051
        %v7020 = vpack.c.b16 %v6060, %v6052
        %v7021 = vpack.c.b16 %v6061, %v6053
        %v7022 = vpack.c.b16 %v6070, %v6062
        %v7023 = vpack.c.b16 %v6071, %v6063
        %v7024 = vpack.c.b16 %v6072, %v6064
        %v7025 = vpack.c.b16 %v6073, %v6065
        %v7026 = vpack.c.b16 %v6074, %v6066
        %v7027 = vpack.c.b16 %v6075, %v6067
        %v7028 = vpack.c.b16 %v6076, %v6068
        %v7029 = vpack.c.b16 %v6077, %v6069
        %v7030 = vpack.c.b16 %v6086, %v6078
        %v7031 = vpack.c.b16 %v6087, %v6079
        %v7032 = vpack.c.b16 %v6088, %v6080
        %v7033 = vpack.c.b16 %v6089, %v6081
        %v7034 = vpack.c.b16 %v6090, %v6082
        %v7035 = vpack.c.b16 %v6091, %v6083
        %v7036 = vpack.c.b16 %v6092, %v6084
        %v7037 = vpack.c.b16 %v6093, %v6085
        %v7038 = vpack.c.b16 %v6102, %v6094
        %v7039 = vpack.c.b16 %v6103, %v6095
        %v7040 = vpack.c.b16 %v6104, %v6096
        %v7041 = vpack.c.b16 %v6105, %v6097
        %v7042 = vpack.c.b16 %v6106, %v6098
        %v7043 = vpack.c.b16 %v6107, %v6099
        %v7044 = vpack.c.b16 %v6108, %v6100
        %v7045 = vpack.c.b16 %v6109, %v6101
        %v7046 = vpack.c.b16 %v6118, %v6110
        %v7047 = vpack.c.b16 %v6119, %v6111
        %v7048 = vpack.c.b16 %v6120, %v6112
        %v7049 = vpack.c.b16 %v6121, %v6113
        %v7050 = vpack.c.b16 %v6122, %v6114
        %v7051 = vpack.c.b16 %v6123, %v6115
        %v7052 = vpack.c.b16 %v6124, %v6116
        %v7053 = vpack.c.b16 %v6125, %v6117
        %v7054 = vpack.c.b16 %v6134, %v6126
        %v7055 = vpack.c.b16 %v6135, %v6127
        %v7056 = vpack.c.b16 %v6136, %v6128
        %v7057 = vpack.c.b16 %v6137, %v6129
        %v7058 = vpack.c.b16 %v6138, %v6130
        %v7059 = vpack.c.b16 %v6139, %v6131
        %v7060 = vpack.c.b16 %v6140, %v6132
        %v7061 = vpack.c.b16 %v6141, %v6133
        %v7062 = vpack.c.b16 %v6150, %v6142
        %v7063 = vpack.c.b16 %v6151, %v6143
        %v7064 = vpack.c.b16 %v6152, %v6144
        %v7065 = vpack.c.b16 %v6153, %v6145
        %v7066 = vpack.c.b16 %v6154, %v6146
        %v7067 = vpack.c.b16 %v6155, %v6147
        %v7068 = vpack.c.b16 %v6156, %v6148
        %v7069 = vpack.c.b16 %v6157, %v6149
        %v7070 = vpack.c.b16 %v6166, %v6158
        %v7071 = vpack.c.b16 %v6167, %v6159
        %v7072 = vpack.c.b16 %v6168, %v6160
        %v7073 = vpack.c.b16 %v6169, %v6161
        %v7074 = vpack.c.b16 %v6170, %v6162
        %v7075 = vpack.c.b16 %v6171, %v6163
        %v7076 = vpack.c.b16 %v6172, %v6164
        %v7077 = vpack.c.b16 %v6173, %v6165
        %v7078 = vpack.c.b16 %v6182, %v6174
        %v7079 = vpack.c.b16 %v6183, %v6175
        %v7080 = vpack.c.b16 %v6184, %v6176
        %v7081 = vpack.c.b16 %v6185, %v6177
        %v7082 = vpack.c.b16 %v6186, %v6178
        %v7083 = vpack.c.b16 %v6187, %v6179
        %v7084 = vpack.c.b16 %v6188, %v6180
        %v7085 = vpack.c.b16 %v6189, %v6181
        %v7086 = vpack.c.b16 %v6198, %v6190
        %v7087 = vpack.c.b16 %v6199, %v6191
        %v7088 = vpack.c.b16 %v6200, %v6192
        %v7089 = vpack.c.b16 %v6201, %v6193
        %v7090 = vpack.c.b16 %v6202, %v6194
        %v7091 = vpack.c.b16 %v6203, %v6195
        %v7092 = vpack.c.b16 %v6204, %v6196
        %v7093 = vpack.c.b16 %v6205, %v6197
        %v7094 = vpack.c.b16 %v6214, %v6206
        %v7095 = vpack.c.b16 %v6215, %v6207
        %v7096 = vpack.c.b16 %v6216, %v6208
        %v7097 = vpack.c.b16 %v6217, %v6209
        %v7098 = vpack.c.b16 %v6218, %v6210
        %v7099 = vpack.c.b16 %v6219, %v6211
        %v7100 = vpack.c.b16 %v6220, %v6212
        %v7101 = vpack.c.b16 %v6221, %v6213
        %v7102 = vpack.c.b16 %v6230, %v6222
        %v7103 = vpack.c.b16 %v6231, %v6223
        %v7104 = vpack.c.b16 %v6232, %v6224
        %v7105 = vpack.c.b16 %v6233, %v6225
        %v7106 = vpack.c.b16 %v6234, %v6226
        %v7107 = vpack.c.b16 %v6235, %v6227
        %v7108 = vpack.c.b16 %v6236, %v6228
        %v7109 = vpack.c.b16 %v6237, %v6229
        %v7110 = vpack.c.b16 %v6246, %v6238
        %v7111 = vpack.c.b16 %v6247, %v6239
        %v7112 = vpack.c.b16 %v6248, %v6240
        %v7113 = vpack.c.b16 %v6249, %v6241
        %v7114 = vpack.c.b16 %v6250, %v6242
        %v7115 = vpack.c.b16 %v6251, %v6243
        %v7116 = vpack.c.b16 %v6252, %v6244
        %v7117 = vpack.c.b16 %v6253, %v6245
        %v7118 = vpack.c.b16 %v6262, %v6254
        %v7119 = vpack.c.b16 %v6263, %v6255
        %v7120 = vpack.c.b16 %v6264, %v6256
        %v7121 = vpack.c.b16 %v6265, %v6257
        %v7122 = vpack.c.b16 %v6266, %v6258
        %v7123 = vpack.c.b16 %v6267, %v6259
        %v7124 = vpack.c.b16 %v6268, %v6260
        %v7125 = vpack.c.b16 %v6269, %v6261
        %v7126 = vpack.c.b16 %v6278, %v6270
        %v7127 = vpack.c.b16 %v6279, %v6271
        %v7128 = vpack.c.b16 %v6280, %v6272
        %v7129 = vpack.c.b16 %v6281, %v6273
        %v7130 = vpack.c.b16 %v6282, %v6274
        %v7131 = vpack.c.b16 %v6283, %v6275
        %v7132 = vpack.c.b16 %v6284, %v6276
        %v7133 = vpack.c.b16 %v6285, %v6277
        %v7134 = vpack.c.b16 %v6294, %v6286
        %v7135 = vpack.c.b16 %v6295, %v6287
        %v7136 = vpack.c.b16 %v6296, %v6288
        %v7137 = vpack.c.b16 %v6297, %v6289
        %v7138 = vpack.c.b16 %v6298, %v6290
        %v7139 = vpack.c.b16 %v6299, %v6291
        %v7140 = vpack.c.b16 %v6300, %v6292
        %v7141 = vpack.c.b16 %v6301, %v6293
        %v7142 = vpack.c.b16 %v6310, %v6302
        %v7143 = vpack.c.b16 %v6311, %v6303
        %v7144 = vpack.c.b16 %v6312, %v6304
        %v7145 = vpack.c.b16 %v6313, %v6305
        %v7146 = vpack.c.b16 %v6314, %v6306
        %v7147 = vpack.c.b16 %v6315, %v6307
        %v7148 = vpack.c.b16 %v6316, %v6308
        %v7149 = vpack.c.b16 %v6317, %v6309
        %v7150 = vpack.c.b16 %v6326, %v6318
        %v7151 = vpack.c.b16 %v6327, %v6319
        %v7152 = vpack.c.b16 %v6328, %v6320
        %v7153 = vpack.c.b16 %v6329, %v6321
        %v7154 = vpack.c.b16 %v6330, %v6322
        %v7155 = vpack.c.b16 %v6331, %v6323
        %v7156 = vpack.c.b16 %v6332, %v6324
        %v7157 = vpack.c.b16 %v6333, %v6325
        %v7158 = vpack.c.b16 %v6342, %v6334
        %v7159 = vpack.c.b16 %v6343, %v6335
        %v7160 = vpack.c.b16 %v6344, %v6336
        %v7161 = vpack.c.b16 %v6345, %v6337
        %v7162 = vpack.c.b16 %v6346, %v6338
        %v7163 = vpack.c.b16 %v6347, %v6339
        %v7164 = vpack.c.b16 %v6348, %v6340
        %v7165 = vpack.c.b16 %v6349, %v6341
        %v7166 = vpack.c.b16 %v6358, %v6350
        %v7167 = vpack.c.b16 %v6359, %v6351
        %v7168 = vpack.c.b16 %v6360, %v6352
        %v7169 = vpack.c.b16 %v6361, %v6353
        %v7170 = vpack.c.b16 %v6362, %v6354
        %v7171 = vpack.c.b16 %v6363, %v6355
        %v7172 = vpack.c.b16 %v6364, %v6356
        %v7173 = vpack.c.b16 %v6365, %v6357
        %v7174 = vpack.c.b16 %v6374, %v6366
        %v7175 = vpack.c.b16 %v6375, %v6367
        %v7176 = vpack.c.b16 %v6376, %v6368
        %v7177 = vpack.c.b16 %v6377, %v6369
        %v7178 = vpack.c.b16 %v6378, %v6370
        %v7179 = vpack.c.b16 %v6379, %v6371
        %v7180 = vpack.c.b16 %v6380, %v6372
        %v7181 = vpack.c.b16 %v6381, %v6373
        %v7182 = vpack.c.b16 %v6390, %v6382
        %v7183 = vpack.c.b16 %v6391, %v6383
        %v7184 = vpack.c.b16 %v6392, %v6384
        %v7185 = vpack.c.b16 %v6393, %v6385
        %v7186 = vpack.c.b16 %v6394, %v6386
        %v7187 = vpack.c.b16 %v6395, %v6387
        %v7188 = vpack.c.b16 %v6396, %v6388
        %v7189 = vpack.c.b16 %v6397, %v6389
        %v7190 = vpack.c.b16 %v6406, %v6398
        %v7191 = vpack.c.b16 %v6407, %v6399
        %v7192 = vpack.c.b16 %v6408, %v6400
        %v7193 = vpack.c.b16 %v6409, %v6401
        %v7194 = vpack.c.b16 %v6410, %v6402
        %v7195 = vpack.c.b16 %v6411, %v6403
        %v7196 = vpack.c.b16 %v6412, %v6404
        %v7197 = vpack.c.b16 %v6413, %v6405
        %v7198 = vpack.c.b16 %v6422, %v6414
        %v7199 = vpack.c.b16 %v6423, %v6415
        %v7200 = vpack.c.b16 %v6424, %v6416
        %v7201 = vpack.c.b16 %v6425, %v6417
        %v7202 = vpack.c.b16 %v6426, %v6418
        %v7203 = vpack.c.b16 %v6427, %v6419
        %v7204 = vpack.c.b16 %v6428, %v6420
        %v7205 = vpack.c.b16 %v6429, %v6421
        %v7206 = vpack.c.b16 %v6438, %v6430
        %v7207 = vpack.c.b16 %v6439, %v6431
        %v7208 = vpack.c.b16 %v6440, %v6432
        %v7209 = vpack.c.b16 %v6441, %v6433
        %v7210 = vpack.c.b16 %v6442, %v6434
        %v7211 = vpack.c.b16 %v6443, %v6435
        %v7212 = vpack.c.b16 %v6444, %v6436
        %v7213 = vpack.c.b16 %v6445, %v6437
        %v7214 = vpack.c.b16 %v6454, %v6446
        %v7215 = vpack.c.b16 %v6455, %v6447
        %v7216 = vpack.c.b16 %v6456, %v6448
        %v7217 = vpack.c.b16 %v6457, %v6449
        %v7218 = vpack.c.b16 %v6458, %v6450
        %v7219 = vpack.c.b16 %v6459, %v6451
        %v7220 = vpack.c.b16 %v6460, %v6452
        %v7221 = vpack.c.b16 %v6461, %v6453
        %v7222 = vpack.c.b16 %v6470, %v6462
        %v7223 = vpack.c.b16 %v6471, %v6463
        %v7224 = vpack.c.b16 %v6472, %v6464
        %v7225 = vpack.c.b16 %v6473, %v6465
        %v7226 = vpack.c.b16 %v6474, %v6466
        %v7227 = vpack.c.b16 %v6475, %v6467
        %v7228 = vpack.c.b16 %v6476, %v6468
        %v7229 = vpack.c.b16 %v6477, %v6469
        %v7230 = vpack.c.b16 %v6486, %v6478
        %v7231 = vpack.c.b16 %v6487, %v6479
        %v7232 = vpack.c.b16 %v6488, %v6480
        %v7233 = vpack.c.b16 %v6489, %v6481
        %v7234 = vpack.c.b16 %v6490, %v6482
        %v7235 = vpack.c.b16 %v6491, %v6483
        %v7236 = vpack.c.b16 %v6492, %v6484
        %v7237 = vpack.c.b16 %v6493, %v6485
        %v7238 = vpack.c.b16 %v6502, %v6494
        %v7239 = vpack.c.b16 %v6503, %v6495
        %v7240 = vpack.c.b16 %v6504, %v6496
        %v7241 = vpack.c.b16 %v6505, %v6497
        %v7242 = vpack.c.b16 %v6506, %v6498
        %v7243 = vpack.c.b16 %v6507, %v6499
        %v7244 = vpack.c.b16 %v6508, %v6500
        %v7245 = vpack.c.b16 %v6509, %v6501
        %v7246 = vpack.c.b16 %v6518, %v6510
        %v7247 = vpack.c.b16 %v6519, %v6511
        %v7248 = vpack.c.b16 %v6520, %v6512
        %v7249 = vpack.c.b16 %v6521, %v6513
        %v7250 = vpack.c.b16 %v6522, %v6514
        %v7251 = vpack.c.b16 %v6523, %v6515
        %v7252 = vpack.c.b16 %v6524, %v6516
        %v7253 = vpack.c.b16 %v6525, %v6517
        %v7254 = vpack.c.b16 %v6534, %v6526
        %v7255 = vpack.c.b16 %v6535, %v6527
        %v7256 = vpack.c.b16 %v6536, %v6528
        %v7257 = vpack.c.b16 %v6537, %v6529
        %v7258 = vpack.c.b16 %v6538, %v6530
        %v7259 = vpack.c.b16 %v6539, %v6531
        %v7260 = vpack.c.b16 %v6540, %v6532
        %v7261 = vpack.c.b16 %v6541, %v6533
        %v7262 = vpack.c.b16 %v6550, %v6542
        %v7263 = vpack.c.b16 %v6551, %v6543
        %v7264 = vpack.c.b16 %v6552, %v6544
        %v7265 = vpack.c.b16 %v6553, %v6545
        %v7266 = vpack.c.b16 %v6554, %v6546
        %v7267 = vpack.c.b16 %v6555, %v6547
        %v7268 = vpack.c.b16 %v6556, %v6548
        %v7269 = vpack.c.b16 %v6557, %v6549
        %v7270 = vpack.c.b16 %v6566, %v6558
        %v7271 = vpack.c.b16 %v6567, %v6559
        %v7272 = vpack.c.b16 %v6568, %v6560
        %v7273 = vpack.c.b16 %v6569, %v6561
        %v7274 = vpack.c.b16 %v6570, %v6562
        %v7275 = vpack.c.b16 %v6571, %v6563
        %v7276 = vpack.c.b16 %v6572, %v6564
        %v7277 = vpack.c.b16 %v6573, %v6565
        %v7278 = vpack.c.b16 %v6582, %v6574
        %v7279 = vpack.c.b16 %v6583, %v6575
        %v7280 = vpack.c.b16 %v6584, %v6576
        %v7281 = vpack.c.b16 %v6585, %v6577
        %v7282 = vpack.c.b16 %v6586, %v6578
        %v7283 = vpack.c.b16 %v6587, %v6579
        %v7284 = vpack.c.b16 %v6588, %v6580
        %v7285 = vpack.c.b16 %v6589, %v6581
        %v7286 = vpack.c.b16 %v6598, %v6590
        %v7287 = vpack.c.b16 %v6599, %v6591
        %v7288 = vpack.c.b16 %v6600, %v6592
        %v7289 = vpack.c.b16 %v6601, %v6593
        %v7290 = vpack.c.b16 %v6602, %v6594
        %v7291 = vpack.c.b16 %v6603, %v6595
        %v7292 = vpack.c.b16 %v6604, %v6596
        %v7293 = vpack.c.b16 %v6605, %v6597
        %v7294 = vpack.c.b16 %v6614, %v6606
        %v7295 = vpack.c.b16 %v6615, %v6607
        %v7296 = vpack.c.b16 %v6616, %v6608
        %v7297 = vpack.c.b16 %v6617, %v6609
        %v7298 = vpack.c.b16 %v6618, %v6610
        %v7299 = vpack.c.b16 %v6619, %v6611
        %v7300 = vpack.c.b16 %v6620, %v6612
        %v7301 = vpack.c.b16 %v6621, %v6613
        %v7302 = vpack.c.b16 %v6630, %v6622
        %v7303 = vpack.c.b16 %v6631, %v6623
        %v7304 = vpack.c.b16 %v6632, %v6624
        %v7305 = vpack.c.b16 %v6633, %v6625
        %v7306 = vpack.c.b16 %v6634, %v6626
        %v7307 = vpack.c.b16 %v6635, %v6627
        %v7308 = vpack.c.b16 %v6636, %v6628
        %v7309 = vpack.c.b16 %v6637, %v6629
        %v7310 = vpack.c.b16 %v6646, %v6638
        %v7311 = vpack.c.b16 %v6647, %v6639
        %v7312 = vpack.c.b16 %v6648, %v6640
        %v7313 = vpack.c.b16 %v6649, %v6641
        %v7314 = vpack.c.b16 %v6650, %v6642
        %v7315 = vpack.c.b16 %v6651, %v6643
        %v7316 = vpack.c.b16 %v6652, %v6644
        %v7317 = vpack.c.b16 %v6653, %v6645
        %v7318 = vpack.c.b16 %v6662, %v6654
        %v7319 = vpack.c.b16 %v6663, %v6655
        %v7320 = vpack.c.b16 %v6664, %v6656
        %v7321 = vpack.c.b16 %v6665, %v6657
        %v7322 = vpack.c.b16 %v6666, %v6658
        %v7323 = vpack.c.b16 %v6667, %v6659
        %v7324 = vpack.c.b16 %v6668, %v6660
        %v7325 = vpack.c.b16 %v6669, %v6661
        %v7326 = vpack.c.b16 %v6678, %v6670
        %v7327 = vpack.c.b16 %v6679, %v6671
        %v7328 = vpack.c.b16 %v6680, %v6672
        %v7329 = vpack.c.b16 %v6681, %v6673
        %v7330 = vpack.c.b16 %v6682, %v6674
        %v7331 = vpack.c.b16 %v6683, %v6675
        %v7332 = vpack.c.b16 %v6684, %v6676
        %v7333 = vpack.c.b16 %v6685, %v6677
        %v7334 = vpack.c.b16 %v6694, %v6686
        %v7335 = vpack.c.b16 %v6695, %v6687
        %v7336 = vpack.c.b16 %v6696, %v6688
        %v7337 = vpack.c.b16 %v6697, %v6689
        %v7338 = vpack.c.b16 %v6698, %v6690
        %v7339 = vpack.c.b16 %v6699, %v6691
        %v7340 = vpack.c.b16 %v6700, %v6692
        %v7341 = vpack.c.b16 %v6701, %v6693
        %v7342 = vpack.c.b16 %v6710, %v6702
        %v7343 = vpack.c.b16 %v6711, %v6703
        %v7344 = vpack.c.b16 %v6712, %v6704
        %v7345 = vpack.c.b16 %v6713, %v6705
        %v7346 = vpack.c.b16 %v6714, %v6706
        %v7347 = vpack.c.b16 %v6715, %v6707
        %v7348 = vpack.c.b16 %v6716, %v6708
        %v7349 = vpack.c.b16 %v6717, %v6709
        %v7350 = vpack.c.b16 %v6726, %v6718
        %v7351 = vpack.c.b16 %v6727, %v6719
        %v7352 = vpack.c.b16 %v6728, %v6720
        %v7353 = vpack.c.b16 %v6729, %v6721
        %v7354 = vpack.c.b16 %v6730, %v6722
        %v7355 = vpack.c.b16 %v6731, %v6723
        %v7356 = vpack.c.b16 %v6732, %v6724
        %v7357 = vpack.c.b16 %v6733, %v6725
        %v7358 = vpack.c.b16 %v6742, %v6734
        %v7359 = vpack.c.b16 %v6743, %v6735
        %v7360 = vpack.c.b16 %v6744, %v6736
        %v7361 = vpack.c.b16 %v6745, %v6737
        %v7362 = vpack.c.b16 %v6746, %v6738
        %v7363 = vpack.c.b16 %v6747, %v6739
        %v7364 = vpack.c.b16 %v6748, %v6740
        %v7365 = vpack.c.b16 %v6749, %v6741
        %v7366 = vpack.c.b16 %v6758, %v6750
        %v7367 = vpack.c.b16 %v6759, %v6751
        %v7368 = vpack.c.b16 %v6760, %v6752
        %v7369 = vpack.c.b16 %v6761, %v6753
        %v7370 = vpack.c.b16 %v6762, %v6754
        %v7371 = vpack.c.b16 %v6763, %v6755
        %v7372 = vpack.c.b16 %v6764, %v6756
        %v7373 = vpack.c.b16 %v6765, %v6757
        %v7374 = vpack.c.b16 %v6774, %v6766
        %v7375 = vpack.c.b16 %v6775, %v6767
        %v7376 = vpack.c.b16 %v6776, %v6768
        %v7377 = vpack.c.b16 %v6777, %v6769
        %v7378 = vpack.c.b16 %v6778, %v6770
        %v7379 = vpack.c.b16 %v6779, %v6771
        %v7380 = vpack.c.b16 %v6780, %v6772
        %v7381 = vpack.c.b16 %v6781, %v6773
        %v7382 = vpack.c.b16 %v6790, %v6782
        %v7383 = vpack.c.b16 %v6791, %v6783
        %v7384 = vpack.c.b16 %v6792, %v6784
        %v7385 = vpack.c.b16 %v6793, %v6785
        %v7386 = vpack.c.b16 %v6794, %v6786
        %v7387 = vpack.c.b16 %v6795, %v6787
        %v7388 = vpack.c.b16 %v6796, %v6788
        %v7389 = vpack.c.b16 %v6797, %v6789
        %v7390 = vpack.c.b16 %v6806, %v6798
        %v7391 = vpack.c.b16 %v6807, %v6799
        %v7392 = vpack.c.b16 %v6808, %v6800
        %v7393 = vpack.c.b16 %v6809, %v6801
        %v7394 = vpack.c.b16 %v6810, %v6802
        %v7395 = vpack.c.b16 %v6811, %v6803
        %v7396 = vpack.c.b16 %v6812, %v6804
        %v7397 = vpack.c.b16 %v6813, %v6805
        %v7398 = vpack.c.b16 %v6822, %v6814
        %v7399 = vpack.c.b16 %v6823, %v6815
        %v7400 = vpack.c.b16 %v6824, %v6816
        %v7401 = vpack.c.b16 %v6825, %v6817
        %v7402 = vpack.c.b16 %v6826, %v6818
        %v7403 = vpack.c.b16 %v6827, %v6819
        %v7404 = vpack.c.b16 %v6828, %v6820
        %v7405 = vpack.c.b16 %v6829, %v6821
        %v7406 = vpack.c.b16 %v6838, %v6830
        %v7407 = vpack.c.b16 %v6839, %v6831
        %v7408 = vpack.c.b16 %v6840, %v6832
        %v7409 = vpack.c.b16 %v6841, %v6833
        %v7410 = vpack.c.b16 %v6842, %v6834
        %v7411 = vpack.c.b16 %v6843, %v6835
        %v7412 = vpack.c.b16 %v6844, %v6836
        %v7413 = vpack.c.b16 %v6845, %v6837
        %v7414 = vpack.c.b16 %v6854, %v6846
        %v7415 = vpack.c.b16 %v6855, %v6847
        %v7416 = vpack.c.b16 %v6856, %v6848
        %v7417 = vpack.c.b16 %v6857, %v6849
        %v7418 = vpack.c.b16 %v6858, %v6850
        %v7419 = vpack.c.b16 %v6859, %v6851
        %v7420 = vpack.c.b16 %v6860, %v6852
        %v7421 = vpack.c.b16 %v6861, %v6853
        %v7422 = vpack.c.b16 %v6870, %v6862
        %v7423 = vpack.c.b16 %v6871, %v6863
        %v7424 = vpack.c.b16 %v6872, %v6864
        %v7425 = vpack.c.b16 %v6873, %v6865
        %v7426 = vpack.c.b16 %v6874, %v6866
        %v7427 = vpack.c.b16 %v6875, %v6867
        %v7428 = vpack.c.b16 %v6876, %v6868
        %v7429 = vpack.c.b16 %v6877, %v6869
        %v7430 = vpack.c.b16 %v6886, %v6878
        %v7431 = vpack.c.b16 %v6887, %v6879
        %v7432 = vpack.c.b16 %v6888, %v6880
        %v7433 = vpack.c.b16 %v6889, %v6881
        %v7434 = vpack.c.b16 %v6890, %v6882
        %v7435 = vpack.c.b16 %v6891, %v6883
        %v7436 = vpack.c.b16 %v6892, %v6884
        %v7437 = vpack.c.b16 %v6893, %v6885
        %v7438 = vpack.c.b16 %v6902, %v6894
        %v7439 = vpack.c.b16 %v6903, %v6895
        %v7440 = vpack.c.b16 %v6904, %v6896
        %v7441 = vpack.c.b16 %v6905, %v6897
        %v7442 = vpack.c.b16 %v6906, %v6898
        %v7443 = vpack.c.b16 %v6907, %v6899
        %v7444 = vpack.c.b16 %v6908, %v6900
        %v7445 = vpack.c.b16 %v6909, %v6901
        %v7446 = vpack.c.b16 %v6918, %v6910
        %v7447 = vpack.c.b16 %v6919, %v6911
        %v7448 = vpack.c.b16 %v6920, %v6912
        %v7449 = vpack.c.b16 %v6921, %v6913
        %v7450 = vpack.c.b16 %v6922, %v6914
        %v7451 = vpack.c.b16 %v6923, %v6915
        %v7452 = vpack.c.b16 %v6924, %v6916
        %v7453 = vpack.c.b16 %v6925, %v6917
        %v7454 = vpack.c.b16 %v6934, %v6926
        %v7455 = vpack.c.b16 %v6935, %v6927
        %v7456 = vpack.c.b16 %v6936, %v6928
        %v7457 = vpack.c.b16 %v6937, %v6929
        %v7458 = vpack.c.b16 %v6938, %v6930
        %v7459 = vpack.c.b16 %v6939, %v6931
        %v7460 = vpack.c.b16 %v6940, %v6932
        %v7461 = vpack.c.b16 %v6941, %v6933
        %v7462 = vpack.c.b16 %v6950, %v6942
        %v7463 = vpack.c.b16 %v6951, %v6943
        %v7464 = vpack.c.b16 %v6952, %v6944
        %v7465 = vpack.c.b16 %v6953, %v6945
        %v7466 = vpack.c.b16 %v6954, %v6946
        %v7467 = vpack.c.b16 %v6955, %v6947
        %v7468 = vpack.c.b16 %v6956, %v6948
        %v7469 = vpack.c.b16 %v6957, %v6949
        %v7983 = vlaneseq
        %v7984 = vshrl.u32 %v7983, 7
        %v7985 = vsub.s32 0, %v7984
        %v7986 = vrot.slane %v5421, %v7985
        %v7987 = vlaneseq
        %v7988 = vshrl.u32 %v7987, 7
        %v7989 = vsub.s32 1, %v7988
        %v7990 = vrot.slane %v5421, %v7989
        %v7991 = vlaneseq
        %v7992 = vshrl.u32 %v7991, 7
        %v7993 = vsub.s32 2, %v7992
        %v7994 = vrot.slane %v5421, %v7993
        %v7995 = vlaneseq
        %v7996 = vshrl.u32 %v7995, 7
        %v7997 = vsub.s32 3, %v7996
        %v7998 = vrot.slane %v5421, %v7997
        %v7999 = vlaneseq
        %v8000 = vshrl.u32 %v7999, 7
        %v8001 = vsub.s32 4, %v8000
        %v8002 = vrot.slane %v5421, %v8001
        %v8003 = vlaneseq
        %v8004 = vshrl.u32 %v8003, 7
        %v8005 = vsub.s32 5, %v8004
        %v8006 = vrot.slane %v5421, %v8005
        %v8007 = vlaneseq
        %v8008 = vshrl.u32 %v8007, 7
        %v8009 = vsub.s32 6, %v8008
        %v8010 = vrot.slane %v5421, %v8009
        %v8011 = vlaneseq
        %v8012 = vshrl.u32 %v8011, 7
        %v8013 = vsub.s32 7, %v8012
        %v8014 = vrot.slane %v5421, %v8013
        %8023 = vmatprep.subr.bf16.mxu0 %v7015
        %8024 = vmatpush1.bf16.msra.mxu0 %v7014
        %8025 = vmatprep.subr.bf16.mxu0 %v7007
        %8026 = vmatpush1.bf16.msra.mxu0 %v7006
        %8027 = vmatprep.subr.bf16.mxu0 %v6999
        %8028 = vmatpush1.bf16.msra.mxu0 %v6998
        %8029 = vmatprep.subr.bf16.mxu0 %v6991
        %8030 = vmatpush1.bf16.msra.mxu0 %v6990
        %8031 = vmatprep.subr.bf16.mxu0 %v6983
        %8032 = vmatpush1.bf16.msra.mxu0 %v6982
        %8033 = vmatprep.subr.bf16.mxu0 %v6975
        %8034 = vmatpush1.bf16.msra.mxu0 %v6974
        %8035 = vmatprep.subr.bf16.mxu0 %v6967
        %8036 = vmatpush1.bf16.msra.mxu0 %v6966
        %8037 = vmatprep.subr.bf16.mxu0 %v6959
        %8038 = vmatpush1.bf16.msra.mxu0 %v6958
        %8039 = vmatprep.subr.bf16.mxu0 %v7079
        %8040 = vmatpush2.bf16.msra.mxu0 %v7078
        %8041 = vmatprep.subr.bf16.mxu0 %v7071
        %8042 = vmatpush2.bf16.msra.mxu0 %v7070
        %8043 = vmatprep.subr.bf16.mxu0 %v7063
        %8044 = vmatpush2.bf16.msra.mxu0 %v7062
        %8045 = vmatprep.subr.bf16.mxu0 %v7055
        %8046 = vmatpush2.bf16.msra.mxu0 %v7054
        %8047 = vmatprep.subr.bf16.mxu0 %v7047
        %8048 = vmatpush2.bf16.msra.mxu0 %v7046
        %8049 = vmatprep.subr.bf16.mxu0 %v7039
        %8050 = vmatpush2.bf16.msra.mxu0 %v7038
        %8051 = vmatprep.subr.bf16.mxu0 %v7031
        %8052 = vmatpush2.bf16.msra.mxu0 %v7030
        %8053 = vmatprep.subr.bf16.mxu0 %v7023
        %8054 = vmatpush2.bf16.msra.mxu0 %v7022
        %8055 = vmatprep.mubr.bf16.mxu0 %v4902
        %8056 = vmatmul.mubr.bf16.gmra.mxu0 %v4901
        %v8057 = vpop.f32.mrf.mxu0
        %v8058 = vadd.f32 %v7986, %v8057
        %v8059 = vpop.f32.mrf.mxu0
        %v8060 = vadd.f32 %v7990, %v8059
        %v8061 = vpop.f32.mrf.mxu0
        %v8062 = vpop.f32.mrf.mxu0
        %8063 = vdwg.mxu0
        %8064 = vmatprep.subr.bf16.mxu0 %v7143
        %8065 = vmatpush1.bf16.msra.mxu0 %v7142
        %8066 = vmatprep.subr.bf16.mxu0 %v7135
        %8067 = vmatpush1.bf16.msra.mxu0 %v7134
        %8068 = vmatprep.subr.bf16.mxu0 %v7127
        %8069 = vmatpush1.bf16.msra.mxu0 %v7126
        %8070 = vmatprep.subr.bf16.mxu0 %v7119
        %8071 = vmatpush1.bf16.msra.mxu0 %v7118
        %8072 = vmatprep.subr.bf16.mxu0 %v7111
        %8073 = vmatpush1.bf16.msra.mxu0 %v7110
        %8074 = vmatprep.subr.bf16.mxu0 %v7103
        %8075 = vmatpush1.bf16.msra.mxu0 %v7102
        %8076 = vmatprep.subr.bf16.mxu0 %v7095
        %8077 = vmatpush1.bf16.msra.mxu0 %v7094
        %8078 = vmatprep.subr.bf16.mxu0 %v7087
        %8079 = vmatpush1.bf16.msra.mxu0 %v7086
        %8080 = vmatprep.subr.bf16.mxu0 %v7207
        %8081 = vmatpush2.bf16.msra.mxu0 %v7206
        %8082 = vmatprep.subr.bf16.mxu0 %v7199
        %8083 = vmatpush2.bf16.msra.mxu0 %v7198
        %8084 = vmatprep.subr.bf16.mxu0 %v7191
        %8085 = vmatpush2.bf16.msra.mxu0 %v7190
        %8086 = vmatprep.subr.bf16.mxu0 %v7183
        %8087 = vmatpush2.bf16.msra.mxu0 %v7182
        %8088 = vmatprep.subr.bf16.mxu0 %v7175
        %8089 = vmatpush2.bf16.msra.mxu0 %v7174
        %8090 = vmatprep.subr.bf16.mxu0 %v7167
        %8091 = vmatpush2.bf16.msra.mxu0 %v7166
        %8092 = vmatprep.subr.bf16.mxu0 %v7159
        %8093 = vmatpush2.bf16.msra.mxu0 %v7158
        %8094 = vmatprep.subr.bf16.mxu0 %v7151
        %8095 = vmatpush2.bf16.msra.mxu0 %v7150
        %8096 = vmatprep.mubr.bf16.mxu0 %v4904
        %8097 = vmatmul.mubr.bf16.gmra.mxu0 %v4903
        %v8098 = vpop.f32.mrf.mxu0
        %v8099 = vadd.f32 %v8058, %v8098
        %v8100 = vpop.f32.mrf.mxu0
        %v8101 = vadd.f32 %v8060, %v8100
        %v8102 = vpop.f32.mrf.mxu0
        %v8103 = vpop.f32.mrf.mxu0
        %8104 = vdwg.mxu0
        %8105 = vmatprep.subr.bf16.mxu0 %v7271
        %8106 = vmatpush1.bf16.msra.mxu0 %v7270
        %8107 = vmatprep.subr.bf16.mxu0 %v7263
        %8108 = vmatpush1.bf16.msra.mxu0 %v7262
        %8109 = vmatprep.subr.bf16.mxu0 %v7255
        %8110 = vmatpush1.bf16.msra.mxu0 %v7254
        %8111 = vmatprep.subr.bf16.mxu0 %v7247
        %8112 = vmatpush1.bf16.msra.mxu0 %v7246
        %8113 = vmatprep.subr.bf16.mxu0 %v7239
        %8114 = vmatpush1.bf16.msra.mxu0 %v7238
        %8115 = vmatprep.subr.bf16.mxu0 %v7231
        %8116 = vmatpush1.bf16.msra.mxu0 %v7230
        %8117 = vmatprep.subr.bf16.mxu0 %v7223
        %8118 = vmatpush1.bf16.msra.mxu0 %v7222
        %8119 = vmatprep.subr.bf16.mxu0 %v7215
        %8120 = vmatpush1.bf16.msra.mxu0 %v7214
        %8121 = vmatprep.subr.bf16.mxu0 %v7335
        %8122 = vmatpush2.bf16.msra.mxu0 %v7334
        %8123 = vmatprep.subr.bf16.mxu0 %v7327
        %8124 = vmatpush2.bf16.msra.mxu0 %v7326
        %8125 = vmatprep.subr.bf16.mxu0 %v7319
        %8126 = vmatpush2.bf16.msra.mxu0 %v7318
        %8127 = vmatprep.subr.bf16.mxu0 %v7311
        %8128 = vmatpush2.bf16.msra.mxu0 %v7310
        %8129 = vmatprep.subr.bf16.mxu0 %v7303
        %8130 = vmatpush2.bf16.msra.mxu0 %v7302
        %8131 = vmatprep.subr.bf16.mxu0 %v7295
        %8132 = vmatpush2.bf16.msra.mxu0 %v7294
        %8133 = vmatprep.subr.bf16.mxu0 %v7287
        %8134 = vmatpush2.bf16.msra.mxu0 %v7286
        %8135 = vmatprep.subr.bf16.mxu0 %v7279
        %8136 = vmatpush2.bf16.msra.mxu0 %v7278
        %8137 = vmatprep.mubr.bf16.mxu0 %v4906
        %8138 = vmatmul.mubr.bf16.gmra.mxu0 %v4905
        %v8139 = vpop.f32.mrf.mxu0
        %v8140 = vadd.f32 %v8099, %v8139
        %v8141 = vpop.f32.mrf.mxu0
        %v8142 = vadd.f32 %v8101, %v8141
        %v8143 = vpop.f32.mrf.mxu0
        %v8144 = vpop.f32.mrf.mxu0
        %8145 = vdwg.mxu0
        %8146 = vmatprep.subr.bf16.mxu0 %v7399
        %8147 = vmatpush1.bf16.msra.mxu0 %v7398
        %8148 = vmatprep.subr.bf16.mxu0 %v7391
        %8149 = vmatpush1.bf16.msra.mxu0 %v7390
        %8150 = vmatprep.subr.bf16.mxu0 %v7383
        %8151 = vmatpush1.bf16.msra.mxu0 %v7382
        %8152 = vmatprep.subr.bf16.mxu0 %v7375
        %8153 = vmatpush1.bf16.msra.mxu0 %v7374
        %8154 = vmatprep.subr.bf16.mxu0 %v7367
        %8155 = vmatpush1.bf16.msra.mxu0 %v7366
        %8156 = vmatprep.subr.bf16.mxu0 %v7359
        %8157 = vmatpush1.bf16.msra.mxu0 %v7358
        %8158 = vmatprep.subr.bf16.mxu0 %v7351
        %8159 = vmatpush1.bf16.msra.mxu0 %v7350
        %8160 = vmatprep.subr.bf16.mxu0 %v7343
        %8161 = vmatpush1.bf16.msra.mxu0 %v7342
        %8162 = vmatprep.subr.bf16.mxu0 %v7463
        %8163 = vmatpush2.bf16.msra.mxu0 %v7462
        %8164 = vmatprep.subr.bf16.mxu0 %v7455
        %8165 = vmatpush2.bf16.msra.mxu0 %v7454
        %8166 = vmatprep.subr.bf16.mxu0 %v7447
        %8167 = vmatpush2.bf16.msra.mxu0 %v7446
        %8168 = vmatprep.subr.bf16.mxu0 %v7439
        %8169 = vmatpush2.bf16.msra.mxu0 %v7438
        %8170 = vmatprep.subr.bf16.mxu0 %v7431
        %8171 = vmatpush2.bf16.msra.mxu0 %v7430
        %8172 = vmatprep.subr.bf16.mxu0 %v7423
        %8173 = vmatpush2.bf16.msra.mxu0 %v7422
        %8174 = vmatprep.subr.bf16.mxu0 %v7415
        %8175 = vmatpush2.bf16.msra.mxu0 %v7414
        %8176 = vmatprep.subr.bf16.mxu0 %v7407
        %8177 = vmatpush2.bf16.msra.mxu0 %v7406
        %8178 = vmatprep.mubr.bf16.mxu0 %v4908
        %8179 = vmatmul.mubr.bf16.gmra.mxu0 %v4907
        %v8180 = vpop.f32.mrf.mxu0
        %v8181 = vadd.f32 %v8140, %v8180
        %v8182 = vpop.f32.mrf.mxu0
        %v8183 = vadd.f32 %v8142, %v8182
        %v8184 = vpop.f32.mrf.mxu0
        %v8185 = vpop.f32.mrf.mxu0
        %8186 = vdwg.mxu0
        %8187 = vmatprep.subr.bf16.mxu0 %v7017
        %8188 = vmatpush1.bf16.msra.mxu0 %v7016
        %8189 = vmatprep.subr.bf16.mxu0 %v7009
        %8190 = vmatpush1.bf16.msra.mxu0 %v7008
        %8191 = vmatprep.subr.bf16.mxu0 %v7001
        %8192 = vmatpush1.bf16.msra.mxu0 %v7000
        %8193 = vmatprep.subr.bf16.mxu0 %v6993
        %8194 = vmatpush1.bf16.msra.mxu0 %v6992
        %8195 = vmatprep.subr.bf16.mxu0 %v6985
        %8196 = vmatpush1.bf16.msra.mxu0 %v6984
        %8197 = vmatprep.subr.bf16.mxu0 %v6977
        %8198 = vmatpush1.bf16.msra.mxu0 %v6976
        %8199 = vmatprep.subr.bf16.mxu0 %v6969
        %8200 = vmatpush1.bf16.msra.mxu0 %v6968
        %8201 = vmatprep.subr.bf16.mxu0 %v6961
        %8202 = vmatpush1.bf16.msra.mxu0 %v6960
        %8203 = vmatprep.subr.bf16.mxu0 %v7081
        %8204 = vmatpush2.bf16.msra.mxu0 %v7080
        %8205 = vmatprep.subr.bf16.mxu0 %v7073
        %8206 = vmatpush2.bf16.msra.mxu0 %v7072
        %8207 = vmatprep.subr.bf16.mxu0 %v7065
        %8208 = vmatpush2.bf16.msra.mxu0 %v7064
        %8209 = vmatprep.subr.bf16.mxu0 %v7057
        %8210 = vmatpush2.bf16.msra.mxu0 %v7056
        %8211 = vmatprep.subr.bf16.mxu0 %v7049
        %8212 = vmatpush2.bf16.msra.mxu0 %v7048
        %8213 = vmatprep.subr.bf16.mxu0 %v7041
        %8214 = vmatpush2.bf16.msra.mxu0 %v7040
        %8215 = vmatprep.subr.bf16.mxu0 %v7033
        %8216 = vmatpush2.bf16.msra.mxu0 %v7032
        %8217 = vmatprep.subr.bf16.mxu0 %v7025
        %8218 = vmatpush2.bf16.msra.mxu0 %v7024
        %8219 = vmatprep.mubr.bf16.mxu0 %v4902
        %8220 = vmatmul.mubr.bf16.gmra.mxu0 %v4901
        %v8221 = vpop.f32.mrf.mxu0
        %v8222 = vadd.f32 %v7994, %v8221
        %v8223 = vpop.f32.mrf.mxu0
        %v8224 = vadd.f32 %v7998, %v8223
        %v8225 = vpop.f32.mrf.mxu0
        %v8226 = vpop.f32.mrf.mxu0
        %8227 = vdwg.mxu0
        %8228 = vmatprep.subr.bf16.mxu0 %v7145
        %8229 = vmatpush1.bf16.msra.mxu0 %v7144
        %8230 = vmatprep.subr.bf16.mxu0 %v7137
        %8231 = vmatpush1.bf16.msra.mxu0 %v7136
        %8232 = vmatprep.subr.bf16.mxu0 %v7129
        %8233 = vmatpush1.bf16.msra.mxu0 %v7128
        %8234 = vmatprep.subr.bf16.mxu0 %v7121
        %8235 = vmatpush1.bf16.msra.mxu0 %v7120
        %8236 = vmatprep.subr.bf16.mxu0 %v7113
        %8237 = vmatpush1.bf16.msra.mxu0 %v7112
        %8238 = vmatprep.subr.bf16.mxu0 %v7105
        %8239 = vmatpush1.bf16.msra.mxu0 %v7104
        %8240 = vmatprep.subr.bf16.mxu0 %v7097
        %8241 = vmatpush1.bf16.msra.mxu0 %v7096
        %8242 = vmatprep.subr.bf16.mxu0 %v7089
        %8243 = vmatpush1.bf16.msra.mxu0 %v7088
        %8244 = vmatprep.subr.bf16.mxu0 %v7209
        %8245 = vmatpush2.bf16.msra.mxu0 %v7208
        %8246 = vmatprep.subr.bf16.mxu0 %v7201
        %8247 = vmatpush2.bf16.msra.mxu0 %v7200
        %8248 = vmatprep.subr.bf16.mxu0 %v7193
        %8249 = vmatpush2.bf16.msra.mxu0 %v7192
        %8250 = vmatprep.subr.bf16.mxu0 %v7185
        %8251 = vmatpush2.bf16.msra.mxu0 %v7184
        %8252 = vmatprep.subr.bf16.mxu0 %v7177
        %8253 = vmatpush2.bf16.msra.mxu0 %v7176
        %8254 = vmatprep.subr.bf16.mxu0 %v7169
        %8255 = vmatpush2.bf16.msra.mxu0 %v7168
        %8256 = vmatprep.subr.bf16.mxu0 %v7161
        %8257 = vmatpush2.bf16.msra.mxu0 %v7160
        %8258 = vmatprep.subr.bf16.mxu0 %v7153
        %8259 = vmatpush2.bf16.msra.mxu0 %v7152
        %8260 = vmatprep.mubr.bf16.mxu0 %v4904
        %8261 = vmatmul.mubr.bf16.gmra.mxu0 %v4903
        %v8262 = vpop.f32.mrf.mxu0
        %v8263 = vadd.f32 %v8222, %v8262
        %v8264 = vpop.f32.mrf.mxu0
        %v8265 = vadd.f32 %v8224, %v8264
        %v8266 = vpop.f32.mrf.mxu0
        %v8267 = vpop.f32.mrf.mxu0
        %8268 = vdwg.mxu0
        %8269 = vmatprep.subr.bf16.mxu0 %v7273
        %8270 = vmatpush1.bf16.msra.mxu0 %v7272
        %8271 = vmatprep.subr.bf16.mxu0 %v7265
        %8272 = vmatpush1.bf16.msra.mxu0 %v7264
        %8273 = vmatprep.subr.bf16.mxu0 %v7257
        %8274 = vmatpush1.bf16.msra.mxu0 %v7256
        %8275 = vmatprep.subr.bf16.mxu0 %v7249
        %8276 = vmatpush1.bf16.msra.mxu0 %v7248
        %8277 = vmatprep.subr.bf16.mxu0 %v7241
        %8278 = vmatpush1.bf16.msra.mxu0 %v7240
        %8279 = vmatprep.subr.bf16.mxu0 %v7233
        %8280 = vmatpush1.bf16.msra.mxu0 %v7232
        %8281 = vmatprep.subr.bf16.mxu0 %v7225
        %8282 = vmatpush1.bf16.msra.mxu0 %v7224
        %8283 = vmatprep.subr.bf16.mxu0 %v7217
        %8284 = vmatpush1.bf16.msra.mxu0 %v7216
        %8285 = vmatprep.subr.bf16.mxu0 %v7337
        %8286 = vmatpush2.bf16.msra.mxu0 %v7336
        %8287 = vmatprep.subr.bf16.mxu0 %v7329
        %8288 = vmatpush2.bf16.msra.mxu0 %v7328
        %8289 = vmatprep.subr.bf16.mxu0 %v7321
        %8290 = vmatpush2.bf16.msra.mxu0 %v7320
        %8291 = vmatprep.subr.bf16.mxu0 %v7313
        %8292 = vmatpush2.bf16.msra.mxu0 %v7312
        %8293 = vmatprep.subr.bf16.mxu0 %v7305
        %8294 = vmatpush2.bf16.msra.mxu0 %v7304
        %8295 = vmatprep.subr.bf16.mxu0 %v7297
        %8296 = vmatpush2.bf16.msra.mxu0 %v7296
        %8297 = vmatprep.subr.bf16.mxu0 %v7289
        %8298 = vmatpush2.bf16.msra.mxu0 %v7288
        %8299 = vmatprep.subr.bf16.mxu0 %v7281
        %8300 = vmatpush2.bf16.msra.mxu0 %v7280
        %8301 = vmatprep.mubr.bf16.mxu0 %v4906
        %8302 = vmatmul.mubr.bf16.gmra.mxu0 %v4905
        %v8303 = vpop.f32.mrf.mxu0
        %v8304 = vadd.f32 %v8263, %v8303
        %v8305 = vpop.f32.mrf.mxu0
        %v8306 = vadd.f32 %v8265, %v8305
        %v8307 = vpop.f32.mrf.mxu0
        %v8308 = vpop.f32.mrf.mxu0
        %8309 = vdwg.mxu0
        %8310 = vmatprep.subr.bf16.mxu0 %v7401
        %8311 = vmatpush1.bf16.msra.mxu0 %v7400
        %8312 = vmatprep.subr.bf16.mxu0 %v7393
        %8313 = vmatpush1.bf16.msra.mxu0 %v7392
        %8314 = vmatprep.subr.bf16.mxu0 %v7385
        %8315 = vmatpush1.bf16.msra.mxu0 %v7384
        %8316 = vmatprep.subr.bf16.mxu0 %v7377
        %8317 = vmatpush1.bf16.msra.mxu0 %v7376
        %8318 = vmatprep.subr.bf16.mxu0 %v7369
        %8319 = vmatpush1.bf16.msra.mxu0 %v7368
        %8320 = vmatprep.subr.bf16.mxu0 %v7361
        %8321 = vmatpush1.bf16.msra.mxu0 %v7360
        %8322 = vmatprep.subr.bf16.mxu0 %v7353
        %8323 = vmatpush1.bf16.msra.mxu0 %v7352
        %8324 = vmatprep.subr.bf16.mxu0 %v7345
        %8325 = vmatpush1.bf16.msra.mxu0 %v7344
        %8326 = vmatprep.subr.bf16.mxu0 %v7465
        %8327 = vmatpush2.bf16.msra.mxu0 %v7464
        %8328 = vmatprep.subr.bf16.mxu0 %v7457
        %8329 = vmatpush2.bf16.msra.mxu0 %v7456
        %8330 = vmatprep.subr.bf16.mxu0 %v7449
        %8331 = vmatpush2.bf16.msra.mxu0 %v7448
        %8332 = vmatprep.subr.bf16.mxu0 %v7441
        %8333 = vmatpush2.bf16.msra.mxu0 %v7440
        %8334 = vmatprep.subr.bf16.mxu0 %v7433
        %8335 = vmatpush2.bf16.msra.mxu0 %v7432
        %8336 = vmatprep.subr.bf16.mxu0 %v7425
        %8337 = vmatpush2.bf16.msra.mxu0 %v7424
        %8338 = vmatprep.subr.bf16.mxu0 %v7417
        %8339 = vmatpush2.bf16.msra.mxu0 %v7416
        %8340 = vmatprep.subr.bf16.mxu0 %v7409
        %8341 = vmatpush2.bf16.msra.mxu0 %v7408
        %8342 = vmatprep.mubr.bf16.mxu0 %v4908
        %8343 = vmatmul.mubr.bf16.gmra.mxu0 %v4907
        %v8344 = vpop.f32.mrf.mxu0
        %v8345 = vadd.f32 %v8304, %v8344
        %v8346 = vpop.f32.mrf.mxu0
        %v8347 = vadd.f32 %v8306, %v8346
        %v8348 = vpop.f32.mrf.mxu0
        %v8349 = vpop.f32.mrf.mxu0
        %8350 = vdwg.mxu0
        %8351 = vmatprep.subr.bf16.mxu0 %v7019
        %8352 = vmatpush1.bf16.msra.mxu0 %v7018
        %8353 = vmatprep.subr.bf16.mxu0 %v7011
        %8354 = vmatpush1.bf16.msra.mxu0 %v7010
        %8355 = vmatprep.subr.bf16.mxu0 %v7003
        %8356 = vmatpush1.bf16.msra.mxu0 %v7002
        %8357 = vmatprep.subr.bf16.mxu0 %v6995
        %8358 = vmatpush1.bf16.msra.mxu0 %v6994
        %8359 = vmatprep.subr.bf16.mxu0 %v6987
        %8360 = vmatpush1.bf16.msra.mxu0 %v6986
        %8361 = vmatprep.subr.bf16.mxu0 %v6979
        %8362 = vmatpush1.bf16.msra.mxu0 %v6978
        %8363 = vmatprep.subr.bf16.mxu0 %v6971
        %8364 = vmatpush1.bf16.msra.mxu0 %v6970
        %8365 = vmatprep.subr.bf16.mxu0 %v6963
        %8366 = vmatpush1.bf16.msra.mxu0 %v6962
        %8367 = vmatprep.subr.bf16.mxu0 %v7083
        %8368 = vmatpush2.bf16.msra.mxu0 %v7082
        %8369 = vmatprep.subr.bf16.mxu0 %v7075
        %8370 = vmatpush2.bf16.msra.mxu0 %v7074
        %8371 = vmatprep.subr.bf16.mxu0 %v7067
        %8372 = vmatpush2.bf16.msra.mxu0 %v7066
        %8373 = vmatprep.subr.bf16.mxu0 %v7059
        %8374 = vmatpush2.bf16.msra.mxu0 %v7058
        %8375 = vmatprep.subr.bf16.mxu0 %v7051
        %8376 = vmatpush2.bf16.msra.mxu0 %v7050
        %8377 = vmatprep.subr.bf16.mxu0 %v7043
        %8378 = vmatpush2.bf16.msra.mxu0 %v7042
        %8379 = vmatprep.subr.bf16.mxu0 %v7035
        %8380 = vmatpush2.bf16.msra.mxu0 %v7034
        %8381 = vmatprep.subr.bf16.mxu0 %v7027
        %8382 = vmatpush2.bf16.msra.mxu0 %v7026
        %8383 = vmatprep.mubr.bf16.mxu0 %v4902
        %8384 = vmatmul.mubr.bf16.gmra.mxu0 %v4901
        %v8385 = vpop.f32.mrf.mxu0
        %v8386 = vadd.f32 %v8002, %v8385
        %v8387 = vpop.f32.mrf.mxu0
        %v8388 = vadd.f32 %v8006, %v8387
        %v8389 = vpop.f32.mrf.mxu0
        %v8390 = vpop.f32.mrf.mxu0
        %8391 = vdwg.mxu0
        %8392 = vmatprep.subr.bf16.mxu0 %v7147
        %8393 = vmatpush1.bf16.msra.mxu0 %v7146
        %8394 = vmatprep.subr.bf16.mxu0 %v7139
        %8395 = vmatpush1.bf16.msra.mxu0 %v7138
        %8396 = vmatprep.subr.bf16.mxu0 %v7131
        %8397 = vmatpush1.bf16.msra.mxu0 %v7130
        %8398 = vmatprep.subr.bf16.mxu0 %v7123
        %8399 = vmatpush1.bf16.msra.mxu0 %v7122
        %8400 = vmatprep.subr.bf16.mxu0 %v7115
        %8401 = vmatpush1.bf16.msra.mxu0 %v7114
        %8402 = vmatprep.subr.bf16.mxu0 %v7107
        %8403 = vmatpush1.bf16.msra.mxu0 %v7106
        %8404 = vmatprep.subr.bf16.mxu0 %v7099
        %8405 = vmatpush1.bf16.msra.mxu0 %v7098
        %8406 = vmatprep.subr.bf16.mxu0 %v7091
        %8407 = vmatpush1.bf16.msra.mxu0 %v7090
        %8408 = vmatprep.subr.bf16.mxu0 %v7211
        %8409 = vmatpush2.bf16.msra.mxu0 %v7210
        %8410 = vmatprep.subr.bf16.mxu0 %v7203
        %8411 = vmatpush2.bf16.msra.mxu0 %v7202
        %8412 = vmatprep.subr.bf16.mxu0 %v7195
        %8413 = vmatpush2.bf16.msra.mxu0 %v7194
        %8414 = vmatprep.subr.bf16.mxu0 %v7187
        %8415 = vmatpush2.bf16.msra.mxu0 %v7186
        %8416 = vmatprep.subr.bf16.mxu0 %v7179
        %8417 = vmatpush2.bf16.msra.mxu0 %v7178
        %8418 = vmatprep.subr.bf16.mxu0 %v7171
        %8419 = vmatpush2.bf16.msra.mxu0 %v7170
        %8420 = vmatprep.subr.bf16.mxu0 %v7163
        %8421 = vmatpush2.bf16.msra.mxu0 %v7162
        %8422 = vmatprep.subr.bf16.mxu0 %v7155
        %8423 = vmatpush2.bf16.msra.mxu0 %v7154
        %8424 = vmatprep.mubr.bf16.mxu0 %v4904
        %8425 = vmatmul.mubr.bf16.gmra.mxu0 %v4903
        %v8426 = vpop.f32.mrf.mxu0
        %v8427 = vadd.f32 %v8386, %v8426
        %v8428 = vpop.f32.mrf.mxu0
        %v8429 = vadd.f32 %v8388, %v8428
        %v8430 = vpop.f32.mrf.mxu0
        %v8431 = vpop.f32.mrf.mxu0
        %8432 = vdwg.mxu0
        %8433 = vmatprep.subr.bf16.mxu0 %v7275
        %8434 = vmatpush1.bf16.msra.mxu0 %v7274
        %8435 = vmatprep.subr.bf16.mxu0 %v7267
        %8436 = vmatpush1.bf16.msra.mxu0 %v7266
        %8437 = vmatprep.subr.bf16.mxu0 %v7259
        %8438 = vmatpush1.bf16.msra.mxu0 %v7258
        %8439 = vmatprep.subr.bf16.mxu0 %v7251
        %8440 = vmatpush1.bf16.msra.mxu0 %v7250
        %8441 = vmatprep.subr.bf16.mxu0 %v7243
        %8442 = vmatpush1.bf16.msra.mxu0 %v7242
        %8443 = vmatprep.subr.bf16.mxu0 %v7235
        %8444 = vmatpush1.bf16.msra.mxu0 %v7234
        %8445 = vmatprep.subr.bf16.mxu0 %v7227
        %8446 = vmatpush1.bf16.msra.mxu0 %v7226
        %8447 = vmatprep.subr.bf16.mxu0 %v7219
        %8448 = vmatpush1.bf16.msra.mxu0 %v7218
        %8449 = vmatprep.subr.bf16.mxu0 %v7339
        %8450 = vmatpush2.bf16.msra.mxu0 %v7338
        %8451 = vmatprep.subr.bf16.mxu0 %v7331
        %8452 = vmatpush2.bf16.msra.mxu0 %v7330
        %8453 = vmatprep.subr.bf16.mxu0 %v7323
        %8454 = vmatpush2.bf16.msra.mxu0 %v7322
        %8455 = vmatprep.subr.bf16.mxu0 %v7315
        %8456 = vmatpush2.bf16.msra.mxu0 %v7314
        %8457 = vmatprep.subr.bf16.mxu0 %v7307
        %8458 = vmatpush2.bf16.msra.mxu0 %v7306
        %8459 = vmatprep.subr.bf16.mxu0 %v7299
        %8460 = vmatpush2.bf16.msra.mxu0 %v7298
        %8461 = vmatprep.subr.bf16.mxu0 %v7291
        %8462 = vmatpush2.bf16.msra.mxu0 %v7290
        %8463 = vmatprep.subr.bf16.mxu0 %v7283
        %8464 = vmatpush2.bf16.msra.mxu0 %v7282
        %8465 = vmatprep.mubr.bf16.mxu0 %v4906
        %8466 = vmatmul.mubr.bf16.gmra.mxu0 %v4905
        %v8467 = vpop.f32.mrf.mxu0
        %v8468 = vadd.f32 %v8427, %v8467
        %v8469 = vpop.f32.mrf.mxu0
        %v8470 = vadd.f32 %v8429, %v8469
        %v8471 = vpop.f32.mrf.mxu0
        %v8472 = vpop.f32.mrf.mxu0
        %8473 = vdwg.mxu0
        %8474 = vmatprep.subr.bf16.mxu0 %v7403
        %8475 = vmatpush1.bf16.msra.mxu0 %v7402
        %8476 = vmatprep.subr.bf16.mxu0 %v7395
        %8477 = vmatpush1.bf16.msra.mxu0 %v7394
        %8478 = vmatprep.subr.bf16.mxu0 %v7387
        %8479 = vmatpush1.bf16.msra.mxu0 %v7386
        %8480 = vmatprep.subr.bf16.mxu0 %v7379
        %8481 = vmatpush1.bf16.msra.mxu0 %v7378
        %8482 = vmatprep.subr.bf16.mxu0 %v7371
        %8483 = vmatpush1.bf16.msra.mxu0 %v7370
        %8484 = vmatprep.subr.bf16.mxu0 %v7363
        %8485 = vmatpush1.bf16.msra.mxu0 %v7362
        %8486 = vmatprep.subr.bf16.mxu0 %v7355
        %8487 = vmatpush1.bf16.msra.mxu0 %v7354
        %8488 = vmatprep.subr.bf16.mxu0 %v7347
        %8489 = vmatpush1.bf16.msra.mxu0 %v7346
        %8490 = vmatprep.subr.bf16.mxu0 %v7467
        %8491 = vmatpush2.bf16.msra.mxu0 %v7466
        %8492 = vmatprep.subr.bf16.mxu0 %v7459
        %8493 = vmatpush2.bf16.msra.mxu0 %v7458
        %8494 = vmatprep.subr.bf16.mxu0 %v7451
        %8495 = vmatpush2.bf16.msra.mxu0 %v7450
        %8496 = vmatprep.subr.bf16.mxu0 %v7443
        %8497 = vmatpush2.bf16.msra.mxu0 %v7442
        %8498 = vmatprep.subr.bf16.mxu0 %v7435
        %8499 = vmatpush2.bf16.msra.mxu0 %v7434
        %8500 = vmatprep.subr.bf16.mxu0 %v7427
        %8501 = vmatpush2.bf16.msra.mxu0 %v7426
        %8502 = vmatprep.subr.bf16.mxu0 %v7419
        %8503 = vmatpush2.bf16.msra.mxu0 %v7418
        %8504 = vmatprep.subr.bf16.mxu0 %v7411
        %8505 = vmatpush2.bf16.msra.mxu0 %v7410
        %8506 = vmatprep.mubr.bf16.mxu0 %v4908
        %8507 = vmatmul.mubr.bf16.gmra.mxu0 %v4907
        %v8508 = vpop.f32.mrf.mxu0
        %v8509 = vadd.f32 %v8468, %v8508
        %v8510 = vpop.f32.mrf.mxu0
        %v8511 = vadd.f32 %v8470, %v8510
        %v8512 = vpop.f32.mrf.mxu0
        %v8513 = vpop.f32.mrf.mxu0
        %8514 = vdwg.mxu0
        %8515 = vmatprep.subr.bf16.mxu0 %v7021
        %8516 = vmatpush1.bf16.msra.mxu0 %v7020
        %8517 = vmatprep.subr.bf16.mxu0 %v7013
        %8518 = vmatpush1.bf16.msra.mxu0 %v7012
        %8519 = vmatprep.subr.bf16.mxu0 %v7005
        %8520 = vmatpush1.bf16.msra.mxu0 %v7004
        %8521 = vmatprep.subr.bf16.mxu0 %v6997
        %8522 = vmatpush1.bf16.msra.mxu0 %v6996
        %8523 = vmatprep.subr.bf16.mxu0 %v6989
        %8524 = vmatpush1.bf16.msra.mxu0 %v6988
        %8525 = vmatprep.subr.bf16.mxu0 %v6981
        %8526 = vmatpush1.bf16.msra.mxu0 %v6980
        %8527 = vmatprep.subr.bf16.mxu0 %v6973
        %8528 = vmatpush1.bf16.msra.mxu0 %v6972
        %8529 = vmatprep.subr.bf16.mxu0 %v6965
        %8530 = vmatpush1.bf16.msra.mxu0 %v6964
        %8531 = vmatprep.subr.bf16.mxu0 %v7085
        %8532 = vmatpush2.bf16.msra.mxu0 %v7084
        %8533 = vmatprep.subr.bf16.mxu0 %v7077
        %8534 = vmatpush2.bf16.msra.mxu0 %v7076
        %8535 = vmatprep.subr.bf16.mxu0 %v7069
        %8536 = vmatpush2.bf16.msra.mxu0 %v7068
        %8537 = vmatprep.subr.bf16.mxu0 %v7061
        %8538 = vmatpush2.bf16.msra.mxu0 %v7060
        %8539 = vmatprep.subr.bf16.mxu0 %v7053
        %8540 = vmatpush2.bf16.msra.mxu0 %v7052
        %8541 = vmatprep.subr.bf16.mxu0 %v7045
        %8542 = vmatpush2.bf16.msra.mxu0 %v7044
        %8543 = vmatprep.subr.bf16.mxu0 %v7037
        %8544 = vmatpush2.bf16.msra.mxu0 %v7036
        %8545 = vmatprep.subr.bf16.mxu0 %v7029
        %8546 = vmatpush2.bf16.msra.mxu0 %v7028
        %8547 = vmatprep.mubr.bf16.mxu0 %v4902
        %8548 = vmatmul.mubr.bf16.gmra.mxu0 %v4901
        %v8549 = vpop.f32.mrf.mxu0
        %v8550 = vadd.f32 %v8010, %v8549
        %v8551 = vpop.f32.mrf.mxu0
        %v8552 = vadd.f32 %v8014, %v8551
        %v8553 = vpop.f32.mrf.mxu0
        %v8554 = vpop.f32.mrf.mxu0
        %8555 = vdwg.mxu0
        %8556 = vmatprep.subr.bf16.mxu0 %v7149
        %8557 = vmatpush1.bf16.msra.mxu0 %v7148
        %8558 = vmatprep.subr.bf16.mxu0 %v7141
        %8559 = vmatpush1.bf16.msra.mxu0 %v7140
        %8560 = vmatprep.subr.bf16.mxu0 %v7133
        %8561 = vmatpush1.bf16.msra.mxu0 %v7132
        %8562 = vmatprep.subr.bf16.mxu0 %v7125
        %8563 = vmatpush1.bf16.msra.mxu0 %v7124
        %8564 = vmatprep.subr.bf16.mxu0 %v7117
        %8565 = vmatpush1.bf16.msra.mxu0 %v7116
        %8566 = vmatprep.subr.bf16.mxu0 %v7109
        %8567 = vmatpush1.bf16.msra.mxu0 %v7108
        %8568 = vmatprep.subr.bf16.mxu0 %v7101
        %8569 = vmatpush1.bf16.msra.mxu0 %v7100
        %8570 = vmatprep.subr.bf16.mxu0 %v7093
        %8571 = vmatpush1.bf16.msra.mxu0 %v7092
        %8572 = vmatprep.subr.bf16.mxu0 %v7213
        %8573 = vmatpush2.bf16.msra.mxu0 %v7212
        %8574 = vmatprep.subr.bf16.mxu0 %v7205
        %8575 = vmatpush2.bf16.msra.mxu0 %v7204
        %8576 = vmatprep.subr.bf16.mxu0 %v7197
        %8577 = vmatpush2.bf16.msra.mxu0 %v7196
        %8578 = vmatprep.subr.bf16.mxu0 %v7189
        %8579 = vmatpush2.bf16.msra.mxu0 %v7188
        %8580 = vmatprep.subr.bf16.mxu0 %v7181
        %8581 = vmatpush2.bf16.msra.mxu0 %v7180
        %8582 = vmatprep.subr.bf16.mxu0 %v7173
        %8583 = vmatpush2.bf16.msra.mxu0 %v7172
        %8584 = vmatprep.subr.bf16.mxu0 %v7165
        %8585 = vmatpush2.bf16.msra.mxu0 %v7164
        %8586 = vmatprep.subr.bf16.mxu0 %v7157
        %8587 = vmatpush2.bf16.msra.mxu0 %v7156
        %8588 = vmatprep.mubr.bf16.mxu0 %v4904
        %8589 = vmatmul.mubr.bf16.gmra.mxu0 %v4903
        %v8590 = vpop.f32.mrf.mxu0
        %v8591 = vadd.f32 %v8550, %v8590
        %v8592 = vpop.f32.mrf.mxu0
        %v8593 = vadd.f32 %v8552, %v8592
        %v8594 = vpop.f32.mrf.mxu0
        %v8595 = vpop.f32.mrf.mxu0
        %8596 = vdwg.mxu0
        %8597 = vmatprep.subr.bf16.mxu0 %v7277
        %8598 = vmatpush1.bf16.msra.mxu0 %v7276
        %8599 = vmatprep.subr.bf16.mxu0 %v7269
        %8600 = vmatpush1.bf16.msra.mxu0 %v7268
        %8601 = vmatprep.subr.bf16.mxu0 %v7261
        %8602 = vmatpush1.bf16.msra.mxu0 %v7260
        %8603 = vmatprep.subr.bf16.mxu0 %v7253
        %8604 = vmatpush1.bf16.msra.mxu0 %v7252
        %8605 = vmatprep.subr.bf16.mxu0 %v7245
        %8606 = vmatpush1.bf16.msra.mxu0 %v7244
        %8607 = vmatprep.subr.bf16.mxu0 %v7237
        %8608 = vmatpush1.bf16.msra.mxu0 %v7236
        %8609 = vmatprep.subr.bf16.mxu0 %v7229
        %8610 = vmatpush1.bf16.msra.mxu0 %v7228
        %8611 = vmatprep.subr.bf16.mxu0 %v7221
        %8612 = vmatpush1.bf16.msra.mxu0 %v7220
        %8613 = vmatprep.subr.bf16.mxu0 %v7341
        %8614 = vmatpush2.bf16.msra.mxu0 %v7340
        %8615 = vmatprep.subr.bf16.mxu0 %v7333
        %8616 = vmatpush2.bf16.msra.mxu0 %v7332
        %8617 = vmatprep.subr.bf16.mxu0 %v7325
        %8618 = vmatpush2.bf16.msra.mxu0 %v7324
        %8619 = vmatprep.subr.bf16.mxu0 %v7317
        %8620 = vmatpush2.bf16.msra.mxu0 %v7316
        %8621 = vmatprep.subr.bf16.mxu0 %v7309
        %8622 = vmatpush2.bf16.msra.mxu0 %v7308
        %8623 = vmatprep.subr.bf16.mxu0 %v7301
        %8624 = vmatpush2.bf16.msra.mxu0 %v7300
        %8625 = vmatprep.subr.bf16.mxu0 %v7293
        %8626 = vmatpush2.bf16.msra.mxu0 %v7292
        %8627 = vmatprep.subr.bf16.mxu0 %v7285
        %8628 = vmatpush2.bf16.msra.mxu0 %v7284
        %8629 = vmatprep.mubr.bf16.mxu0 %v4906
        %8630 = vmatmul.mubr.bf16.gmra.mxu0 %v4905
        %v8631 = vpop.f32.mrf.mxu0
        %v8632 = vadd.f32 %v8591, %v8631
        %v8633 = vpop.f32.mrf.mxu0
        %v8634 = vadd.f32 %v8593, %v8633
        %v8635 = vpop.f32.mrf.mxu0
        %v8636 = vpop.f32.mrf.mxu0
        %8637 = vdwg.mxu0
        %8638 = vmatprep.subr.bf16.mxu0 %v7405
        %8639 = vmatpush1.bf16.msra.mxu0 %v7404
        %8640 = vmatprep.subr.bf16.mxu0 %v7397
        %8641 = vmatpush1.bf16.msra.mxu0 %v7396
        %8642 = vmatprep.subr.bf16.mxu0 %v7389
        %8643 = vmatpush1.bf16.msra.mxu0 %v7388
        %8644 = vmatprep.subr.bf16.mxu0 %v7381
        %8645 = vmatpush1.bf16.msra.mxu0 %v7380
        %8646 = vmatprep.subr.bf16.mxu0 %v7373
        %8647 = vmatpush1.bf16.msra.mxu0 %v7372
        %8648 = vmatprep.subr.bf16.mxu0 %v7365
        %8649 = vmatpush1.bf16.msra.mxu0 %v7364
        %8650 = vmatprep.subr.bf16.mxu0 %v7357
        %8651 = vmatpush1.bf16.msra.mxu0 %v7356
        %8652 = vmatprep.subr.bf16.mxu0 %v7349
        %8653 = vmatpush1.bf16.msra.mxu0 %v7348
        %8654 = vmatprep.subr.bf16.mxu0 %v7469
        %8655 = vmatpush2.bf16.msra.mxu0 %v7468
        %8656 = vmatprep.subr.bf16.mxu0 %v7461
        %8657 = vmatpush2.bf16.msra.mxu0 %v7460
        %8658 = vmatprep.subr.bf16.mxu0 %v7453
        %8659 = vmatpush2.bf16.msra.mxu0 %v7452
        %8660 = vmatprep.subr.bf16.mxu0 %v7445
        %8661 = vmatpush2.bf16.msra.mxu0 %v7444
        %8662 = vmatprep.subr.bf16.mxu0 %v7437
        %8663 = vmatpush2.bf16.msra.mxu0 %v7436
        %8664 = vmatprep.subr.bf16.mxu0 %v7429
        %8665 = vmatpush2.bf16.msra.mxu0 %v7428
        %8666 = vmatprep.subr.bf16.mxu0 %v7421
        %8667 = vmatpush2.bf16.msra.mxu0 %v7420
        %8668 = vmatprep.subr.bf16.mxu0 %v7413
        %8669 = vmatpush2.bf16.msra.mxu0 %v7412
        %8670 = vmatprep.mubr.bf16.mxu0 %v4908
        %8671 = vmatmul.mubr.bf16.gmra.mxu0 %v4907
        %v8672 = vpop.f32.mrf.mxu0
        %v8673 = vadd.f32 %v8632, %v8672
        %v8674 = vpop.f32.mrf.mxu0
        %v8675 = vadd.f32 %v8634, %v8674
        %v8676 = vpop.f32.mrf.mxu0
        %v8677 = vpop.f32.mrf.mxu0
        %8678 = vdwg.mxu0
        %v8679 = vmax.f32 %v8181, 0.0
        %v8680 = vmax.f32 %v8183, 0.0
        %v8681 = vmax.f32 %v8345, 0.0
        %v8682 = vmax.f32 %v8347, 0.0
        %v8683 = vmax.f32 %v8509, 0.0
        %v8684 = vmax.f32 %v8511, 0.0
        %v8685 = vmax.f32 %v8673, 0.0
        %v8686 = vmax.f32 %v8675, 0.0
        %v8687 = vpack.c.bf16 %v8679, %v8679
        %v8688 = vpack.c.bf16 %v8680, %v8680
        %v8689 = vpack.c.bf16 %v8681, %v8681
        %v8690 = vpack.c.bf16 %v8682, %v8682
        %v8691 = vpack.c.bf16 %v8683, %v8683
        %v8692 = vpack.c.bf16 %v8684, %v8684
        %v8693 = vpack.c.bf16 %v8685, %v8685
        %v8694 = vpack.c.bf16 %v8686, %v8686
        %v8695 = vld [vmem:[#allocation27] sm:$0xff]
        %v8696 = vld [vmem:[#allocation27 + $0x8] sm:$0xff]
        %v8697 = vld [vmem:[#allocation27 + $0x10] sm:$0xff]
        %v8698 = vld [vmem:[#allocation27 + $0x18] sm:$0xff]
        %v8699 = vld [vmem:[#allocation27 + $0x20] sm:$0xff]
        %v8700 = vld [vmem:[#allocation27 + $0x28] sm:$0xff]
        %v8701 = vld [vmem:[#allocation27 + $0x30] sm:$0xff]
        %v8702 = vld [vmem:[#allocation27 + $0x38] sm:$0xff]
        %v8703 = vld [vmem:[#allocation27 + $0x40] sm:$0xff]
        %v8704 = vld [vmem:[#allocation27 + $0x48] sm:$0xff]
        %v8705 = vld [vmem:[#allocation27 + $0x50] sm:$0xff]
        %v8706 = vld [vmem:[#allocation27 + $0x58] sm:$0xff]
        %v8707 = vld [vmem:[#allocation27 + $0x60] sm:$0xff]
        %v8708 = vld [vmem:[#allocation27 + $0x68] sm:$0xff]
        %v8709 = vld [vmem:[#allocation27 + $0x70] sm:$0xff]
        %v8710 = vld [vmem:[#allocation27 + $0x78] sm:$0xff]
        %v8711 = vld [vmem:[#allocation27 + $0x80] sm:$0xff]
        %v8712 = vld [vmem:[#allocation27 + $0x88] sm:$0xff]
        %v8713 = vld [vmem:[#allocation27 + $0x90] sm:$0xff]
        %v8714 = vld [vmem:[#allocation27 + $0x98] sm:$0xff]
        %v8715 = vld [vmem:[#allocation27 + $0xa0] sm:$0xff]
        %v8716 = vld [vmem:[#allocation27 + $0xa8] sm:$0xff]
        %v8717 = vld [vmem:[#allocation27 + $0xb0] sm:$0xff]
        %v8718 = vld [vmem:[#allocation27 + $0xb8] sm:$0xff]
        %v8719 = vld [vmem:[#allocation27 + $0xc0] sm:$0xff]
        %v8720 = vld [vmem:[#allocation27 + $0xc8] sm:$0xff]
        %v8721 = vld [vmem:[#allocation27 + $0xd0] sm:$0xff]
        %v8722 = vld [vmem:[#allocation27 + $0xd8] sm:$0xff]
        %v8723 = vld [vmem:[#allocation27 + $0xe0] sm:$0xff]
        %v8724 = vld [vmem:[#allocation27 + $0xe8] sm:$0xff]
        %v8725 = vld [vmem:[#allocation27 + $0xf0] sm:$0xff]
        %v8726 = vld [vmem:[#allocation27 + $0xf8] sm:$0xff]
        %v8727 = vld [vmem:[#allocation27 + $0x100] sm:$0xff]
        %v8728 = vld [vmem:[#allocation27 + $0x108] sm:$0xff]
        %v8729 = vld [vmem:[#allocation27 + $0x110] sm:$0xff]
        %v8730 = vld [vmem:[#allocation27 + $0x118] sm:$0xff]
        %v8731 = vld [vmem:[#allocation27 + $0x120] sm:$0xff]
        %v8732 = vld [vmem:[#allocation27 + $0x128] sm:$0xff]
        %v8733 = vld [vmem:[#allocation27 + $0x130] sm:$0xff]
        %v8734 = vld [vmem:[#allocation27 + $0x138] sm:$0xff]
        %v8735 = vld [vmem:[#allocation27 + $0x140] sm:$0xff]
        %v8736 = vld [vmem:[#allocation27 + $0x148] sm:$0xff]
        %v8737 = vld [vmem:[#allocation27 + $0x150] sm:$0xff]
        %v8738 = vld [vmem:[#allocation27 + $0x158] sm:$0xff]
        %v8739 = vld [vmem:[#allocation27 + $0x160] sm:$0xff]
        %v8740 = vld [vmem:[#allocation27 + $0x168] sm:$0xff]
        %v8741 = vld [vmem:[#allocation27 + $0x170] sm:$0xff]
        %v8742 = vld [vmem:[#allocation27 + $0x178] sm:$0xff]
        %v8743 = vld [vmem:[#allocation27 + $0x180] sm:$0xff]
        %v8744 = vld [vmem:[#allocation27 + $0x188] sm:$0xff]
        %v8745 = vld [vmem:[#allocation27 + $0x190] sm:$0xff]
        %v8746 = vld [vmem:[#allocation27 + $0x198] sm:$0xff]
        %v8747 = vld [vmem:[#allocation27 + $0x1a0] sm:$0xff]
        %v8748 = vld [vmem:[#allocation27 + $0x1a8] sm:$0xff]
        %v8749 = vld [vmem:[#allocation27 + $0x1b0] sm:$0xff]
        %v8750 = vld [vmem:[#allocation27 + $0x1b8] sm:$0xff]
        %v8751 = vld [vmem:[#allocation27 + $0x1c0] sm:$0xff]
        %v8752 = vld [vmem:[#allocation27 + $0x1c8] sm:$0xff]
        %v8753 = vld [vmem:[#allocation27 + $0x1d0] sm:$0xff]
        %v8754 = vld [vmem:[#allocation27 + $0x1d8] sm:$0xff]
        %v8755 = vld [vmem:[#allocation27 + $0x1e0] sm:$0xff]
        %v8756 = vld [vmem:[#allocation27 + $0x1e8] sm:$0xff]
        %v8757 = vld [vmem:[#allocation27 + $0x1f0] sm:$0xff]
        %v8758 = vld [vmem:[#allocation27 + $0x1f8] sm:$0xff]
        %v8759 = vld [vmem:[#allocation27 + $0x200] sm:$0xff]
        %v8760 = vld [vmem:[#allocation27 + $0x208] sm:$0xff]
        %v8761 = vld [vmem:[#allocation27 + $0x210] sm:$0xff]
        %v8762 = vld [vmem:[#allocation27 + $0x218] sm:$0xff]
        %v8763 = vld [vmem:[#allocation27 + $0x220] sm:$0xff]
        %v8764 = vld [vmem:[#allocation27 + $0x228] sm:$0xff]
        %v8765 = vld [vmem:[#allocation27 + $0x230] sm:$0xff]
        %v8766 = vld [vmem:[#allocation27 + $0x238] sm:$0xff]
        %v8767 = vld [vmem:[#allocation27 + $0x240] sm:$0xff]
        %v8768 = vld [vmem:[#allocation27 + $0x248] sm:$0xff]
        %v8769 = vld [vmem:[#allocation27 + $0x250] sm:$0xff]
        %v8770 = vld [vmem:[#allocation27 + $0x258] sm:$0xff]
        %v8771 = vld [vmem:[#allocation27 + $0x260] sm:$0xff]
        %v8772 = vld [vmem:[#allocation27 + $0x268] sm:$0xff]
        %v8773 = vld [vmem:[#allocation27 + $0x270] sm:$0xff]
        %v8774 = vld [vmem:[#allocation27 + $0x278] sm:$0xff]
        %v8775 = vld [vmem:[#allocation27 + $0x280] sm:$0xff]
        %v8776 = vld [vmem:[#allocation27 + $0x288] sm:$0xff]
        %v8777 = vld [vmem:[#allocation27 + $0x290] sm:$0xff]
        %v8778 = vld [vmem:[#allocation27 + $0x298] sm:$0xff]
        %v8779 = vld [vmem:[#allocation27 + $0x2a0] sm:$0xff]
        %v8780 = vld [vmem:[#allocation27 + $0x2a8] sm:$0xff]
        %v8781 = vld [vmem:[#allocation27 + $0x2b0] sm:$0xff]
        %v8782 = vld [vmem:[#allocation27 + $0x2b8] sm:$0xff]
        %v8783 = vld [vmem:[#allocation27 + $0x2c0] sm:$0xff]
        %v8784 = vld [vmem:[#allocation27 + $0x2c8] sm:$0xff]
        %v8785 = vld [vmem:[#allocation27 + $0x2d0] sm:$0xff]
        %v8786 = vld [vmem:[#allocation27 + $0x2d8] sm:$0xff]
        %v8787 = vld [vmem:[#allocation27 + $0x2e0] sm:$0xff]
        %v8788 = vld [vmem:[#allocation27 + $0x2e8] sm:$0xff]
        %v8789 = vld [vmem:[#allocation27 + $0x2f0] sm:$0xff]
        %v8790 = vld [vmem:[#allocation27 + $0x2f8] sm:$0xff]
        %v8791 = vld [vmem:[#allocation27 + $0x300] sm:$0xff]
        %v8792 = vld [vmem:[#allocation27 + $0x308] sm:$0xff]
        %v8793 = vld [vmem:[#allocation27 + $0x310] sm:$0xff]
        %v8794 = vld [vmem:[#allocation27 + $0x318] sm:$0xff]
        %v8795 = vld [vmem:[#allocation27 + $0x320] sm:$0xff]
        %v8796 = vld [vmem:[#allocation27 + $0x328] sm:$0xff]
        %v8797 = vld [vmem:[#allocation27 + $0x330] sm:$0xff]
        %v8798 = vld [vmem:[#allocation27 + $0x338] sm:$0xff]
        %v8799 = vld [vmem:[#allocation27 + $0x340] sm:$0xff]
        %v8800 = vld [vmem:[#allocation27 + $0x348] sm:$0xff]
        %v8801 = vld [vmem:[#allocation27 + $0x350] sm:$0xff]
        %v8802 = vld [vmem:[#allocation27 + $0x358] sm:$0xff]
        %v8803 = vld [vmem:[#allocation27 + $0x360] sm:$0xff]
        %v8804 = vld [vmem:[#allocation27 + $0x368] sm:$0xff]
        %v8805 = vld [vmem:[#allocation27 + $0x370] sm:$0xff]
        %v8806 = vld [vmem:[#allocation27 + $0x378] sm:$0xff]
        %v8807 = vld [vmem:[#allocation27 + $0x380] sm:$0xff]
        %v8808 = vld [vmem:[#allocation27 + $0x388] sm:$0xff]
        %v8809 = vld [vmem:[#allocation27 + $0x390] sm:$0xff]
        %v8810 = vld [vmem:[#allocation27 + $0x398] sm:$0xff]
        %v8811 = vld [vmem:[#allocation27 + $0x3a0] sm:$0xff]
        %v8812 = vld [vmem:[#allocation27 + $0x3a8] sm:$0xff]
        %v8813 = vld [vmem:[#allocation27 + $0x3b0] sm:$0xff]
        %v8814 = vld [vmem:[#allocation27 + $0x3b8] sm:$0xff]
        %v8815 = vld [vmem:[#allocation27 + $0x3c0] sm:$0xff]
        %v8816 = vld [vmem:[#allocation27 + $0x3c8] sm:$0xff]
        %v8817 = vld [vmem:[#allocation27 + $0x3d0] sm:$0xff]
        %v8818 = vld [vmem:[#allocation27 + $0x3d8] sm:$0xff]
        %v8819 = vld [vmem:[#allocation27 + $0x3e0] sm:$0xff]
        %v8820 = vld [vmem:[#allocation27 + $0x3e8] sm:$0xff]
        %v8821 = vld [vmem:[#allocation27 + $0x3f0] sm:$0xff]
        %v8822 = vld [vmem:[#allocation27 + $0x3f8] sm:$0xff]
        %v8823 = vld [vmem:[#allocation27 + $0x400] sm:$0xff]
        %v8824 = vld [vmem:[#allocation27 + $0x408] sm:$0xff]
        %v8825 = vld [vmem:[#allocation27 + $0x410] sm:$0xff]
        %v8826 = vld [vmem:[#allocation27 + $0x418] sm:$0xff]
        %v8827 = vld [vmem:[#allocation27 + $0x420] sm:$0xff]
        %v8828 = vld [vmem:[#allocation27 + $0x428] sm:$0xff]
        %v8829 = vld [vmem:[#allocation27 + $0x430] sm:$0xff]
        %v8830 = vld [vmem:[#allocation27 + $0x438] sm:$0xff]
        %v8831 = vld [vmem:[#allocation27 + $0x440] sm:$0xff]
        %v8832 = vld [vmem:[#allocation27 + $0x448] sm:$0xff]
        %v8833 = vld [vmem:[#allocation27 + $0x450] sm:$0xff]
        %v8834 = vld [vmem:[#allocation27 + $0x458] sm:$0xff]
        %v8835 = vld [vmem:[#allocation27 + $0x460] sm:$0xff]
        %v8836 = vld [vmem:[#allocation27 + $0x468] sm:$0xff]
        %v8837 = vld [vmem:[#allocation27 + $0x470] sm:$0xff]
        %v8838 = vld [vmem:[#allocation27 + $0x478] sm:$0xff]
        %v8839 = vld [vmem:[#allocation27 + $0x480] sm:$0xff]
        %v8840 = vld [vmem:[#allocation27 + $0x488] sm:$0xff]
        %v8841 = vld [vmem:[#allocation27 + $0x490] sm:$0xff]
        %v8842 = vld [vmem:[#allocation27 + $0x498] sm:$0xff]
        %v8843 = vld [vmem:[#allocation27 + $0x4a0] sm:$0xff]
        %v8844 = vld [vmem:[#allocation27 + $0x4a8] sm:$0xff]
        %v8845 = vld [vmem:[#allocation27 + $0x4b0] sm:$0xff]
        %v8846 = vld [vmem:[#allocation27 + $0x4b8] sm:$0xff]
        %v8847 = vld [vmem:[#allocation27 + $0x4c0] sm:$0xff]
        %v8848 = vld [vmem:[#allocation27 + $0x4c8] sm:$0xff]
        %v8849 = vld [vmem:[#allocation27 + $0x4d0] sm:$0xff]
        %v8850 = vld [vmem:[#allocation27 + $0x4d8] sm:$0xff]
        %v8851 = vld [vmem:[#allocation27 + $0x4e0] sm:$0xff]
        %v8852 = vld [vmem:[#allocation27 + $0x4e8] sm:$0xff]
        %v8853 = vld [vmem:[#allocation27 + $0x4f0] sm:$0xff]
        %v8854 = vld [vmem:[#allocation27 + $0x4f8] sm:$0xff]
        %v8855 = vld [vmem:[#allocation27 + $0x500] sm:$0xff]
        %v8856 = vld [vmem:[#allocation27 + $0x508] sm:$0xff]
        %v8857 = vld [vmem:[#allocation27 + $0x510] sm:$0xff]
        %v8858 = vld [vmem:[#allocation27 + $0x518] sm:$0xff]
        %v8859 = vld [vmem:[#allocation27 + $0x520] sm:$0xff]
        %v8860 = vld [vmem:[#allocation27 + $0x528] sm:$0xff]
        %v8861 = vld [vmem:[#allocation27 + $0x530] sm:$0xff]
        %v8862 = vld [vmem:[#allocation27 + $0x538] sm:$0xff]
        %v8863 = vld [vmem:[#allocation27 + $0x540] sm:$0xff]
        %v8864 = vld [vmem:[#allocation27 + $0x548] sm:$0xff]
        %v8865 = vld [vmem:[#allocation27 + $0x550] sm:$0xff]
        %v8866 = vld [vmem:[#allocation27 + $0x558] sm:$0xff]
        %v8867 = vld [vmem:[#allocation27 + $0x560] sm:$0xff]
        %v8868 = vld [vmem:[#allocation27 + $0x568] sm:$0xff]
        %v8869 = vld [vmem:[#allocation27 + $0x570] sm:$0xff]
        %v8870 = vld [vmem:[#allocation27 + $0x578] sm:$0xff]
        %v8871 = vld [vmem:[#allocation27 + $0x580] sm:$0xff]
        %v8872 = vld [vmem:[#allocation27 + $0x588] sm:$0xff]
        %v8873 = vld [vmem:[#allocation27 + $0x590] sm:$0xff]
        %v8874 = vld [vmem:[#allocation27 + $0x598] sm:$0xff]
        %v8875 = vld [vmem:[#allocation27 + $0x5a0] sm:$0xff]
        %v8876 = vld [vmem:[#allocation27 + $0x5a8] sm:$0xff]
        %v8877 = vld [vmem:[#allocation27 + $0x5b0] sm:$0xff]
        %v8878 = vld [vmem:[#allocation27 + $0x5b8] sm:$0xff]
        %v8879 = vld [vmem:[#allocation27 + $0x5c0] sm:$0xff]
        %v8880 = vld [vmem:[#allocation27 + $0x5c8] sm:$0xff]
        %v8881 = vld [vmem:[#allocation27 + $0x5d0] sm:$0xff]
        %v8882 = vld [vmem:[#allocation27 + $0x5d8] sm:$0xff]
        %v8883 = vld [vmem:[#allocation27 + $0x5e0] sm:$0xff]
        %v8884 = vld [vmem:[#allocation27 + $0x5e8] sm:$0xff]
        %v8885 = vld [vmem:[#allocation27 + $0x5f0] sm:$0xff]
        %v8886 = vld [vmem:[#allocation27 + $0x5f8] sm:$0xff]
        %v8887 = vld [vmem:[#allocation27 + $0x600] sm:$0xff]
        %v8888 = vld [vmem:[#allocation27 + $0x608] sm:$0xff]
        %v8889 = vld [vmem:[#allocation27 + $0x610] sm:$0xff]
        %v8890 = vld [vmem:[#allocation27 + $0x618] sm:$0xff]
        %v8891 = vld [vmem:[#allocation27 + $0x620] sm:$0xff]
        %v8892 = vld [vmem:[#allocation27 + $0x628] sm:$0xff]
        %v8893 = vld [vmem:[#allocation27 + $0x630] sm:$0xff]
        %v8894 = vld [vmem:[#allocation27 + $0x638] sm:$0xff]
        %v8895 = vld [vmem:[#allocation27 + $0x640] sm:$0xff]
        %v8896 = vld [vmem:[#allocation27 + $0x648] sm:$0xff]
        %v8897 = vld [vmem:[#allocation27 + $0x650] sm:$0xff]
        %v8898 = vld [vmem:[#allocation27 + $0x658] sm:$0xff]
        %v8899 = vld [vmem:[#allocation27 + $0x660] sm:$0xff]
        %v8900 = vld [vmem:[#allocation27 + $0x668] sm:$0xff]
        %v8901 = vld [vmem:[#allocation27 + $0x670] sm:$0xff]
        %v8902 = vld [vmem:[#allocation27 + $0x678] sm:$0xff]
        %v8903 = vld [vmem:[#allocation27 + $0x680] sm:$0xff]
        %v8904 = vld [vmem:[#allocation27 + $0x688] sm:$0xff]
        %v8905 = vld [vmem:[#allocation27 + $0x690] sm:$0xff]
        %v8906 = vld [vmem:[#allocation27 + $0x698] sm:$0xff]
        %v8907 = vld [vmem:[#allocation27 + $0x6a0] sm:$0xff]
        %v8908 = vld [vmem:[#allocation27 + $0x6a8] sm:$0xff]
        %v8909 = vld [vmem:[#allocation27 + $0x6b0] sm:$0xff]
        %v8910 = vld [vmem:[#allocation27 + $0x6b8] sm:$0xff]
        %v8911 = vld [vmem:[#allocation27 + $0x6c0] sm:$0xff]
        %v8912 = vld [vmem:[#allocation27 + $0x6c8] sm:$0xff]
        %v8913 = vld [vmem:[#allocation27 + $0x6d0] sm:$0xff]
        %v8914 = vld [vmem:[#allocation27 + $0x6d8] sm:$0xff]
        %v8915 = vld [vmem:[#allocation27 + $0x6e0] sm:$0xff]
        %v8916 = vld [vmem:[#allocation27 + $0x6e8] sm:$0xff]
        %v8917 = vld [vmem:[#allocation27 + $0x6f0] sm:$0xff]
        %v8918 = vld [vmem:[#allocation27 + $0x6f8] sm:$0xff]
        %v8919 = vld [vmem:[#allocation27 + $0x700] sm:$0xff]
        %v8920 = vld [vmem:[#allocation27 + $0x708] sm:$0xff]
        %v8921 = vld [vmem:[#allocation27 + $0x710] sm:$0xff]
        %v8922 = vld [vmem:[#allocation27 + $0x718] sm:$0xff]
        %v8923 = vld [vmem:[#allocation27 + $0x720] sm:$0xff]
        %v8924 = vld [vmem:[#allocation27 + $0x728] sm:$0xff]
        %v8925 = vld [vmem:[#allocation27 + $0x730] sm:$0xff]
        %v8926 = vld [vmem:[#allocation27 + $0x738] sm:$0xff]
        %v8927 = vld [vmem:[#allocation27 + $0x740] sm:$0xff]
        %v8928 = vld [vmem:[#allocation27 + $0x748] sm:$0xff]
        %v8929 = vld [vmem:[#allocation27 + $0x750] sm:$0xff]
        %v8930 = vld [vmem:[#allocation27 + $0x758] sm:$0xff]
        %v8931 = vld [vmem:[#allocation27 + $0x760] sm:$0xff]
        %v8932 = vld [vmem:[#allocation27 + $0x768] sm:$0xff]
        %v8933 = vld [vmem:[#allocation27 + $0x770] sm:$0xff]
        %v8934 = vld [vmem:[#allocation27 + $0x778] sm:$0xff]
        %v8935 = vld [vmem:[#allocation27 + $0x780] sm:$0xff]
        %v8936 = vld [vmem:[#allocation27 + $0x788] sm:$0xff]
        %v8937 = vld [vmem:[#allocation27 + $0x790] sm:$0xff]
        %v8938 = vld [vmem:[#allocation27 + $0x798] sm:$0xff]
        %v8939 = vld [vmem:[#allocation27 + $0x7a0] sm:$0xff]
        %v8940 = vld [vmem:[#allocation27 + $0x7a8] sm:$0xff]
        %v8941 = vld [vmem:[#allocation27 + $0x7b0] sm:$0xff]
        %v8942 = vld [vmem:[#allocation27 + $0x7b8] sm:$0xff]
        %v8943 = vld [vmem:[#allocation27 + $0x7c0] sm:$0xff]
        %v8944 = vld [vmem:[#allocation27 + $0x7c8] sm:$0xff]
        %v8945 = vld [vmem:[#allocation27 + $0x7d0] sm:$0xff]
        %v8946 = vld [vmem:[#allocation27 + $0x7d8] sm:$0xff]
        %v8947 = vld [vmem:[#allocation27 + $0x7e0] sm:$0xff]
        %v8948 = vld [vmem:[#allocation27 + $0x7e8] sm:$0xff]
        %v8949 = vld [vmem:[#allocation27 + $0x7f0] sm:$0xff]
        %v8950 = vld [vmem:[#allocation27 + $0x7f8] sm:$0xff]
        %v8951 = vld [vmem:[#allocation28] sm:$0xf]
        %v9208 = vunpack.c.l.b16 %v8695
        %v9209 = vunpack.c.h.b16 %v8695
        %v9210 = vunpack.c.l.b16 %v8696
        %v9211 = vunpack.c.h.b16 %v8696
        %v9212 = vunpack.c.l.b16 %v8697
        %v9213 = vunpack.c.h.b16 %v8697
        %v9214 = vunpack.c.l.b16 %v8698
        %v9215 = vunpack.c.h.b16 %v8698
        %v9216 = vunpack.c.l.b16 %v8699
        %v9217 = vunpack.c.h.b16 %v8699
        %v9218 = vunpack.c.l.b16 %v8700
        %v9219 = vunpack.c.h.b16 %v8700
        %v9220 = vunpack.c.l.b16 %v8701
        %v9221 = vunpack.c.h.b16 %v8701
        %v9222 = vunpack.c.l.b16 %v8702
        %v9223 = vunpack.c.h.b16 %v8702
        %v9224 = vunpack.c.l.b16 %v8703
        %v9225 = vunpack.c.h.b16 %v8703
        %v9226 = vunpack.c.l.b16 %v8704
        %v9227 = vunpack.c.h.b16 %v8704
        %v9228 = vunpack.c.l.b16 %v8705
        %v9229 = vunpack.c.h.b16 %v8705
        %v9230 = vunpack.c.l.b16 %v8706
        %v9231 = vunpack.c.h.b16 %v8706
        %v9232 = vunpack.c.l.b16 %v8707
        %v9233 = vunpack.c.h.b16 %v8707
        %v9234 = vunpack.c.l.b16 %v8708
        %v9235 = vunpack.c.h.b16 %v8708
        %v9236 = vunpack.c.l.b16 %v8709
        %v9237 = vunpack.c.h.b16 %v8709
        %v9238 = vunpack.c.l.b16 %v8710
        %v9239 = vunpack.c.h.b16 %v8710
        %v9240 = vunpack.c.l.b16 %v8711
        %v9241 = vunpack.c.h.b16 %v8711
        %v9242 = vunpack.c.l.b16 %v8712
        %v9243 = vunpack.c.h.b16 %v8712
        %v9244 = vunpack.c.l.b16 %v8713
        %v9245 = vunpack.c.h.b16 %v8713
        %v9246 = vunpack.c.l.b16 %v8714
        %v9247 = vunpack.c.h.b16 %v8714
        %v9248 = vunpack.c.l.b16 %v8715
        %v9249 = vunpack.c.h.b16 %v8715
        %v9250 = vunpack.c.l.b16 %v8716
        %v9251 = vunpack.c.h.b16 %v8716
        %v9252 = vunpack.c.l.b16 %v8717
        %v9253 = vunpack.c.h.b16 %v8717
        %v9254 = vunpack.c.l.b16 %v8718
        %v9255 = vunpack.c.h.b16 %v8718
        %v9256 = vunpack.c.l.b16 %v8719
        %v9257 = vunpack.c.h.b16 %v8719
        %v9258 = vunpack.c.l.b16 %v8720
        %v9259 = vunpack.c.h.b16 %v8720
        %v9260 = vunpack.c.l.b16 %v8721
        %v9261 = vunpack.c.h.b16 %v8721
        %v9262 = vunpack.c.l.b16 %v8722
        %v9263 = vunpack.c.h.b16 %v8722
        %v9264 = vunpack.c.l.b16 %v8723
        %v9265 = vunpack.c.h.b16 %v8723
        %v9266 = vunpack.c.l.b16 %v8724
        %v9267 = vunpack.c.h.b16 %v8724
        %v9268 = vunpack.c.l.b16 %v8725
        %v9269 = vunpack.c.h.b16 %v8725
        %v9270 = vunpack.c.l.b16 %v8726
        %v9271 = vunpack.c.h.b16 %v8726
        %v9272 = vunpack.c.l.b16 %v8727
        %v9273 = vunpack.c.h.b16 %v8727
        %v9274 = vunpack.c.l.b16 %v8728
        %v9275 = vunpack.c.h.b16 %v8728
        %v9276 = vunpack.c.l.b16 %v8729
        %v9277 = vunpack.c.h.b16 %v8729
        %v9278 = vunpack.c.l.b16 %v8730
        %v9279 = vunpack.c.h.b16 %v8730
        %v9280 = vunpack.c.l.b16 %v8731
        %v9281 = vunpack.c.h.b16 %v8731
        %v9282 = vunpack.c.l.b16 %v8732
        %v9283 = vunpack.c.h.b16 %v8732
        %v9284 = vunpack.c.l.b16 %v8733
        %v9285 = vunpack.c.h.b16 %v8733
        %v9286 = vunpack.c.l.b16 %v8734
        %v9287 = vunpack.c.h.b16 %v8734
        %v9288 = vunpack.c.l.b16 %v8735
        %v9289 = vunpack.c.h.b16 %v8735
        %v9290 = vunpack.c.l.b16 %v8736
        %v9291 = vunpack.c.h.b16 %v8736
        %v9292 = vunpack.c.l.b16 %v8737
        %v9293 = vunpack.c.h.b16 %v8737
        %v9294 = vunpack.c.l.b16 %v8738
        %v9295 = vunpack.c.h.b16 %v8738
        %v9296 = vunpack.c.l.b16 %v8739
        %v9297 = vunpack.c.h.b16 %v8739
        %v9298 = vunpack.c.l.b16 %v8740
        %v9299 = vunpack.c.h.b16 %v8740
        %v9300 = vunpack.c.l.b16 %v8741
        %v9301 = vunpack.c.h.b16 %v8741
        %v9302 = vunpack.c.l.b16 %v8742
        %v9303 = vunpack.c.h.b16 %v8742
        %v9304 = vunpack.c.l.b16 %v8743
        %v9305 = vunpack.c.h.b16 %v8743
        %v9306 = vunpack.c.l.b16 %v8744
        %v9307 = vunpack.c.h.b16 %v8744
        %v9308 = vunpack.c.l.b16 %v8745
        %v9309 = vunpack.c.h.b16 %v8745
        %v9310 = vunpack.c.l.b16 %v8746
        %v9311 = vunpack.c.h.b16 %v8746
        %v9312 = vunpack.c.l.b16 %v8747
        %v9313 = vunpack.c.h.b16 %v8747
        %v9314 = vunpack.c.l.b16 %v8748
        %v9315 = vunpack.c.h.b16 %v8748
        %v9316 = vunpack.c.l.b16 %v8749
        %v9317 = vunpack.c.h.b16 %v8749
        %v9318 = vunpack.c.l.b16 %v8750
        %v9319 = vunpack.c.h.b16 %v8750
        %v9320 = vunpack.c.l.b16 %v8751
        %v9321 = vunpack.c.h.b16 %v8751
        %v9322 = vunpack.c.l.b16 %v8752
        %v9323 = vunpack.c.h.b16 %v8752
        %v9324 = vunpack.c.l.b16 %v8753
        %v9325 = vunpack.c.h.b16 %v8753
        %v9326 = vunpack.c.l.b16 %v8754
        %v9327 = vunpack.c.h.b16 %v8754
        %v9328 = vunpack.c.l.b16 %v8755
        %v9329 = vunpack.c.h.b16 %v8755
        %v9330 = vunpack.c.l.b16 %v8756
        %v9331 = vunpack.c.h.b16 %v8756
        %v9332 = vunpack.c.l.b16 %v8757
        %v9333 = vunpack.c.h.b16 %v8757
        %v9334 = vunpack.c.l.b16 %v8758
        %v9335 = vunpack.c.h.b16 %v8758
        %v9336 = vunpack.c.l.b16 %v8759
        %v9337 = vunpack.c.h.b16 %v8759
        %v9338 = vunpack.c.l.b16 %v8760
        %v9339 = vunpack.c.h.b16 %v8760
        %v9340 = vunpack.c.l.b16 %v8761
        %v9341 = vunpack.c.h.b16 %v8761
        %v9342 = vunpack.c.l.b16 %v8762
        %v9343 = vunpack.c.h.b16 %v8762
        %v9344 = vunpack.c.l.b16 %v8763
        %v9345 = vunpack.c.h.b16 %v8763
        %v9346 = vunpack.c.l.b16 %v8764
        %v9347 = vunpack.c.h.b16 %v8764
        %v9348 = vunpack.c.l.b16 %v8765
        %v9349 = vunpack.c.h.b16 %v8765
        %v9350 = vunpack.c.l.b16 %v8766
        %v9351 = vunpack.c.h.b16 %v8766
        %v9352 = vunpack.c.l.b16 %v8767
        %v9353 = vunpack.c.h.b16 %v8767
        %v9354 = vunpack.c.l.b16 %v8768
        %v9355 = vunpack.c.h.b16 %v8768
        %v9356 = vunpack.c.l.b16 %v8769
        %v9357 = vunpack.c.h.b16 %v8769
        %v9358 = vunpack.c.l.b16 %v8770
        %v9359 = vunpack.c.h.b16 %v8770
        %v9360 = vunpack.c.l.b16 %v8771
        %v9361 = vunpack.c.h.b16 %v8771
        %v9362 = vunpack.c.l.b16 %v8772
        %v9363 = vunpack.c.h.b16 %v8772
        %v9364 = vunpack.c.l.b16 %v8773
        %v9365 = vunpack.c.h.b16 %v8773
        %v9366 = vunpack.c.l.b16 %v8774
        %v9367 = vunpack.c.h.b16 %v8774
        %v9368 = vunpack.c.l.b16 %v8775
        %v9369 = vunpack.c.h.b16 %v8775
        %v9370 = vunpack.c.l.b16 %v8776
        %v9371 = vunpack.c.h.b16 %v8776
        %v9372 = vunpack.c.l.b16 %v8777
        %v9373 = vunpack.c.h.b16 %v8777
        %v9374 = vunpack.c.l.b16 %v8778
        %v9375 = vunpack.c.h.b16 %v8778
        %v9376 = vunpack.c.l.b16 %v8779
        %v9377 = vunpack.c.h.b16 %v8779
        %v9378 = vunpack.c.l.b16 %v8780
        %v9379 = vunpack.c.h.b16 %v8780
        %v9380 = vunpack.c.l.b16 %v8781
        %v9381 = vunpack.c.h.b16 %v8781
        %v9382 = vunpack.c.l.b16 %v8782
        %v9383 = vunpack.c.h.b16 %v8782
        %v9384 = vunpack.c.l.b16 %v8783
        %v9385 = vunpack.c.h.b16 %v8783
        %v9386 = vunpack.c.l.b16 %v8784
        %v9387 = vunpack.c.h.b16 %v8784
        %v9388 = vunpack.c.l.b16 %v8785
        %v9389 = vunpack.c.h.b16 %v8785
        %v9390 = vunpack.c.l.b16 %v8786
        %v9391 = vunpack.c.h.b16 %v8786
        %v9392 = vunpack.c.l.b16 %v8787
        %v9393 = vunpack.c.h.b16 %v8787
        %v9394 = vunpack.c.l.b16 %v8788
        %v9395 = vunpack.c.h.b16 %v8788
        %v9396 = vunpack.c.l.b16 %v8789
        %v9397 = vunpack.c.h.b16 %v8789
        %v9398 = vunpack.c.l.b16 %v8790
        %v9399 = vunpack.c.h.b16 %v8790
        %v9400 = vunpack.c.l.b16 %v8791
        %v9401 = vunpack.c.h.b16 %v8791
        %v9402 = vunpack.c.l.b16 %v8792
        %v9403 = vunpack.c.h.b16 %v8792
        %v9404 = vunpack.c.l.b16 %v8793
        %v9405 = vunpack.c.h.b16 %v8793
        %v9406 = vunpack.c.l.b16 %v8794
        %v9407 = vunpack.c.h.b16 %v8794
        %v9408 = vunpack.c.l.b16 %v8795
        %v9409 = vunpack.c.h.b16 %v8795
        %v9410 = vunpack.c.l.b16 %v8796
        %v9411 = vunpack.c.h.b16 %v8796
        %v9412 = vunpack.c.l.b16 %v8797
        %v9413 = vunpack.c.h.b16 %v8797
        %v9414 = vunpack.c.l.b16 %v8798
        %v9415 = vunpack.c.h.b16 %v8798
        %v9416 = vunpack.c.l.b16 %v8799
        %v9417 = vunpack.c.h.b16 %v8799
        %v9418 = vunpack.c.l.b16 %v8800
        %v9419 = vunpack.c.h.b16 %v8800
        %v9420 = vunpack.c.l.b16 %v8801
        %v9421 = vunpack.c.h.b16 %v8801
        %v9422 = vunpack.c.l.b16 %v8802
        %v9423 = vunpack.c.h.b16 %v8802
        %v9424 = vunpack.c.l.b16 %v8803
        %v9425 = vunpack.c.h.b16 %v8803
        %v9426 = vunpack.c.l.b16 %v8804
        %v9427 = vunpack.c.h.b16 %v8804
        %v9428 = vunpack.c.l.b16 %v8805
        %v9429 = vunpack.c.h.b16 %v8805
        %v9430 = vunpack.c.l.b16 %v8806
        %v9431 = vunpack.c.h.b16 %v8806
        %v9432 = vunpack.c.l.b16 %v8807
        %v9433 = vunpack.c.h.b16 %v8807
        %v9434 = vunpack.c.l.b16 %v8808
        %v9435 = vunpack.c.h.b16 %v8808
        %v9436 = vunpack.c.l.b16 %v8809
        %v9437 = vunpack.c.h.b16 %v8809
        %v9438 = vunpack.c.l.b16 %v8810
        %v9439 = vunpack.c.h.b16 %v8810
        %v9440 = vunpack.c.l.b16 %v8811
        %v9441 = vunpack.c.h.b16 %v8811
        %v9442 = vunpack.c.l.b16 %v8812
        %v9443 = vunpack.c.h.b16 %v8812
        %v9444 = vunpack.c.l.b16 %v8813
        %v9445 = vunpack.c.h.b16 %v8813
        %v9446 = vunpack.c.l.b16 %v8814
        %v9447 = vunpack.c.h.b16 %v8814
        %v9448 = vunpack.c.l.b16 %v8815
        %v9449 = vunpack.c.h.b16 %v8815
        %v9450 = vunpack.c.l.b16 %v8816
        %v9451 = vunpack.c.h.b16 %v8816
        %v9452 = vunpack.c.l.b16 %v8817
        %v9453 = vunpack.c.h.b16 %v8817
        %v9454 = vunpack.c.l.b16 %v8818
        %v9455 = vunpack.c.h.b16 %v8818
        %v9456 = vunpack.c.l.b16 %v8819
        %v9457 = vunpack.c.h.b16 %v8819
        %v9458 = vunpack.c.l.b16 %v8820
        %v9459 = vunpack.c.h.b16 %v8820
        %v9460 = vunpack.c.l.b16 %v8821
        %v9461 = vunpack.c.h.b16 %v8821
        %v9462 = vunpack.c.l.b16 %v8822
        %v9463 = vunpack.c.h.b16 %v8822
        %v9464 = vunpack.c.l.b16 %v8823
        %v9465 = vunpack.c.h.b16 %v8823
        %v9466 = vunpack.c.l.b16 %v8824
        %v9467 = vunpack.c.h.b16 %v8824
        %v9468 = vunpack.c.l.b16 %v8825
        %v9469 = vunpack.c.h.b16 %v8825
        %v9470 = vunpack.c.l.b16 %v8826
        %v9471 = vunpack.c.h.b16 %v8826
        %v9472 = vunpack.c.l.b16 %v8827
        %v9473 = vunpack.c.h.b16 %v8827
        %v9474 = vunpack.c.l.b16 %v8828
        %v9475 = vunpack.c.h.b16 %v8828
        %v9476 = vunpack.c.l.b16 %v8829
        %v9477 = vunpack.c.h.b16 %v8829
        %v9478 = vunpack.c.l.b16 %v8830
        %v9479 = vunpack.c.h.b16 %v8830
        %v9480 = vunpack.c.l.b16 %v8831
        %v9481 = vunpack.c.h.b16 %v8831
        %v9482 = vunpack.c.l.b16 %v8832
        %v9483 = vunpack.c.h.b16 %v8832
        %v9484 = vunpack.c.l.b16 %v8833
        %v9485 = vunpack.c.h.b16 %v8833
        %v9486 = vunpack.c.l.b16 %v8834
        %v9487 = vunpack.c.h.b16 %v8834
        %v9488 = vunpack.c.l.b16 %v8835
        %v9489 = vunpack.c.h.b16 %v8835
        %v9490 = vunpack.c.l.b16 %v8836
        %v9491 = vunpack.c.h.b16 %v8836
        %v9492 = vunpack.c.l.b16 %v8837
        %v9493 = vunpack.c.h.b16 %v8837
        %v9494 = vunpack.c.l.b16 %v8838
        %v9495 = vunpack.c.h.b16 %v8838
        %v9496 = vunpack.c.l.b16 %v8839
        %v9497 = vunpack.c.h.b16 %v8839
        %v9498 = vunpack.c.l.b16 %v8840
        %v9499 = vunpack.c.h.b16 %v8840
        %v9500 = vunpack.c.l.b16 %v8841
        %v9501 = vunpack.c.h.b16 %v8841
        %v9502 = vunpack.c.l.b16 %v8842
        %v9503 = vunpack.c.h.b16 %v8842
        %v9504 = vunpack.c.l.b16 %v8843
        %v9505 = vunpack.c.h.b16 %v8843
        %v9506 = vunpack.c.l.b16 %v8844
        %v9507 = vunpack.c.h.b16 %v8844
        %v9508 = vunpack.c.l.b16 %v8845
        %v9509 = vunpack.c.h.b16 %v8845
        %v9510 = vunpack.c.l.b16 %v8846
        %v9511 = vunpack.c.h.b16 %v8846
        %v9512 = vunpack.c.l.b16 %v8847
        %v9513 = vunpack.c.h.b16 %v8847
        %v9514 = vunpack.c.l.b16 %v8848
        %v9515 = vunpack.c.h.b16 %v8848
        %v9516 = vunpack.c.l.b16 %v8849
        %v9517 = vunpack.c.h.b16 %v8849
        %v9518 = vunpack.c.l.b16 %v8850
        %v9519 = vunpack.c.h.b16 %v8850
        %v9520 = vunpack.c.l.b16 %v8851
        %v9521 = vunpack.c.h.b16 %v8851
        %v9522 = vunpack.c.l.b16 %v8852
        %v9523 = vunpack.c.h.b16 %v8852
        %v9524 = vunpack.c.l.b16 %v8853
        %v9525 = vunpack.c.h.b16 %v8853
        %v9526 = vunpack.c.l.b16 %v8854
        %v9527 = vunpack.c.h.b16 %v8854
        %v9528 = vunpack.c.l.b16 %v8855
        %v9529 = vunpack.c.h.b16 %v8855
        %v9530 = vunpack.c.l.b16 %v8856
        %v9531 = vunpack.c.h.b16 %v8856
        %v9532 = vunpack.c.l.b16 %v8857
        %v9533 = vunpack.c.h.b16 %v8857
        %v9534 = vunpack.c.l.b16 %v8858
        %v9535 = vunpack.c.h.b16 %v8858
        %v9536 = vunpack.c.l.b16 %v8859
        %v9537 = vunpack.c.h.b16 %v8859
        %v9538 = vunpack.c.l.b16 %v8860
        %v9539 = vunpack.c.h.b16 %v8860
        %v9540 = vunpack.c.l.b16 %v8861
        %v9541 = vunpack.c.h.b16 %v8861
        %v9542 = vunpack.c.l.b16 %v8862
        %v9543 = vunpack.c.h.b16 %v8862
        %v9544 = vunpack.c.l.b16 %v8863
        %v9545 = vunpack.c.h.b16 %v8863
        %v9546 = vunpack.c.l.b16 %v8864
        %v9547 = vunpack.c.h.b16 %v8864
        %v9548 = vunpack.c.l.b16 %v8865
        %v9549 = vunpack.c.h.b16 %v8865
        %v9550 = vunpack.c.l.b16 %v8866
        %v9551 = vunpack.c.h.b16 %v8866
        %v9552 = vunpack.c.l.b16 %v8867
        %v9553 = vunpack.c.h.b16 %v8867
        %v9554 = vunpack.c.l.b16 %v8868
        %v9555 = vunpack.c.h.b16 %v8868
        %v9556 = vunpack.c.l.b16 %v8869
        %v9557 = vunpack.c.h.b16 %v8869
        %v9558 = vunpack.c.l.b16 %v8870
        %v9559 = vunpack.c.h.b16 %v8870
        %v9560 = vunpack.c.l.b16 %v8871
        %v9561 = vunpack.c.h.b16 %v8871
        %v9562 = vunpack.c.l.b16 %v8872
        %v9563 = vunpack.c.h.b16 %v8872
        %v9564 = vunpack.c.l.b16 %v8873
        %v9565 = vunpack.c.h.b16 %v8873
        %v9566 = vunpack.c.l.b16 %v8874
        %v9567 = vunpack.c.h.b16 %v8874
        %v9568 = vunpack.c.l.b16 %v8875
        %v9569 = vunpack.c.h.b16 %v8875
        %v9570 = vunpack.c.l.b16 %v8876
        %v9571 = vunpack.c.h.b16 %v8876
        %v9572 = vunpack.c.l.b16 %v8877
        %v9573 = vunpack.c.h.b16 %v8877
        %v9574 = vunpack.c.l.b16 %v8878
        %v9575 = vunpack.c.h.b16 %v8878
        %v9576 = vunpack.c.l.b16 %v8879
        %v9577 = vunpack.c.h.b16 %v8879
        %v9578 = vunpack.c.l.b16 %v8880
        %v9579 = vunpack.c.h.b16 %v8880
        %v9580 = vunpack.c.l.b16 %v8881
        %v9581 = vunpack.c.h.b16 %v8881
        %v9582 = vunpack.c.l.b16 %v8882
        %v9583 = vunpack.c.h.b16 %v8882
        %v9584 = vunpack.c.l.b16 %v8883
        %v9585 = vunpack.c.h.b16 %v8883
        %v9586 = vunpack.c.l.b16 %v8884
        %v9587 = vunpack.c.h.b16 %v8884
        %v9588 = vunpack.c.l.b16 %v8885
        %v9589 = vunpack.c.h.b16 %v8885
        %v9590 = vunpack.c.l.b16 %v8886
        %v9591 = vunpack.c.h.b16 %v8886
        %v9592 = vunpack.c.l.b16 %v8887
        %v9593 = vunpack.c.h.b16 %v8887
        %v9594 = vunpack.c.l.b16 %v8888
        %v9595 = vunpack.c.h.b16 %v8888
        %v9596 = vunpack.c.l.b16 %v8889
        %v9597 = vunpack.c.h.b16 %v8889
        %v9598 = vunpack.c.l.b16 %v8890
        %v9599 = vunpack.c.h.b16 %v8890
        %v9600 = vunpack.c.l.b16 %v8891
        %v9601 = vunpack.c.h.b16 %v8891
        %v9602 = vunpack.c.l.b16 %v8892
        %v9603 = vunpack.c.h.b16 %v8892
        %v9604 = vunpack.c.l.b16 %v8893
        %v9605 = vunpack.c.h.b16 %v8893
        %v9606 = vunpack.c.l.b16 %v8894
        %v9607 = vunpack.c.h.b16 %v8894
        %v9608 = vunpack.c.l.b16 %v8895
        %v9609 = vunpack.c.h.b16 %v8895
        %v9610 = vunpack.c.l.b16 %v8896
        %v9611 = vunpack.c.h.b16 %v8896
        %v9612 = vunpack.c.l.b16 %v8897
        %v9613 = vunpack.c.h.b16 %v8897
        %v9614 = vunpack.c.l.b16 %v8898
        %v9615 = vunpack.c.h.b16 %v8898
        %v9616 = vunpack.c.l.b16 %v8899
        %v9617 = vunpack.c.h.b16 %v8899
        %v9618 = vunpack.c.l.b16 %v8900
        %v9619 = vunpack.c.h.b16 %v8900
        %v9620 = vunpack.c.l.b16 %v8901
        %v9621 = vunpack.c.h.b16 %v8901
        %v9622 = vunpack.c.l.b16 %v8902
        %v9623 = vunpack.c.h.b16 %v8902
        %v9624 = vunpack.c.l.b16 %v8903
        %v9625 = vunpack.c.h.b16 %v8903
        %v9626 = vunpack.c.l.b16 %v8904
        %v9627 = vunpack.c.h.b16 %v8904
        %v9628 = vunpack.c.l.b16 %v8905
        %v9629 = vunpack.c.h.b16 %v8905
        %v9630 = vunpack.c.l.b16 %v8906
        %v9631 = vunpack.c.h.b16 %v8906
        %v9632 = vunpack.c.l.b16 %v8907
        %v9633 = vunpack.c.h.b16 %v8907
        %v9634 = vunpack.c.l.b16 %v8908
        %v9635 = vunpack.c.h.b16 %v8908
        %v9636 = vunpack.c.l.b16 %v8909
        %v9637 = vunpack.c.h.b16 %v8909
        %v9638 = vunpack.c.l.b16 %v8910
        %v9639 = vunpack.c.h.b16 %v8910
        %v9640 = vunpack.c.l.b16 %v8911
        %v9641 = vunpack.c.h.b16 %v8911
        %v9642 = vunpack.c.l.b16 %v8912
        %v9643 = vunpack.c.h.b16 %v8912
        %v9644 = vunpack.c.l.b16 %v8913
        %v9645 = vunpack.c.h.b16 %v8913
        %v9646 = vunpack.c.l.b16 %v8914
        %v9647 = vunpack.c.h.b16 %v8914
        %v9648 = vunpack.c.l.b16 %v8915
        %v9649 = vunpack.c.h.b16 %v8915
        %v9650 = vunpack.c.l.b16 %v8916
        %v9651 = vunpack.c.h.b16 %v8916
        %v9652 = vunpack.c.l.b16 %v8917
        %v9653 = vunpack.c.h.b16 %v8917
        %v9654 = vunpack.c.l.b16 %v8918
        %v9655 = vunpack.c.h.b16 %v8918
        %v9656 = vunpack.c.l.b16 %v8919
        %v9657 = vunpack.c.h.b16 %v8919
        %v9658 = vunpack.c.l.b16 %v8920
        %v9659 = vunpack.c.h.b16 %v8920
        %v9660 = vunpack.c.l.b16 %v8921
        %v9661 = vunpack.c.h.b16 %v8921
        %v9662 = vunpack.c.l.b16 %v8922
        %v9663 = vunpack.c.h.b16 %v8922
        %v9664 = vunpack.c.l.b16 %v8923
        %v9665 = vunpack.c.h.b16 %v8923
        %v9666 = vunpack.c.l.b16 %v8924
        %v9667 = vunpack.c.h.b16 %v8924
        %v9668 = vunpack.c.l.b16 %v8925
        %v9669 = vunpack.c.h.b16 %v8925
        %v9670 = vunpack.c.l.b16 %v8926
        %v9671 = vunpack.c.h.b16 %v8926
        %v9672 = vunpack.c.l.b16 %v8927
        %v9673 = vunpack.c.h.b16 %v8927
        %v9674 = vunpack.c.l.b16 %v8928
        %v9675 = vunpack.c.h.b16 %v8928
        %v9676 = vunpack.c.l.b16 %v8929
        %v9677 = vunpack.c.h.b16 %v8929
        %v9678 = vunpack.c.l.b16 %v8930
        %v9679 = vunpack.c.h.b16 %v8930
        %v9680 = vunpack.c.l.b16 %v8931
        %v9681 = vunpack.c.h.b16 %v8931
        %v9682 = vunpack.c.l.b16 %v8932
        %v9683 = vunpack.c.h.b16 %v8932
        %v9684 = vunpack.c.l.b16 %v8933
        %v9685 = vunpack.c.h.b16 %v8933
        %v9686 = vunpack.c.l.b16 %v8934
        %v9687 = vunpack.c.h.b16 %v8934
        %v9688 = vunpack.c.l.b16 %v8935
        %v9689 = vunpack.c.h.b16 %v8935
        %v9690 = vunpack.c.l.b16 %v8936
        %v9691 = vunpack.c.h.b16 %v8936
        %v9692 = vunpack.c.l.b16 %v8937
        %v9693 = vunpack.c.h.b16 %v8937
        %v9694 = vunpack.c.l.b16 %v8938
        %v9695 = vunpack.c.h.b16 %v8938
        %v9696 = vunpack.c.l.b16 %v8939
        %v9697 = vunpack.c.h.b16 %v8939
        %v9698 = vunpack.c.l.b16 %v8940
        %v9699 = vunpack.c.h.b16 %v8940
        %v9700 = vunpack.c.l.b16 %v8941
        %v9701 = vunpack.c.h.b16 %v8941
        %v9702 = vunpack.c.l.b16 %v8942
        %v9703 = vunpack.c.h.b16 %v8942
        %v9704 = vunpack.c.l.b16 %v8943
        %v9705 = vunpack.c.h.b16 %v8943
        %v9706 = vunpack.c.l.b16 %v8944
        %v9707 = vunpack.c.h.b16 %v8944
        %v9708 = vunpack.c.l.b16 %v8945
        %v9709 = vunpack.c.h.b16 %v8945
        %v9710 = vunpack.c.l.b16 %v8946
        %v9711 = vunpack.c.h.b16 %v8946
        %v9712 = vunpack.c.l.b16 %v8947
        %v9713 = vunpack.c.h.b16 %v8947
        %v9714 = vunpack.c.l.b16 %v8948
        %v9715 = vunpack.c.h.b16 %v8948
        %v9716 = vunpack.c.l.b16 %v8949
        %v9717 = vunpack.c.h.b16 %v8949
        %v9718 = vunpack.c.l.b16 %v8950
        %v9719 = vunpack.c.h.b16 %v8950
        %v9720 = vpack.c.b16 %v9212, %v9208
        %v9721 = vpack.c.b16 %v9213, %v9209
        %v9722 = vpack.c.b16 %v9214, %v9210
        %v9723 = vpack.c.b16 %v9215, %v9211
        %v9724 = vpack.c.b16 %v9220, %v9216
        %v9725 = vpack.c.b16 %v9221, %v9217
        %v9726 = vpack.c.b16 %v9222, %v9218
        %v9727 = vpack.c.b16 %v9223, %v9219
        %v9728 = vpack.c.b16 %v9228, %v9224
        %v9729 = vpack.c.b16 %v9229, %v9225
        %v9730 = vpack.c.b16 %v9230, %v9226
        %v9731 = vpack.c.b16 %v9231, %v9227
        %v9732 = vpack.c.b16 %v9236, %v9232
        %v9733 = vpack.c.b16 %v9237, %v9233
        %v9734 = vpack.c.b16 %v9238, %v9234
        %v9735 = vpack.c.b16 %v9239, %v9235
        %v9736 = vpack.c.b16 %v9244, %v9240
        %v9737 = vpack.c.b16 %v9245, %v9241
        %v9738 = vpack.c.b16 %v9246, %v9242
        %v9739 = vpack.c.b16 %v9247, %v9243
        %v9740 = vpack.c.b16 %v9252, %v9248
        %v9741 = vpack.c.b16 %v9253, %v9249
        %v9742 = vpack.c.b16 %v9254, %v9250
        %v9743 = vpack.c.b16 %v9255, %v9251
        %v9744 = vpack.c.b16 %v9260, %v9256
        %v9745 = vpack.c.b16 %v9261, %v9257
        %v9746 = vpack.c.b16 %v9262, %v9258
        %v9747 = vpack.c.b16 %v9263, %v9259
        %v9748 = vpack.c.b16 %v9268, %v9264
        %v9749 = vpack.c.b16 %v9269, %v9265
        %v9750 = vpack.c.b16 %v9270, %v9266
        %v9751 = vpack.c.b16 %v9271, %v9267
        %v9752 = vpack.c.b16 %v9276, %v9272
        %v9753 = vpack.c.b16 %v9277, %v9273
        %v9754 = vpack.c.b16 %v9278, %v9274
        %v9755 = vpack.c.b16 %v9279, %v9275
        %v9756 = vpack.c.b16 %v9284, %v9280
        %v9757 = vpack.c.b16 %v9285, %v9281
        %v9758 = vpack.c.b16 %v9286, %v9282
        %v9759 = vpack.c.b16 %v9287, %v9283
        %v9760 = vpack.c.b16 %v9292, %v9288
        %v9761 = vpack.c.b16 %v9293, %v9289
        %v9762 = vpack.c.b16 %v9294, %v9290
        %v9763 = vpack.c.b16 %v9295, %v9291
        %v9764 = vpack.c.b16 %v9300, %v9296
        %v9765 = vpack.c.b16 %v9301, %v9297
        %v9766 = vpack.c.b16 %v9302, %v9298
        %v9767 = vpack.c.b16 %v9303, %v9299
        %v9768 = vpack.c.b16 %v9308, %v9304
        %v9769 = vpack.c.b16 %v9309, %v9305
        %v9770 = vpack.c.b16 %v9310, %v9306
        %v9771 = vpack.c.b16 %v9311, %v9307
        %v9772 = vpack.c.b16 %v9316, %v9312
        %v9773 = vpack.c.b16 %v9317, %v9313
        %v9774 = vpack.c.b16 %v9318, %v9314
        %v9775 = vpack.c.b16 %v9319, %v9315
        %v9776 = vpack.c.b16 %v9324, %v9320
        %v9777 = vpack.c.b16 %v9325, %v9321
        %v9778 = vpack.c.b16 %v9326, %v9322
        %v9779 = vpack.c.b16 %v9327, %v9323
        %v9780 = vpack.c.b16 %v9332, %v9328
        %v9781 = vpack.c.b16 %v9333, %v9329
        %v9782 = vpack.c.b16 %v9334, %v9330
        %v9783 = vpack.c.b16 %v9335, %v9331
        %v9784 = vpack.c.b16 %v9340, %v9336
        %v9785 = vpack.c.b16 %v9341, %v9337
        %v9786 = vpack.c.b16 %v9342, %v9338
        %v9787 = vpack.c.b16 %v9343, %v9339
        %v9788 = vpack.c.b16 %v9348, %v9344
        %v9789 = vpack.c.b16 %v9349, %v9345
        %v9790 = vpack.c.b16 %v9350, %v9346
        %v9791 = vpack.c.b16 %v9351, %v9347
        %v9792 = vpack.c.b16 %v9356, %v9352
        %v9793 = vpack.c.b16 %v9357, %v9353
        %v9794 = vpack.c.b16 %v9358, %v9354
        %v9795 = vpack.c.b16 %v9359, %v9355
        %v9796 = vpack.c.b16 %v9364, %v9360
        %v9797 = vpack.c.b16 %v9365, %v9361
        %v9798 = vpack.c.b16 %v9366, %v9362
        %v9799 = vpack.c.b16 %v9367, %v9363
        %v9800 = vpack.c.b16 %v9372, %v9368
        %v9801 = vpack.c.b16 %v9373, %v9369
        %v9802 = vpack.c.b16 %v9374, %v9370
        %v9803 = vpack.c.b16 %v9375, %v9371
        %v9804 = vpack.c.b16 %v9380, %v9376
        %v9805 = vpack.c.b16 %v9381, %v9377
        %v9806 = vpack.c.b16 %v9382, %v9378
        %v9807 = vpack.c.b16 %v9383, %v9379
        %v9808 = vpack.c.b16 %v9388, %v9384
        %v9809 = vpack.c.b16 %v9389, %v9385
        %v9810 = vpack.c.b16 %v9390, %v9386
        %v9811 = vpack.c.b16 %v9391, %v9387
        %v9812 = vpack.c.b16 %v9396, %v9392
        %v9813 = vpack.c.b16 %v9397, %v9393
        %v9814 = vpack.c.b16 %v9398, %v9394
        %v9815 = vpack.c.b16 %v9399, %v9395
        %v9816 = vpack.c.b16 %v9404, %v9400
        %v9817 = vpack.c.b16 %v9405, %v9401
        %v9818 = vpack.c.b16 %v9406, %v9402
        %v9819 = vpack.c.b16 %v9407, %v9403
        %v9820 = vpack.c.b16 %v9412, %v9408
        %v9821 = vpack.c.b16 %v9413, %v9409
        %v9822 = vpack.c.b16 %v9414, %v9410
        %v9823 = vpack.c.b16 %v9415, %v9411
        %v9824 = vpack.c.b16 %v9420, %v9416
        %v9825 = vpack.c.b16 %v9421, %v9417
        %v9826 = vpack.c.b16 %v9422, %v9418
        %v9827 = vpack.c.b16 %v9423, %v9419
        %v9828 = vpack.c.b16 %v9428, %v9424
        %v9829 = vpack.c.b16 %v9429, %v9425
        %v9830 = vpack.c.b16 %v9430, %v9426
        %v9831 = vpack.c.b16 %v9431, %v9427
        %v9832 = vpack.c.b16 %v9436, %v9432
        %v9833 = vpack.c.b16 %v9437, %v9433
        %v9834 = vpack.c.b16 %v9438, %v9434
        %v9835 = vpack.c.b16 %v9439, %v9435
        %v9836 = vpack.c.b16 %v9444, %v9440
        %v9837 = vpack.c.b16 %v9445, %v9441
        %v9838 = vpack.c.b16 %v9446, %v9442
        %v9839 = vpack.c.b16 %v9447, %v9443
        %v9840 = vpack.c.b16 %v9452, %v9448
        %v9841 = vpack.c.b16 %v9453, %v9449
        %v9842 = vpack.c.b16 %v9454, %v9450
        %v9843 = vpack.c.b16 %v9455, %v9451
        %v9844 = vpack.c.b16 %v9460, %v9456
        %v9845 = vpack.c.b16 %v9461, %v9457
        %v9846 = vpack.c.b16 %v9462, %v9458
        %v9847 = vpack.c.b16 %v9463, %v9459
        %v9848 = vpack.c.b16 %v9468, %v9464
        %v9849 = vpack.c.b16 %v9469, %v9465
        %v9850 = vpack.c.b16 %v9470, %v9466
        %v9851 = vpack.c.b16 %v9471, %v9467
        %v9852 = vpack.c.b16 %v9476, %v9472
        %v9853 = vpack.c.b16 %v9477, %v9473
        %v9854 = vpack.c.b16 %v9478, %v9474
        %v9855 = vpack.c.b16 %v9479, %v9475
        %v9856 = vpack.c.b16 %v9484, %v9480
        %v9857 = vpack.c.b16 %v9485, %v9481
        %v9858 = vpack.c.b16 %v9486, %v9482
        %v9859 = vpack.c.b16 %v9487, %v9483
        %v9860 = vpack.c.b16 %v9492, %v9488
        %v9861 = vpack.c.b16 %v9493, %v9489
        %v9862 = vpack.c.b16 %v9494, %v9490
        %v9863 = vpack.c.b16 %v9495, %v9491
        %v9864 = vpack.c.b16 %v9500, %v9496
        %v9865 = vpack.c.b16 %v9501, %v9497
        %v9866 = vpack.c.b16 %v9502, %v9498
        %v9867 = vpack.c.b16 %v9503, %v9499
        %v9868 = vpack.c.b16 %v9508, %v9504
        %v9869 = vpack.c.b16 %v9509, %v9505
        %v9870 = vpack.c.b16 %v9510, %v9506
        %v9871 = vpack.c.b16 %v9511, %v9507
        %v9872 = vpack.c.b16 %v9516, %v9512
        %v9873 = vpack.c.b16 %v9517, %v9513
        %v9874 = vpack.c.b16 %v9518, %v9514
        %v9875 = vpack.c.b16 %v9519, %v9515
        %v9876 = vpack.c.b16 %v9524, %v9520
        %v9877 = vpack.c.b16 %v9525, %v9521
        %v9878 = vpack.c.b16 %v9526, %v9522
        %v9879 = vpack.c.b16 %v9527, %v9523
        %v9880 = vpack.c.b16 %v9532, %v9528
        %v9881 = vpack.c.b16 %v9533, %v9529
        %v9882 = vpack.c.b16 %v9534, %v9530
        %v9883 = vpack.c.b16 %v9535, %v9531
        %v9884 = vpack.c.b16 %v9540, %v9536
        %v9885 = vpack.c.b16 %v9541, %v9537
        %v9886 = vpack.c.b16 %v9542, %v9538
        %v9887 = vpack.c.b16 %v9543, %v9539
        %v9888 = vpack.c.b16 %v9548, %v9544
        %v9889 = vpack.c.b16 %v9549, %v9545
        %v9890 = vpack.c.b16 %v9550, %v9546
        %v9891 = vpack.c.b16 %v9551, %v9547
        %v9892 = vpack.c.b16 %v9556, %v9552
        %v9893 = vpack.c.b16 %v9557, %v9553
        %v9894 = vpack.c.b16 %v9558, %v9554
        %v9895 = vpack.c.b16 %v9559, %v9555
        %v9896 = vpack.c.b16 %v9564, %v9560
        %v9897 = vpack.c.b16 %v9565, %v9561
        %v9898 = vpack.c.b16 %v9566, %v9562
        %v9899 = vpack.c.b16 %v9567, %v9563
        %v9900 = vpack.c.b16 %v9572, %v9568
        %v9901 = vpack.c.b16 %v9573, %v9569
        %v9902 = vpack.c.b16 %v9574, %v9570
        %v9903 = vpack.c.b16 %v9575, %v9571
        %v9904 = vpack.c.b16 %v9580, %v9576
        %v9905 = vpack.c.b16 %v9581, %v9577
        %v9906 = vpack.c.b16 %v9582, %v9578
        %v9907 = vpack.c.b16 %v9583, %v9579
        %v9908 = vpack.c.b16 %v9588, %v9584
        %v9909 = vpack.c.b16 %v9589, %v9585
        %v9910 = vpack.c.b16 %v9590, %v9586
        %v9911 = vpack.c.b16 %v9591, %v9587
        %v9912 = vpack.c.b16 %v9596, %v9592
        %v9913 = vpack.c.b16 %v9597, %v9593
        %v9914 = vpack.c.b16 %v9598, %v9594
        %v9915 = vpack.c.b16 %v9599, %v9595
        %v9916 = vpack.c.b16 %v9604, %v9600
        %v9917 = vpack.c.b16 %v9605, %v9601
        %v9918 = vpack.c.b16 %v9606, %v9602
        %v9919 = vpack.c.b16 %v9607, %v9603
        %v9920 = vpack.c.b16 %v9612, %v9608
        %v9921 = vpack.c.b16 %v9613, %v9609
        %v9922 = vpack.c.b16 %v9614, %v9610
        %v9923 = vpack.c.b16 %v9615, %v9611
        %v9924 = vpack.c.b16 %v9620, %v9616
        %v9925 = vpack.c.b16 %v9621, %v9617
        %v9926 = vpack.c.b16 %v9622, %v9618
        %v9927 = vpack.c.b16 %v9623, %v9619
        %v9928 = vpack.c.b16 %v9628, %v9624
        %v9929 = vpack.c.b16 %v9629, %v9625
        %v9930 = vpack.c.b16 %v9630, %v9626
        %v9931 = vpack.c.b16 %v9631, %v9627
        %v9932 = vpack.c.b16 %v9636, %v9632
        %v9933 = vpack.c.b16 %v9637, %v9633
        %v9934 = vpack.c.b16 %v9638, %v9634
        %v9935 = vpack.c.b16 %v9639, %v9635
        %v9936 = vpack.c.b16 %v9644, %v9640
        %v9937 = vpack.c.b16 %v9645, %v9641
        %v9938 = vpack.c.b16 %v9646, %v9642
        %v9939 = vpack.c.b16 %v9647, %v9643
        %v9940 = vpack.c.b16 %v9652, %v9648
        %v9941 = vpack.c.b16 %v9653, %v9649
        %v9942 = vpack.c.b16 %v9654, %v9650
        %v9943 = vpack.c.b16 %v9655, %v9651
        %v9944 = vpack.c.b16 %v9660, %v9656
        %v9945 = vpack.c.b16 %v9661, %v9657
        %v9946 = vpack.c.b16 %v9662, %v9658
        %v9947 = vpack.c.b16 %v9663, %v9659
        %v9948 = vpack.c.b16 %v9668, %v9664
        %v9949 = vpack.c.b16 %v9669, %v9665
        %v9950 = vpack.c.b16 %v9670, %v9666
        %v9951 = vpack.c.b16 %v9671, %v9667
        %v9952 = vpack.c.b16 %v9676, %v9672
        %v9953 = vpack.c.b16 %v9677, %v9673
        %v9954 = vpack.c.b16 %v9678, %v9674
        %v9955 = vpack.c.b16 %v9679, %v9675
        %v9956 = vpack.c.b16 %v9684, %v9680
        %v9957 = vpack.c.b16 %v9685, %v9681
        %v9958 = vpack.c.b16 %v9686, %v9682
        %v9959 = vpack.c.b16 %v9687, %v9683
        %v9960 = vpack.c.b16 %v9692, %v9688
        %v9961 = vpack.c.b16 %v9693, %v9689
        %v9962 = vpack.c.b16 %v9694, %v9690
        %v9963 = vpack.c.b16 %v9695, %v9691
        %v9964 = vpack.c.b16 %v9700, %v9696
        %v9965 = vpack.c.b16 %v9701, %v9697
        %v9966 = vpack.c.b16 %v9702, %v9698
        %v9967 = vpack.c.b16 %v9703, %v9699
        %v9968 = vpack.c.b16 %v9708, %v9704
        %v9969 = vpack.c.b16 %v9709, %v9705
        %v9970 = vpack.c.b16 %v9710, %v9706
        %v9971 = vpack.c.b16 %v9711, %v9707
        %v9972 = vpack.c.b16 %v9716, %v9712
        %v9973 = vpack.c.b16 %v9717, %v9713
        %v9974 = vpack.c.b16 %v9718, %v9714
        %v9975 = vpack.c.b16 %v9719, %v9715
        %v10233 = vlaneseq
        %v10234 = vshrl.u32 %v10233, 7
        %v10235 = vsub.s32 0, %v10234
        %v10236 = vrot.slane %v8951, %v10235
        %v10237 = vlaneseq
        %v10238 = vshrl.u32 %v10237, 7
        %v10239 = vsub.s32 1, %v10238
        %v10240 = vrot.slane %v8951, %v10239
        %v10241 = vlaneseq
        %v10242 = vshrl.u32 %v10241, 7
        %v10243 = vsub.s32 2, %v10242
        %v10244 = vrot.slane %v8951, %v10243
        %v10245 = vlaneseq
        %v10246 = vshrl.u32 %v10245, 7
        %v10247 = vsub.s32 3, %v10246
        %v10248 = vrot.slane %v8951, %v10247
        %10253 = vmatprep.subr.bf16.mxu0 %v9749
        %10254 = vmatpush1.bf16.msra.mxu0 %v9748
        %10255 = vmatprep.subr.bf16.mxu0 %v9745
        %10256 = vmatpush1.bf16.msra.mxu0 %v9744
        %10257 = vmatprep.subr.bf16.mxu0 %v9741
        %10258 = vmatpush1.bf16.msra.mxu0 %v9740
        %10259 = vmatprep.subr.bf16.mxu0 %v9737
        %10260 = vmatpush1.bf16.msra.mxu0 %v9736
        %10261 = vmatprep.subr.bf16.mxu0 %v9733
        %10262 = vmatpush1.bf16.msra.mxu0 %v9732
        %10263 = vmatprep.subr.bf16.mxu0 %v9729
        %10264 = vmatpush1.bf16.msra.mxu0 %v9728
        %10265 = vmatprep.subr.bf16.mxu0 %v9725
        %10266 = vmatpush1.bf16.msra.mxu0 %v9724
        %10267 = vmatprep.subr.bf16.mxu0 %v9721
        %10268 = vmatpush1.bf16.msra.mxu0 %v9720
        %10269 = vmatprep.subr.bf16.mxu0 %v9781
        %10270 = vmatpush2.bf16.msra.mxu0 %v9780
        %10271 = vmatprep.subr.bf16.mxu0 %v9777
        %10272 = vmatpush2.bf16.msra.mxu0 %v9776
        %10273 = vmatprep.subr.bf16.mxu0 %v9773
        %10274 = vmatpush2.bf16.msra.mxu0 %v9772
        %10275 = vmatprep.subr.bf16.mxu0 %v9769
        %10276 = vmatpush2.bf16.msra.mxu0 %v9768
        %10277 = vmatprep.subr.bf16.mxu0 %v9765
        %10278 = vmatpush2.bf16.msra.mxu0 %v9764
        %10279 = vmatprep.subr.bf16.mxu0 %v9761
        %10280 = vmatpush2.bf16.msra.mxu0 %v9760
        %10281 = vmatprep.subr.bf16.mxu0 %v9757
        %10282 = vmatpush2.bf16.msra.mxu0 %v9756
        %10283 = vmatprep.subr.bf16.mxu0 %v9753
        %10284 = vmatpush2.bf16.msra.mxu0 %v9752
        %10285 = vmatprep.mubr.bf16.mxu0 %v8688
        %10286 = vmatmul.mubr.bf16.gmra.mxu0 %v8687
        %v10287 = vpop.f32.mrf.mxu0
        %v10288 = vadd.f32 %v10236, %v10287
        %v10289 = vpop.f32.mrf.mxu0
        %v10290 = vadd.f32 %v10240, %v10289
        %v10291 = vpop.f32.mrf.mxu0
        %v10292 = vpop.f32.mrf.mxu0
        %10293 = vdwg.mxu0
        %10294 = vmatprep.subr.bf16.mxu0 %v9813
        %10295 = vmatpush1.bf16.msra.mxu0 %v9812
        %10296 = vmatprep.subr.bf16.mxu0 %v9809
        %10297 = vmatpush1.bf16.msra.mxu0 %v9808
        %10298 = vmatprep.subr.bf16.mxu0 %v9805
        %10299 = vmatpush1.bf16.msra.mxu0 %v9804
        %10300 = vmatprep.subr.bf16.mxu0 %v9801
        %10301 = vmatpush1.bf16.msra.mxu0 %v9800
        %10302 = vmatprep.subr.bf16.mxu0 %v9797
        %10303 = vmatpush1.bf16.msra.mxu0 %v9796
        %10304 = vmatprep.subr.bf16.mxu0 %v9793
        %10305 = vmatpush1.bf16.msra.mxu0 %v9792
        %10306 = vmatprep.subr.bf16.mxu0 %v9789
        %10307 = vmatpush1.bf16.msra.mxu0 %v9788
        %10308 = vmatprep.subr.bf16.mxu0 %v9785
        %10309 = vmatpush1.bf16.msra.mxu0 %v9784
        %10310 = vmatprep.subr.bf16.mxu0 %v9845
        %10311 = vmatpush2.bf16.msra.mxu0 %v9844
        %10312 = vmatprep.subr.bf16.mxu0 %v9841
        %10313 = vmatpush2.bf16.msra.mxu0 %v9840
        %10314 = vmatprep.subr.bf16.mxu0 %v9837
        %10315 = vmatpush2.bf16.msra.mxu0 %v9836
        %10316 = vmatprep.subr.bf16.mxu0 %v9833
        %10317 = vmatpush2.bf16.msra.mxu0 %v9832
        %10318 = vmatprep.subr.bf16.mxu0 %v9829
        %10319 = vmatpush2.bf16.msra.mxu0 %v9828
        %10320 = vmatprep.subr.bf16.mxu0 %v9825
        %10321 = vmatpush2.bf16.msra.mxu0 %v9824
        %10322 = vmatprep.subr.bf16.mxu0 %v9821
        %10323 = vmatpush2.bf16.msra.mxu0 %v9820
        %10324 = vmatprep.subr.bf16.mxu0 %v9817
        %10325 = vmatpush2.bf16.msra.mxu0 %v9816
        %10326 = vmatprep.mubr.bf16.mxu0 %v8690
        %10327 = vmatmul.mubr.bf16.gmra.mxu0 %v8689
        %v10328 = vpop.f32.mrf.mxu0
        %v10329 = vadd.f32 %v10288, %v10328
        %v10330 = vpop.f32.mrf.mxu0
        %v10331 = vadd.f32 %v10290, %v10330
        %v10332 = vpop.f32.mrf.mxu0
        %v10333 = vpop.f32.mrf.mxu0
        %10334 = vdwg.mxu0
        %10335 = vmatprep.subr.bf16.mxu0 %v9877
        %10336 = vmatpush1.bf16.msra.mxu0 %v9876
        %10337 = vmatprep.subr.bf16.mxu0 %v9873
        %10338 = vmatpush1.bf16.msra.mxu0 %v9872
        %10339 = vmatprep.subr.bf16.mxu0 %v9869
        %10340 = vmatpush1.bf16.msra.mxu0 %v9868
        %10341 = vmatprep.subr.bf16.mxu0 %v9865
        %10342 = vmatpush1.bf16.msra.mxu0 %v9864
        %10343 = vmatprep.subr.bf16.mxu0 %v9861
        %10344 = vmatpush1.bf16.msra.mxu0 %v9860
        %10345 = vmatprep.subr.bf16.mxu0 %v9857
        %10346 = vmatpush1.bf16.msra.mxu0 %v9856
        %10347 = vmatprep.subr.bf16.mxu0 %v9853
        %10348 = vmatpush1.bf16.msra.mxu0 %v9852
        %10349 = vmatprep.subr.bf16.mxu0 %v9849
        %10350 = vmatpush1.bf16.msra.mxu0 %v9848
        %10351 = vmatprep.subr.bf16.mxu0 %v9909
        %10352 = vmatpush2.bf16.msra.mxu0 %v9908
        %10353 = vmatprep.subr.bf16.mxu0 %v9905
        %10354 = vmatpush2.bf16.msra.mxu0 %v9904
        %10355 = vmatprep.subr.bf16.mxu0 %v9901
        %10356 = vmatpush2.bf16.msra.mxu0 %v9900
        %10357 = vmatprep.subr.bf16.mxu0 %v9897
        %10358 = vmatpush2.bf16.msra.mxu0 %v9896
        %10359 = vmatprep.subr.bf16.mxu0 %v9893
        %10360 = vmatpush2.bf16.msra.mxu0 %v9892
        %10361 = vmatprep.subr.bf16.mxu0 %v9889
        %10362 = vmatpush2.bf16.msra.mxu0 %v9888
        %10363 = vmatprep.subr.bf16.mxu0 %v9885
        %10364 = vmatpush2.bf16.msra.mxu0 %v9884
        %10365 = vmatprep.subr.bf16.mxu0 %v9881
        %10366 = vmatpush2.bf16.msra.mxu0 %v9880
        %10367 = vmatprep.mubr.bf16.mxu0 %v8692
        %10368 = vmatmul.mubr.bf16.gmra.mxu0 %v8691
        %v10369 = vpop.f32.mrf.mxu0
        %v10370 = vadd.f32 %v10329, %v10369
        %v10371 = vpop.f32.mrf.mxu0
        %v10372 = vadd.f32 %v10331, %v10371
        %v10373 = vpop.f32.mrf.mxu0
        %v10374 = vpop.f32.mrf.mxu0
        %10375 = vdwg.mxu0
        %10376 = vmatprep.subr.bf16.mxu0 %v9941
        %10377 = vmatpush1.bf16.msra.mxu0 %v9940
        %10378 = vmatprep.subr.bf16.mxu0 %v9937
        %10379 = vmatpush1.bf16.msra.mxu0 %v9936
        %10380 = vmatprep.subr.bf16.mxu0 %v9933
        %10381 = vmatpush1.bf16.msra.mxu0 %v9932
        %10382 = vmatprep.subr.bf16.mxu0 %v9929
        %10383 = vmatpush1.bf16.msra.mxu0 %v9928
        %10384 = vmatprep.subr.bf16.mxu0 %v9925
        %10385 = vmatpush1.bf16.msra.mxu0 %v9924
        %10386 = vmatprep.subr.bf16.mxu0 %v9921
        %10387 = vmatpush1.bf16.msra.mxu0 %v9920
        %10388 = vmatprep.subr.bf16.mxu0 %v9917
        %10389 = vmatpush1.bf16.msra.mxu0 %v9916
        %10390 = vmatprep.subr.bf16.mxu0 %v9913
        %10391 = vmatpush1.bf16.msra.mxu0 %v9912
        %10392 = vmatprep.subr.bf16.mxu0 %v9973
        %10393 = vmatpush2.bf16.msra.mxu0 %v9972
        %10394 = vmatprep.subr.bf16.mxu0 %v9969
        %10395 = vmatpush2.bf16.msra.mxu0 %v9968
        %10396 = vmatprep.subr.bf16.mxu0 %v9965
        %10397 = vmatpush2.bf16.msra.mxu0 %v9964
        %10398 = vmatprep.subr.bf16.mxu0 %v9961
        %10399 = vmatpush2.bf16.msra.mxu0 %v9960
        %10400 = vmatprep.subr.bf16.mxu0 %v9957
        %10401 = vmatpush2.bf16.msra.mxu0 %v9956
        %10402 = vmatprep.subr.bf16.mxu0 %v9953
        %10403 = vmatpush2.bf16.msra.mxu0 %v9952
        %10404 = vmatprep.subr.bf16.mxu0 %v9949
        %10405 = vmatpush2.bf16.msra.mxu0 %v9948
        %10406 = vmatprep.subr.bf16.mxu0 %v9945
        %10407 = vmatpush2.bf16.msra.mxu0 %v9944
        %10408 = vmatprep.mubr.bf16.mxu0 %v8694
        %10409 = vmatmul.mubr.bf16.gmra.mxu0 %v8693
        %v10410 = vpop.f32.mrf.mxu0
        %v10411 = vadd.f32 %v10370, %v10410
        %v10412 = vpop.f32.mrf.mxu0
        %v10413 = vadd.f32 %v10372, %v10412
        %v10414 = vpop.f32.mrf.mxu0
        %v10415 = vpop.f32.mrf.mxu0
        %10416 = vdwg.mxu0
        %10417 = vmatprep.subr.bf16.mxu0 %v9751
        %10418 = vmatpush1.bf16.msra.mxu0 %v9750
        %10419 = vmatprep.subr.bf16.mxu0 %v9747
        %10420 = vmatpush1.bf16.msra.mxu0 %v9746
        %10421 = vmatprep.subr.bf16.mxu0 %v9743
        %10422 = vmatpush1.bf16.msra.mxu0 %v9742
        %10423 = vmatprep.subr.bf16.mxu0 %v9739
        %10424 = vmatpush1.bf16.msra.mxu0 %v9738
        %10425 = vmatprep.subr.bf16.mxu0 %v9735
        %10426 = vmatpush1.bf16.msra.mxu0 %v9734
        %10427 = vmatprep.subr.bf16.mxu0 %v9731
        %10428 = vmatpush1.bf16.msra.mxu0 %v9730
        %10429 = vmatprep.subr.bf16.mxu0 %v9727
        %10430 = vmatpush1.bf16.msra.mxu0 %v9726
        %10431 = vmatprep.subr.bf16.mxu0 %v9723
        %10432 = vmatpush1.bf16.msra.mxu0 %v9722
        %10433 = vmatprep.subr.bf16.mxu0 %v9783
        %10434 = vmatpush2.bf16.msra.mxu0 %v9782
        %10435 = vmatprep.subr.bf16.mxu0 %v9779
        %10436 = vmatpush2.bf16.msra.mxu0 %v9778
        %10437 = vmatprep.subr.bf16.mxu0 %v9775
        %10438 = vmatpush2.bf16.msra.mxu0 %v9774
        %10439 = vmatprep.subr.bf16.mxu0 %v9771
        %10440 = vmatpush2.bf16.msra.mxu0 %v9770
        %10441 = vmatprep.subr.bf16.mxu0 %v9767
        %10442 = vmatpush2.bf16.msra.mxu0 %v9766
        %10443 = vmatprep.subr.bf16.mxu0 %v9763
        %10444 = vmatpush2.bf16.msra.mxu0 %v9762
        %10445 = vmatprep.subr.bf16.mxu0 %v9759
        %10446 = vmatpush2.bf16.msra.mxu0 %v9758
        %10447 = vmatprep.subr.bf16.mxu0 %v9755
        %10448 = vmatpush2.bf16.msra.mxu0 %v9754
        %10449 = vmatprep.mubr.bf16.mxu0 %v8688
        %10450 = vmatmul.mubr.bf16.gmra.mxu0 %v8687
        %v10451 = vpop.f32.mrf.mxu0
        %v10452 = vadd.f32 %v10244, %v10451
        %v10453 = vpop.f32.mrf.mxu0
        %v10454 = vadd.f32 %v10248, %v10453
        %v10455 = vpop.f32.mrf.mxu0
        %v10456 = vpop.f32.mrf.mxu0
        %10457 = vdwg.mxu0
        %10458 = vmatprep.subr.bf16.mxu0 %v9815
        %10459 = vmatpush1.bf16.msra.mxu0 %v9814
        %10460 = vmatprep.subr.bf16.mxu0 %v9811
        %10461 = vmatpush1.bf16.msra.mxu0 %v9810
        %10462 = vmatprep.subr.bf16.mxu0 %v9807
        %10463 = vmatpush1.bf16.msra.mxu0 %v9806
        %10464 = vmatprep.subr.bf16.mxu0 %v9803
        %10465 = vmatpush1.bf16.msra.mxu0 %v9802
        %10466 = vmatprep.subr.bf16.mxu0 %v9799
        %10467 = vmatpush1.bf16.msra.mxu0 %v9798
        %10468 = vmatprep.subr.bf16.mxu0 %v9795
        %10469 = vmatpush1.bf16.msra.mxu0 %v9794
        %10470 = vmatprep.subr.bf16.mxu0 %v9791
        %10471 = vmatpush1.bf16.msra.mxu0 %v9790
        %10472 = vmatprep.subr.bf16.mxu0 %v9787
        %10473 = vmatpush1.bf16.msra.mxu0 %v9786
        %10474 = vmatprep.subr.bf16.mxu0 %v9847
        %10475 = vmatpush2.bf16.msra.mxu0 %v9846
        %10476 = vmatprep.subr.bf16.mxu0 %v9843
        %10477 = vmatpush2.bf16.msra.mxu0 %v9842
        %10478 = vmatprep.subr.bf16.mxu0 %v9839
        %10479 = vmatpush2.bf16.msra.mxu0 %v9838
        %10480 = vmatprep.subr.bf16.mxu0 %v9835
        %10481 = vmatpush2.bf16.msra.mxu0 %v9834
        %10482 = vmatprep.subr.bf16.mxu0 %v9831
        %10483 = vmatpush2.bf16.msra.mxu0 %v9830
        %10484 = vmatprep.subr.bf16.mxu0 %v9827
        %10485 = vmatpush2.bf16.msra.mxu0 %v9826
        %10486 = vmatprep.subr.bf16.mxu0 %v9823
        %10487 = vmatpush2.bf16.msra.mxu0 %v9822
        %10488 = vmatprep.subr.bf16.mxu0 %v9819
        %10489 = vmatpush2.bf16.msra.mxu0 %v9818
        %10490 = vmatprep.mubr.bf16.mxu0 %v8690
        %10491 = vmatmul.mubr.bf16.gmra.mxu0 %v8689
        %v10492 = vpop.f32.mrf.mxu0
        %v10493 = vadd.f32 %v10452, %v10492
        %v10494 = vpop.f32.mrf.mxu0
        %v10495 = vadd.f32 %v10454, %v10494
        %v10496 = vpop.f32.mrf.mxu0
        %v10497 = vpop.f32.mrf.mxu0
        %10498 = vdwg.mxu0
        %10499 = vmatprep.subr.bf16.mxu0 %v9879
        %10500 = vmatpush1.bf16.msra.mxu0 %v9878
        %10501 = vmatprep.subr.bf16.mxu0 %v9875
        %10502 = vmatpush1.bf16.msra.mxu0 %v9874
        %10503 = vmatprep.subr.bf16.mxu0 %v9871
        %10504 = vmatpush1.bf16.msra.mxu0 %v9870
        %10505 = vmatprep.subr.bf16.mxu0 %v9867
        %10506 = vmatpush1.bf16.msra.mxu0 %v9866
        %10507 = vmatprep.subr.bf16.mxu0 %v9863
        %10508 = vmatpush1.bf16.msra.mxu0 %v9862
        %10509 = vmatprep.subr.bf16.mxu0 %v9859
        %10510 = vmatpush1.bf16.msra.mxu0 %v9858
        %10511 = vmatprep.subr.bf16.mxu0 %v9855
        %10512 = vmatpush1.bf16.msra.mxu0 %v9854
        %10513 = vmatprep.subr.bf16.mxu0 %v9851
        %10514 = vmatpush1.bf16.msra.mxu0 %v9850
        %10515 = vmatprep.subr.bf16.mxu0 %v9911
        %10516 = vmatpush2.bf16.msra.mxu0 %v9910
        %10517 = vmatprep.subr.bf16.mxu0 %v9907
        %10518 = vmatpush2.bf16.msra.mxu0 %v9906
        %10519 = vmatprep.subr.bf16.mxu0 %v9903
        %10520 = vmatpush2.bf16.msra.mxu0 %v9902
        %10521 = vmatprep.subr.bf16.mxu0 %v9899
        %10522 = vmatpush2.bf16.msra.mxu0 %v9898
        %10523 = vmatprep.subr.bf16.mxu0 %v9895
        %10524 = vmatpush2.bf16.msra.mxu0 %v9894
        %10525 = vmatprep.subr.bf16.mxu0 %v9891
        %10526 = vmatpush2.bf16.msra.mxu0 %v9890
        %10527 = vmatprep.subr.bf16.mxu0 %v9887
        %10528 = vmatpush2.bf16.msra.mxu0 %v9886
        %10529 = vmatprep.subr.bf16.mxu0 %v9883
        %10530 = vmatpush2.bf16.msra.mxu0 %v9882
        %10531 = vmatprep.mubr.bf16.mxu0 %v8692
        %10532 = vmatmul.mubr.bf16.gmra.mxu0 %v8691
        %v10533 = vpop.f32.mrf.mxu0
        %v10534 = vadd.f32 %v10493, %v10533
        %v10535 = vpop.f32.mrf.mxu0
        %v10536 = vadd.f32 %v10495, %v10535
        %v10537 = vpop.f32.mrf.mxu0
        %v10538 = vpop.f32.mrf.mxu0
        %10539 = vdwg.mxu0
        %10540 = vmatprep.subr.bf16.mxu0 %v9943
        %10541 = vmatpush1.bf16.msra.mxu0 %v9942
        %10542 = vmatprep.subr.bf16.mxu0 %v9939
        %10543 = vmatpush1.bf16.msra.mxu0 %v9938
        %10544 = vmatprep.subr.bf16.mxu0 %v9935
        %10545 = vmatpush1.bf16.msra.mxu0 %v9934
        %10546 = vmatprep.subr.bf16.mxu0 %v9931
        %10547 = vmatpush1.bf16.msra.mxu0 %v9930
        %10548 = vmatprep.subr.bf16.mxu0 %v9927
        %10549 = vmatpush1.bf16.msra.mxu0 %v9926
        %10550 = vmatprep.subr.bf16.mxu0 %v9923
        %10551 = vmatpush1.bf16.msra.mxu0 %v9922
        %10552 = vmatprep.subr.bf16.mxu0 %v9919
        %10553 = vmatpush1.bf16.msra.mxu0 %v9918
        %10554 = vmatprep.subr.bf16.mxu0 %v9915
        %10555 = vmatpush1.bf16.msra.mxu0 %v9914
        %10556 = vmatprep.subr.bf16.mxu0 %v9975
        %10557 = vmatpush2.bf16.msra.mxu0 %v9974
        %10558 = vmatprep.subr.bf16.mxu0 %v9971
        %10559 = vmatpush2.bf16.msra.mxu0 %v9970
        %10560 = vmatprep.subr.bf16.mxu0 %v9967
        %10561 = vmatpush2.bf16.msra.mxu0 %v9966
        %10562 = vmatprep.subr.bf16.mxu0 %v9963
        %10563 = vmatpush2.bf16.msra.mxu0 %v9962
        %10564 = vmatprep.subr.bf16.mxu0 %v9959
        %10565 = vmatpush2.bf16.msra.mxu0 %v9958
        %10566 = vmatprep.subr.bf16.mxu0 %v9955
        %10567 = vmatpush2.bf16.msra.mxu0 %v9954
        %10568 = vmatprep.subr.bf16.mxu0 %v9951
        %10569 = vmatpush2.bf16.msra.mxu0 %v9950
        %10570 = vmatprep.subr.bf16.mxu0 %v9947
        %10571 = vmatpush2.bf16.msra.mxu0 %v9946
        %10572 = vmatprep.mubr.bf16.mxu0 %v8694
        %10573 = vmatmul.mubr.bf16.gmra.mxu0 %v8693
        %v10574 = vpop.f32.mrf.mxu0
        %v10575 = vadd.f32 %v10534, %v10574
        %v10576 = vpop.f32.mrf.mxu0
        %v10577 = vadd.f32 %v10536, %v10576
        %v10578 = vpop.f32.mrf.mxu0
        %v10579 = vpop.f32.mrf.mxu0
        %10580 = vdwg.mxu0
        %v10581 = vmax.f32 %v10411, 0.0
        %v10582 = vmax.f32 %v10413, 0.0
        %v10583 = vmax.f32 %v10575, 0.0
        %v10584 = vmax.f32 %v10577, 0.0
        %v10585 = vpack.c.bf16 %v10581, %v10581
        %v10586 = vpack.c.bf16 %v10582, %v10582
        %v10587 = vpack.c.bf16 %v10583, %v10583
        %v10588 = vpack.c.bf16 %v10584, %v10584
        %v10589 = vld [vmem:[#allocation30] sm:$0xf]
        %v10590 = vld [vmem:[#allocation30 + $0x4] sm:$0xf]
        %v10591 = vld [vmem:[#allocation30 + $0x8] sm:$0xf]
        %v10592 = vld [vmem:[#allocation30 + $0xc] sm:$0xf]
        %v10593 = vld [vmem:[#allocation30 + $0x10] sm:$0xf]
        %v10594 = vld [vmem:[#allocation30 + $0x14] sm:$0xf]
        %v10595 = vld [vmem:[#allocation30 + $0x18] sm:$0xf]
        %v10596 = vld [vmem:[#allocation30 + $0x1c] sm:$0xf]
        %v10597 = vld [vmem:[#allocation30 + $0x20] sm:$0xf]
        %v10598 = vld [vmem:[#allocation30 + $0x24] sm:$0xf]
        %v10599 = vld [vmem:[#allocation30 + $0x28] sm:$0xf]
        %v10600 = vld [vmem:[#allocation30 + $0x2c] sm:$0xf]
        %v10601 = vld [vmem:[#allocation30 + $0x30] sm:$0xf]
        %v10602 = vld [vmem:[#allocation30 + $0x34] sm:$0xf]
        %v10603 = vld [vmem:[#allocation30 + $0x38] sm:$0xf]
        %v10604 = vld [vmem:[#allocation30 + $0x3c] sm:$0xf]
        %v10605 = vld [vmem:[#allocation30 + $0x40] sm:$0xf]
        %v10606 = vld [vmem:[#allocation30 + $0x44] sm:$0xf]
        %v10607 = vld [vmem:[#allocation30 + $0x48] sm:$0xf]
        %v10608 = vld [vmem:[#allocation30 + $0x4c] sm:$0xf]
        %v10609 = vld [vmem:[#allocation30 + $0x50] sm:$0xf]
        %v10610 = vld [vmem:[#allocation30 + $0x54] sm:$0xf]
        %v10611 = vld [vmem:[#allocation30 + $0x58] sm:$0xf]
        %v10612 = vld [vmem:[#allocation30 + $0x5c] sm:$0xf]
        %v10613 = vld [vmem:[#allocation30 + $0x60] sm:$0xf]
        %v10614 = vld [vmem:[#allocation30 + $0x64] sm:$0xf]
        %v10615 = vld [vmem:[#allocation30 + $0x68] sm:$0xf]
        %v10616 = vld [vmem:[#allocation30 + $0x6c] sm:$0xf]
        %v10617 = vld [vmem:[#allocation30 + $0x70] sm:$0xf]
        %v10618 = vld [vmem:[#allocation30 + $0x74] sm:$0xf]
        %v10619 = vld [vmem:[#allocation30 + $0x78] sm:$0xf]
        %v10620 = vld [vmem:[#allocation30 + $0x7c] sm:$0xf]
        %v10621 = vld [vmem:[#allocation30 + $0x80] sm:$0xf]
        %v10622 = vld [vmem:[#allocation30 + $0x84] sm:$0xf]
        %v10623 = vld [vmem:[#allocation30 + $0x88] sm:$0xf]
        %v10624 = vld [vmem:[#allocation30 + $0x8c] sm:$0xf]
        %v10625 = vld [vmem:[#allocation30 + $0x90] sm:$0xf]
        %v10626 = vld [vmem:[#allocation30 + $0x94] sm:$0xf]
        %v10627 = vld [vmem:[#allocation30 + $0x98] sm:$0xf]
        %v10628 = vld [vmem:[#allocation30 + $0x9c] sm:$0xf]
        %v10629 = vld [vmem:[#allocation30 + $0xa0] sm:$0xf]
        %v10630 = vld [vmem:[#allocation30 + $0xa4] sm:$0xf]
        %v10631 = vld [vmem:[#allocation30 + $0xa8] sm:$0xf]
        %v10632 = vld [vmem:[#allocation30 + $0xac] sm:$0xf]
        %v10633 = vld [vmem:[#allocation30 + $0xb0] sm:$0xf]
        %v10634 = vld [vmem:[#allocation30 + $0xb4] sm:$0xf]
        %v10635 = vld [vmem:[#allocation30 + $0xb8] sm:$0xf]
        %v10636 = vld [vmem:[#allocation30 + $0xbc] sm:$0xf]
        %v10637 = vld [vmem:[#allocation30 + $0xc0] sm:$0xf]
        %v10638 = vld [vmem:[#allocation30 + $0xc4] sm:$0xf]
        %v10639 = vld [vmem:[#allocation30 + $0xc8] sm:$0xf]
        %v10640 = vld [vmem:[#allocation30 + $0xcc] sm:$0xf]
        %v10641 = vld [vmem:[#allocation30 + $0xd0] sm:$0xf]
        %v10642 = vld [vmem:[#allocation30 + $0xd4] sm:$0xf]
        %v10643 = vld [vmem:[#allocation30 + $0xd8] sm:$0xf]
        %v10644 = vld [vmem:[#allocation30 + $0xdc] sm:$0xf]
        %v10645 = vld [vmem:[#allocation30 + $0xe0] sm:$0xf]
        %v10646 = vld [vmem:[#allocation30 + $0xe4] sm:$0xf]
        %v10647 = vld [vmem:[#allocation30 + $0xe8] sm:$0xf]
        %v10648 = vld [vmem:[#allocation30 + $0xec] sm:$0xf]
        %v10649 = vld [vmem:[#allocation30 + $0xf0] sm:$0xf]
        %v10650 = vld [vmem:[#allocation30 + $0xf4] sm:$0xf]
        %v10651 = vld [vmem:[#allocation30 + $0xf8] sm:$0xf]
        %v10652 = vld [vmem:[#allocation30 + $0xfc] sm:$0xf]
        %v10653 = vld [vmem:[#allocation31] sm:$0x1]
        %v10718 = vunpack.c.l.b16 %v10589
        %v10719 = vunpack.c.l.b16 %v10590
        %v10720 = vunpack.c.l.b16 %v10591
        %v10721 = vunpack.c.l.b16 %v10592
        %v10722 = vunpack.c.l.b16 %v10593
        %v10723 = vunpack.c.l.b16 %v10594
        %v10724 = vunpack.c.l.b16 %v10595
        %v10725 = vunpack.c.l.b16 %v10596
        %v10726 = vunpack.c.l.b16 %v10597
        %v10727 = vunpack.c.l.b16 %v10598
        %v10728 = vunpack.c.l.b16 %v10599
        %v10729 = vunpack.c.l.b16 %v10600
        %v10730 = vunpack.c.l.b16 %v10601
        %v10731 = vunpack.c.l.b16 %v10602
        %v10732 = vunpack.c.l.b16 %v10603
        %v10733 = vunpack.c.l.b16 %v10604
        %v10734 = vunpack.c.l.b16 %v10605
        %v10735 = vunpack.c.l.b16 %v10606
        %v10736 = vunpack.c.l.b16 %v10607
        %v10737 = vunpack.c.l.b16 %v10608
        %v10738 = vunpack.c.l.b16 %v10609
        %v10739 = vunpack.c.l.b16 %v10610
        %v10740 = vunpack.c.l.b16 %v10611
        %v10741 = vunpack.c.l.b16 %v10612
        %v10742 = vunpack.c.l.b16 %v10613
        %v10743 = vunpack.c.l.b16 %v10614
        %v10744 = vunpack.c.l.b16 %v10615
        %v10745 = vunpack.c.l.b16 %v10616
        %v10746 = vunpack.c.l.b16 %v10617
        %v10747 = vunpack.c.l.b16 %v10618
        %v10748 = vunpack.c.l.b16 %v10619
        %v10749 = vunpack.c.l.b16 %v10620
        %v10750 = vunpack.c.l.b16 %v10621
        %v10751 = vunpack.c.l.b16 %v10622
        %v10752 = vunpack.c.l.b16 %v10623
        %v10753 = vunpack.c.l.b16 %v10624
        %v10754 = vunpack.c.l.b16 %v10625
        %v10755 = vunpack.c.l.b16 %v10626
        %v10756 = vunpack.c.l.b16 %v10627
        %v10757 = vunpack.c.l.b16 %v10628
        %v10758 = vunpack.c.l.b16 %v10629
        %v10759 = vunpack.c.l.b16 %v10630
        %v10760 = vunpack.c.l.b16 %v10631
        %v10761 = vunpack.c.l.b16 %v10632
        %v10762 = vunpack.c.l.b16 %v10633
        %v10763 = vunpack.c.l.b16 %v10634
        %v10764 = vunpack.c.l.b16 %v10635
        %v10765 = vunpack.c.l.b16 %v10636
        %v10766 = vunpack.c.l.b16 %v10637
        %v10767 = vunpack.c.l.b16 %v10638
        %v10768 = vunpack.c.l.b16 %v10639
        %v10769 = vunpack.c.l.b16 %v10640
        %v10770 = vunpack.c.l.b16 %v10641
        %v10771 = vunpack.c.l.b16 %v10642
        %v10772 = vunpack.c.l.b16 %v10643
        %v10773 = vunpack.c.l.b16 %v10644
        %v10774 = vunpack.c.l.b16 %v10645
        %v10775 = vunpack.c.l.b16 %v10646
        %v10776 = vunpack.c.l.b16 %v10647
        %v10777 = vunpack.c.l.b16 %v10648
        %v10778 = vunpack.c.l.b16 %v10649
        %v10779 = vunpack.c.l.b16 %v10650
        %v10780 = vunpack.c.l.b16 %v10651
        %v10781 = vunpack.c.l.b16 %v10652
        %v10782 = vpack.c.b16 %v10719, %v10718
        %v10783 = vpack.c.b16 %v10721, %v10720
        %v10784 = vpack.c.b16 %v10723, %v10722
        %v10785 = vpack.c.b16 %v10725, %v10724
        %v10786 = vpack.c.b16 %v10727, %v10726
        %v10787 = vpack.c.b16 %v10729, %v10728
        %v10788 = vpack.c.b16 %v10731, %v10730
        %v10789 = vpack.c.b16 %v10733, %v10732
        %v10790 = vpack.c.b16 %v10735, %v10734
        %v10791 = vpack.c.b16 %v10737, %v10736
        %v10792 = vpack.c.b16 %v10739, %v10738
        %v10793 = vpack.c.b16 %v10741, %v10740
        %v10794 = vpack.c.b16 %v10743, %v10742
        %v10795 = vpack.c.b16 %v10745, %v10744
        %v10796 = vpack.c.b16 %v10747, %v10746
        %v10797 = vpack.c.b16 %v10749, %v10748
        %v10798 = vpack.c.b16 %v10751, %v10750
        %v10799 = vpack.c.b16 %v10753, %v10752
        %v10800 = vpack.c.b16 %v10755, %v10754
        %v10801 = vpack.c.b16 %v10757, %v10756
        %v10802 = vpack.c.b16 %v10759, %v10758
        %v10803 = vpack.c.b16 %v10761, %v10760
        %v10804 = vpack.c.b16 %v10763, %v10762
        %v10805 = vpack.c.b16 %v10765, %v10764
        %v10806 = vpack.c.b16 %v10767, %v10766
        %v10807 = vpack.c.b16 %v10769, %v10768
        %v10808 = vpack.c.b16 %v10771, %v10770
        %v10809 = vpack.c.b16 %v10773, %v10772
        %v10810 = vpack.c.b16 %v10775, %v10774
        %v10811 = vpack.c.b16 %v10777, %v10776
        %v10812 = vpack.c.b16 %v10779, %v10778
        %v10813 = vpack.c.b16 %v10781, %v10780
        %10846 = vmatprep.subr.bf16.mxu0 0
        %10847 = vmatpush1.bf16.msra.mxu0 %v10789
        %10848 = vmatprep.subr.bf16.mxu0 0
        %10849 = vmatpush1.bf16.msra.mxu0 %v10788
        %10850 = vmatprep.subr.bf16.mxu0 0
        %10851 = vmatpush1.bf16.msra.mxu0 %v10787
        %10852 = vmatprep.subr.bf16.mxu0 0
        %10853 = vmatpush1.bf16.msra.mxu0 %v10786
        %10854 = vmatprep.subr.bf16.mxu0 0
        %10855 = vmatpush1.bf16.msra.mxu0 %v10785
        %10856 = vmatprep.subr.bf16.mxu0 0
        %10857 = vmatpush1.bf16.msra.mxu0 %v10784
        %10858 = vmatprep.subr.bf16.mxu0 0
        %10859 = vmatpush1.bf16.msra.mxu0 %v10783
        %10860 = vmatprep.subr.bf16.mxu0 0
        %10861 = vmatpush1.bf16.msra.mxu0 %v10782
        %10862 = vmatprep.subr.bf16.mxu0 0
        %10863 = vmatpush2.bf16.msra.mxu0 %v10797
        %10864 = vmatprep.subr.bf16.mxu0 0
        %10865 = vmatpush2.bf16.msra.mxu0 %v10796
        %10866 = vmatprep.subr.bf16.mxu0 0
        %10867 = vmatpush2.bf16.msra.mxu0 %v10795
        %10868 = vmatprep.subr.bf16.mxu0 0
        %10869 = vmatpush2.bf16.msra.mxu0 %v10794
        %10870 = vmatprep.subr.bf16.mxu0 0
        %10871 = vmatpush2.bf16.msra.mxu0 %v10793
        %10872 = vmatprep.subr.bf16.mxu0 0
        %10873 = vmatpush2.bf16.msra.mxu0 %v10792
        %10874 = vmatprep.subr.bf16.mxu0 0
        %10875 = vmatpush2.bf16.msra.mxu0 %v10791
        %10876 = vmatprep.subr.bf16.mxu0 0
        %10877 = vmatpush2.bf16.msra.mxu0 %v10790
        %10878 = vmatprep.mubr.bf16.mxu0 %v10586
        %10879 = vmatmul.mubr.bf16.gmra.mxu0 %v10585
        %v10880 = vpop.f32.mrf.mxu0
        %v10881 = vadd.f32 %v10653, %v10880
        %v10882 = vpop.f32.mrf.mxu0
        %v10883 = vpop.f32.mrf.mxu0
        %v10884 = vpop.f32.mrf.mxu0
        %10885 = vdwg.mxu0
        %10886 = vmatprep.subr.bf16.mxu0 0
        %10887 = vmatpush1.bf16.msra.mxu0 %v10805
        %10888 = vmatprep.subr.bf16.mxu0 0
        %10889 = vmatpush1.bf16.msra.mxu0 %v10804
        %10890 = vmatprep.subr.bf16.mxu0 0
        %10891 = vmatpush1.bf16.msra.mxu0 %v10803
        %10892 = vmatprep.subr.bf16.mxu0 0
        %10893 = vmatpush1.bf16.msra.mxu0 %v10802
        %10894 = vmatprep.subr.bf16.mxu0 0
        %10895 = vmatpush1.bf16.msra.mxu0 %v10801
        %10896 = vmatprep.subr.bf16.mxu0 0
        %10897 = vmatpush1.bf16.msra.mxu0 %v10800
        %10898 = vmatprep.subr.bf16.mxu0 0
        %10899 = vmatpush1.bf16.msra.mxu0 %v10799
        %10900 = vmatprep.subr.bf16.mxu0 0
        %10901 = vmatpush1.bf16.msra.mxu0 %v10798
        %10902 = vmatprep.subr.bf16.mxu0 0
        %10903 = vmatpush2.bf16.msra.mxu0 %v10813
        %10904 = vmatprep.subr.bf16.mxu0 0
        %10905 = vmatpush2.bf16.msra.mxu0 %v10812
        %10906 = vmatprep.subr.bf16.mxu0 0
        %10907 = vmatpush2.bf16.msra.mxu0 %v10811
        %10908 = vmatprep.subr.bf16.mxu0 0
        %10909 = vmatpush2.bf16.msra.mxu0 %v10810
        %10910 = vmatprep.subr.bf16.mxu0 0
        %10911 = vmatpush2.bf16.msra.mxu0 %v10809
        %10912 = vmatprep.subr.bf16.mxu0 0
        %10913 = vmatpush2.bf16.msra.mxu0 %v10808
        %10914 = vmatprep.subr.bf16.mxu0 0
        %10915 = vmatpush2.bf16.msra.mxu0 %v10807
        %10916 = vmatprep.subr.bf16.mxu0 0
        %10917 = vmatpush2.bf16.msra.mxu0 %v10806
        %10918 = vmatprep.mubr.bf16.mxu0 %v10588
        %10919 = vmatmul.mubr.bf16.gmra.mxu0 %v10587
        %v10920 = vpop.f32.mrf.mxu0
        %v10921 = vadd.f32 %v10881, %v10920
        %v10922 = vpop.f32.mrf.mxu0
        %v10923 = vpop.f32.mrf.mxu0
        %v10924 = vpop.f32.mrf.mxu0
        %10925 = vdwg.mxu0
        %10926 = vst [vmem:[%s970] sm:$0x1] %v10921
        %p10927 = scmp.lt.s32.totalorder %s44, 1
        %s10928 = scalar_select %p10927, %s44, 1
        %s10929 = scalar_lea.vmem %s22, %s10928
        // Predicated region
        $region189: #{deepdta_forward.1} parent=107 // pred_check
          %p10930 = pneg %p534
        $region190: #{deepdta_forward.1} parent=107 // pred_check_branch
          %10932 = sbr.rel (%p10930) target = $region192
        $region191: #{deepdta_forward.1} parent=107 // pred_region
          _
        $region192: #{deepdta_forward.1} parent=107 // pred_fallthru
          _
      $region108: #{deepdta_forward.1} parent=5 // pred_fallthru
        _
      %p10933 = scmp.le.s32.totalorder 2, %s39
      // Predicated region
      $region193: #{deepdta_forward.1} parent=5 // pred_check
        %p10934 = pneg %p10933
      $region194: #{deepdta_forward.1} parent=5 // pred_check_branch
        %10936 = sbr.rel (%p10934) target = $region196
      $region195: #{deepdta_forward.1} parent=5 // pred_region
        %s10937 = ssub.s32 %s39, 2
        // Predicated region
        $region197: #{deepdta_forward.1} parent=195 // pred_check
          %p10938 = pneg %p540
        $region198: #{deepdta_forward.1} parent=195 // pred_check_branch
          %10940 = sbr.rel (%p10938) target = $region200
        $region199: #{deepdta_forward.1} parent=195 // pred_region
          %p10941 = scmp.lt.s32.totalorder %s45, 1
          %s10942 = scalar_select %p10941, %s45, 1
          %s10943 = scalar_lea.vmem %s22, %s10942
        $region200: #{deepdta_forward.1} parent=195 // pred_fallthru
          _
      $region196: #{deepdta_forward.1} parent=5 // pred_fallthru
        _
    $region6: #{deepdta_forward.1} parent=1 // loop_footer
      %s43 = sadd.s32 1, %s39
    $region7: #{deepdta_forward.1} parent=1 // loop_footer_branch
      %38 = sbr.rel target = $region3
    $region8: #{deepdta_forward.1} parent=1 // loop_exit
      _
    %10944 = vsyncpa [#allocation3], 1
    %s10945 = scalar_lea.sflag [#allocation3], 1
    %10946 = vsyncpa %s10945, 1
    %10947 = vsyncpa [#allocation5], 1
    %10948 = vsyncpa [#allocation8], 1
    %10949 = vsyncpa [#allocation11], 1
    %10950 = vsyncpa [#allocation14], 1
    %10951 = vsyncpa [#allocation17], 1
    %10952 = vsyncpa [#allocation20], 1
    %10953 = vsyncpa [#allocation23], 1
    %10954 = vsyncpa [#allocation26], 1
    %10955 = vsyncpa [#allocation29], 1
    %10956 = vsyncpa [#allocation32], 1

</llo_original>
